<compile_context>
chip_gen: v5e
topology: v5e:2x2
jax: 0.10.0
libtpu: 0.0.40
codegen_flags: <defaults>
</compile_context>

<pallas_src>
import functools

import jax
import jax.numpy as jnp
from jax.experimental import pallas as pl
from jax.experimental.pallas import tpu as pltpu

C_STEM = 8  # stand-in image backbone: conv-stem channels


def _round_up(x, m):
    return ((x + m - 1) // m) * m


# ---------------------------------------------------------------------------
# Fused kernel.  Everything runs "transposed": features on sublanes, batch on
# the 128-lane axis.
# ---------------------------------------------------------------------------
def _combonet_kernel(wc_ref, bc_ref, clin_ref, img_ref, mask_ref, wm_ref, b_ref,
                     o_ref, pooled_ref, *,
                     Wp, chunk, n_chunks, c_stem, n_clin_pad, mat_offs, bias_offs):
    f32, bf16 = jnp.float32, jnp.bfloat16

    def dense(x, name, out, inn, relu=True):
        r0 = mat_offs[name]
        w = wm_ref[r0:r0 + out, 0:inn]                       # bf16 (out, inn)
        b0 = bias_offs[name]
        b = b_ref[b0:b0 + out, :]                            # f32  (out, 1)
        h = jnp.dot(w, x.astype(bf16), preferred_element_type=f32) + b
        return jnp.maximum(h, 0.0) if relu else h

    # ---- ClinicalMLP: fc1+ReLU -> fc2+ReLU -> fc3+ReLU --------------------
    x = clin_ref[...]                                        # (n_clin_pad, TB) f32
    h = dense(x, "c1", 128, n_clin_pad)
    h = dense(h, "c2", 64, 128)
    clin_feat = dense(h, "c3", 32, 64)                       # (32, TB)

    # ---- Image path: 3x3 "same" conv as 9 sublane-shifted VPU FMAs (f32),
    #      ReLU, masked global-average-pool as an MXU ones-vector matmul,
    #      then ONE small head matmul over the pooled channels. -------------
    TB = o_ref.shape[1]
    pooled = [jnp.zeros((1, TB), f32) for _ in range(c_stem)]
    for s in range(n_chunks):                                # static spatial chunks
        base = s * chunk
        taps = [img_ref[base + di * Wp + dj: base + di * Wp + dj + chunk, :]
                for di in range(3) for dj in range(3)]       # 9 x (chunk, TB)
        mrow = mask_ref[s:s + 1, :]                          # (1, chunk) {0,1}
        for c in range(c_stem):
            acc = taps[0] * wc_ref[c * 9]
            for k in range(1, 9):
                acc = acc + taps[k] * wc_ref[c * 9 + k]
            acc = jnp.maximum(acc + bc_ref[c], 0.0)          # (chunk, TB)
            pooled[c] = pooled[c] + jnp.dot(mrow, acc,
                                            preferred_element_type=f32)
    for c in range(c_stem):
        pooled_ref[c:c + 1, :] = pooled[c]
    # head weight is pre-scaled by 1/(H*W); linear head (no ReLU), as before.
    img_feat = dense(pooled_ref[...], "wh", 64, c_stem, relu=False)   # (64, TB)

    # ---- CombinerMLP: torch.cat((clin, img), dim=1) via split fc1 weight --
    # TODO(synk): Config.dropout_rate dropout omitted (inference behaviour).
    r_a, r_b = mat_offs["m1a"], mat_offs["m1b"]
    b1 = bias_offs["m1"]
    h = jnp.dot(wm_ref[r_a:r_a + 64, 0:32], clin_feat.astype(bf16),
                preferred_element_type=f32)
    h = h + jnp.dot(wm_ref[r_b:r_b + 64, 0:64], img_feat.astype(bf16),
                    preferred_element_type=f32)
    h = jnp.maximum(h + b_ref[b1:b1 + 64, :], 0.0)
    h = dense(h, "m2", 32, 64)
    h = dense(h, "m3", 16, 32)
    logits = dense(h, "m4", 8, 16, relu=False)               # rows 3..7 zero-padded
    o_ref[...] = logits.astype(o_ref.dtype)


# ---------------------------------------------------------------------------
# Wrapper
# ---------------------------------------------------------------------------
def _vmem_budget():
    try:
        cap = int(pltpu.get_tpu_info().vmem_capacity_bytes)
    except Exception:
        cap = 64 << 20                              # conservative (v7x-sized)
    budget = min(int(cap * 0.55), 48 << 20)         # ~35 MiB on v7x, 48 MiB v5e/v6e
    limit = min(int(cap * 0.70), budget + (16 << 20))
    return budget, limit


def combonet_forward(params, clinical_data, image_data):
    B, C, H, W = image_data.shape
    assert C == 1, "image backbone expects a single input channel (like torch code)"
    f32 = jnp.float32
    n_clin = clinical_data.shape[1]
    n_clin_pad = _round_up(n_clin, 8)

    Hp, Wp = H + 2, W + 2
    span = H * Wp                                   # conv output span, padded-row stride
    chunk = min(_round_up(span, 8), 512)            # spatial rows per in-kernel step
    n_chunks = -(-span // chunk)
    slab_rows = _round_up(n_chunks * chunk + 2 * Wp + 2, 8)

    pc, pi, pm = params["clinical"], params["image"], params["combiner"]
    c_stem = pi["conv_w"].shape[0]

    # ---- batch tiling: batch on the 128-lane axis -------------------------
    budget, vmem_limit = _vmem_budget()
    B_pad = _round_up(B, 8)
    if B_pad <= 128:
        TB = B_pad                                  # single grid step (block == full array)
    else:
        per_lane = slab_rows * 4 * 2 + 11 * chunk * 4 + n_clin_pad * 8 + 4096
        fixed = 2 << 20                             # packed weights, biases, slack
        tb_cap = max(128, ((budget - fixed) // per_lane) // 128 * 128)
        TB = min(tb_cap, 512)
        # >= 2 grid steps so both v7x TensorCores get work on the "parallel" axis.
        half = max(128, (_round_up(B_pad, 256) // 2) // 128 * 128)
        TB = min(TB, half)
        B_pad = _round_up(B_pad, TB)
    nb = B_pad // TB

    # ---- inputs: transposed, lane-dense layouts ---------------------------
    clin_t = jnp.pad(clinical_data.astype(f32),
                     ((0, B_pad - B), (0, n_clin_pad - n_clin))).T      # (n_clin_pad, B_pad)
    img = jnp.pad(image_data[:, 0].astype(f32), ((0, 0), (1, 1), (1, 1)))
    img = img.reshape(B, Hp * Wp)
    img_t = jnp.pad(img, ((0, B_pad - B), (0, slab_rows - Hp * Wp))).T  # (slab_rows, B_pad)

    # pooling mask: conv output position p (stride Wp) is valid iff its column
    # index < W and p < span; folded into the pooling ones-vector.
    p = jnp.arange(n_chunks * chunk, dtype=jnp.int32)
    mask = (((p % Wp) < W) & (p < span)).astype(f32).reshape(n_chunks, chunk)

    # ---- pack weights: one bf16 matrix slab + one f32 bias slab -----------
    inv_hw = 1.0 / float(H * W)
    mat_entries = [
        ("c1", pc["w1"]), ("c2", pc["w2"]), ("c3", pc["w3"]),
        ("wh", pi["head_w"] * inv_hw),
        ("m1a", pm["w1"][:, :32]), ("m1b", pm["w1"][:, 32:]),
        ("m2", pm["w2"]), ("m3", pm["w3"]), ("m4", pm["w4"]),
    ]
    mat_offs, blocks, r = {}, [], 0
    for name, m in mat_entries:
        out, inn = m.shape
        out_p = _round_up(out, 16)                  # bf16 sublane tile = 16 rows
        blk = jnp.zeros((out_p, 128), f32).at[:out, :inn].set(m.astype(f32))
        blocks.append(blk)
        mat_offs[name] = r
        r += out_p
    wmat = jnp.concatenate(blocks, axis=0).astype(jnp.bfloat16)         # (r, 128)

    bias_entries = [("c1", pc["b1"]), ("c2", pc["b2"]), ("c3", pc["b3"]),
                    ("wh", pi["head_b"]), ("m1", pm["b1"]), ("m2", pm["b2"]),
                    ("m3", pm["b3"]), ("m4", pm["b4"])]
    bias_offs = {name: 128 * j for j, (name, _) in enumerate(bias_entries)}
    bslab = jnp.zeros((128 * len(bias_entries), 1), f32)
    for j, (_, b) in enumerate(bias_entries):
        bslab = bslab.at[128 * j:128 * j + b.shape[0], 0].set(b.astype(f32))

    # conv stem taps/bias as SMEM scalars; flattening matches k = di*3 + dj.
    wc_flat = pi["conv_w"].reshape(c_stem * 9).astype(f32)
    bc = pi["conv_b"].astype(f32)

    kernel = functools.partial(
        _combonet_kernel, Wp=Wp, chunk=chunk, n_chunks=n_chunks,
        c_stem=c_stem, n_clin_pad=n_clin_pad,
        mat_offs=mat_offs, bias_offs=bias_offs)

    smem = pl.BlockSpec(memory_space=pltpu.MemorySpace.SMEM)
    full = lambda shape: pl.BlockSpec(shape, lambda b: (0, 0))

    out_t = pl.pallas_call(
        kernel,
        out_shape=jax.ShapeDtypeStruct((8, B_pad), f32),
        grid=(nb,),
        in_specs=[
            smem,                                             # wc_flat (c_stem*9,)
            smem,                                             # bc (c_stem,)
            pl.BlockSpec((n_clin_pad, TB), lambda b: (0, b)), # clinical^T
            pl.BlockSpec((slab_rows, TB), lambda b: (0, b)),  # padded image slab
            full(mask.shape),                                 # pooling mask rows
            full(wmat.shape),                                 # packed bf16 matrices
            full(bslab.shape),                                # packed f32 biases
        ],
        out_specs=pl.BlockSpec((8, TB), lambda b: (0, b)),
        scratch_shapes=[pltpu.VMEM((c_stem, TB), f32)],       # pooled channel sums
        compiler_params=pltpu.CompilerParams(
            dimension_semantics=("parallel",),
            vmem_limit_bytes=vmem_limit),
    )(wc_flat, bc, clin_t, img_t, mask, wmat, bslab)

    return out_t[:3, :B].T                                    # (B, 3)


# ---------------------------------------------------------------------------
# Deterministic parameter init (PyTorch-Linear-style uniform, torch layouts)
# ---------------------------------------------------------------------------
def _linear_init(key, fan_in, fan_out):
    kw, kb = jax.random.split(key)
    bound = 1.0 / float(fan_in) ** 0.5
    w = jax.random.uniform(kw, (fan_out, fan_in), jnp.float32, -bound, bound)
    b = jax.random.uniform(kb, (fan_out,), jnp.float32, -bound, bound)
    return w, b


def init_params(key, n_clinical_vars, stem_channels=C_STEM):
    ks = jax.random.split(key, 9)
    cw1, cb1 = _linear_init(ks[0], n_clinical_vars, 128)
    cw2, cb2 = _linear_init(ks[1], 128, 64)
    cw3, cb3 = _linear_init(ks[2], 64, 32)
    conv_w, conv_b = _linear_init(ks[3], 9, stem_channels)    # 3x3x1 conv taps
    head_w, head_b = _linear_init(ks[4], stem_channels, 64)   # image head -> 64
    mw1, mb1 = _linear_init(ks[5], 64 + 32, 64)
    mw2, mb2 = _linear_init(ks[6], 64, 32)
    mw3, mb3 = _linear_init(ks[7], 32, 16)
    mw4, mb4 = _linear_init(ks[8], 16, 3)
    return {
        "clinical": {"w1": cw1, "b1": cb1, "w2": cw2, "b2": cb2,
                     "w3": cw3, "b3": cb3},
        "image": {"conv_w": conv_w.reshape(stem_channels, 1, 3, 3),
                  "conv_b": conv_b, "head_w": head_w, "head_b": head_b},
        "combiner": {"w1": mw1, "b1": mb1, "w2": mw2, "b2": mb2,
                     "w3": mw3, "b3": mb3, "w4": mw4, "b4": mb4},
    }


# ---------------------------------------------------------------------------
if __name__ == "__main__":
    key = jax.random.PRNGKey(0)
    k_clin, k_img, k_params = jax.random.split(key, 3)

    B, n_clinical_vars, H, W = 2, 8, 16, 16
    clinical_data = jax.random.normal(k_clin, (B, n_clinical_vars), jnp.float32)
    image_data = jax.random.normal(k_img, (B, 1, H, W), jnp.float32)  # NCHW, C=1

    params = init_params(k_params, n_clinical_vars)

    fwd = jax.jit(combonet_forward)
    out = jax.block_until_ready(fwd(params, clinical_data, image_data))
    assert out.shape == (B, 3) and out.dtype == jnp.float32
    print("KERNEL_OK")
</pallas_src>

<mosaic_0001>
module attributes {stable_mosaic.version = 11 : i64} {
  func.func @_combonet_kernel(%arg0: i32, %arg1: memref<72xf32, #tpu.memory_space<smem>>, %arg2: memref<8xf32, #tpu.memory_space<smem>>, %arg3: memref<8x8xf32, #tpu.memory_space<vmem>>, %arg4: memref<328x8xf32, #tpu.memory_space<vmem>>, %arg5: memref<1x288xf32, #tpu.memory_space<vmem>>, %arg6: memref<480x128xbf16, #tpu.memory_space<vmem>>, %arg7: memref<1024x1xf32, #tpu.memory_space<vmem>>, %arg8: memref<8x8xf32, #tpu.memory_space<vmem>>, %arg9: memref<8x8xf32, #tpu.memory_space<vmem>>) attributes {dimension_semantics = [#tpu.dimension_semantics<parallel>], iteration_bounds = array<i64: 1>, scalar_prefetch = 0 : i64, scratch_operands = 1 : i64, tpu.core_type = #tpu.core_type<tc>, window_params = [{transform_indices = @transform_0, window_bounds = array<i64: 72>}, {transform_indices = @transform_1, window_bounds = array<i64: 8>}, {transform_indices = @transform_2, window_bounds = array<i64: 8, 8>}, {transform_indices = @transform_3, window_bounds = array<i64: 328, 8>}, {pipeline_mode = #tpu.pipeline_mode<synchronous>, transform_indices = @transform_4, window_bounds = array<i64: 1, 288>}, {pipeline_mode = #tpu.pipeline_mode<synchronous>, transform_indices = @transform_5, window_bounds = array<i64: 480, 128>}, {pipeline_mode = #tpu.pipeline_mode<synchronous>, transform_indices = @transform_6, window_bounds = array<i64: 1024, 1>}, {transform_indices = @transform_7, window_bounds = array<i64: 8, 8>}]} {
    %c0 = arith.constant 0 : index
    %c0_0 = arith.constant 0 : index
    %0 = vector.load %arg3[%c0, %c0_0] : memref<8x8xf32, #tpu.memory_space<vmem>>, vector<8x8xf32>
    %c0_1 = arith.constant 0 : index
    %c0_2 = arith.constant 0 : index
    %1 = vector.load %arg6[%c0_1, %c0_2] : memref<480x128xbf16, #tpu.memory_space<vmem>>, vector<128x8xbf16>
    %c0_3 = arith.constant 0 : index
    %c0_4 = arith.constant 0 : index
    %2 = vector.load %arg7[%c0_3, %c0_4] : memref<1024x1xf32, #tpu.memory_space<vmem>>, vector<128x1xf32>
    %3 = arith.truncf %0 : vector<8x8xf32> to vector<8x8xbf16>
    %cst = arith.constant dense<0.000000e+00> : vector<128x8xf32>
    %4 = tpu.matmul %1, %3, %cst {dimension_numbers = #tpu.dot_dimension_numbers<[1], [0], [0], [1], [0, 0, 1, 1], [], []>} : vector<128x8xbf16>, vector<8x8xbf16>, vector<128x8xf32> -> vector<128x8xf32>
    %5 = vector.broadcast %2 : vector<128x1xf32> to vector<128x8xf32>
    %6 = arith.addf %4, %5 : vector<128x8xf32>
    %cst_5 = arith.constant 0.000000e+00 : f32
    %7 = vector.broadcast %cst_5 : f32 to vector<128x8xf32>
    %8 = arith.maximumf %6, %7 : vector<128x8xf32>
    %c128 = arith.constant 128 : index
    %c0_6 = arith.constant 0 : index
    %9 = vector.load %arg6[%c128, %c0_6] : memref<480x128xbf16, #tpu.memory_space<vmem>>, vector<64x128xbf16>
    %c128_7 = arith.constant 128 : index
    %c0_8 = arith.constant 0 : index
    %10 = vector.load %arg7[%c128_7, %c0_8] : memref<1024x1xf32, #tpu.memory_space<vmem>>, vector<64x1xf32>
    %11 = arith.truncf %8 : vector<128x8xf32> to vector<128x8xbf16>
    %cst_9 = arith.constant dense<0.000000e+00> : vector<64x8xf32>
    %12 = tpu.matmul %9, %11, %cst_9 {dimension_numbers = #tpu.dot_dimension_numbers<[1], [0], [0], [1], [0, 0, 1, 1], [], []>} : vector<64x128xbf16>, vector<128x8xbf16>, vector<64x8xf32> -> vector<64x8xf32>
    %13 = vector.broadcast %10 : vector<64x1xf32> to vector<64x8xf32>
    %14 = arith.addf %12, %13 : vector<64x8xf32>
    %cst_10 = arith.constant 0.000000e+00 : f32
    %15 = vector.broadcast %cst_10 : f32 to vector<64x8xf32>
    %16 = arith.maximumf %14, %15 : vector<64x8xf32>
    %c192 = arith.constant 192 : index
    %c0_11 = arith.constant 0 : index
    %17 = vector.load %arg6[%c192, %c0_11] : memref<480x128xbf16, #tpu.memory_space<vmem>>, vector<32x64xbf16>
    %c256 = arith.constant 256 : index
    %c0_12 = arith.constant 0 : index
    %18 = vector.load %arg7[%c256, %c0_12] : memref<1024x1xf32, #tpu.memory_space<vmem>>, vector<32x1xf32>
    %19 = arith.truncf %16 : vector<64x8xf32> to vector<64x8xbf16>
    %cst_13 = arith.constant dense<0.000000e+00> : vector<32x8xf32>
    %20 = tpu.matmul %17, %19, %cst_13 {dimension_numbers = #tpu.dot_dimension_numbers<[1], [0], [0], [1], [0, 0, 1, 1], [], []>} : vector<32x64xbf16>, vector<64x8xbf16>, vector<32x8xf32> -> vector<32x8xf32>
    %21 = vector.broadcast %18 : vector<32x1xf32> to vector<32x8xf32>
    %22 = arith.addf %20, %21 : vector<32x8xf32>
    %cst_14 = arith.constant 0.000000e+00 : f32
    %23 = vector.broadcast %cst_14 : f32 to vector<32x8xf32>
    %24 = arith.maximumf %22, %23 : vector<32x8xf32>
    %cst_15 = arith.constant 0.000000e+00 : f32
    %25 = vector.broadcast %cst_15 : f32 to vector<1x8xf32>
    %cst_16 = arith.constant 0.000000e+00 : f32
    %26 = vector.broadcast %cst_16 : f32 to vector<1x8xf32>
    %cst_17 = arith.constant 0.000000e+00 : f32
    %27 = vector.broadcast %cst_17 : f32 to vector<1x8xf32>
    %cst_18 = arith.constant 0.000000e+00 : f32
    %28 = vector.broadcast %cst_18 : f32 to vector<1x8xf32>
    %cst_19 = arith.constant 0.000000e+00 : f32
    %29 = vector.broadcast %cst_19 : f32 to vector<1x8xf32>
    %cst_20 = arith.constant 0.000000e+00 : f32
    %30 = vector.broadcast %cst_20 : f32 to vector<1x8xf32>
    %cst_21 = arith.constant 0.000000e+00 : f32
    %31 = vector.broadcast %cst_21 : f32 to vector<1x8xf32>
    %cst_22 = arith.constant 0.000000e+00 : f32
    %32 = vector.broadcast %cst_22 : f32 to vector<1x8xf32>
    %c0_23 = arith.constant 0 : index
    %c0_24 = arith.constant 0 : index
    %33 = vector.load %arg4[%c0_23, %c0_24] : memref<328x8xf32, #tpu.memory_space<vmem>>, vector<288x8xf32>
    %c1 = arith.constant 1 : index
    %c0_25 = arith.constant 0 : index
    %34 = vector.load %arg4[%c1, %c0_25] : memref<328x8xf32, #tpu.memory_space<vmem>>, vector<288x8xf32>
    %c2 = arith.constant 2 : index
    %c0_26 = arith.constant 0 : index
    %35 = vector.load %arg4[%c2, %c0_26] : memref<328x8xf32, #tpu.memory_space<vmem>>, vector<288x8xf32>
    %c18 = arith.constant 18 : index
    %c0_27 = arith.constant 0 : index
    %36 = vector.load %arg4[%c18, %c0_27] : memref<328x8xf32, #tpu.memory_space<vmem>>, vector<288x8xf32>
    %c19 = arith.constant 19 : index
    %c0_28 = arith.constant 0 : index
    %37 = vector.load %arg4[%c19, %c0_28] : memref<328x8xf32, #tpu.memory_space<vmem>>, vector<288x8xf32>
    %c20 = arith.constant 20 : index
    %c0_29 = arith.constant 0 : index
    %38 = vector.load %arg4[%c20, %c0_29] : memref<328x8xf32, #tpu.memory_space<vmem>>, vector<288x8xf32>
    %c36 = arith.constant 36 : index
    %c0_30 = arith.constant 0 : index
    %39 = vector.load %arg4[%c36, %c0_30] : memref<328x8xf32, #tpu.memory_space<vmem>>, vector<288x8xf32>
    %c37 = arith.constant 37 : index
    %c0_31 = arith.constant 0 : index
    %40 = vector.load %arg4[%c37, %c0_31] : memref<328x8xf32, #tpu.memory_space<vmem>>, vector<288x8xf32>
    %c38 = arith.constant 38 : index
    %c0_32 = arith.constant 0 : index
    %41 = vector.load %arg4[%c38, %c0_32] : memref<328x8xf32, #tpu.memory_space<vmem>>, vector<288x8xf32>
    %c0_33 = arith.constant 0 : index
    %c0_34 = arith.constant 0 : index
    %42 = vector.load %arg5[%c0_33, %c0_34] : memref<1x288xf32, #tpu.memory_space<vmem>>, vector<1x288xf32>
    %c0_35 = arith.constant 0 : index
    %43 = memref.load %arg1[%c0_35] : memref<72xf32, #tpu.memory_space<smem>>
    %44 = vector.broadcast %43 : f32 to vector<288x8xf32>
    %45 = arith.mulf %33, %44 : vector<288x8xf32>
    %c1_36 = arith.constant 1 : index
    %46 = memref.load %arg1[%c1_36] : memref<72xf32, #tpu.memory_space<smem>>
    %47 = vector.broadcast %46 : f32 to vector<288x8xf32>
    %48 = arith.mulf %34, %47 : vector<288x8xf32>
    %49 = arith.addf %45, %48 : vector<288x8xf32>
    %c2_37 = arith.constant 2 : index
    %50 = memref.load %arg1[%c2_37] : memref<72xf32, #tpu.memory_space<smem>>
    %51 = vector.broadcast %50 : f32 to vector<288x8xf32>
    %52 = arith.mulf %35, %51 : vector<288x8xf32>
    %53 = arith.addf %49, %52 : vector<288x8xf32>
    %c3 = arith.constant 3 : index
    %54 = memref.load %arg1[%c3] : memref<72xf32, #tpu.memory_space<smem>>
    %55 = vector.broadcast %54 : f32 to vector<288x8xf32>
    %56 = arith.mulf %36, %55 : vector<288x8xf32>
    %57 = arith.addf %53, %56 : vector<288x8xf32>
    %c4 = arith.constant 4 : index
    %58 = memref.load %arg1[%c4] : memref<72xf32, #tpu.memory_space<smem>>
    %59 = vector.broadcast %58 : f32 to vector<288x8xf32>
    %60 = arith.mulf %37, %59 : vector<288x8xf32>
    %61 = arith.addf %57, %60 : vector<288x8xf32>
    %c5 = arith.constant 5 : index
    %62 = memref.load %arg1[%c5] : memref<72xf32, #tpu.memory_space<smem>>
    %63 = vector.broadcast %62 : f32 to vector<288x8xf32>
    %64 = arith.mulf %38, %63 : vector<288x8xf32>
    %65 = arith.addf %61, %64 : vector<288x8xf32>
    %c6 = arith.constant 6 : index
    %66 = memref.load %arg1[%c6] : memref<72xf32, #tpu.memory_space<smem>>
    %67 = vector.broadcast %66 : f32 to vector<288x8xf32>
    %68 = arith.mulf %39, %67 : vector<288x8xf32>
    %69 = arith.addf %65, %68 : vector<288x8xf32>
    %c7 = arith.constant 7 : index
    %70 = memref.load %arg1[%c7] : memref<72xf32, #tpu.memory_space<smem>>
    %71 = vector.broadcast %70 : f32 to vector<288x8xf32>
    %72 = arith.mulf %40, %71 : vector<288x8xf32>
    %73 = arith.addf %69, %72 : vector<288x8xf32>
    %c8 = arith.constant 8 : index
    %74 = memref.load %arg1[%c8] : memref<72xf32, #tpu.memory_space<smem>>
    %75 = vector.broadcast %74 : f32 to vector<288x8xf32>
    %76 = arith.mulf %41, %75 : vector<288x8xf32>
    %77 = arith.addf %73, %76 : vector<288x8xf32>
    %c0_38 = arith.constant 0 : index
    %78 = memref.load %arg2[%c0_38] : memref<8xf32, #tpu.memory_space<smem>>
    %79 = vector.broadcast %78 : f32 to vector<288x8xf32>
    %80 = arith.addf %77, %79 : vector<288x8xf32>
    %cst_39 = arith.constant 0.000000e+00 : f32
    %81 = vector.broadcast %cst_39 : f32 to vector<288x8xf32>
    %82 = arith.maximumf %80, %81 : vector<288x8xf32>
    %cst_40 = arith.constant dense<0.000000e+00> : vector<1x8xf32>
    %83 = tpu.matmul %42, %82, %cst_40 {dimension_numbers = #tpu.dot_dimension_numbers<[1], [0], [0], [1], [0, 0, 1, 1], [], []>} : vector<1x288xf32>, vector<288x8xf32>, vector<1x8xf32> -> vector<1x8xf32>
    %84 = arith.addf %25, %83 : vector<1x8xf32>
    %c9 = arith.constant 9 : index
    %85 = memref.load %arg1[%c9] : memref<72xf32, #tpu.memory_space<smem>>
    %86 = vector.broadcast %85 : f32 to vector<288x8xf32>
    %87 = arith.mulf %33, %86 : vector<288x8xf32>
    %c10 = arith.constant 10 : index
    %88 = memref.load %arg1[%c10] : memref<72xf32, #tpu.memory_space<smem>>
    %89 = vector.broadcast %88 : f32 to vector<288x8xf32>
    %90 = arith.mulf %34, %89 : vector<288x8xf32>
    %91 = arith.addf %87, %90 : vector<288x8xf32>
    %c11 = arith.constant 11 : index
    %92 = memref.load %arg1[%c11] : memref<72xf32, #tpu.memory_space<smem>>
    %93 = vector.broadcast %92 : f32 to vector<288x8xf32>
    %94 = arith.mulf %35, %93 : vector<288x8xf32>
    %95 = arith.addf %91, %94 : vector<288x8xf32>
    %c12 = arith.constant 12 : index
    %96 = memref.load %arg1[%c12] : memref<72xf32, #tpu.memory_space<smem>>
    %97 = vector.broadcast %96 : f32 to vector<288x8xf32>
    %98 = arith.mulf %36, %97 : vector<288x8xf32>
    %99 = arith.addf %95, %98 : vector<288x8xf32>
    %c13 = arith.constant 13 : index
    %100 = memref.load %arg1[%c13] : memref<72xf32, #tpu.memory_space<smem>>
    %101 = vector.broadcast %100 : f32 to vector<288x8xf32>
    %102 = arith.mulf %37, %101 : vector<288x8xf32>
    %103 = arith.addf %99, %102 : vector<288x8xf32>
    %c14 = arith.constant 14 : index
    %104 = memref.load %arg1[%c14] : memref<72xf32, #tpu.memory_space<smem>>
    %105 = vector.broadcast %104 : f32 to vector<288x8xf32>
    %106 = arith.mulf %38, %105 : vector<288x8xf32>
    %107 = arith.addf %103, %106 : vector<288x8xf32>
    %c15 = arith.constant 15 : index
    %108 = memref.load %arg1[%c15] : memref<72xf32, #tpu.memory_space<smem>>
    %109 = vector.broadcast %108 : f32 to vector<288x8xf32>
    %110 = arith.mulf %39, %109 : vector<288x8xf32>
    %111 = arith.addf %107, %110 : vector<288x8xf32>
    %c16 = arith.constant 16 : index
    %112 = memref.load %arg1[%c16] : memref<72xf32, #tpu.memory_space<smem>>
    %113 = vector.broadcast %112 : f32 to vector<288x8xf32>
    %114 = arith.mulf %40, %113 : vector<288x8xf32>
    %115 = arith.addf %111, %114 : vector<288x8xf32>
    %c17 = arith.constant 17 : index
    %116 = memref.load %arg1[%c17] : memref<72xf32, #tpu.memory_space<smem>>
    %117 = vector.broadcast %116 : f32 to vector<288x8xf32>
    %118 = arith.mulf %41, %117 : vector<288x8xf32>
    %119 = arith.addf %115, %118 : vector<288x8xf32>
    %c1_41 = arith.constant 1 : index
    %120 = memref.load %arg2[%c1_41] : memref<8xf32, #tpu.memory_space<smem>>
    %121 = vector.broadcast %120 : f32 to vector<288x8xf32>
    %122 = arith.addf %119, %121 : vector<288x8xf32>
    %cst_42 = arith.constant 0.000000e+00 : f32
    %123 = vector.broadcast %cst_42 : f32 to vector<288x8xf32>
    %124 = arith.maximumf %122, %123 : vector<288x8xf32>
    %cst_43 = arith.constant dense<0.000000e+00> : vector<1x8xf32>
    %125 = tpu.matmul %42, %124, %cst_43 {dimension_numbers = #tpu.dot_dimension_numbers<[1], [0], [0], [1], [0, 0, 1, 1], [], []>} : vector<1x288xf32>, vector<288x8xf32>, vector<1x8xf32> -> vector<1x8xf32>
    %126 = arith.addf %26, %125 : vector<1x8xf32>
    %c18_44 = arith.constant 18 : index
    %127 = memref.load %arg1[%c18_44] : memref<72xf32, #tpu.memory_space<smem>>
    %128 = vector.broadcast %127 : f32 to vector<288x8xf32>
    %129 = arith.mulf %33, %128 : vector<288x8xf32>
    %c19_45 = arith.constant 19 : index
    %130 = memref.load %arg1[%c19_45] : memref<72xf32, #tpu.memory_space<smem>>
    %131 = vector.broadcast %130 : f32 to vector<288x8xf32>
    %132 = arith.mulf %34, %131 : vector<288x8xf32>
    %133 = arith.addf %129, %132 : vector<288x8xf32>
    %c20_46 = arith.constant 20 : index
    %134 = memref.load %arg1[%c20_46] : memref<72xf32, #tpu.memory_space<smem>>
    %135 = vector.broadcast %134 : f32 to vector<288x8xf32>
    %136 = arith.mulf %35, %135 : vector<288x8xf32>
    %137 = arith.addf %133, %136 : vector<288x8xf32>
    %c21 = arith.constant 21 : index
    %138 = memref.load %arg1[%c21] : memref<72xf32, #tpu.memory_space<smem>>
    %139 = vector.broadcast %138 : f32 to vector<288x8xf32>
    %140 = arith.mulf %36, %139 : vector<288x8xf32>
    %141 = arith.addf %137, %140 : vector<288x8xf32>
    %c22 = arith.constant 22 : index
    %142 = memref.load %arg1[%c22] : memref<72xf32, #tpu.memory_space<smem>>
    %143 = vector.broadcast %142 : f32 to vector<288x8xf32>
    %144 = arith.mulf %37, %143 : vector<288x8xf32>
    %145 = arith.addf %141, %144 : vector<288x8xf32>
    %c23 = arith.constant 23 : index
    %146 = memref.load %arg1[%c23] : memref<72xf32, #tpu.memory_space<smem>>
    %147 = vector.broadcast %146 : f32 to vector<288x8xf32>
    %148 = arith.mulf %38, %147 : vector<288x8xf32>
    %149 = arith.addf %145, %148 : vector<288x8xf32>
    %c24 = arith.constant 24 : index
    %150 = memref.load %arg1[%c24] : memref<72xf32, #tpu.memory_space<smem>>
    %151 = vector.broadcast %150 : f32 to vector<288x8xf32>
    %152 = arith.mulf %39, %151 : vector<288x8xf32>
    %153 = arith.addf %149, %152 : vector<288x8xf32>
    %c25 = arith.constant 25 : index
    %154 = memref.load %arg1[%c25] : memref<72xf32, #tpu.memory_space<smem>>
    %155 = vector.broadcast %154 : f32 to vector<288x8xf32>
    %156 = arith.mulf %40, %155 : vector<288x8xf32>
    %157 = arith.addf %153, %156 : vector<288x8xf32>
    %c26 = arith.constant 26 : index
    %158 = memref.load %arg1[%c26] : memref<72xf32, #tpu.memory_space<smem>>
    %159 = vector.broadcast %158 : f32 to vector<288x8xf32>
    %160 = arith.mulf %41, %159 : vector<288x8xf32>
    %161 = arith.addf %157, %160 : vector<288x8xf32>
    %c2_47 = arith.constant 2 : index
    %162 = memref.load %arg2[%c2_47] : memref<8xf32, #tpu.memory_space<smem>>
    %163 = vector.broadcast %162 : f32 to vector<288x8xf32>
    %164 = arith.addf %161, %163 : vector<288x8xf32>
    %cst_48 = arith.constant 0.000000e+00 : f32
    %165 = vector.broadcast %cst_48 : f32 to vector<288x8xf32>
    %166 = arith.maximumf %164, %165 : vector<288x8xf32>
    %cst_49 = arith.constant dense<0.000000e+00> : vector<1x8xf32>
    %167 = tpu.matmul %42, %166, %cst_49 {dimension_numbers = #tpu.dot_dimension_numbers<[1], [0], [0], [1], [0, 0, 1, 1], [], []>} : vector<1x288xf32>, vector<288x8xf32>, vector<1x8xf32> -> vector<1x8xf32>
    %168 = arith.addf %27, %167 : vector<1x8xf32>
    %c27 = arith.constant 27 : index
    %169 = memref.load %arg1[%c27] : memref<72xf32, #tpu.memory_space<smem>>
    %170 = vector.broadcast %169 : f32 to vector<288x8xf32>
    %171 = arith.mulf %33, %170 : vector<288x8xf32>
    %c28 = arith.constant 28 : index
    %172 = memref.load %arg1[%c28] : memref<72xf32, #tpu.memory_space<smem>>
    %173 = vector.broadcast %172 : f32 to vector<288x8xf32>
    %174 = arith.mulf %34, %173 : vector<288x8xf32>
    %175 = arith.addf %171, %174 : vector<288x8xf32>
    %c29 = arith.constant 29 : index
    %176 = memref.load %arg1[%c29] : memref<72xf32, #tpu.memory_space<smem>>
    %177 = vector.broadcast %176 : f32 to vector<288x8xf32>
    %178 = arith.mulf %35, %177 : vector<288x8xf32>
    %179 = arith.addf %175, %178 : vector<288x8xf32>
    %c30 = arith.constant 30 : index
    %180 = memref.load %arg1[%c30] : memref<72xf32, #tpu.memory_space<smem>>
    %181 = vector.broadcast %180 : f32 to vector<288x8xf32>
    %182 = arith.mulf %36, %181 : vector<288x8xf32>
    %183 = arith.addf %179, %182 : vector<288x8xf32>
    %c31 = arith.constant 31 : index
    %184 = memref.load %arg1[%c31] : memref<72xf32, #tpu.memory_space<smem>>
    %185 = vector.broadcast %184 : f32 to vector<288x8xf32>
    %186 = arith.mulf %37, %185 : vector<288x8xf32>
    %187 = arith.addf %183, %186 : vector<288x8xf32>
    %c32 = arith.constant 32 : index
    %188 = memref.load %arg1[%c32] : memref<72xf32, #tpu.memory_space<smem>>
    %189 = vector.broadcast %188 : f32 to vector<288x8xf32>
    %190 = arith.mulf %38, %189 : vector<288x8xf32>
    %191 = arith.addf %187, %190 : vector<288x8xf32>
    %c33 = arith.constant 33 : index
    %192 = memref.load %arg1[%c33] : memref<72xf32, #tpu.memory_space<smem>>
    %193 = vector.broadcast %192 : f32 to vector<288x8xf32>
    %194 = arith.mulf %39, %193 : vector<288x8xf32>
    %195 = arith.addf %191, %194 : vector<288x8xf32>
    %c34 = arith.constant 34 : index
    %196 = memref.load %arg1[%c34] : memref<72xf32, #tpu.memory_space<smem>>
    %197 = vector.broadcast %196 : f32 to vector<288x8xf32>
    %198 = arith.mulf %40, %197 : vector<288x8xf32>
    %199 = arith.addf %195, %198 : vector<288x8xf32>
    %c35 = arith.constant 35 : index
    %200 = memref.load %arg1[%c35] : memref<72xf32, #tpu.memory_space<smem>>
    %201 = vector.broadcast %200 : f32 to vector<288x8xf32>
    %202 = arith.mulf %41, %201 : vector<288x8xf32>
    %203 = arith.addf %199, %202 : vector<288x8xf32>
    %c3_50 = arith.constant 3 : index
    %204 = memref.load %arg2[%c3_50] : memref<8xf32, #tpu.memory_space<smem>>
    %205 = vector.broadcast %204 : f32 to vector<288x8xf32>
    %206 = arith.addf %203, %205 : vector<288x8xf32>
    %cst_51 = arith.constant 0.000000e+00 : f32
    %207 = vector.broadcast %cst_51 : f32 to vector<288x8xf32>
    %208 = arith.maximumf %206, %207 : vector<288x8xf32>
    %cst_52 = arith.constant dense<0.000000e+00> : vector<1x8xf32>
    %209 = tpu.matmul %42, %208, %cst_52 {dimension_numbers = #tpu.dot_dimension_numbers<[1], [0], [0], [1], [0, 0, 1, 1], [], []>} : vector<1x288xf32>, vector<288x8xf32>, vector<1x8xf32> -> vector<1x8xf32>
    %210 = arith.addf %28, %209 : vector<1x8xf32>
    %c36_53 = arith.constant 36 : index
    %211 = memref.load %arg1[%c36_53] : memref<72xf32, #tpu.memory_space<smem>>
    %212 = vector.broadcast %211 : f32 to vector<288x8xf32>
    %213 = arith.mulf %33, %212 : vector<288x8xf32>
    %c37_54 = arith.constant 37 : index
    %214 = memref.load %arg1[%c37_54] : memref<72xf32, #tpu.memory_space<smem>>
    %215 = vector.broadcast %214 : f32 to vector<288x8xf32>
    %216 = arith.mulf %34, %215 : vector<288x8xf32>
    %217 = arith.addf %213, %216 : vector<288x8xf32>
    %c38_55 = arith.constant 38 : index
    %218 = memref.load %arg1[%c38_55] : memref<72xf32, #tpu.memory_space<smem>>
    %219 = vector.broadcast %218 : f32 to vector<288x8xf32>
    %220 = arith.mulf %35, %219 : vector<288x8xf32>
    %221 = arith.addf %217, %220 : vector<288x8xf32>
    %c39 = arith.constant 39 : index
    %222 = memref.load %arg1[%c39] : memref<72xf32, #tpu.memory_space<smem>>
    %223 = vector.broadcast %222 : f32 to vector<288x8xf32>
    %224 = arith.mulf %36, %223 : vector<288x8xf32>
    %225 = arith.addf %221, %224 : vector<288x8xf32>
    %c40 = arith.constant 40 : index
    %226 = memref.load %arg1[%c40] : memref<72xf32, #tpu.memory_space<smem>>
    %227 = vector.broadcast %226 : f32 to vector<288x8xf32>
    %228 = arith.mulf %37, %227 : vector<288x8xf32>
    %229 = arith.addf %225, %228 : vector<288x8xf32>
    %c41 = arith.constant 41 : index
    %230 = memref.load %arg1[%c41] : memref<72xf32, #tpu.memory_space<smem>>
    %231 = vector.broadcast %230 : f32 to vector<288x8xf32>
    %232 = arith.mulf %38, %231 : vector<288x8xf32>
    %233 = arith.addf %229, %232 : vector<288x8xf32>
    %c42 = arith.constant 42 : index
    %234 = memref.load %arg1[%c42] : memref<72xf32, #tpu.memory_space<smem>>
    %235 = vector.broadcast %234 : f32 to vector<288x8xf32>
    %236 = arith.mulf %39, %235 : vector<288x8xf32>
    %237 = arith.addf %233, %236 : vector<288x8xf32>
    %c43 = arith.constant 43 : index
    %238 = memref.load %arg1[%c43] : memref<72xf32, #tpu.memory_space<smem>>
    %239 = vector.broadcast %238 : f32 to vector<288x8xf32>
    %240 = arith.mulf %40, %239 : vector<288x8xf32>
    %241 = arith.addf %237, %240 : vector<288x8xf32>
    %c44 = arith.constant 44 : index
    %242 = memref.load %arg1[%c44] : memref<72xf32, #tpu.memory_space<smem>>
    %243 = vector.broadcast %242 : f32 to vector<288x8xf32>
    %244 = arith.mulf %41, %243 : vector<288x8xf32>
    %245 = arith.addf %241, %244 : vector<288x8xf32>
    %c4_56 = arith.constant 4 : index
    %246 = memref.load %arg2[%c4_56] : memref<8xf32, #tpu.memory_space<smem>>
    %247 = vector.broadcast %246 : f32 to vector<288x8xf32>
    %248 = arith.addf %245, %247 : vector<288x8xf32>
    %cst_57 = arith.constant 0.000000e+00 : f32
    %249 = vector.broadcast %cst_57 : f32 to vector<288x8xf32>
    %250 = arith.maximumf %248, %249 : vector<288x8xf32>
    %cst_58 = arith.constant dense<0.000000e+00> : vector<1x8xf32>
    %251 = tpu.matmul %42, %250, %cst_58 {dimension_numbers = #tpu.dot_dimension_numbers<[1], [0], [0], [1], [0, 0, 1, 1], [], []>} : vector<1x288xf32>, vector<288x8xf32>, vector<1x8xf32> -> vector<1x8xf32>
    %252 = arith.addf %29, %251 : vector<1x8xf32>
    %c45 = arith.constant 45 : index
    %253 = memref.load %arg1[%c45] : memref<72xf32, #tpu.memory_space<smem>>
    %254 = vector.broadcast %253 : f32 to vector<288x8xf32>
    %255 = arith.mulf %33, %254 : vector<288x8xf32>
    %c46 = arith.constant 46 : index
    %256 = memref.load %arg1[%c46] : memref<72xf32, #tpu.memory_space<smem>>
    %257 = vector.broadcast %256 : f32 to vector<288x8xf32>
    %258 = arith.mulf %34, %257 : vector<288x8xf32>
    %259 = arith.addf %255, %258 : vector<288x8xf32>
    %c47 = arith.constant 47 : index
    %260 = memref.load %arg1[%c47] : memref<72xf32, #tpu.memory_space<smem>>
    %261 = vector.broadcast %260 : f32 to vector<288x8xf32>
    %262 = arith.mulf %35, %261 : vector<288x8xf32>
    %263 = arith.addf %259, %262 : vector<288x8xf32>
    %c48 = arith.constant 48 : index
    %264 = memref.load %arg1[%c48] : memref<72xf32, #tpu.memory_space<smem>>
    %265 = vector.broadcast %264 : f32 to vector<288x8xf32>
    %266 = arith.mulf %36, %265 : vector<288x8xf32>
    %267 = arith.addf %263, %266 : vector<288x8xf32>
    %c49 = arith.constant 49 : index
    %268 = memref.load %arg1[%c49] : memref<72xf32, #tpu.memory_space<smem>>
    %269 = vector.broadcast %268 : f32 to vector<288x8xf32>
    %270 = arith.mulf %37, %269 : vector<288x8xf32>
    %271 = arith.addf %267, %270 : vector<288x8xf32>
    %c50 = arith.constant 50 : index
    %272 = memref.load %arg1[%c50] : memref<72xf32, #tpu.memory_space<smem>>
    %273 = vector.broadcast %272 : f32 to vector<288x8xf32>
    %274 = arith.mulf %38, %273 : vector<288x8xf32>
    %275 = arith.addf %271, %274 : vector<288x8xf32>
    %c51 = arith.constant 51 : index
    %276 = memref.load %arg1[%c51] : memref<72xf32, #tpu.memory_space<smem>>
    %277 = vector.broadcast %276 : f32 to vector<288x8xf32>
    %278 = arith.mulf %39, %277 : vector<288x8xf32>
    %279 = arith.addf %275, %278 : vector<288x8xf32>
    %c52 = arith.constant 52 : index
    %280 = memref.load %arg1[%c52] : memref<72xf32, #tpu.memory_space<smem>>
    %281 = vector.broadcast %280 : f32 to vector<288x8xf32>
    %282 = arith.mulf %40, %281 : vector<288x8xf32>
    %283 = arith.addf %279, %282 : vector<288x8xf32>
    %c53 = arith.constant 53 : index
    %284 = memref.load %arg1[%c53] : memref<72xf32, #tpu.memory_space<smem>>
    %285 = vector.broadcast %284 : f32 to vector<288x8xf32>
    %286 = arith.mulf %41, %285 : vector<288x8xf32>
    %287 = arith.addf %283, %286 : vector<288x8xf32>
    %c5_59 = arith.constant 5 : index
    %288 = memref.load %arg2[%c5_59] : memref<8xf32, #tpu.memory_space<smem>>
    %289 = vector.broadcast %288 : f32 to vector<288x8xf32>
    %290 = arith.addf %287, %289 : vector<288x8xf32>
    %cst_60 = arith.constant 0.000000e+00 : f32
    %291 = vector.broadcast %cst_60 : f32 to vector<288x8xf32>
    %292 = arith.maximumf %290, %291 : vector<288x8xf32>
    %cst_61 = arith.constant dense<0.000000e+00> : vector<1x8xf32>
    %293 = tpu.matmul %42, %292, %cst_61 {dimension_numbers = #tpu.dot_dimension_numbers<[1], [0], [0], [1], [0, 0, 1, 1], [], []>} : vector<1x288xf32>, vector<288x8xf32>, vector<1x8xf32> -> vector<1x8xf32>
    %294 = arith.addf %30, %293 : vector<1x8xf32>
    %c54 = arith.constant 54 : index
    %295 = memref.load %arg1[%c54] : memref<72xf32, #tpu.memory_space<smem>>
    %296 = vector.broadcast %295 : f32 to vector<288x8xf32>
    %297 = arith.mulf %33, %296 : vector<288x8xf32>
    %c55 = arith.constant 55 : index
    %298 = memref.load %arg1[%c55] : memref<72xf32, #tpu.memory_space<smem>>
    %299 = vector.broadcast %298 : f32 to vector<288x8xf32>
    %300 = arith.mulf %34, %299 : vector<288x8xf32>
    %301 = arith.addf %297, %300 : vector<288x8xf32>
    %c56 = arith.constant 56 : index
    %302 = memref.load %arg1[%c56] : memref<72xf32, #tpu.memory_space<smem>>
    %303 = vector.broadcast %302 : f32 to vector<288x8xf32>
    %304 = arith.mulf %35, %303 : vector<288x8xf32>
    %305 = arith.addf %301, %304 : vector<288x8xf32>
    %c57 = arith.constant 57 : index
    %306 = memref.load %arg1[%c57] : memref<72xf32, #tpu.memory_space<smem>>
    %307 = vector.broadcast %306 : f32 to vector<288x8xf32>
    %308 = arith.mulf %36, %307 : vector<288x8xf32>
    %309 = arith.addf %305, %308 : vector<288x8xf32>
    %c58 = arith.constant 58 : index
    %310 = memref.load %arg1[%c58] : memref<72xf32, #tpu.memory_space<smem>>
    %311 = vector.broadcast %310 : f32 to vector<288x8xf32>
    %312 = arith.mulf %37, %311 : vector<288x8xf32>
    %313 = arith.addf %309, %312 : vector<288x8xf32>
    %c59 = arith.constant 59 : index
    %314 = memref.load %arg1[%c59] : memref<72xf32, #tpu.memory_space<smem>>
    %315 = vector.broadcast %314 : f32 to vector<288x8xf32>
    %316 = arith.mulf %38, %315 : vector<288x8xf32>
    %317 = arith.addf %313, %316 : vector<288x8xf32>
    %c60 = arith.constant 60 : index
    %318 = memref.load %arg1[%c60] : memref<72xf32, #tpu.memory_space<smem>>
    %319 = vector.broadcast %318 : f32 to vector<288x8xf32>
    %320 = arith.mulf %39, %319 : vector<288x8xf32>
    %321 = arith.addf %317, %320 : vector<288x8xf32>
    %c61 = arith.constant 61 : index
    %322 = memref.load %arg1[%c61] : memref<72xf32, #tpu.memory_space<smem>>
    %323 = vector.broadcast %322 : f32 to vector<288x8xf32>
    %324 = arith.mulf %40, %323 : vector<288x8xf32>
    %325 = arith.addf %321, %324 : vector<288x8xf32>
    %c62 = arith.constant 62 : index
    %326 = memref.load %arg1[%c62] : memref<72xf32, #tpu.memory_space<smem>>
    %327 = vector.broadcast %326 : f32 to vector<288x8xf32>
    %328 = arith.mulf %41, %327 : vector<288x8xf32>
    %329 = arith.addf %325, %328 : vector<288x8xf32>
    %c6_62 = arith.constant 6 : index
    %330 = memref.load %arg2[%c6_62] : memref<8xf32, #tpu.memory_space<smem>>
    %331 = vector.broadcast %330 : f32 to vector<288x8xf32>
    %332 = arith.addf %329, %331 : vector<288x8xf32>
    %cst_63 = arith.constant 0.000000e+00 : f32
    %333 = vector.broadcast %cst_63 : f32 to vector<288x8xf32>
    %334 = arith.maximumf %332, %333 : vector<288x8xf32>
    %cst_64 = arith.constant dense<0.000000e+00> : vector<1x8xf32>
    %335 = tpu.matmul %42, %334, %cst_64 {dimension_numbers = #tpu.dot_dimension_numbers<[1], [0], [0], [1], [0, 0, 1, 1], [], []>} : vector<1x288xf32>, vector<288x8xf32>, vector<1x8xf32> -> vector<1x8xf32>
    %336 = arith.addf %31, %335 : vector<1x8xf32>
    %c63 = arith.constant 63 : index
    %337 = memref.load %arg1[%c63] : memref<72xf32, #tpu.memory_space<smem>>
    %338 = vector.broadcast %337 : f32 to vector<288x8xf32>
    %339 = arith.mulf %33, %338 : vector<288x8xf32>
    %c64 = arith.constant 64 : index
    %340 = memref.load %arg1[%c64] : memref<72xf32, #tpu.memory_space<smem>>
    %341 = vector.broadcast %340 : f32 to vector<288x8xf32>
    %342 = arith.mulf %34, %341 : vector<288x8xf32>
    %343 = arith.addf %339, %342 : vector<288x8xf32>
    %c65 = arith.constant 65 : index
    %344 = memref.load %arg1[%c65] : memref<72xf32, #tpu.memory_space<smem>>
    %345 = vector.broadcast %344 : f32 to vector<288x8xf32>
    %346 = arith.mulf %35, %345 : vector<288x8xf32>
    %347 = arith.addf %343, %346 : vector<288x8xf32>
    %c66 = arith.constant 66 : index
    %348 = memref.load %arg1[%c66] : memref<72xf32, #tpu.memory_space<smem>>
    %349 = vector.broadcast %348 : f32 to vector<288x8xf32>
    %350 = arith.mulf %36, %349 : vector<288x8xf32>
    %351 = arith.addf %347, %350 : vector<288x8xf32>
    %c67 = arith.constant 67 : index
    %352 = memref.load %arg1[%c67] : memref<72xf32, #tpu.memory_space<smem>>
    %353 = vector.broadcast %352 : f32 to vector<288x8xf32>
    %354 = arith.mulf %37, %353 : vector<288x8xf32>
    %355 = arith.addf %351, %354 : vector<288x8xf32>
    %c68 = arith.constant 68 : index
    %356 = memref.load %arg1[%c68] : memref<72xf32, #tpu.memory_space<smem>>
    %357 = vector.broadcast %356 : f32 to vector<288x8xf32>
    %358 = arith.mulf %38, %357 : vector<288x8xf32>
    %359 = arith.addf %355, %358 : vector<288x8xf32>
    %c69 = arith.constant 69 : index
    %360 = memref.load %arg1[%c69] : memref<72xf32, #tpu.memory_space<smem>>
    %361 = vector.broadcast %360 : f32 to vector<288x8xf32>
    %362 = arith.mulf %39, %361 : vector<288x8xf32>
    %363 = arith.addf %359, %362 : vector<288x8xf32>
    %c70 = arith.constant 70 : index
    %364 = memref.load %arg1[%c70] : memref<72xf32, #tpu.memory_space<smem>>
    %365 = vector.broadcast %364 : f32 to vector<288x8xf32>
    %366 = arith.mulf %40, %365 : vector<288x8xf32>
    %367 = arith.addf %363, %366 : vector<288x8xf32>
    %c71 = arith.constant 71 : index
    %368 = memref.load %arg1[%c71] : memref<72xf32, #tpu.memory_space<smem>>
    %369 = vector.broadcast %368 : f32 to vector<288x8xf32>
    %370 = arith.mulf %41, %369 : vector<288x8xf32>
    %371 = arith.addf %367, %370 : vector<288x8xf32>
    %c7_65 = arith.constant 7 : index
    %372 = memref.load %arg2[%c7_65] : memref<8xf32, #tpu.memory_space<smem>>
    %373 = vector.broadcast %372 : f32 to vector<288x8xf32>
    %374 = arith.addf %371, %373 : vector<288x8xf32>
    %cst_66 = arith.constant 0.000000e+00 : f32
    %375 = vector.broadcast %cst_66 : f32 to vector<288x8xf32>
    %376 = arith.maximumf %374, %375 : vector<288x8xf32>
    %cst_67 = arith.constant dense<0.000000e+00> : vector<1x8xf32>
    %377 = tpu.matmul %42, %376, %cst_67 {dimension_numbers = #tpu.dot_dimension_numbers<[1], [0], [0], [1], [0, 0, 1, 1], [], []>} : vector<1x288xf32>, vector<288x8xf32>, vector<1x8xf32> -> vector<1x8xf32>
    %378 = arith.addf %32, %377 : vector<1x8xf32>
    %c0_68 = arith.constant 0 : index
    %c0_69 = arith.constant 0 : index
    %379 = vector.load %arg9[%c0_68, %c0_69] : memref<8x8xf32, #tpu.memory_space<vmem>>, vector<1x8xf32>
    tpu.vector_store %arg9[%c0_68, %c0_69], %84 {strides = array<i32>} : memref<8x8xf32, #tpu.memory_space<vmem>>, vector<1x8xf32>,
    %c1_70 = arith.constant 1 : index
    %c0_71 = arith.constant 0 : index
    %380 = vector.load %arg9[%c1_70, %c0_71] : memref<8x8xf32, #tpu.memory_space<vmem>>, vector<1x8xf32>
    tpu.vector_store %arg9[%c1_70, %c0_71], %126 {strides = array<i32>} : memref<8x8xf32, #tpu.memory_space<vmem>>, vector<1x8xf32>,
    %c2_72 = arith.constant 2 : index
    %c0_73 = arith.constant 0 : index
    %381 = vector.load %arg9[%c2_72, %c0_73] : memref<8x8xf32, #tpu.memory_space<vmem>>, vector<1x8xf32>
    tpu.vector_store %arg9[%c2_72, %c0_73], %168 {strides = array<i32>} : memref<8x8xf32, #tpu.memory_space<vmem>>, vector<1x8xf32>,
    %c3_74 = arith.constant 3 : index
    %c0_75 = arith.constant 0 : index
    %382 = vector.load %arg9[%c3_74, %c0_75] : memref<8x8xf32, #tpu.memory_space<vmem>>, vector<1x8xf32>
    tpu.vector_store %arg9[%c3_74, %c0_75], %210 {strides = array<i32>} : memref<8x8xf32, #tpu.memory_space<vmem>>, vector<1x8xf32>,
    %c4_76 = arith.constant 4 : index
    %c0_77 = arith.constant 0 : index
    %383 = vector.load %arg9[%c4_76, %c0_77] : memref<8x8xf32, #tpu.memory_space<vmem>>, vector<1x8xf32>
    tpu.vector_store %arg9[%c4_76, %c0_77], %252 {strides = array<i32>} : memref<8x8xf32, #tpu.memory_space<vmem>>, vector<1x8xf32>,
    %c5_78 = arith.constant 5 : index
    %c0_79 = arith.constant 0 : index
    %384 = vector.load %arg9[%c5_78, %c0_79] : memref<8x8xf32, #tpu.memory_space<vmem>>, vector<1x8xf32>
    tpu.vector_store %arg9[%c5_78, %c0_79], %294 {strides = array<i32>} : memref<8x8xf32, #tpu.memory_space<vmem>>, vector<1x8xf32>,
    %c6_80 = arith.constant 6 : index
    %c0_81 = arith.constant 0 : index
    %385 = vector.load %arg9[%c6_80, %c0_81] : memref<8x8xf32, #tpu.memory_space<vmem>>, vector<1x8xf32>
    tpu.vector_store %arg9[%c6_80, %c0_81], %336 {strides = array<i32>} : memref<8x8xf32, #tpu.memory_space<vmem>>, vector<1x8xf32>,
    %c7_82 = arith.constant 7 : index
    %c0_83 = arith.constant 0 : index
    %386 = vector.load %arg9[%c7_82, %c0_83] : memref<8x8xf32, #tpu.memory_space<vmem>>, vector<1x8xf32>
    tpu.vector_store %arg9[%c7_82, %c0_83], %378 {strides = array<i32>} : memref<8x8xf32, #tpu.memory_space<vmem>>, vector<1x8xf32>,
    %c0_84 = arith.constant 0 : index
    %c0_85 = arith.constant 0 : index
    %387 = vector.load %arg9[%c0_84, %c0_85] : memref<8x8xf32, #tpu.memory_space<vmem>>, vector<8x8xf32>
    %c224 = arith.constant 224 : index
    %c0_86 = arith.constant 0 : index
    %388 = vector.load %arg6[%c224, %c0_86] : memref<480x128xbf16, #tpu.memory_space<vmem>>, vector<64x8xbf16>
    %c384 = arith.constant 384 : index
    %c0_87 = arith.constant 0 : index
    %389 = vector.load %arg7[%c384, %c0_87] : memref<1024x1xf32, #tpu.memory_space<vmem>>, vector<64x1xf32>
    %390 = arith.truncf %387 : vector<8x8xf32> to vector<8x8xbf16>
    %cst_88 = arith.constant dense<0.000000e+00> : vector<64x8xf32>
    %391 = tpu.matmul %388, %390, %cst_88 {dimension_numbers = #tpu.dot_dimension_numbers<[1], [0], [0], [1], [0, 0, 1, 1], [], []>} : vector<64x8xbf16>, vector<8x8xbf16>, vector<64x8xf32> -> vector<64x8xf32>
    %392 = vector.broadcast %389 : vector<64x1xf32> to vector<64x8xf32>
    %393 = arith.addf %391, %392 : vector<64x8xf32>
    %c288 = arith.constant 288 : index
    %c0_89 = arith.constant 0 : index
    %394 = vector.load %arg6[%c288, %c0_89] : memref<480x128xbf16, #tpu.memory_space<vmem>>, vector<64x32xbf16>
    %395 = arith.truncf %24 : vector<32x8xf32> to vector<32x8xbf16>
    %cst_90 = arith.constant dense<0.000000e+00> : vector<64x8xf32>
    %396 = tpu.matmul %394, %395, %cst_90 {dimension_numbers = #tpu.dot_dimension_numbers<[1], [0], [0], [1], [0, 0, 1, 1], [], []>} : vector<64x32xbf16>, vector<32x8xbf16>, vector<64x8xf32> -> vector<64x8xf32>
    %c352 = arith.constant 352 : index
    %c0_91 = arith.constant 0 : index
    %397 = vector.load %arg6[%c352, %c0_91] : memref<480x128xbf16, #tpu.memory_space<vmem>>, vector<64x64xbf16>
    %398 = arith.truncf %393 : vector<64x8xf32> to vector<64x8xbf16>
    %cst_92 = arith.constant dense<0.000000e+00> : vector<64x8xf32>
    %399 = tpu.matmul %397, %398, %cst_92 {dimension_numbers = #tpu.dot_dimension_numbers<[1], [0], [0], [1], [0, 0, 1, 1], [], []>} : vector<64x64xbf16>, vector<64x8xbf16>, vector<64x8xf32> -> vector<64x8xf32>
    %400 = arith.addf %396, %399 : vector<64x8xf32>
    %c512 = arith.constant 512 : index
    %c0_93 = arith.constant 0 : index
    %401 = vector.load %arg7[%c512, %c0_93] : memref<1024x1xf32, #tpu.memory_space<vmem>>, vector<64x1xf32>
    %402 = vector.broadcast %401 : vector<64x1xf32> to vector<64x8xf32>
    %403 = arith.addf %400, %402 : vector<64x8xf32>
    %cst_94 = arith.constant 0.000000e+00 : f32
    %404 = vector.broadcast %cst_94 : f32 to vector<64x8xf32>
    %405 = arith.maximumf %403, %404 : vector<64x8xf32>
    %c416 = arith.constant 416 : index
    %c0_95 = arith.constant 0 : index
    %406 = vector.load %arg6[%c416, %c0_95] : memref<480x128xbf16, #tpu.memory_space<vmem>>, vector<32x64xbf16>
    %c640 = arith.constant 640 : index
    %c0_96 = arith.constant 0 : index
    %407 = vector.load %arg7[%c640, %c0_96] : memref<1024x1xf32, #tpu.memory_space<vmem>>, vector<32x1xf32>
    %408 = arith.truncf %405 : vector<64x8xf32> to vector<64x8xbf16>
    %cst_97 = arith.constant dense<0.000000e+00> : vector<32x8xf32>
    %409 = tpu.matmul %406, %408, %cst_97 {dimension_numbers = #tpu.dot_dimension_numbers<[1], [0], [0], [1], [0, 0, 1, 1], [], []>} : vector<32x64xbf16>, vector<64x8xbf16>, vector<32x8xf32> -> vector<32x8xf32>
    %410 = vector.broadcast %407 : vector<32x1xf32> to vector<32x8xf32>
    %411 = arith.addf %409, %410 : vector<32x8xf32>
    %cst_98 = arith.constant 0.000000e+00 : f32
    %412 = vector.broadcast %cst_98 : f32 to vector<32x8xf32>
    %413 = arith.maximumf %411, %412 : vector<32x8xf32>
    %c448 = arith.constant 448 : index
    %c0_99 = arith.constant 0 : index
    %414 = vector.load %arg6[%c448, %c0_99] : memref<480x128xbf16, #tpu.memory_space<vmem>>, vector<16x32xbf16>
    %c768 = arith.constant 768 : index
    %c0_100 = arith.constant 0 : index
    %415 = vector.load %arg7[%c768, %c0_100] : memref<1024x1xf32, #tpu.memory_space<vmem>>, vector<16x1xf32>
    %416 = arith.truncf %413 : vector<32x8xf32> to vector<32x8xbf16>
    %cst_101 = arith.constant dense<0.000000e+00> : vector<16x8xf32>
    %417 = tpu.matmul %414, %416, %cst_101 {dimension_numbers = #tpu.dot_dimension_numbers<[1], [0], [0], [1], [0, 0, 1, 1], [], []>} : vector<16x32xbf16>, vector<32x8xbf16>, vector<16x8xf32> -> vector<16x8xf32>
    %418 = vector.broadcast %415 : vector<16x1xf32> to vector<16x8xf32>
    %419 = arith.addf %417, %418 : vector<16x8xf32>
    %cst_102 = arith.constant 0.000000e+00 : f32
    %420 = vector.broadcast %cst_102 : f32 to vector<16x8xf32>
    %421 = arith.maximumf %419, %420 : vector<16x8xf32>
    %c464 = arith.constant 464 : index
    %c0_103 = arith.constant 0 : index
    %422 = vector.load %arg6[%c464, %c0_103] : memref<480x128xbf16, #tpu.memory_space<vmem>>, vector<8x16xbf16>
    %c896 = arith.constant 896 : index
    %c0_104 = arith.constant 0 : index
    %423 = vector.load %arg7[%c896, %c0_104] : memref<1024x1xf32, #tpu.memory_space<vmem>>, vector<8x1xf32>
    %424 = arith.truncf %421 : vector<16x8xf32> to vector<16x8xbf16>
    %cst_105 = arith.constant dense<0.000000e+00> : vector<8x8xf32>
    %425 = tpu.matmul %422, %424, %cst_105 {dimension_numbers = #tpu.dot_dimension_numbers<[1], [0], [0], [1], [0, 0, 1, 1], [], []>} : vector<8x16xbf16>, vector<16x8xbf16>, vector<8x8xf32> -> vector<8x8xf32>
    %426 = vector.broadcast %423 : vector<8x1xf32> to vector<8x8xf32>
    %427 = arith.addf %425, %426 : vector<8x8xf32>
    %c0_106 = arith.constant 0 : index
    %c0_107 = arith.constant 0 : index
    %428 = vector.load %arg8[%c0_106, %c0_107] : memref<8x8xf32, #tpu.memory_space<vmem>>, vector<8x8xf32>
    tpu.vector_store %arg8[%c0_106, %c0_107], %427 {strides = array<i32>} : memref<8x8xf32, #tpu.memory_space<vmem>>, vector<8x8xf32>,
    return
  }
  func.func @transform_0(%arg0: i32) -> i32 {
    %c0_i32 = arith.constant 0 : i32
    %c0_i32_0 = arith.constant 0 : i32
    return %c0_i32 : i32
  }
  func.func @transform_1(%arg0: i32) -> i32 {
    %c0_i32 = arith.constant 0 : i32
    %c0_i32_0 = arith.constant 0 : i32
    return %c0_i32 : i32
  }
  func.func @transform_2(%arg0: i32) -> (i32, i32) {
    %c0_i32 = arith.constant 0 : i32
    %c0_i32_0 = arith.constant 0 : i32
    return %c0_i32, %arg0 : i32, i32
  }
  func.func @transform_3(%arg0: i32) -> (i32, i32) {
    %c0_i32 = arith.constant 0 : i32
    %c0_i32_0 = arith.constant 0 : i32
    return %c0_i32, %arg0 : i32, i32
  }
  func.func @transform_4(%arg0: i32) -> (i32, i32) {
    %c0_i32 = arith.constant 0 : i32
    %c0_i32_0 = arith.constant 0 : i32
    %c0_i32_1 = arith.constant 0 : i32
    return %c0_i32, %c0_i32_0 : i32, i32
  }
  func.func @transform_5(%arg0: i32) -> (i32, i32) {
    %c0_i32 = arith.constant 0 : i32
    %c0_i32_0 = arith.constant 0 : i32
    %c0_i32_1 = arith.constant 0 : i32
    return %c0_i32, %c0_i32_0 : i32, i32
  }
  func.func @transform_6(%arg0: i32) -> (i32, i32) {
    %c0_i32 = arith.constant 0 : i32
    %c0_i32_0 = arith.constant 0 : i32
    %c0_i32_1 = arith.constant 0 : i32
    return %c0_i32, %c0_i32_0 : i32, i32
  }
  func.func @transform_7(%arg0: i32) -> (i32, i32) {
    %c0_i32 = arith.constant 0 : i32
    %c0_i32_0 = arith.constant 0 : i32
    return %c0_i32, %arg0 : i32, i32
  }
}

</mosaic_0001>

<llo_original>
// kernel: combonet_forward.1
$region0: #{combonet_forward.1}
  #allocation0 [shape = 'u32[]', space=smem, size = 0x4, offset = 0x4, fixed_abs, tag = 'smem constant byte address 0x4 - core index']
  #allocation1 [shape = 'u32[72,128]{1,0:T(1,128)}', space=vmem, size = 0x9000, scoped, tag = 'internal scratch']
  #allocation2 [shape = 'f32[8,8]{1,0:T(8,128)}', space=vmem, size = 0x1000, scoped, tag = 'scratch operand']
  %s0 = inlined_call_operand.vmem [shape: f32[72], index: 0, kind: input, shape index: {}]
  %s1 = inlined_call_operand.vmem [shape: f32[8], index: 1, kind: input, shape index: {}]
  %s2 = inlined_call_operand.vmem [shape: f32[8,8], index: 2, kind: input, shape index: {}]
  %s3 = inlined_call_operand.vmem [shape: f32[328,8], index: 3, kind: input, shape index: {}]
  %s4 = inlined_call_operand.vmem [shape: f32[1,288], index: 4, kind: input, shape index: {}]
  %s5 = inlined_call_operand.vmem [shape: bf16[480,128], index: 5, kind: input, shape index: {}]
  %s6 = inlined_call_operand.vmem [shape: f32[1024,1], index: 6, kind: input, shape index: {}]
  %s7 = inlined_call_operand.vmem [shape: f32[8,8], index: 7, kind: output, shape index: {}]
  %s8 = sld [smem:[#allocation0]]
  $region46: #{combonet_forward.1} parent=0
    _
  %s10 = ssub.s32 1, %s8
  %s11 = scalar_select 0, %s10, %s8
  $region1: #{combonet_forward.1} parent=0
    #allocation3 [shape = 'u8[512]{0}', space=smem, size = 0x200, scoped, tag = 'input window, operand 0, single buffered']
    #allocation4 [shape = 's32[1]{0}', space=sflag, size = 0x4, scoped, tag = 'scoped memory for combonet_forward.1']
    #allocation5 [shape = 'u8[512]{0}', space=smem, size = 0x200, scoped, tag = 'input window, operand 1, single buffered']
    #allocation6 [shape = 's32[1]{0}', space=sflag, size = 0x4, scoped, tag = 'scoped memory for combonet_forward.1']
    %12 = vsyncpa [#allocation4], 0
    %13 = vsyncpa [#allocation6], 0
    // Predicated region
    $region2: #{combonet_forward.1} parent=1 // pred_check
      _
    $region3: #{combonet_forward.1} parent=1 // pred_check_branch
      %15 = sbr.rel (0) target = $region5
    $region4: #{combonet_forward.1} parent=1 // pred_region
      %17 = vsyncadd [#allocation4], 0
      %s19 = sshll.u32 %s0, 4
      %s20 = int_to_ptr.vmem [resolvable:$true] %s19
      %22 = dma.vmem_to_smem %s20, 16, [#allocation3], [#allocation4]
    $region5: #{combonet_forward.1} parent=1 // pred_fallthru
      _
    // Predicated region
    $region6: #{combonet_forward.1} parent=1 // pred_check
      _
    $region7: #{combonet_forward.1} parent=1 // pred_check_branch
      %24 = sbr.rel (0) target = $region9
    $region8: #{combonet_forward.1} parent=1 // pred_region
      %26 = vsyncadd [#allocation6], 0
      %s28 = sshll.u32 %s1, 4
      %s29 = int_to_ptr.vmem [resolvable:$true] %s28
      %31 = dma.vmem_to_smem %s29, 16, [#allocation5], [#allocation6]
    $region9: #{combonet_forward.1} parent=1 // pred_fallthru
      _
    // Predicated region
    $region10: #{combonet_forward.1} parent=1 // pred_check
      _
    $region11: #{combonet_forward.1} parent=1 // pred_check_branch
      %33 = sbr.rel (0) target = $region13
    $region12: #{combonet_forward.1} parent=1 // pred_region
      _
    $region13: #{combonet_forward.1} parent=1 // pred_fallthru
      _
    // Predicated region
    $region14: #{combonet_forward.1} parent=1 // pred_check
      _
    $region15: #{combonet_forward.1} parent=1 // pred_check_branch
      %35 = sbr.rel (0) target = $region17
    $region16: #{combonet_forward.1} parent=1 // pred_region
      _
    $region17: #{combonet_forward.1} parent=1 // pred_fallthru
      _
    // Predicated region
    $region18: #{combonet_forward.1} parent=1 // pred_check
      _
    $region19: #{combonet_forward.1} parent=1 // pred_check_branch
      %37 = sbr.rel (0) target = $region21
    $region20: #{combonet_forward.1} parent=1 // pred_region
      _
    $region21: #{combonet_forward.1} parent=1 // pred_fallthru
      _
    // Predicated region
    $region22: #{combonet_forward.1} parent=1 // pred_check
      _
    $region23: #{combonet_forward.1} parent=1 // pred_check_branch
      %39 = sbr.rel (0) target = $region25
    $region24: #{combonet_forward.1} parent=1 // pred_region
      _
    $region25: #{combonet_forward.1} parent=1 // pred_fallthru
      _
    // Predicated region
    $region26: #{combonet_forward.1} parent=1 // pred_check
      _
    $region27: #{combonet_forward.1} parent=1 // pred_check_branch
      %41 = sbr.rel (0) target = $region29
    $region28: #{combonet_forward.1} parent=1 // pred_region
      _
    $region29: #{combonet_forward.1} parent=1 // pred_fallthru
      _
    // Predicated region
    $region30: #{combonet_forward.1} parent=1 // pred_check
      _
    $region31: #{combonet_forward.1} parent=1 // pred_check_branch
      %43 = sbr.rel (0) target = $region33
    $region32: #{combonet_forward.1} parent=1 // pred_region
      %45 = dma.done [#allocation4], 16
    $region33: #{combonet_forward.1} parent=1 // pred_fallthru
      _
    // Predicated region
    $region34: #{combonet_forward.1} parent=1 // pred_check
      _
    $region35: #{combonet_forward.1} parent=1 // pred_check_branch
      %47 = sbr.rel (0) target = $region37
    $region36: #{combonet_forward.1} parent=1 // pred_region
      %49 = dma.done [#allocation6], 16
    $region37: #{combonet_forward.1} parent=1 // pred_fallthru
      _
    %50 = sfence
    %v52 = vld [vmem:[%s2] sm:$0xff]
    %v53 = vld [vmem:[%s5] sm:$0xf]
    %v54 = vld [vmem:[%s5 + $0x4] sm:$0xf]
    %v55 = vld [vmem:[%s5 + $0x8] sm:$0xf]
    %v56 = vld [vmem:[%s5 + $0xc] sm:$0xf]
    %v57 = vld [vmem:[%s5 + $0x10] sm:$0xf]
    %v58 = vld [vmem:[%s5 + $0x14] sm:$0xf]
    %v59 = vld [vmem:[%s5 + $0x18] sm:$0xf]
    %v60 = vld [vmem:[%s5 + $0x1c] sm:$0xf]
    %v61 = vld [vmem:[%s5 + $0x20] sm:$0xf]
    %v62 = vld [vmem:[%s5 + $0x24] sm:$0xf]
    %v63 = vld [vmem:[%s5 + $0x28] sm:$0xf]
    %v64 = vld [vmem:[%s5 + $0x2c] sm:$0xf]
    %v65 = vld [vmem:[%s5 + $0x30] sm:$0xf]
    %v66 = vld [vmem:[%s5 + $0x34] sm:$0xf]
    %v67 = vld [vmem:[%s5 + $0x38] sm:$0xf]
    %v68 = vld [vmem:[%s5 + $0x3c] sm:$0xf]
    %v69 = vld [vmem:[%s6] sm:$0xff]
    %v70 = vld [vmem:[%s6 + $0x8] sm:$0xff]
    %v71 = vld [vmem:[%s6 + $0x10] sm:$0xff]
    %v72 = vld [vmem:[%s6 + $0x18] sm:$0xff]
    %v73 = vld [vmem:[%s6 + $0x20] sm:$0xff]
    %v74 = vld [vmem:[%s6 + $0x28] sm:$0xff]
    %v75 = vld [vmem:[%s6 + $0x30] sm:$0xff]
    %v76 = vld [vmem:[%s6 + $0x38] sm:$0xff]
    %v77 = vld [vmem:[%s6 + $0x40] sm:$0xff]
    %v78 = vld [vmem:[%s6 + $0x48] sm:$0xff]
    %v79 = vld [vmem:[%s6 + $0x50] sm:$0xff]
    %v80 = vld [vmem:[%s6 + $0x58] sm:$0xff]
    %v81 = vld [vmem:[%s6 + $0x60] sm:$0xff]
    %v82 = vld [vmem:[%s6 + $0x68] sm:$0xff]
    %v83 = vld [vmem:[%s6 + $0x70] sm:$0xff]
    %v84 = vld [vmem:[%s6 + $0x78] sm:$0xff]
    %v85 = vpack.c.bf16 %v52, %v52
    %87 = vset.pattern.permute.xlu0 0
    %88 = vperm.xlu0 %87, %v69
    %v89 = vpop.permute.xlu0 %88
    %92 = vset.pattern.permute.xlu0 0
    %93 = vperm.xlu0 %92, %v70
    %v94 = vpop.permute.xlu0 %93
    %97 = vset.pattern.permute.xlu0 0
    %98 = vperm.xlu0 %97, %v71
    %v99 = vpop.permute.xlu0 %98
    %102 = vset.pattern.permute.xlu0 0
    %103 = vperm.xlu0 %102, %v72
    %v104 = vpop.permute.xlu0 %103
    %107 = vset.pattern.permute.xlu0 0
    %108 = vperm.xlu0 %107, %v73
    %v109 = vpop.permute.xlu0 %108
    %112 = vset.pattern.permute.xlu0 0
    %113 = vperm.xlu0 %112, %v74
    %v114 = vpop.permute.xlu0 %113
    %117 = vset.pattern.permute.xlu0 0
    %118 = vperm.xlu0 %117, %v75
    %v119 = vpop.permute.xlu0 %118
    %122 = vset.pattern.permute.xlu0 0
    %123 = vperm.xlu0 %122, %v76
    %v124 = vpop.permute.xlu0 %123
    %127 = vset.pattern.permute.xlu0 0
    %128 = vperm.xlu0 %127, %v77
    %v129 = vpop.permute.xlu0 %128
    %132 = vset.pattern.permute.xlu0 0
    %133 = vperm.xlu0 %132, %v78
    %v134 = vpop.permute.xlu0 %133
    %137 = vset.pattern.permute.xlu0 0
    %138 = vperm.xlu0 %137, %v79
    %v139 = vpop.permute.xlu0 %138
    %142 = vset.pattern.permute.xlu0 0
    %143 = vperm.xlu0 %142, %v80
    %v144 = vpop.permute.xlu0 %143
    %147 = vset.pattern.permute.xlu0 0
    %148 = vperm.xlu0 %147, %v81
    %v149 = vpop.permute.xlu0 %148
    %152 = vset.pattern.permute.xlu0 0
    %153 = vperm.xlu0 %152, %v82
    %v154 = vpop.permute.xlu0 %153
    %157 = vset.pattern.permute.xlu0 0
    %158 = vperm.xlu0 %157, %v83
    %v159 = vpop.permute.xlu0 %158
    %162 = vset.pattern.permute.xlu0 0
    %163 = vperm.xlu0 %162, %v84
    %v164 = vpop.permute.xlu0 %163
    %v182 = vunpack.c.l.b16 %v53
    %v183 = vunpack.c.l.b16 %v54
    %v184 = vunpack.c.l.b16 %v55
    %v185 = vunpack.c.l.b16 %v56
    %v186 = vunpack.c.l.b16 %v57
    %v187 = vunpack.c.l.b16 %v58
    %v188 = vunpack.c.l.b16 %v59
    %v189 = vunpack.c.l.b16 %v60
    %v190 = vunpack.c.l.b16 %v61
    %v191 = vunpack.c.l.b16 %v62
    %v192 = vunpack.c.l.b16 %v63
    %v193 = vunpack.c.l.b16 %v64
    %v194 = vunpack.c.l.b16 %v65
    %v195 = vunpack.c.l.b16 %v66
    %v196 = vunpack.c.l.b16 %v67
    %v197 = vunpack.c.l.b16 %v68
    %v198 = vpack.c.b16 %v183, %v182
    %v199 = vpack.c.b16 %v185, %v184
    %v200 = vpack.c.b16 %v187, %v186
    %v201 = vpack.c.b16 %v189, %v188
    %v202 = vpack.c.b16 %v191, %v190
    %v203 = vpack.c.b16 %v193, %v192
    %v204 = vpack.c.b16 %v195, %v194
    %v205 = vpack.c.b16 %v197, %v196
    %vm206 = vcmask 64512
    %v208 = vsel %vm206, %v198, 0
    %v211 = vsel %vm206, %v199, 0
    %v214 = vsel %vm206, %v200, 0
    %v217 = vsel %vm206, %v201, 0
    %v220 = vsel %vm206, %v202, 0
    %v223 = vsel %vm206, %v203, 0
    %v226 = vsel %vm206, %v204, 0
    %v229 = vsel %vm206, %v205, 0
    %vm231 = vcmask 1043456
    %v233 = vsel %vm231, %v85, 0
    %235 = vmatpush.bf16.msra.mxu0 0
    %236 = vmatpush.bf16.msra.mxu0 0
    %237 = vmatpush.bf16.msra.mxu0 0
    %238 = vmatpush.bf16.msra.mxu0 0
    %239 = vmatpush.bf16.msra.mxu0 0
    %240 = vmatpush.bf16.msra.mxu0 0
    %241 = vmatpush.bf16.msra.mxu0 0
    %242 = vmatpush.bf16.msra.mxu0 %v233
    %243 = vmatmul.bf16.gmra.mxu0 %v208
    %v244 = vpop.f32.mrf.mxu0
    %v245 = vadd.f32 %v89, %v244
    %v246 = vpop.f32.mrf.mxu0
    %v247 = vadd.f32 %v94, %v246
    %248 = vmatmul.bf16.gmra.mxu0 %v211
    %v249 = vpop.f32.mrf.mxu0
    %v250 = vadd.f32 %v99, %v249
    %v251 = vpop.f32.mrf.mxu0
    %v252 = vadd.f32 %v104, %v251
    %253 = vmatmul.bf16.gmra.mxu0 %v214
    %v254 = vpop.f32.mrf.mxu0
    %v255 = vadd.f32 %v109, %v254
    %v256 = vpop.f32.mrf.mxu0
    %v257 = vadd.f32 %v114, %v256
    %258 = vmatmul.bf16.gmra.mxu0 %v217
    %v259 = vpop.f32.mrf.mxu0
    %v260 = vadd.f32 %v119, %v259
    %v261 = vpop.f32.mrf.mxu0
    %v262 = vadd.f32 %v124, %v261
    %263 = vmatmul.bf16.gmra.mxu0 %v220
    %v264 = vpop.f32.mrf.mxu0
    %v265 = vadd.f32 %v129, %v264
    %v266 = vpop.f32.mrf.mxu0
    %v267 = vadd.f32 %v134, %v266
    %268 = vmatmul.bf16.gmra.mxu0 %v223
    %v269 = vpop.f32.mrf.mxu0
    %v270 = vadd.f32 %v139, %v269
    %v271 = vpop.f32.mrf.mxu0
    %v272 = vadd.f32 %v144, %v271
    %273 = vmatmul.bf16.gmra.mxu0 %v226
    %v274 = vpop.f32.mrf.mxu0
    %v275 = vadd.f32 %v149, %v274
    %v276 = vpop.f32.mrf.mxu0
    %v277 = vadd.f32 %v154, %v276
    %278 = vmatmul.bf16.gmra.mxu0 %v229
    %v279 = vpop.f32.mrf.mxu0
    %v280 = vadd.f32 %v159, %v279
    %v281 = vpop.f32.mrf.mxu0
    %v282 = vadd.f32 %v164, %v281
    %283 = vdwg.mxu0
    %v284 = vmax.f32 %v245, 0.0
    %v285 = vmax.f32 %v247, 0.0
    %v286 = vmax.f32 %v250, 0.0
    %v287 = vmax.f32 %v252, 0.0
    %v288 = vmax.f32 %v255, 0.0
    %v289 = vmax.f32 %v257, 0.0
    %v290 = vmax.f32 %v260, 0.0
    %v291 = vmax.f32 %v262, 0.0
    %v292 = vmax.f32 %v265, 0.0
    %v293 = vmax.f32 %v267, 0.0
    %v294 = vmax.f32 %v270, 0.0
    %v295 = vmax.f32 %v272, 0.0
    %v296 = vmax.f32 %v275, 0.0
    %v297 = vmax.f32 %v277, 0.0
    %v298 = vmax.f32 %v280, 0.0
    %v299 = vmax.f32 %v282, 0.0
    %v300 = vld [vmem:[%s5 + $0x40] sm:$0xf]
    %v301 = vld [vmem:[%s5 + $0x44] sm:$0xf]
    %v302 = vld [vmem:[%s5 + $0x48] sm:$0xf]
    %v303 = vld [vmem:[%s5 + $0x4c] sm:$0xf]
    %v304 = vld [vmem:[%s5 + $0x50] sm:$0xf]
    %v305 = vld [vmem:[%s5 + $0x54] sm:$0xf]
    %v306 = vld [vmem:[%s5 + $0x58] sm:$0xf]
    %v307 = vld [vmem:[%s5 + $0x5c] sm:$0xf]
    %v308 = vld [vmem:[%s6 + $0x80] sm:$0xff]
    %v309 = vld [vmem:[%s6 + $0x88] sm:$0xff]
    %v310 = vld [vmem:[%s6 + $0x90] sm:$0xff]
    %v311 = vld [vmem:[%s6 + $0x98] sm:$0xff]
    %v312 = vld [vmem:[%s6 + $0xa0] sm:$0xff]
    %v313 = vld [vmem:[%s6 + $0xa8] sm:$0xff]
    %v314 = vld [vmem:[%s6 + $0xb0] sm:$0xff]
    %v315 = vld [vmem:[%s6 + $0xb8] sm:$0xff]
    %v316 = vpack.c.bf16 %v285, %v284
    %v317 = vpack.c.bf16 %v287, %v286
    %v318 = vpack.c.bf16 %v289, %v288
    %v319 = vpack.c.bf16 %v291, %v290
    %v320 = vpack.c.bf16 %v293, %v292
    %v321 = vpack.c.bf16 %v295, %v294
    %v322 = vpack.c.bf16 %v297, %v296
    %v323 = vpack.c.bf16 %v299, %v298
    %325 = vset.pattern.permute.xlu0 0
    %326 = vperm.xlu0 %325, %v308
    %v327 = vpop.permute.xlu0 %326
    %330 = vset.pattern.permute.xlu0 0
    %331 = vperm.xlu0 %330, %v309
    %v332 = vpop.permute.xlu0 %331
    %335 = vset.pattern.permute.xlu0 0
    %336 = vperm.xlu0 %335, %v310
    %v337 = vpop.permute.xlu0 %336
    %340 = vset.pattern.permute.xlu0 0
    %341 = vperm.xlu0 %340, %v311
    %v342 = vpop.permute.xlu0 %341
    %345 = vset.pattern.permute.xlu0 0
    %346 = vperm.xlu0 %345, %v312
    %v347 = vpop.permute.xlu0 %346
    %350 = vset.pattern.permute.xlu0 0
    %351 = vperm.xlu0 %350, %v313
    %v352 = vpop.permute.xlu0 %351
    %355 = vset.pattern.permute.xlu0 0
    %356 = vperm.xlu0 %355, %v314
    %v357 = vpop.permute.xlu0 %356
    %360 = vset.pattern.permute.xlu0 0
    %361 = vperm.xlu0 %360, %v315
    %v362 = vpop.permute.xlu0 %361
    %v372 = vunpack.c.l.b16 %v300
    %v373 = vunpack.c.l.b16 %v301
    %v374 = vunpack.c.l.b16 %v302
    %v375 = vunpack.c.l.b16 %v303
    %v376 = vunpack.c.l.b16 %v304
    %v377 = vunpack.c.l.b16 %v305
    %v378 = vunpack.c.l.b16 %v306
    %v379 = vunpack.c.l.b16 %v307
    %v380 = vpack.c.b16 %v373, %v372
    %v381 = vpack.c.b16 %v375, %v374
    %v382 = vpack.c.b16 %v377, %v376
    %v383 = vpack.c.b16 %v379, %v378
    %388 = vmatpush.bf16.msra.mxu0 %v323
    %389 = vmatpush.bf16.msra.mxu0 %v322
    %390 = vmatpush.bf16.msra.mxu0 %v321
    %391 = vmatpush.bf16.msra.mxu0 %v320
    %392 = vmatpush.bf16.msra.mxu0 %v319
    %393 = vmatpush.bf16.msra.mxu0 %v318
    %394 = vmatpush.bf16.msra.mxu0 %v317
    %395 = vmatpush.bf16.msra.mxu0 %v316
    %396 = vmatmul.bf16.gmra.mxu0 %v380
    %v397 = vpop.f32.mrf.mxu0
    %v398 = vadd.f32 %v327, %v397
    %v399 = vpop.f32.mrf.mxu0
    %v400 = vadd.f32 %v332, %v399
    %401 = vmatmul.bf16.gmra.mxu0 %v381
    %v402 = vpop.f32.mrf.mxu0
    %v403 = vadd.f32 %v337, %v402
    %v404 = vpop.f32.mrf.mxu0
    %v405 = vadd.f32 %v342, %v404
    %406 = vmatmul.bf16.gmra.mxu0 %v382
    %v407 = vpop.f32.mrf.mxu0
    %v408 = vadd.f32 %v347, %v407
    %v409 = vpop.f32.mrf.mxu0
    %v410 = vadd.f32 %v352, %v409
    %411 = vmatmul.bf16.gmra.mxu0 %v383
    %v412 = vpop.f32.mrf.mxu0
    %v413 = vadd.f32 %v357, %v412
    %v414 = vpop.f32.mrf.mxu0
    %v415 = vadd.f32 %v362, %v414
    %416 = vdwg.mxu0
    %v417 = vmax.f32 %v398, 0.0
    %v418 = vmax.f32 %v400, 0.0
    %v419 = vmax.f32 %v403, 0.0
    %v420 = vmax.f32 %v405, 0.0
    %v421 = vmax.f32 %v408, 0.0
    %v422 = vmax.f32 %v410, 0.0
    %v423 = vmax.f32 %v413, 0.0
    %v424 = vmax.f32 %v415, 0.0
    %v425 = vld [vmem:[%s5 + $0x60] sm:$0xf]
    %v426 = vld [vmem:[%s5 + $0x64] sm:$0xf]
    %v427 = vld [vmem:[%s5 + $0x68] sm:$0xf]
    %v428 = vld [vmem:[%s5 + $0x6c] sm:$0xf]
    %v429 = vld [vmem:[%s6 + $0x100] sm:$0xff]
    %v430 = vld [vmem:[%s6 + $0x108] sm:$0xff]
    %v431 = vld [vmem:[%s6 + $0x110] sm:$0xff]
    %v432 = vld [vmem:[%s6 + $0x118] sm:$0xff]
    %v433 = vpack.c.bf16 %v418, %v417
    %v434 = vpack.c.bf16 %v420, %v419
    %v435 = vpack.c.bf16 %v422, %v421
    %v436 = vpack.c.bf16 %v424, %v423
    %438 = vset.pattern.permute.xlu0 0
    %439 = vperm.xlu0 %438, %v429
    %v440 = vpop.permute.xlu0 %439
    %443 = vset.pattern.permute.xlu0 0
    %444 = vperm.xlu0 %443, %v430
    %v445 = vpop.permute.xlu0 %444
    %448 = vset.pattern.permute.xlu0 0
    %449 = vperm.xlu0 %448, %v431
    %v450 = vpop.permute.xlu0 %449
    %453 = vset.pattern.permute.xlu0 0
    %454 = vperm.xlu0 %453, %v432
    %v455 = vpop.permute.xlu0 %454
    %v461 = vunpack.c.l.b16 %v425
    %v462 = vunpack.c.l.b16 %v426
    %v463 = vunpack.c.l.b16 %v427
    %v464 = vunpack.c.l.b16 %v428
    %v465 = vpack.c.b16 %v462, %v461
    %v466 = vpack.c.b16 %v464, %v463
    %vm467 = vcmask 523264
    %v469 = vsel %vm467, %v465, 0
    %v472 = vsel %vm467, %v466, 0
    %474 = vmatpush.bf16.msra.mxu0 0
    %475 = vmatpush.bf16.msra.mxu0 0
    %476 = vmatpush.bf16.msra.mxu0 0
    %477 = vmatpush.bf16.msra.mxu0 0
    %478 = vmatpush.bf16.msra.mxu0 %v436
    %479 = vmatpush.bf16.msra.mxu0 %v435
    %480 = vmatpush.bf16.msra.mxu0 %v434
    %481 = vmatpush.bf16.msra.mxu0 %v433
    %482 = vmatmul.bf16.gmra.mxu0 %v469
    %v483 = vpop.f32.mrf.mxu0
    %v484 = vadd.f32 %v440, %v483
    %v485 = vpop.f32.mrf.mxu0
    %v486 = vadd.f32 %v445, %v485
    %487 = vmatmul.bf16.gmra.mxu0 %v472
    %v488 = vpop.f32.mrf.mxu0
    %v489 = vadd.f32 %v450, %v488
    %v490 = vpop.f32.mrf.mxu0
    %v491 = vadd.f32 %v455, %v490
    %492 = vdwg.mxu0
    %v493 = vmax.f32 %v484, 0.0
    %v494 = vmax.f32 %v486, 0.0
    %v495 = vmax.f32 %v489, 0.0
    %v496 = vmax.f32 %v491, 0.0
    %v497 = vld [vmem:[%s3] sm:$0xff]
    %v498 = vld [vmem:[%s3 + $0x8] sm:$0xff]
    %v499 = vld [vmem:[%s3 + $0x10] sm:$0xff]
    %v500 = vld [vmem:[%s3 + $0x18] sm:$0xff]
    %v501 = vld [vmem:[%s3 + $0x20] sm:$0xff]
    %v502 = vld [vmem:[%s3 + $0x28] sm:$0xff]
    %v503 = vld [vmem:[%s3 + $0x30] sm:$0xff]
    %v504 = vld [vmem:[%s3 + $0x38] sm:$0xff]
    %v505 = vld [vmem:[%s3 + $0x40] sm:$0xff]
    %v506 = vld [vmem:[%s3 + $0x48] sm:$0xff]
    %v507 = vld [vmem:[%s3 + $0x50] sm:$0xff]
    %v508 = vld [vmem:[%s3 + $0x58] sm:$0xff]
    %v509 = vld [vmem:[%s3 + $0x60] sm:$0xff]
    %v510 = vld [vmem:[%s3 + $0x68] sm:$0xff]
    %v511 = vld [vmem:[%s3 + $0x70] sm:$0xff]
    %v512 = vld [vmem:[%s3 + $0x78] sm:$0xff]
    %v513 = vld [vmem:[%s3 + $0x80] sm:$0xff]
    %v514 = vld [vmem:[%s3 + $0x88] sm:$0xff]
    %v515 = vld [vmem:[%s3 + $0x90] sm:$0xff]
    %v516 = vld [vmem:[%s3 + $0x98] sm:$0xff]
    %v517 = vld [vmem:[%s3 + $0xa0] sm:$0xff]
    %v518 = vld [vmem:[%s3 + $0xa8] sm:$0xff]
    %v519 = vld [vmem:[%s3 + $0xb0] sm:$0xff]
    %v520 = vld [vmem:[%s3 + $0xb8] sm:$0xff]
    %v521 = vld [vmem:[%s3 + $0xc0] sm:$0xff]
    %v522 = vld [vmem:[%s3 + $0xc8] sm:$0xff]
    %v523 = vld [vmem:[%s3 + $0xd0] sm:$0xff]
    %v524 = vld [vmem:[%s3 + $0xd8] sm:$0xff]
    %v525 = vld [vmem:[%s3 + $0xe0] sm:$0xff]
    %v526 = vld [vmem:[%s3 + $0xe8] sm:$0xff]
    %v527 = vld [vmem:[%s3 + $0xf0] sm:$0xff]
    %v528 = vld [vmem:[%s3 + $0xf8] sm:$0xff]
    %v529 = vld [vmem:[%s3 + $0x100] sm:$0xff]
    %v530 = vld [vmem:[%s3 + $0x108] sm:$0xff]
    %v531 = vld [vmem:[%s3 + $0x110] sm:$0xff]
    %v532 = vld [vmem:[%s3 + $0x118] sm:$0xff]
    %v533 = vld [vmem:[%s3 + $0x1] sm:$0xff]
    %v534 = vld [vmem:[%s3 + $0x9] sm:$0xff]
    %v535 = vld [vmem:[%s3 + $0x11] sm:$0xff]
    %v536 = vld [vmem:[%s3 + $0x19] sm:$0xff]
    %v537 = vld [vmem:[%s3 + $0x21] sm:$0xff]
    %v538 = vld [vmem:[%s3 + $0x29] sm:$0xff]
    %v539 = vld [vmem:[%s3 + $0x31] sm:$0xff]
    %v540 = vld [vmem:[%s3 + $0x39] sm:$0xff]
    %v541 = vld [vmem:[%s3 + $0x41] sm:$0xff]
    %v542 = vld [vmem:[%s3 + $0x49] sm:$0xff]
    %v543 = vld [vmem:[%s3 + $0x51] sm:$0xff]
    %v544 = vld [vmem:[%s3 + $0x59] sm:$0xff]
    %v545 = vld [vmem:[%s3 + $0x61] sm:$0xff]
    %v546 = vld [vmem:[%s3 + $0x69] sm:$0xff]
    %v547 = vld [vmem:[%s3 + $0x71] sm:$0xff]
    %v548 = vld [vmem:[%s3 + $0x79] sm:$0xff]
    %v549 = vld [vmem:[%s3 + $0x81] sm:$0xff]
    %v550 = vld [vmem:[%s3 + $0x89] sm:$0xff]
    %v551 = vld [vmem:[%s3 + $0x91] sm:$0xff]
    %v552 = vld [vmem:[%s3 + $0x99] sm:$0xff]
    %v553 = vld [vmem:[%s3 + $0xa1] sm:$0xff]
    %v554 = vld [vmem:[%s3 + $0xa9] sm:$0xff]
    %v555 = vld [vmem:[%s3 + $0xb1] sm:$0xff]
    %v556 = vld [vmem:[%s3 + $0xb9] sm:$0xff]
    %v557 = vld [vmem:[%s3 + $0xc1] sm:$0xff]
    %v558 = vld [vmem:[%s3 + $0xc9] sm:$0xff]
    %v559 = vld [vmem:[%s3 + $0xd1] sm:$0xff]
    %v560 = vld [vmem:[%s3 + $0xd9] sm:$0xff]
    %v561 = vld [vmem:[%s3 + $0xe1] sm:$0xff]
    %v562 = vld [vmem:[%s3 + $0xe9] sm:$0xff]
    %v563 = vld [vmem:[%s3 + $0xf1] sm:$0xff]
    %v564 = vld [vmem:[%s3 + $0xf9] sm:$0xff]
    %v565 = vld [vmem:[%s3 + $0x101] sm:$0xff]
    %v566 = vld [vmem:[%s3 + $0x109] sm:$0xff]
    %v567 = vld [vmem:[%s3 + $0x111] sm:$0xff]
    %v568 = vld [vmem:[%s3 + $0x119] sm:$0xff]
    %v569 = vld [vmem:[%s3 + $0x2] sm:$0xff]
    %v570 = vld [vmem:[%s3 + $0xa] sm:$0xff]
    %v571 = vld [vmem:[%s3 + $0x12] sm:$0xff]
    %v572 = vld [vmem:[%s3 + $0x1a] sm:$0xff]
    %v573 = vld [vmem:[%s3 + $0x22] sm:$0xff]
    %v574 = vld [vmem:[%s3 + $0x2a] sm:$0xff]
    %v575 = vld [vmem:[%s3 + $0x32] sm:$0xff]
    %v576 = vld [vmem:[%s3 + $0x3a] sm:$0xff]
    %v577 = vld [vmem:[%s3 + $0x42] sm:$0xff]
    %v578 = vld [vmem:[%s3 + $0x4a] sm:$0xff]
    %v579 = vld [vmem:[%s3 + $0x52] sm:$0xff]
    %v580 = vld [vmem:[%s3 + $0x5a] sm:$0xff]
    %v581 = vld [vmem:[%s3 + $0x62] sm:$0xff]
    %v582 = vld [vmem:[%s3 + $0x6a] sm:$0xff]
    %v583 = vld [vmem:[%s3 + $0x72] sm:$0xff]
    %v584 = vld [vmem:[%s3 + $0x7a] sm:$0xff]
    %v585 = vld [vmem:[%s3 + $0x82] sm:$0xff]
    %v586 = vld [vmem:[%s3 + $0x8a] sm:$0xff]
    %v587 = vld [vmem:[%s3 + $0x92] sm:$0xff]
    %v588 = vld [vmem:[%s3 + $0x9a] sm:$0xff]
    %v589 = vld [vmem:[%s3 + $0xa2] sm:$0xff]
    %v590 = vld [vmem:[%s3 + $0xaa] sm:$0xff]
    %v591 = vld [vmem:[%s3 + $0xb2] sm:$0xff]
    %v592 = vld [vmem:[%s3 + $0xba] sm:$0xff]
    %v593 = vld [vmem:[%s3 + $0xc2] sm:$0xff]
    %v594 = vld [vmem:[%s3 + $0xca] sm:$0xff]
    %v595 = vld [vmem:[%s3 + $0xd2] sm:$0xff]
    %v596 = vld [vmem:[%s3 + $0xda] sm:$0xff]
    %v597 = vld [vmem:[%s3 + $0xe2] sm:$0xff]
    %v598 = vld [vmem:[%s3 + $0xea] sm:$0xff]
    %v599 = vld [vmem:[%s3 + $0xf2] sm:$0xff]
    %v600 = vld [vmem:[%s3 + $0xfa] sm:$0xff]
    %v601 = vld [vmem:[%s3 + $0x102] sm:$0xff]
    %v602 = vld [vmem:[%s3 + $0x10a] sm:$0xff]
    %v603 = vld [vmem:[%s3 + $0x112] sm:$0xff]
    %v604 = vld [vmem:[%s3 + $0x11a] sm:$0xff]
    %v605 = vld [vmem:[%s3 + $0x122] sm:$0xff]
    %v606 = vld [vmem:[%s3 + $0x12a] sm:$0xff]
    %v607 = vld [vmem:[%s3 + $0x13] sm:$0xff]
    %v608 = vld [vmem:[%s3 + $0x1b] sm:$0xff]
    %v609 = vld [vmem:[%s3 + $0x23] sm:$0xff]
    %v610 = vld [vmem:[%s3 + $0x2b] sm:$0xff]
    %v611 = vld [vmem:[%s3 + $0x33] sm:$0xff]
    %v612 = vld [vmem:[%s3 + $0x3b] sm:$0xff]
    %v613 = vld [vmem:[%s3 + $0x43] sm:$0xff]
    %v614 = vld [vmem:[%s3 + $0x4b] sm:$0xff]
    %v615 = vld [vmem:[%s3 + $0x53] sm:$0xff]
    %v616 = vld [vmem:[%s3 + $0x5b] sm:$0xff]
    %v617 = vld [vmem:[%s3 + $0x63] sm:$0xff]
    %v618 = vld [vmem:[%s3 + $0x6b] sm:$0xff]
    %v619 = vld [vmem:[%s3 + $0x73] sm:$0xff]
    %v620 = vld [vmem:[%s3 + $0x7b] sm:$0xff]
    %v621 = vld [vmem:[%s3 + $0x83] sm:$0xff]
    %v622 = vld [vmem:[%s3 + $0x8b] sm:$0xff]
    %v623 = vld [vmem:[%s3 + $0x93] sm:$0xff]
    %v624 = vld [vmem:[%s3 + $0x9b] sm:$0xff]
    %v625 = vld [vmem:[%s3 + $0xa3] sm:$0xff]
    %v626 = vld [vmem:[%s3 + $0xab] sm:$0xff]
    %v627 = vld [vmem:[%s3 + $0xb3] sm:$0xff]
    %v628 = vld [vmem:[%s3 + $0xbb] sm:$0xff]
    %v629 = vld [vmem:[%s3 + $0xc3] sm:$0xff]
    %v630 = vld [vmem:[%s3 + $0xcb] sm:$0xff]
    %v631 = vld [vmem:[%s3 + $0xd3] sm:$0xff]
    %v632 = vld [vmem:[%s3 + $0xdb] sm:$0xff]
    %v633 = vld [vmem:[%s3 + $0xe3] sm:$0xff]
    %v634 = vld [vmem:[%s3 + $0xeb] sm:$0xff]
    %v635 = vld [vmem:[%s3 + $0xf3] sm:$0xff]
    %v636 = vld [vmem:[%s3 + $0xfb] sm:$0xff]
    %v637 = vld [vmem:[%s3 + $0x103] sm:$0xff]
    %v638 = vld [vmem:[%s3 + $0x10b] sm:$0xff]
    %v639 = vld [vmem:[%s3 + $0x113] sm:$0xff]
    %v640 = vld [vmem:[%s3 + $0x11b] sm:$0xff]
    %v641 = vld [vmem:[%s3 + $0x123] sm:$0xff]
    %v642 = vld [vmem:[%s3 + $0x12b] sm:$0xff]
    %v643 = vld [vmem:[%s3 + $0x14] sm:$0xff]
    %v644 = vld [vmem:[%s3 + $0x1c] sm:$0xff]
    %v645 = vld [vmem:[%s3 + $0x24] sm:$0xff]
    %v646 = vld [vmem:[%s3 + $0x2c] sm:$0xff]
    %v647 = vld [vmem:[%s3 + $0x34] sm:$0xff]
    %v648 = vld [vmem:[%s3 + $0x3c] sm:$0xff]
    %v649 = vld [vmem:[%s3 + $0x44] sm:$0xff]
    %v650 = vld [vmem:[%s3 + $0x4c] sm:$0xff]
    %v651 = vld [vmem:[%s3 + $0x54] sm:$0xff]
    %v652 = vld [vmem:[%s3 + $0x5c] sm:$0xff]
    %v653 = vld [vmem:[%s3 + $0x64] sm:$0xff]
    %v654 = vld [vmem:[%s3 + $0x6c] sm:$0xff]
    %v655 = vld [vmem:[%s3 + $0x74] sm:$0xff]
    %v656 = vld [vmem:[%s3 + $0x7c] sm:$0xff]
    %v657 = vld [vmem:[%s3 + $0x84] sm:$0xff]
    %v658 = vld [vmem:[%s3 + $0x8c] sm:$0xff]
    %v659 = vld [vmem:[%s3 + $0x94] sm:$0xff]
    %v660 = vld [vmem:[%s3 + $0x9c] sm:$0xff]
    %v661 = vld [vmem:[%s3 + $0xa4] sm:$0xff]
    %v662 = vld [vmem:[%s3 + $0xac] sm:$0xff]
    %v663 = vld [vmem:[%s3 + $0xb4] sm:$0xff]
    %v664 = vld [vmem:[%s3 + $0xbc] sm:$0xff]
    %v665 = vld [vmem:[%s3 + $0xc4] sm:$0xff]
    %v666 = vld [vmem:[%s3 + $0xcc] sm:$0xff]
    %v667 = vld [vmem:[%s3 + $0xd4] sm:$0xff]
    %v668 = vld [vmem:[%s3 + $0xdc] sm:$0xff]
    %v669 = vld [vmem:[%s3 + $0xe4] sm:$0xff]
    %v670 = vld [vmem:[%s3 + $0xec] sm:$0xff]
    %v671 = vld [vmem:[%s3 + $0xf4] sm:$0xff]
    %v672 = vld [vmem:[%s3 + $0xfc] sm:$0xff]
    %v673 = vld [vmem:[%s3 + $0x104] sm:$0xff]
    %v674 = vld [vmem:[%s3 + $0x10c] sm:$0xff]
    %v675 = vld [vmem:[%s3 + $0x114] sm:$0xff]
    %v676 = vld [vmem:[%s3 + $0x11c] sm:$0xff]
    %v677 = vld [vmem:[%s3 + $0x124] sm:$0xff]
    %v678 = vld [vmem:[%s3 + $0x12c] sm:$0xff]
    %v679 = vld [vmem:[%s3 + $0x134] sm:$0xff]
    %v680 = vld [vmem:[%s3 + $0x13c] sm:$0xff]
    %v681 = vld [vmem:[%s3 + $0x25] sm:$0xff]
    %v682 = vld [vmem:[%s3 + $0x2d] sm:$0xff]
    %v683 = vld [vmem:[%s3 + $0x35] sm:$0xff]
    %v684 = vld [vmem:[%s3 + $0x3d] sm:$0xff]
    %v685 = vld [vmem:[%s3 + $0x45] sm:$0xff]
    %v686 = vld [vmem:[%s3 + $0x4d] sm:$0xff]
    %v687 = vld [vmem:[%s3 + $0x55] sm:$0xff]
    %v688 = vld [vmem:[%s3 + $0x5d] sm:$0xff]
    %v689 = vld [vmem:[%s3 + $0x65] sm:$0xff]
    %v690 = vld [vmem:[%s3 + $0x6d] sm:$0xff]
    %v691 = vld [vmem:[%s3 + $0x75] sm:$0xff]
    %v692 = vld [vmem:[%s3 + $0x7d] sm:$0xff]
    %v693 = vld [vmem:[%s3 + $0x85] sm:$0xff]
    %v694 = vld [vmem:[%s3 + $0x8d] sm:$0xff]
    %v695 = vld [vmem:[%s3 + $0x95] sm:$0xff]
    %v696 = vld [vmem:[%s3 + $0x9d] sm:$0xff]
    %v697 = vld [vmem:[%s3 + $0xa5] sm:$0xff]
    %v698 = vld [vmem:[%s3 + $0xad] sm:$0xff]
    %v699 = vld [vmem:[%s3 + $0xb5] sm:$0xff]
    %v700 = vld [vmem:[%s3 + $0xbd] sm:$0xff]
    %v701 = vld [vmem:[%s3 + $0xc5] sm:$0xff]
    %v702 = vld [vmem:[%s3 + $0xcd] sm:$0xff]
    %v703 = vld [vmem:[%s3 + $0xd5] sm:$0xff]
    %v704 = vld [vmem:[%s3 + $0xdd] sm:$0xff]
    %v705 = vld [vmem:[%s3 + $0xe5] sm:$0xff]
    %v706 = vld [vmem:[%s3 + $0xed] sm:$0xff]
    %v707 = vld [vmem:[%s3 + $0xf5] sm:$0xff]
    %v708 = vld [vmem:[%s3 + $0xfd] sm:$0xff]
    %v709 = vld [vmem:[%s3 + $0x105] sm:$0xff]
    %v710 = vld [vmem:[%s3 + $0x10d] sm:$0xff]
    %v711 = vld [vmem:[%s3 + $0x115] sm:$0xff]
    %v712 = vld [vmem:[%s3 + $0x11d] sm:$0xff]
    %v713 = vld [vmem:[%s3 + $0x125] sm:$0xff]
    %v714 = vld [vmem:[%s3 + $0x12d] sm:$0xff]
    %v715 = vld [vmem:[%s3 + $0x135] sm:$0xff]
    %v716 = vld [vmem:[%s3 + $0x13d] sm:$0xff]
    %v717 = vld [vmem:[%s3 + $0x26] sm:$0xff]
    %v718 = vld [vmem:[%s3 + $0x2e] sm:$0xff]
    %v719 = vld [vmem:[%s3 + $0x36] sm:$0xff]
    %v720 = vld [vmem:[%s3 + $0x3e] sm:$0xff]
    %v721 = vld [vmem:[%s3 + $0x46] sm:$0xff]
    %v722 = vld [vmem:[%s3 + $0x4e] sm:$0xff]
    %v723 = vld [vmem:[%s3 + $0x56] sm:$0xff]
    %v724 = vld [vmem:[%s3 + $0x5e] sm:$0xff]
    %v725 = vld [vmem:[%s3 + $0x66] sm:$0xff]
    %v726 = vld [vmem:[%s3 + $0x6e] sm:$0xff]
    %v727 = vld [vmem:[%s3 + $0x76] sm:$0xff]
    %v728 = vld [vmem:[%s3 + $0x7e] sm:$0xff]
    %v729 = vld [vmem:[%s3 + $0x86] sm:$0xff]
    %v730 = vld [vmem:[%s3 + $0x8e] sm:$0xff]
    %v731 = vld [vmem:[%s3 + $0x96] sm:$0xff]
    %v732 = vld [vmem:[%s3 + $0x9e] sm:$0xff]
    %v733 = vld [vmem:[%s3 + $0xa6] sm:$0xff]
    %v734 = vld [vmem:[%s3 + $0xae] sm:$0xff]
    %v735 = vld [vmem:[%s3 + $0xb6] sm:$0xff]
    %v736 = vld [vmem:[%s3 + $0xbe] sm:$0xff]
    %v737 = vld [vmem:[%s3 + $0xc6] sm:$0xff]
    %v738 = vld [vmem:[%s3 + $0xce] sm:$0xff]
    %v739 = vld [vmem:[%s3 + $0xd6] sm:$0xff]
    %v740 = vld [vmem:[%s3 + $0xde] sm:$0xff]
    %v741 = vld [vmem:[%s3 + $0xe6] sm:$0xff]
    %v742 = vld [vmem:[%s3 + $0xee] sm:$0xff]
    %v743 = vld [vmem:[%s3 + $0xf6] sm:$0xff]
    %v744 = vld [vmem:[%s3 + $0xfe] sm:$0xff]
    %v745 = vld [vmem:[%s3 + $0x106] sm:$0xff]
    %v746 = vld [vmem:[%s3 + $0x10e] sm:$0xff]
    %v747 = vld [vmem:[%s3 + $0x116] sm:$0xff]
    %v748 = vld [vmem:[%s3 + $0x11e] sm:$0xff]
    %v749 = vld [vmem:[%s3 + $0x126] sm:$0xff]
    %v750 = vld [vmem:[%s3 + $0x12e] sm:$0xff]
    %v751 = vld [vmem:[%s3 + $0x136] sm:$0xff]
    %v752 = vld [vmem:[%s3 + $0x13e] sm:$0xff]
    %v753 = vld [vmem:[%s4] sm:$0x7]
    %s754 = sld [smem:[#allocation3]]
    %v755 = vstv %s754
    %v756 = vmul.f32 %v497, %v755
    %v757 = vmul.f32 %v498, %v755
    %v758 = vmul.f32 %v499, %v755
    %v759 = vmul.f32 %v500, %v755
    %v760 = vmul.f32 %v501, %v755
    %v761 = vmul.f32 %v502, %v755
    %v762 = vmul.f32 %v503, %v755
    %v763 = vmul.f32 %v504, %v755
    %v764 = vmul.f32 %v505, %v755
    %v765 = vmul.f32 %v506, %v755
    %v766 = vmul.f32 %v507, %v755
    %v767 = vmul.f32 %v508, %v755
    %v768 = vmul.f32 %v509, %v755
    %v769 = vmul.f32 %v510, %v755
    %v770 = vmul.f32 %v511, %v755
    %v771 = vmul.f32 %v512, %v755
    %v772 = vmul.f32 %v513, %v755
    %v773 = vmul.f32 %v514, %v755
    %v774 = vmul.f32 %v515, %v755
    %v775 = vmul.f32 %v516, %v755
    %v776 = vmul.f32 %v517, %v755
    %v777 = vmul.f32 %v518, %v755
    %v778 = vmul.f32 %v519, %v755
    %v779 = vmul.f32 %v520, %v755
    %v780 = vmul.f32 %v521, %v755
    %v781 = vmul.f32 %v522, %v755
    %v782 = vmul.f32 %v523, %v755
    %v783 = vmul.f32 %v524, %v755
    %v784 = vmul.f32 %v525, %v755
    %v785 = vmul.f32 %v526, %v755
    %v786 = vmul.f32 %v527, %v755
    %v787 = vmul.f32 %v528, %v755
    %v788 = vmul.f32 %v529, %v755
    %v789 = vmul.f32 %v530, %v755
    %v790 = vmul.f32 %v531, %v755
    %v791 = vmul.f32 %v532, %v755
    %s792 = sld [smem:[#allocation3 + $0x1]]
    %v793 = vstv %s792
    %v794 = vmul.f32 %v533, %v793
    %v795 = vmul.f32 %v534, %v793
    %v796 = vmul.f32 %v535, %v793
    %v797 = vmul.f32 %v536, %v793
    %v798 = vmul.f32 %v537, %v793
    %v799 = vmul.f32 %v538, %v793
    %v800 = vmul.f32 %v539, %v793
    %v801 = vmul.f32 %v540, %v793
    %v802 = vmul.f32 %v541, %v793
    %v803 = vmul.f32 %v542, %v793
    %v804 = vmul.f32 %v543, %v793
    %v805 = vmul.f32 %v544, %v793
    %v806 = vmul.f32 %v545, %v793
    %v807 = vmul.f32 %v546, %v793
    %v808 = vmul.f32 %v547, %v793
    %v809 = vmul.f32 %v548, %v793
    %v810 = vmul.f32 %v549, %v793
    %v811 = vmul.f32 %v550, %v793
    %v812 = vmul.f32 %v551, %v793
    %v813 = vmul.f32 %v552, %v793
    %v814 = vmul.f32 %v553, %v793
    %v815 = vmul.f32 %v554, %v793
    %v816 = vmul.f32 %v555, %v793
    %v817 = vmul.f32 %v556, %v793
    %v818 = vmul.f32 %v557, %v793
    %v819 = vmul.f32 %v558, %v793
    %v820 = vmul.f32 %v559, %v793
    %v821 = vmul.f32 %v560, %v793
    %v822 = vmul.f32 %v561, %v793
    %v823 = vmul.f32 %v562, %v793
    %v824 = vmul.f32 %v563, %v793
    %v825 = vmul.f32 %v564, %v793
    %v826 = vmul.f32 %v565, %v793
    %v827 = vmul.f32 %v566, %v793
    %v828 = vmul.f32 %v567, %v793
    %v829 = vmul.f32 %v568, %v793
    %v830 = vadd.f32 %v756, %v794
    %v831 = vadd.f32 %v757, %v795
    %v832 = vadd.f32 %v758, %v796
    %v833 = vadd.f32 %v759, %v797
    %v834 = vadd.f32 %v760, %v798
    %v835 = vadd.f32 %v761, %v799
    %v836 = vadd.f32 %v762, %v800
    %v837 = vadd.f32 %v763, %v801
    %v838 = vadd.f32 %v764, %v802
    %v839 = vadd.f32 %v765, %v803
    %v840 = vadd.f32 %v766, %v804
    %v841 = vadd.f32 %v767, %v805
    %v842 = vadd.f32 %v768, %v806
    %v843 = vadd.f32 %v769, %v807
    %v844 = vadd.f32 %v770, %v808
    %v845 = vadd.f32 %v771, %v809
    %v846 = vadd.f32 %v772, %v810
    %v847 = vadd.f32 %v773, %v811
    %v848 = vadd.f32 %v774, %v812
    %v849 = vadd.f32 %v775, %v813
    %v850 = vadd.f32 %v776, %v814
    %v851 = vadd.f32 %v777, %v815
    %v852 = vadd.f32 %v778, %v816
    %v853 = vadd.f32 %v779, %v817
    %v854 = vadd.f32 %v780, %v818
    %v855 = vadd.f32 %v781, %v819
    %v856 = vadd.f32 %v782, %v820
    %v857 = vadd.f32 %v783, %v821
    %v858 = vadd.f32 %v784, %v822
    %v859 = vadd.f32 %v785, %v823
    %v860 = vadd.f32 %v786, %v824
    %v861 = vadd.f32 %v787, %v825
    %v862 = vadd.f32 %v788, %v826
    %v863 = vadd.f32 %v789, %v827
    %v864 = vadd.f32 %v790, %v828
    %v865 = vadd.f32 %v791, %v829
    %s866 = sld [smem:[#allocation3 + $0x2]]
    %v867 = vstv %s866
    %v868 = vmul.f32 %v569, %v867
    %v869 = vmul.f32 %v570, %v867
    %v870 = vmul.f32 %v571, %v867
    %v871 = vmul.f32 %v572, %v867
    %v872 = vmul.f32 %v573, %v867
    %v873 = vmul.f32 %v574, %v867
    %v874 = vmul.f32 %v575, %v867
    %v875 = vmul.f32 %v576, %v867
    %v876 = vmul.f32 %v577, %v867
    %v877 = vmul.f32 %v578, %v867
    %v878 = vmul.f32 %v579, %v867
    %v879 = vmul.f32 %v580, %v867
    %v880 = vmul.f32 %v581, %v867
    %v881 = vmul.f32 %v582, %v867
    %v882 = vmul.f32 %v583, %v867
    %v883 = vmul.f32 %v584, %v867
    %v884 = vmul.f32 %v585, %v867
    %v885 = vmul.f32 %v586, %v867
    %v886 = vmul.f32 %v587, %v867
    %v887 = vmul.f32 %v588, %v867
    %v888 = vmul.f32 %v589, %v867
    %v889 = vmul.f32 %v590, %v867
    %v890 = vmul.f32 %v591, %v867
    %v891 = vmul.f32 %v592, %v867
    %v892 = vmul.f32 %v593, %v867
    %v893 = vmul.f32 %v594, %v867
    %v894 = vmul.f32 %v595, %v867
    %v895 = vmul.f32 %v596, %v867
    %v896 = vmul.f32 %v597, %v867
    %v897 = vmul.f32 %v598, %v867
    %v898 = vmul.f32 %v599, %v867
    %v899 = vmul.f32 %v600, %v867
    %v900 = vmul.f32 %v601, %v867
    %v901 = vmul.f32 %v602, %v867
    %v902 = vmul.f32 %v603, %v867
    %v903 = vmul.f32 %v604, %v867
    %v904 = vadd.f32 %v830, %v868
    %v905 = vadd.f32 %v831, %v869
    %v906 = vadd.f32 %v832, %v870
    %v907 = vadd.f32 %v833, %v871
    %v908 = vadd.f32 %v834, %v872
    %v909 = vadd.f32 %v835, %v873
    %v910 = vadd.f32 %v836, %v874
    %v911 = vadd.f32 %v837, %v875
    %v912 = vadd.f32 %v838, %v876
    %v913 = vadd.f32 %v839, %v877
    %v914 = vadd.f32 %v840, %v878
    %v915 = vadd.f32 %v841, %v879
    %v916 = vadd.f32 %v842, %v880
    %v917 = vadd.f32 %v843, %v881
    %v918 = vadd.f32 %v844, %v882
    %v919 = vadd.f32 %v845, %v883
    %v920 = vadd.f32 %v846, %v884
    %v921 = vadd.f32 %v847, %v885
    %v922 = vadd.f32 %v848, %v886
    %v923 = vadd.f32 %v849, %v887
    %v924 = vadd.f32 %v850, %v888
    %v925 = vadd.f32 %v851, %v889
    %v926 = vadd.f32 %v852, %v890
    %v927 = vadd.f32 %v853, %v891
    %v928 = vadd.f32 %v854, %v892
    %v929 = vadd.f32 %v855, %v893
    %v930 = vadd.f32 %v856, %v894
    %v931 = vadd.f32 %v857, %v895
    %v932 = vadd.f32 %v858, %v896
    %v933 = vadd.f32 %v859, %v897
    %v934 = vadd.f32 %v860, %v898
    %v935 = vadd.f32 %v861, %v899
    %v936 = vadd.f32 %v862, %v900
    %v937 = vadd.f32 %v863, %v901
    %v938 = vadd.f32 %v864, %v902
    %v939 = vadd.f32 %v865, %v903
    %s940 = sld [smem:[#allocation3 + $0x3]]
    %v941 = vstv %s940
    %v942 = vmul.f32 %v571, %v941
    %v943 = vmul.f32 %v572, %v941
    %v944 = vmul.f32 %v573, %v941
    %v945 = vmul.f32 %v574, %v941
    %v946 = vmul.f32 %v575, %v941
    %v947 = vmul.f32 %v576, %v941
    %v948 = vmul.f32 %v577, %v941
    %v949 = vmul.f32 %v578, %v941
    %v950 = vmul.f32 %v579, %v941
    %v951 = vmul.f32 %v580, %v941
    %v952 = vmul.f32 %v581, %v941
    %v953 = vmul.f32 %v582, %v941
    %v954 = vmul.f32 %v583, %v941
    %v955 = vmul.f32 %v584, %v941
    %v956 = vmul.f32 %v585, %v941
    %v957 = vmul.f32 %v586, %v941
    %v958 = vmul.f32 %v587, %v941
    %v959 = vmul.f32 %v588, %v941
    %v960 = vmul.f32 %v589, %v941
    %v961 = vmul.f32 %v590, %v941
    %v962 = vmul.f32 %v591, %v941
    %v963 = vmul.f32 %v592, %v941
    %v964 = vmul.f32 %v593, %v941
    %v965 = vmul.f32 %v594, %v941
    %v966 = vmul.f32 %v595, %v941
    %v967 = vmul.f32 %v596, %v941
    %v968 = vmul.f32 %v597, %v941
    %v969 = vmul.f32 %v598, %v941
    %v970 = vmul.f32 %v599, %v941
    %v971 = vmul.f32 %v600, %v941
    %v972 = vmul.f32 %v601, %v941
    %v973 = vmul.f32 %v602, %v941
    %v974 = vmul.f32 %v603, %v941
    %v975 = vmul.f32 %v604, %v941
    %v976 = vmul.f32 %v605, %v941
    %v977 = vmul.f32 %v606, %v941
    %v978 = vadd.f32 %v904, %v942
    %v979 = vadd.f32 %v905, %v943
    %v980 = vadd.f32 %v906, %v944
    %v981 = vadd.f32 %v907, %v945
    %v982 = vadd.f32 %v908, %v946
    %v983 = vadd.f32 %v909, %v947
    %v984 = vadd.f32 %v910, %v948
    %v985 = vadd.f32 %v911, %v949
    %v986 = vadd.f32 %v912, %v950
    %v987 = vadd.f32 %v913, %v951
    %v988 = vadd.f32 %v914, %v952
    %v989 = vadd.f32 %v915, %v953
    %v990 = vadd.f32 %v916, %v954
    %v991 = vadd.f32 %v917, %v955
    %v992 = vadd.f32 %v918, %v956
    %v993 = vadd.f32 %v919, %v957
    %v994 = vadd.f32 %v920, %v958
    %v995 = vadd.f32 %v921, %v959
    %v996 = vadd.f32 %v922, %v960
    %v997 = vadd.f32 %v923, %v961
    %v998 = vadd.f32 %v924, %v962
    %v999 = vadd.f32 %v925, %v963
    %v1000 = vadd.f32 %v926, %v964
    %v1001 = vadd.f32 %v927, %v965
    %v1002 = vadd.f32 %v928, %v966
    %v1003 = vadd.f32 %v929, %v967
    %v1004 = vadd.f32 %v930, %v968
    %v1005 = vadd.f32 %v931, %v969
    %v1006 = vadd.f32 %v932, %v970
    %v1007 = vadd.f32 %v933, %v971
    %v1008 = vadd.f32 %v934, %v972
    %v1009 = vadd.f32 %v935, %v973
    %v1010 = vadd.f32 %v936, %v974
    %v1011 = vadd.f32 %v937, %v975
    %v1012 = vadd.f32 %v938, %v976
    %v1013 = vadd.f32 %v939, %v977
    %s1014 = sld [smem:[#allocation3 + $0x4]]
    %v1015 = vstv %s1014
    %v1016 = vmul.f32 %v607, %v1015
    %v1017 = vmul.f32 %v608, %v1015
    %v1018 = vmul.f32 %v609, %v1015
    %v1019 = vmul.f32 %v610, %v1015
    %v1020 = vmul.f32 %v611, %v1015
    %v1021 = vmul.f32 %v612, %v1015
    %v1022 = vmul.f32 %v613, %v1015
    %v1023 = vmul.f32 %v614, %v1015
    %v1024 = vmul.f32 %v615, %v1015
    %v1025 = vmul.f32 %v616, %v1015
    %v1026 = vmul.f32 %v617, %v1015
    %v1027 = vmul.f32 %v618, %v1015
    %v1028 = vmul.f32 %v619, %v1015
    %v1029 = vmul.f32 %v620, %v1015
    %v1030 = vmul.f32 %v621, %v1015
    %v1031 = vmul.f32 %v622, %v1015
    %v1032 = vmul.f32 %v623, %v1015
    %v1033 = vmul.f32 %v624, %v1015
    %v1034 = vmul.f32 %v625, %v1015
    %v1035 = vmul.f32 %v626, %v1015
    %v1036 = vmul.f32 %v627, %v1015
    %v1037 = vmul.f32 %v628, %v1015
    %v1038 = vmul.f32 %v629, %v1015
    %v1039 = vmul.f32 %v630, %v1015
    %v1040 = vmul.f32 %v631, %v1015
    %v1041 = vmul.f32 %v632, %v1015
    %v1042 = vmul.f32 %v633, %v1015
    %v1043 = vmul.f32 %v634, %v1015
    %v1044 = vmul.f32 %v635, %v1015
    %v1045 = vmul.f32 %v636, %v1015
    %v1046 = vmul.f32 %v637, %v1015
    %v1047 = vmul.f32 %v638, %v1015
    %v1048 = vmul.f32 %v639, %v1015
    %v1049 = vmul.f32 %v640, %v1015
    %v1050 = vmul.f32 %v641, %v1015
    %v1051 = vmul.f32 %v642, %v1015
    %v1052 = vadd.f32 %v978, %v1016
    %v1053 = vadd.f32 %v979, %v1017
    %v1054 = vadd.f32 %v980, %v1018
    %v1055 = vadd.f32 %v981, %v1019
    %v1056 = vadd.f32 %v982, %v1020
    %v1057 = vadd.f32 %v983, %v1021
    %v1058 = vadd.f32 %v984, %v1022
    %v1059 = vadd.f32 %v985, %v1023
    %v1060 = vadd.f32 %v986, %v1024
    %v1061 = vadd.f32 %v987, %v1025
    %v1062 = vadd.f32 %v988, %v1026
    %v1063 = vadd.f32 %v989, %v1027
    %v1064 = vadd.f32 %v990, %v1028
    %v1065 = vadd.f32 %v991, %v1029
    %v1066 = vadd.f32 %v992, %v1030
    %v1067 = vadd.f32 %v993, %v1031
    %v1068 = vadd.f32 %v994, %v1032
    %v1069 = vadd.f32 %v995, %v1033
    %v1070 = vadd.f32 %v996, %v1034
    %v1071 = vadd.f32 %v997, %v1035
    %v1072 = vadd.f32 %v998, %v1036
    %v1073 = vadd.f32 %v999, %v1037
    %v1074 = vadd.f32 %v1000, %v1038
    %v1075 = vadd.f32 %v1001, %v1039
    %v1076 = vadd.f32 %v1002, %v1040
    %v1077 = vadd.f32 %v1003, %v1041
    %v1078 = vadd.f32 %v1004, %v1042
    %v1079 = vadd.f32 %v1005, %v1043
    %v1080 = vadd.f32 %v1006, %v1044
    %v1081 = vadd.f32 %v1007, %v1045
    %v1082 = vadd.f32 %v1008, %v1046
    %v1083 = vadd.f32 %v1009, %v1047
    %v1084 = vadd.f32 %v1010, %v1048
    %v1085 = vadd.f32 %v1011, %v1049
    %v1086 = vadd.f32 %v1012, %v1050
    %v1087 = vadd.f32 %v1013, %v1051
    %s1088 = sld [smem:[#allocation3 + $0x5]]
    %v1089 = vstv %s1088
    %v1090 = vmul.f32 %v643, %v1089
    %v1091 = vmul.f32 %v644, %v1089
    %v1092 = vmul.f32 %v645, %v1089
    %v1093 = vmul.f32 %v646, %v1089
    %v1094 = vmul.f32 %v647, %v1089
    %v1095 = vmul.f32 %v648, %v1089
    %v1096 = vmul.f32 %v649, %v1089
    %v1097 = vmul.f32 %v650, %v1089
    %v1098 = vmul.f32 %v651, %v1089
    %v1099 = vmul.f32 %v652, %v1089
    %v1100 = vmul.f32 %v653, %v1089
    %v1101 = vmul.f32 %v654, %v1089
    %v1102 = vmul.f32 %v655, %v1089
    %v1103 = vmul.f32 %v656, %v1089
    %v1104 = vmul.f32 %v657, %v1089
    %v1105 = vmul.f32 %v658, %v1089
    %v1106 = vmul.f32 %v659, %v1089
    %v1107 = vmul.f32 %v660, %v1089
    %v1108 = vmul.f32 %v661, %v1089
    %v1109 = vmul.f32 %v662, %v1089
    %v1110 = vmul.f32 %v663, %v1089
    %v1111 = vmul.f32 %v664, %v1089
    %v1112 = vmul.f32 %v665, %v1089
    %v1113 = vmul.f32 %v666, %v1089
    %v1114 = vmul.f32 %v667, %v1089
    %v1115 = vmul.f32 %v668, %v1089
    %v1116 = vmul.f32 %v669, %v1089
    %v1117 = vmul.f32 %v670, %v1089
    %v1118 = vmul.f32 %v671, %v1089
    %v1119 = vmul.f32 %v672, %v1089
    %v1120 = vmul.f32 %v673, %v1089
    %v1121 = vmul.f32 %v674, %v1089
    %v1122 = vmul.f32 %v675, %v1089
    %v1123 = vmul.f32 %v676, %v1089
    %v1124 = vmul.f32 %v677, %v1089
    %v1125 = vmul.f32 %v678, %v1089
    %v1126 = vadd.f32 %v1052, %v1090
    %v1127 = vadd.f32 %v1053, %v1091
    %v1128 = vadd.f32 %v1054, %v1092
    %v1129 = vadd.f32 %v1055, %v1093
    %v1130 = vadd.f32 %v1056, %v1094
    %v1131 = vadd.f32 %v1057, %v1095
    %v1132 = vadd.f32 %v1058, %v1096
    %v1133 = vadd.f32 %v1059, %v1097
    %v1134 = vadd.f32 %v1060, %v1098
    %v1135 = vadd.f32 %v1061, %v1099
    %v1136 = vadd.f32 %v1062, %v1100
    %v1137 = vadd.f32 %v1063, %v1101
    %v1138 = vadd.f32 %v1064, %v1102
    %v1139 = vadd.f32 %v1065, %v1103
    %v1140 = vadd.f32 %v1066, %v1104
    %v1141 = vadd.f32 %v1067, %v1105
    %v1142 = vadd.f32 %v1068, %v1106
    %v1143 = vadd.f32 %v1069, %v1107
    %v1144 = vadd.f32 %v1070, %v1108
    %v1145 = vadd.f32 %v1071, %v1109
    %v1146 = vadd.f32 %v1072, %v1110
    %v1147 = vadd.f32 %v1073, %v1111
    %v1148 = vadd.f32 %v1074, %v1112
    %v1149 = vadd.f32 %v1075, %v1113
    %v1150 = vadd.f32 %v1076, %v1114
    %v1151 = vadd.f32 %v1077, %v1115
    %v1152 = vadd.f32 %v1078, %v1116
    %v1153 = vadd.f32 %v1079, %v1117
    %v1154 = vadd.f32 %v1080, %v1118
    %v1155 = vadd.f32 %v1081, %v1119
    %v1156 = vadd.f32 %v1082, %v1120
    %v1157 = vadd.f32 %v1083, %v1121
    %v1158 = vadd.f32 %v1084, %v1122
    %v1159 = vadd.f32 %v1085, %v1123
    %v1160 = vadd.f32 %v1086, %v1124
    %v1161 = vadd.f32 %v1087, %v1125
    %s1162 = sld [smem:[#allocation3 + $0x6]]
    %v1163 = vstv %s1162
    %v1164 = vmul.f32 %v645, %v1163
    %v1165 = vmul.f32 %v646, %v1163
    %v1166 = vmul.f32 %v647, %v1163
    %v1167 = vmul.f32 %v648, %v1163
    %v1168 = vmul.f32 %v649, %v1163
    %v1169 = vmul.f32 %v650, %v1163
    %v1170 = vmul.f32 %v651, %v1163
    %v1171 = vmul.f32 %v652, %v1163
    %v1172 = vmul.f32 %v653, %v1163
    %v1173 = vmul.f32 %v654, %v1163
    %v1174 = vmul.f32 %v655, %v1163
    %v1175 = vmul.f32 %v656, %v1163
    %v1176 = vmul.f32 %v657, %v1163
    %v1177 = vmul.f32 %v658, %v1163
    %v1178 = vmul.f32 %v659, %v1163
    %v1179 = vmul.f32 %v660, %v1163
    %v1180 = vmul.f32 %v661, %v1163
    %v1181 = vmul.f32 %v662, %v1163
    %v1182 = vmul.f32 %v663, %v1163
    %v1183 = vmul.f32 %v664, %v1163
    %v1184 = vmul.f32 %v665, %v1163
    %v1185 = vmul.f32 %v666, %v1163
    %v1186 = vmul.f32 %v667, %v1163
    %v1187 = vmul.f32 %v668, %v1163
    %v1188 = vmul.f32 %v669, %v1163
    %v1189 = vmul.f32 %v670, %v1163
    %v1190 = vmul.f32 %v671, %v1163
    %v1191 = vmul.f32 %v672, %v1163
    %v1192 = vmul.f32 %v673, %v1163
    %v1193 = vmul.f32 %v674, %v1163
    %v1194 = vmul.f32 %v675, %v1163
    %v1195 = vmul.f32 %v676, %v1163
    %v1196 = vmul.f32 %v677, %v1163
    %v1197 = vmul.f32 %v678, %v1163
    %v1198 = vmul.f32 %v679, %v1163
    %v1199 = vmul.f32 %v680, %v1163
    %v1200 = vadd.f32 %v1126, %v1164
    %v1201 = vadd.f32 %v1127, %v1165
    %v1202 = vadd.f32 %v1128, %v1166
    %v1203 = vadd.f32 %v1129, %v1167
    %v1204 = vadd.f32 %v1130, %v1168
    %v1205 = vadd.f32 %v1131, %v1169
    %v1206 = vadd.f32 %v1132, %v1170
    %v1207 = vadd.f32 %v1133, %v1171
    %v1208 = vadd.f32 %v1134, %v1172
    %v1209 = vadd.f32 %v1135, %v1173
    %v1210 = vadd.f32 %v1136, %v1174
    %v1211 = vadd.f32 %v1137, %v1175
    %v1212 = vadd.f32 %v1138, %v1176
    %v1213 = vadd.f32 %v1139, %v1177
    %v1214 = vadd.f32 %v1140, %v1178
    %v1215 = vadd.f32 %v1141, %v1179
    %v1216 = vadd.f32 %v1142, %v1180
    %v1217 = vadd.f32 %v1143, %v1181
    %v1218 = vadd.f32 %v1144, %v1182
    %v1219 = vadd.f32 %v1145, %v1183
    %v1220 = vadd.f32 %v1146, %v1184
    %v1221 = vadd.f32 %v1147, %v1185
    %v1222 = vadd.f32 %v1148, %v1186
    %v1223 = vadd.f32 %v1149, %v1187
    %v1224 = vadd.f32 %v1150, %v1188
    %v1225 = vadd.f32 %v1151, %v1189
    %v1226 = vadd.f32 %v1152, %v1190
    %v1227 = vadd.f32 %v1153, %v1191
    %v1228 = vadd.f32 %v1154, %v1192
    %v1229 = vadd.f32 %v1155, %v1193
    %v1230 = vadd.f32 %v1156, %v1194
    %v1231 = vadd.f32 %v1157, %v1195
    %v1232 = vadd.f32 %v1158, %v1196
    %v1233 = vadd.f32 %v1159, %v1197
    %v1234 = vadd.f32 %v1160, %v1198
    %v1235 = vadd.f32 %v1161, %v1199
    %s1236 = sld [smem:[#allocation3 + $0x7]]
    %v1237 = vstv %s1236
    %v1238 = vmul.f32 %v681, %v1237
    %v1239 = vmul.f32 %v682, %v1237
    %v1240 = vmul.f32 %v683, %v1237
    %v1241 = vmul.f32 %v684, %v1237
    %v1242 = vmul.f32 %v685, %v1237
    %v1243 = vmul.f32 %v686, %v1237
    %v1244 = vmul.f32 %v687, %v1237
    %v1245 = vmul.f32 %v688, %v1237
    %v1246 = vmul.f32 %v689, %v1237
    %v1247 = vmul.f32 %v690, %v1237
    %v1248 = vmul.f32 %v691, %v1237
    %v1249 = vmul.f32 %v692, %v1237
    %v1250 = vmul.f32 %v693, %v1237
    %v1251 = vmul.f32 %v694, %v1237
    %v1252 = vmul.f32 %v695, %v1237
    %v1253 = vmul.f32 %v696, %v1237
    %v1254 = vmul.f32 %v697, %v1237
    %v1255 = vmul.f32 %v698, %v1237
    %v1256 = vmul.f32 %v699, %v1237
    %v1257 = vmul.f32 %v700, %v1237
    %v1258 = vmul.f32 %v701, %v1237
    %v1259 = vmul.f32 %v702, %v1237
    %v1260 = vmul.f32 %v703, %v1237
    %v1261 = vmul.f32 %v704, %v1237
    %v1262 = vmul.f32 %v705, %v1237
    %v1263 = vmul.f32 %v706, %v1237
    %v1264 = vmul.f32 %v707, %v1237
    %v1265 = vmul.f32 %v708, %v1237
    %v1266 = vmul.f32 %v709, %v1237
    %v1267 = vmul.f32 %v710, %v1237
    %v1268 = vmul.f32 %v711, %v1237
    %v1269 = vmul.f32 %v712, %v1237
    %v1270 = vmul.f32 %v713, %v1237
    %v1271 = vmul.f32 %v714, %v1237
    %v1272 = vmul.f32 %v715, %v1237
    %v1273 = vmul.f32 %v716, %v1237
    %v1274 = vadd.f32 %v1200, %v1238
    %v1275 = vadd.f32 %v1201, %v1239
    %v1276 = vadd.f32 %v1202, %v1240
    %v1277 = vadd.f32 %v1203, %v1241
    %v1278 = vadd.f32 %v1204, %v1242
    %v1279 = vadd.f32 %v1205, %v1243
    %v1280 = vadd.f32 %v1206, %v1244
    %v1281 = vadd.f32 %v1207, %v1245
    %v1282 = vadd.f32 %v1208, %v1246
    %v1283 = vadd.f32 %v1209, %v1247
    %v1284 = vadd.f32 %v1210, %v1248
    %v1285 = vadd.f32 %v1211, %v1249
    %v1286 = vadd.f32 %v1212, %v1250
    %v1287 = vadd.f32 %v1213, %v1251
    %v1288 = vadd.f32 %v1214, %v1252
    %v1289 = vadd.f32 %v1215, %v1253
    %v1290 = vadd.f32 %v1216, %v1254
    %v1291 = vadd.f32 %v1217, %v1255
    %v1292 = vadd.f32 %v1218, %v1256
    %v1293 = vadd.f32 %v1219, %v1257
    %v1294 = vadd.f32 %v1220, %v1258
    %v1295 = vadd.f32 %v1221, %v1259
    %v1296 = vadd.f32 %v1222, %v1260
    %v1297 = vadd.f32 %v1223, %v1261
    %v1298 = vadd.f32 %v1224, %v1262
    %v1299 = vadd.f32 %v1225, %v1263
    %v1300 = vadd.f32 %v1226, %v1264
    %v1301 = vadd.f32 %v1227, %v1265
    %v1302 = vadd.f32 %v1228, %v1266
    %v1303 = vadd.f32 %v1229, %v1267
    %v1304 = vadd.f32 %v1230, %v1268
    %v1305 = vadd.f32 %v1231, %v1269
    %v1306 = vadd.f32 %v1232, %v1270
    %v1307 = vadd.f32 %v1233, %v1271
    %v1308 = vadd.f32 %v1234, %v1272
    %v1309 = vadd.f32 %v1235, %v1273
    %s1310 = sld [smem:[#allocation3 + $0x8]]
    %v1311 = vstv %s1310
    %v1312 = vmul.f32 %v717, %v1311
    %v1313 = vmul.f32 %v718, %v1311
    %v1314 = vmul.f32 %v719, %v1311
    %v1315 = vmul.f32 %v720, %v1311
    %v1316 = vmul.f32 %v721, %v1311
    %v1317 = vmul.f32 %v722, %v1311
    %v1318 = vmul.f32 %v723, %v1311
    %v1319 = vmul.f32 %v724, %v1311
    %v1320 = vmul.f32 %v725, %v1311
    %v1321 = vmul.f32 %v726, %v1311
    %v1322 = vmul.f32 %v727, %v1311
    %v1323 = vmul.f32 %v728, %v1311
    %v1324 = vmul.f32 %v729, %v1311
    %v1325 = vmul.f32 %v730, %v1311
    %v1326 = vmul.f32 %v731, %v1311
    %v1327 = vmul.f32 %v732, %v1311
    %v1328 = vmul.f32 %v733, %v1311
    %v1329 = vmul.f32 %v734, %v1311
    %v1330 = vmul.f32 %v735, %v1311
    %v1331 = vmul.f32 %v736, %v1311
    %v1332 = vmul.f32 %v737, %v1311
    %v1333 = vmul.f32 %v738, %v1311
    %v1334 = vmul.f32 %v739, %v1311
    %v1335 = vmul.f32 %v740, %v1311
    %v1336 = vmul.f32 %v741, %v1311
    %v1337 = vmul.f32 %v742, %v1311
    %v1338 = vmul.f32 %v743, %v1311
    %v1339 = vmul.f32 %v744, %v1311
    %v1340 = vmul.f32 %v745, %v1311
    %v1341 = vmul.f32 %v746, %v1311
    %v1342 = vmul.f32 %v747, %v1311
    %v1343 = vmul.f32 %v748, %v1311
    %v1344 = vmul.f32 %v749, %v1311
    %v1345 = vmul.f32 %v750, %v1311
    %v1346 = vmul.f32 %v751, %v1311
    %v1347 = vmul.f32 %v752, %v1311
    %v1348 = vadd.f32 %v1274, %v1312
    %v1349 = vadd.f32 %v1275, %v1313
    %v1350 = vadd.f32 %v1276, %v1314
    %v1351 = vadd.f32 %v1277, %v1315
    %v1352 = vadd.f32 %v1278, %v1316
    %v1353 = vadd.f32 %v1279, %v1317
    %v1354 = vadd.f32 %v1280, %v1318
    %v1355 = vadd.f32 %v1281, %v1319
    %v1356 = vadd.f32 %v1282, %v1320
    %v1357 = vadd.f32 %v1283, %v1321
    %v1358 = vadd.f32 %v1284, %v1322
    %v1359 = vadd.f32 %v1285, %v1323
    %v1360 = vadd.f32 %v1286, %v1324
    %v1361 = vadd.f32 %v1287, %v1325
    %v1362 = vadd.f32 %v1288, %v1326
    %v1363 = vadd.f32 %v1289, %v1327
    %v1364 = vadd.f32 %v1290, %v1328
    %v1365 = vadd.f32 %v1291, %v1329
    %v1366 = vadd.f32 %v1292, %v1330
    %v1367 = vadd.f32 %v1293, %v1331
    %v1368 = vadd.f32 %v1294, %v1332
    %v1369 = vadd.f32 %v1295, %v1333
    %v1370 = vadd.f32 %v1296, %v1334
    %v1371 = vadd.f32 %v1297, %v1335
    %v1372 = vadd.f32 %v1298, %v1336
    %v1373 = vadd.f32 %v1299, %v1337
    %v1374 = vadd.f32 %v1300, %v1338
    %v1375 = vadd.f32 %v1301, %v1339
    %v1376 = vadd.f32 %v1302, %v1340
    %v1377 = vadd.f32 %v1303, %v1341
    %v1378 = vadd.f32 %v1304, %v1342
    %v1379 = vadd.f32 %v1305, %v1343
    %v1380 = vadd.f32 %v1306, %v1344
    %v1381 = vadd.f32 %v1307, %v1345
    %v1382 = vadd.f32 %v1308, %v1346
    %v1383 = vadd.f32 %v1309, %v1347
    %s1384 = sld [smem:[#allocation5]]
    %v1385 = vstv %s1384
    %v1386 = vadd.f32 %v1348, %v1385
    %v1387 = vadd.f32 %v1349, %v1385
    %v1388 = vadd.f32 %v1350, %v1385
    %v1389 = vadd.f32 %v1351, %v1385
    %v1390 = vadd.f32 %v1352, %v1385
    %v1391 = vadd.f32 %v1353, %v1385
    %v1392 = vadd.f32 %v1354, %v1385
    %v1393 = vadd.f32 %v1355, %v1385
    %v1394 = vadd.f32 %v1356, %v1385
    %v1395 = vadd.f32 %v1357, %v1385
    %v1396 = vadd.f32 %v1358, %v1385
    %v1397 = vadd.f32 %v1359, %v1385
    %v1398 = vadd.f32 %v1360, %v1385
    %v1399 = vadd.f32 %v1361, %v1385
    %v1400 = vadd.f32 %v1362, %v1385
    %v1401 = vadd.f32 %v1363, %v1385
    %v1402 = vadd.f32 %v1364, %v1385
    %v1403 = vadd.f32 %v1365, %v1385
    %v1404 = vadd.f32 %v1366, %v1385
    %v1405 = vadd.f32 %v1367, %v1385
    %v1406 = vadd.f32 %v1368, %v1385
    %v1407 = vadd.f32 %v1369, %v1385
    %v1408 = vadd.f32 %v1370, %v1385
    %v1409 = vadd.f32 %v1371, %v1385
    %v1410 = vadd.f32 %v1372, %v1385
    %v1411 = vadd.f32 %v1373, %v1385
    %v1412 = vadd.f32 %v1374, %v1385
    %v1413 = vadd.f32 %v1375, %v1385
    %v1414 = vadd.f32 %v1376, %v1385
    %v1415 = vadd.f32 %v1377, %v1385
    %v1416 = vadd.f32 %v1378, %v1385
    %v1417 = vadd.f32 %v1379, %v1385
    %v1418 = vadd.f32 %v1380, %v1385
    %v1419 = vadd.f32 %v1381, %v1385
    %v1420 = vadd.f32 %v1382, %v1385
    %v1421 = vadd.f32 %v1383, %v1385
    %v1422 = vmax.f32 %v1386, 0.0
    %v1423 = vmax.f32 %v1387, 0.0
    %v1424 = vmax.f32 %v1388, 0.0
    %v1425 = vmax.f32 %v1389, 0.0
    %v1426 = vmax.f32 %v1390, 0.0
    %v1427 = vmax.f32 %v1391, 0.0
    %v1428 = vmax.f32 %v1392, 0.0
    %v1429 = vmax.f32 %v1393, 0.0
    %v1430 = vmax.f32 %v1394, 0.0
    %v1431 = vmax.f32 %v1395, 0.0
    %v1432 = vmax.f32 %v1396, 0.0
    %v1433 = vmax.f32 %v1397, 0.0
    %v1434 = vmax.f32 %v1398, 0.0
    %v1435 = vmax.f32 %v1399, 0.0
    %v1436 = vmax.f32 %v1400, 0.0
    %v1437 = vmax.f32 %v1401, 0.0
    %v1438 = vmax.f32 %v1402, 0.0
    %v1439 = vmax.f32 %v1403, 0.0
    %v1440 = vmax.f32 %v1404, 0.0
    %v1441 = vmax.f32 %v1405, 0.0
    %v1442 = vmax.f32 %v1406, 0.0
    %v1443 = vmax.f32 %v1407, 0.0
    %v1444 = vmax.f32 %v1408, 0.0
    %v1445 = vmax.f32 %v1409, 0.0
    %v1446 = vmax.f32 %v1410, 0.0
    %v1447 = vmax.f32 %v1411, 0.0
    %v1448 = vmax.f32 %v1412, 0.0
    %v1449 = vmax.f32 %v1413, 0.0
    %v1450 = vmax.f32 %v1414, 0.0
    %v1451 = vmax.f32 %v1415, 0.0
    %v1452 = vmax.f32 %v1416, 0.0
    %v1453 = vmax.f32 %v1417, 0.0
    %v1454 = vmax.f32 %v1418, 0.0
    %v1455 = vmax.f32 %v1419, 0.0
    %v1456 = vmax.f32 %v1420, 0.0
    %v1457 = vmax.f32 %v1421, 0.0
    %v1459 = vperm.slane %v753, 0
    %v1460 = vperm.slane %v753, 1
    %v1461 = vperm.slane %v753, 2
    %vm1464 = vcmask 261120
    %v1465 = vsel %vm1464, %v1461, 0
    %1467 = vmatpush.msra.mxu0 %v1437
    %1468 = vmatpush.msra.mxu0 %v1436
    %1469 = vmatpush.msra.mxu0 %v1435
    %1470 = vmatpush.msra.mxu0 %v1434
    %1471 = vmatpush.msra.mxu0 %v1433
    %1472 = vmatpush.msra.mxu0 %v1432
    %1473 = vmatpush.msra.mxu0 %v1431
    %1474 = vmatpush.msra.mxu0 %v1430
    %1475 = vmatpush.msra.mxu0 %v1429
    %1476 = vmatpush.msra.mxu0 %v1428
    %1477 = vmatpush.msra.mxu0 %v1427
    %1478 = vmatpush.msra.mxu0 %v1426
    %1479 = vmatpush.msra.mxu0 %v1425
    %1480 = vmatpush.msra.mxu0 %v1424
    %1481 = vmatpush.msra.mxu0 %v1423
    %1482 = vmatpush.msra.mxu0 %v1422
    %1483 = vmatmul.f32.gmra.mxu0 %v1459
    %v1484 = vpop.f32.mrf.mxu0
    %v1485 = vadd.f32 0.0, %v1484
    %1486 = vdwg.mxu0
    %1487 = vmatpush.msra.mxu0 %v1453
    %1488 = vmatpush.msra.mxu0 %v1452
    %1489 = vmatpush.msra.mxu0 %v1451
    %1490 = vmatpush.msra.mxu0 %v1450
    %1491 = vmatpush.msra.mxu0 %v1449
    %1492 = vmatpush.msra.mxu0 %v1448
    %1493 = vmatpush.msra.mxu0 %v1447
    %1494 = vmatpush.msra.mxu0 %v1446
    %1495 = vmatpush.msra.mxu0 %v1445
    %1496 = vmatpush.msra.mxu0 %v1444
    %1497 = vmatpush.msra.mxu0 %v1443
    %1498 = vmatpush.msra.mxu0 %v1442
    %1499 = vmatpush.msra.mxu0 %v1441
    %1500 = vmatpush.msra.mxu0 %v1440
    %1501 = vmatpush.msra.mxu0 %v1439
    %1502 = vmatpush.msra.mxu0 %v1438
    %1503 = vmatmul.f32.gmra.mxu0 %v1460
    %v1504 = vpop.f32.mrf.mxu0
    %v1505 = vadd.f32 %v1485, %v1504
    %1506 = vdwg.mxu0
    %1507 = vmatpush.msra.mxu0 0.0
    %1508 = vmatpush.msra.mxu0 0.0
    %1509 = vmatpush.msra.mxu0 0.0
    %1510 = vmatpush.msra.mxu0 0.0
    %1511 = vmatpush.msra.mxu0 0.0
    %1512 = vmatpush.msra.mxu0 0.0
    %1513 = vmatpush.msra.mxu0 0.0
    %1514 = vmatpush.msra.mxu0 0.0
    %1515 = vmatpush.msra.mxu0 0.0
    %1516 = vmatpush.msra.mxu0 0.0
    %1517 = vmatpush.msra.mxu0 0.0
    %1518 = vmatpush.msra.mxu0 0.0
    %1519 = vmatpush.msra.mxu0 %v1457
    %1520 = vmatpush.msra.mxu0 %v1456
    %1521 = vmatpush.msra.mxu0 %v1455
    %1522 = vmatpush.msra.mxu0 %v1454
    %1523 = vmatmul.f32.gmra.mxu0 %v1465
    %v1524 = vpop.f32.mrf.mxu0
    %v1525 = vadd.f32 %v1505, %v1524
    %1526 = vdwg.mxu0
    %s1527 = sld [smem:[#allocation3 + $0x9]]
    %v1528 = vstv %s1527
    %v1529 = vmul.f32 %v497, %v1528
    %v1530 = vmul.f32 %v498, %v1528
    %v1531 = vmul.f32 %v499, %v1528
    %v1532 = vmul.f32 %v500, %v1528
    %v1533 = vmul.f32 %v501, %v1528
    %v1534 = vmul.f32 %v502, %v1528
    %v1535 = vmul.f32 %v503, %v1528
    %v1536 = vmul.f32 %v504, %v1528
    %v1537 = vmul.f32 %v505, %v1528
    %v1538 = vmul.f32 %v506, %v1528
    %v1539 = vmul.f32 %v507, %v1528
    %v1540 = vmul.f32 %v508, %v1528
    %v1541 = vmul.f32 %v509, %v1528
    %v1542 = vmul.f32 %v510, %v1528
    %v1543 = vmul.f32 %v511, %v1528
    %v1544 = vmul.f32 %v512, %v1528
    %v1545 = vmul.f32 %v513, %v1528
    %v1546 = vmul.f32 %v514, %v1528
    %v1547 = vmul.f32 %v515, %v1528
    %v1548 = vmul.f32 %v516, %v1528
    %v1549 = vmul.f32 %v517, %v1528
    %v1550 = vmul.f32 %v518, %v1528
    %v1551 = vmul.f32 %v519, %v1528
    %v1552 = vmul.f32 %v520, %v1528
    %v1553 = vmul.f32 %v521, %v1528
    %v1554 = vmul.f32 %v522, %v1528
    %v1555 = vmul.f32 %v523, %v1528
    %v1556 = vmul.f32 %v524, %v1528
    %v1557 = vmul.f32 %v525, %v1528
    %v1558 = vmul.f32 %v526, %v1528
    %v1559 = vmul.f32 %v527, %v1528
    %v1560 = vmul.f32 %v528, %v1528
    %v1561 = vmul.f32 %v529, %v1528
    %v1562 = vmul.f32 %v530, %v1528
    %v1563 = vmul.f32 %v531, %v1528
    %v1564 = vmul.f32 %v532, %v1528
    %s1565 = sld [smem:[#allocation3 + $0xa]]
    %v1566 = vstv %s1565
    %v1567 = vmul.f32 %v533, %v1566
    %v1568 = vmul.f32 %v534, %v1566
    %v1569 = vmul.f32 %v535, %v1566
    %v1570 = vmul.f32 %v536, %v1566
    %v1571 = vmul.f32 %v537, %v1566
    %v1572 = vmul.f32 %v538, %v1566
    %v1573 = vmul.f32 %v539, %v1566
    %v1574 = vmul.f32 %v540, %v1566
    %v1575 = vmul.f32 %v541, %v1566
    %v1576 = vmul.f32 %v542, %v1566
    %v1577 = vmul.f32 %v543, %v1566
    %v1578 = vmul.f32 %v544, %v1566
    %v1579 = vmul.f32 %v545, %v1566
    %v1580 = vmul.f32 %v546, %v1566
    %v1581 = vmul.f32 %v547, %v1566
    %v1582 = vmul.f32 %v548, %v1566
    %v1583 = vmul.f32 %v549, %v1566
    %v1584 = vmul.f32 %v550, %v1566
    %v1585 = vmul.f32 %v551, %v1566
    %v1586 = vmul.f32 %v552, %v1566
    %v1587 = vmul.f32 %v553, %v1566
    %v1588 = vmul.f32 %v554, %v1566
    %v1589 = vmul.f32 %v555, %v1566
    %v1590 = vmul.f32 %v556, %v1566
    %v1591 = vmul.f32 %v557, %v1566
    %v1592 = vmul.f32 %v558, %v1566
    %v1593 = vmul.f32 %v559, %v1566
    %v1594 = vmul.f32 %v560, %v1566
    %v1595 = vmul.f32 %v561, %v1566
    %v1596 = vmul.f32 %v562, %v1566
    %v1597 = vmul.f32 %v563, %v1566
    %v1598 = vmul.f32 %v564, %v1566
    %v1599 = vmul.f32 %v565, %v1566
    %v1600 = vmul.f32 %v566, %v1566
    %v1601 = vmul.f32 %v567, %v1566
    %v1602 = vmul.f32 %v568, %v1566
    %v1603 = vadd.f32 %v1529, %v1567
    %v1604 = vadd.f32 %v1530, %v1568
    %v1605 = vadd.f32 %v1531, %v1569
    %v1606 = vadd.f32 %v1532, %v1570
    %v1607 = vadd.f32 %v1533, %v1571
    %v1608 = vadd.f32 %v1534, %v1572
    %v1609 = vadd.f32 %v1535, %v1573
    %v1610 = vadd.f32 %v1536, %v1574
    %v1611 = vadd.f32 %v1537, %v1575
    %v1612 = vadd.f32 %v1538, %v1576
    %v1613 = vadd.f32 %v1539, %v1577
    %v1614 = vadd.f32 %v1540, %v1578
    %v1615 = vadd.f32 %v1541, %v1579
    %v1616 = vadd.f32 %v1542, %v1580
    %v1617 = vadd.f32 %v1543, %v1581
    %v1618 = vadd.f32 %v1544, %v1582
    %v1619 = vadd.f32 %v1545, %v1583
    %v1620 = vadd.f32 %v1546, %v1584
    %v1621 = vadd.f32 %v1547, %v1585
    %v1622 = vadd.f32 %v1548, %v1586
    %v1623 = vadd.f32 %v1549, %v1587
    %v1624 = vadd.f32 %v1550, %v1588
    %v1625 = vadd.f32 %v1551, %v1589
    %v1626 = vadd.f32 %v1552, %v1590
    %v1627 = vadd.f32 %v1553, %v1591
    %v1628 = vadd.f32 %v1554, %v1592
    %v1629 = vadd.f32 %v1555, %v1593
    %v1630 = vadd.f32 %v1556, %v1594
    %v1631 = vadd.f32 %v1557, %v1595
    %v1632 = vadd.f32 %v1558, %v1596
    %v1633 = vadd.f32 %v1559, %v1597
    %v1634 = vadd.f32 %v1560, %v1598
    %v1635 = vadd.f32 %v1561, %v1599
    %v1636 = vadd.f32 %v1562, %v1600
    %v1637 = vadd.f32 %v1563, %v1601
    %v1638 = vadd.f32 %v1564, %v1602
    %s1639 = sld [smem:[#allocation3 + $0xb]]
    %v1640 = vstv %s1639
    %v1641 = vmul.f32 %v569, %v1640
    %v1642 = vmul.f32 %v570, %v1640
    %v1643 = vmul.f32 %v571, %v1640
    %v1644 = vmul.f32 %v572, %v1640
    %v1645 = vmul.f32 %v573, %v1640
    %v1646 = vmul.f32 %v574, %v1640
    %v1647 = vmul.f32 %v575, %v1640
    %v1648 = vmul.f32 %v576, %v1640
    %v1649 = vmul.f32 %v577, %v1640
    %v1650 = vmul.f32 %v578, %v1640
    %v1651 = vmul.f32 %v579, %v1640
    %v1652 = vmul.f32 %v580, %v1640
    %v1653 = vmul.f32 %v581, %v1640
    %v1654 = vmul.f32 %v582, %v1640
    %v1655 = vmul.f32 %v583, %v1640
    %v1656 = vmul.f32 %v584, %v1640
    %v1657 = vmul.f32 %v585, %v1640
    %v1658 = vmul.f32 %v586, %v1640
    %v1659 = vmul.f32 %v587, %v1640
    %v1660 = vmul.f32 %v588, %v1640
    %v1661 = vmul.f32 %v589, %v1640
    %v1662 = vmul.f32 %v590, %v1640
    %v1663 = vmul.f32 %v591, %v1640
    %v1664 = vmul.f32 %v592, %v1640
    %v1665 = vmul.f32 %v593, %v1640
    %v1666 = vmul.f32 %v594, %v1640
    %v1667 = vmul.f32 %v595, %v1640
    %v1668 = vmul.f32 %v596, %v1640
    %v1669 = vmul.f32 %v597, %v1640
    %v1670 = vmul.f32 %v598, %v1640
    %v1671 = vmul.f32 %v599, %v1640
    %v1672 = vmul.f32 %v600, %v1640
    %v1673 = vmul.f32 %v601, %v1640
    %v1674 = vmul.f32 %v602, %v1640
    %v1675 = vmul.f32 %v603, %v1640
    %v1676 = vmul.f32 %v604, %v1640
    %v1677 = vadd.f32 %v1603, %v1641
    %v1678 = vadd.f32 %v1604, %v1642
    %v1679 = vadd.f32 %v1605, %v1643
    %v1680 = vadd.f32 %v1606, %v1644
    %v1681 = vadd.f32 %v1607, %v1645
    %v1682 = vadd.f32 %v1608, %v1646
    %v1683 = vadd.f32 %v1609, %v1647
    %v1684 = vadd.f32 %v1610, %v1648
    %v1685 = vadd.f32 %v1611, %v1649
    %v1686 = vadd.f32 %v1612, %v1650
    %v1687 = vadd.f32 %v1613, %v1651
    %v1688 = vadd.f32 %v1614, %v1652
    %v1689 = vadd.f32 %v1615, %v1653
    %v1690 = vadd.f32 %v1616, %v1654
    %v1691 = vadd.f32 %v1617, %v1655
    %v1692 = vadd.f32 %v1618, %v1656
    %v1693 = vadd.f32 %v1619, %v1657
    %v1694 = vadd.f32 %v1620, %v1658
    %v1695 = vadd.f32 %v1621, %v1659
    %v1696 = vadd.f32 %v1622, %v1660
    %v1697 = vadd.f32 %v1623, %v1661
    %v1698 = vadd.f32 %v1624, %v1662
    %v1699 = vadd.f32 %v1625, %v1663
    %v1700 = vadd.f32 %v1626, %v1664
    %v1701 = vadd.f32 %v1627, %v1665
    %v1702 = vadd.f32 %v1628, %v1666
    %v1703 = vadd.f32 %v1629, %v1667
    %v1704 = vadd.f32 %v1630, %v1668
    %v1705 = vadd.f32 %v1631, %v1669
    %v1706 = vadd.f32 %v1632, %v1670
    %v1707 = vadd.f32 %v1633, %v1671
    %v1708 = vadd.f32 %v1634, %v1672
    %v1709 = vadd.f32 %v1635, %v1673
    %v1710 = vadd.f32 %v1636, %v1674
    %v1711 = vadd.f32 %v1637, %v1675
    %v1712 = vadd.f32 %v1638, %v1676
    %s1713 = sld [smem:[#allocation3 + $0xc]]
    %v1714 = vstv %s1713
    %v1715 = vmul.f32 %v571, %v1714
    %v1716 = vmul.f32 %v572, %v1714
    %v1717 = vmul.f32 %v573, %v1714
    %v1718 = vmul.f32 %v574, %v1714
    %v1719 = vmul.f32 %v575, %v1714
    %v1720 = vmul.f32 %v576, %v1714
    %v1721 = vmul.f32 %v577, %v1714
    %v1722 = vmul.f32 %v578, %v1714
    %v1723 = vmul.f32 %v579, %v1714
    %v1724 = vmul.f32 %v580, %v1714
    %v1725 = vmul.f32 %v581, %v1714
    %v1726 = vmul.f32 %v582, %v1714
    %v1727 = vmul.f32 %v583, %v1714
    %v1728 = vmul.f32 %v584, %v1714
    %v1729 = vmul.f32 %v585, %v1714
    %v1730 = vmul.f32 %v586, %v1714
    %v1731 = vmul.f32 %v587, %v1714
    %v1732 = vmul.f32 %v588, %v1714
    %v1733 = vmul.f32 %v589, %v1714
    %v1734 = vmul.f32 %v590, %v1714
    %v1735 = vmul.f32 %v591, %v1714
    %v1736 = vmul.f32 %v592, %v1714
    %v1737 = vmul.f32 %v593, %v1714
    %v1738 = vmul.f32 %v594, %v1714
    %v1739 = vmul.f32 %v595, %v1714
    %v1740 = vmul.f32 %v596, %v1714
    %v1741 = vmul.f32 %v597, %v1714
    %v1742 = vmul.f32 %v598, %v1714
    %v1743 = vmul.f32 %v599, %v1714
    %v1744 = vmul.f32 %v600, %v1714
    %v1745 = vmul.f32 %v601, %v1714
    %v1746 = vmul.f32 %v602, %v1714
    %v1747 = vmul.f32 %v603, %v1714
    %v1748 = vmul.f32 %v604, %v1714
    %v1749 = vmul.f32 %v605, %v1714
    %v1750 = vmul.f32 %v606, %v1714
    %v1751 = vadd.f32 %v1677, %v1715
    %v1752 = vadd.f32 %v1678, %v1716
    %v1753 = vadd.f32 %v1679, %v1717
    %v1754 = vadd.f32 %v1680, %v1718
    %v1755 = vadd.f32 %v1681, %v1719
    %v1756 = vadd.f32 %v1682, %v1720
    %v1757 = vadd.f32 %v1683, %v1721
    %v1758 = vadd.f32 %v1684, %v1722
    %v1759 = vadd.f32 %v1685, %v1723
    %v1760 = vadd.f32 %v1686, %v1724
    %v1761 = vadd.f32 %v1687, %v1725
    %v1762 = vadd.f32 %v1688, %v1726
    %v1763 = vadd.f32 %v1689, %v1727
    %v1764 = vadd.f32 %v1690, %v1728
    %v1765 = vadd.f32 %v1691, %v1729
    %v1766 = vadd.f32 %v1692, %v1730
    %v1767 = vadd.f32 %v1693, %v1731
    %v1768 = vadd.f32 %v1694, %v1732
    %v1769 = vadd.f32 %v1695, %v1733
    %v1770 = vadd.f32 %v1696, %v1734
    %v1771 = vadd.f32 %v1697, %v1735
    %v1772 = vadd.f32 %v1698, %v1736
    %v1773 = vadd.f32 %v1699, %v1737
    %v1774 = vadd.f32 %v1700, %v1738
    %v1775 = vadd.f32 %v1701, %v1739
    %v1776 = vadd.f32 %v1702, %v1740
    %v1777 = vadd.f32 %v1703, %v1741
    %v1778 = vadd.f32 %v1704, %v1742
    %v1779 = vadd.f32 %v1705, %v1743
    %v1780 = vadd.f32 %v1706, %v1744
    %v1781 = vadd.f32 %v1707, %v1745
    %v1782 = vadd.f32 %v1708, %v1746
    %v1783 = vadd.f32 %v1709, %v1747
    %v1784 = vadd.f32 %v1710, %v1748
    %v1785 = vadd.f32 %v1711, %v1749
    %v1786 = vadd.f32 %v1712, %v1750
    %s1787 = sld [smem:[#allocation3 + $0xd]]
    %v1788 = vstv %s1787
    %v1789 = vmul.f32 %v607, %v1788
    %v1790 = vmul.f32 %v608, %v1788
    %v1791 = vmul.f32 %v609, %v1788
    %v1792 = vmul.f32 %v610, %v1788
    %v1793 = vmul.f32 %v611, %v1788
    %v1794 = vmul.f32 %v612, %v1788
    %v1795 = vmul.f32 %v613, %v1788
    %v1796 = vmul.f32 %v614, %v1788
    %v1797 = vmul.f32 %v615, %v1788
    %v1798 = vmul.f32 %v616, %v1788
    %v1799 = vmul.f32 %v617, %v1788
    %v1800 = vmul.f32 %v618, %v1788
    %v1801 = vmul.f32 %v619, %v1788
    %v1802 = vmul.f32 %v620, %v1788
    %v1803 = vmul.f32 %v621, %v1788
    %v1804 = vmul.f32 %v622, %v1788
    %v1805 = vmul.f32 %v623, %v1788
    %v1806 = vmul.f32 %v624, %v1788
    %v1807 = vmul.f32 %v625, %v1788
    %v1808 = vmul.f32 %v626, %v1788
    %v1809 = vmul.f32 %v627, %v1788
    %v1810 = vmul.f32 %v628, %v1788
    %v1811 = vmul.f32 %v629, %v1788
    %v1812 = vmul.f32 %v630, %v1788
    %v1813 = vmul.f32 %v631, %v1788
    %v1814 = vmul.f32 %v632, %v1788
    %v1815 = vmul.f32 %v633, %v1788
    %v1816 = vmul.f32 %v634, %v1788
    %v1817 = vmul.f32 %v635, %v1788
    %v1818 = vmul.f32 %v636, %v1788
    %v1819 = vmul.f32 %v637, %v1788
    %v1820 = vmul.f32 %v638, %v1788
    %v1821 = vmul.f32 %v639, %v1788
    %v1822 = vmul.f32 %v640, %v1788
    %v1823 = vmul.f32 %v641, %v1788
    %v1824 = vmul.f32 %v642, %v1788
    %v1825 = vadd.f32 %v1751, %v1789
    %v1826 = vadd.f32 %v1752, %v1790
    %v1827 = vadd.f32 %v1753, %v1791
    %v1828 = vadd.f32 %v1754, %v1792
    %v1829 = vadd.f32 %v1755, %v1793
    %v1830 = vadd.f32 %v1756, %v1794
    %v1831 = vadd.f32 %v1757, %v1795
    %v1832 = vadd.f32 %v1758, %v1796
    %v1833 = vadd.f32 %v1759, %v1797
    %v1834 = vadd.f32 %v1760, %v1798
    %v1835 = vadd.f32 %v1761, %v1799
    %v1836 = vadd.f32 %v1762, %v1800
    %v1837 = vadd.f32 %v1763, %v1801
    %v1838 = vadd.f32 %v1764, %v1802
    %v1839 = vadd.f32 %v1765, %v1803
    %v1840 = vadd.f32 %v1766, %v1804
    %v1841 = vadd.f32 %v1767, %v1805
    %v1842 = vadd.f32 %v1768, %v1806
    %v1843 = vadd.f32 %v1769, %v1807
    %v1844 = vadd.f32 %v1770, %v1808
    %v1845 = vadd.f32 %v1771, %v1809
    %v1846 = vadd.f32 %v1772, %v1810
    %v1847 = vadd.f32 %v1773, %v1811
    %v1848 = vadd.f32 %v1774, %v1812
    %v1849 = vadd.f32 %v1775, %v1813
    %v1850 = vadd.f32 %v1776, %v1814
    %v1851 = vadd.f32 %v1777, %v1815
    %v1852 = vadd.f32 %v1778, %v1816
    %v1853 = vadd.f32 %v1779, %v1817
    %v1854 = vadd.f32 %v1780, %v1818
    %v1855 = vadd.f32 %v1781, %v1819
    %v1856 = vadd.f32 %v1782, %v1820
    %v1857 = vadd.f32 %v1783, %v1821
    %v1858 = vadd.f32 %v1784, %v1822
    %v1859 = vadd.f32 %v1785, %v1823
    %v1860 = vadd.f32 %v1786, %v1824
    %s1861 = sld [smem:[#allocation3 + $0xe]]
    %v1862 = vstv %s1861
    %v1863 = vmul.f32 %v643, %v1862
    %v1864 = vmul.f32 %v644, %v1862
    %v1865 = vmul.f32 %v645, %v1862
    %v1866 = vmul.f32 %v646, %v1862
    %v1867 = vmul.f32 %v647, %v1862
    %v1868 = vmul.f32 %v648, %v1862
    %v1869 = vmul.f32 %v649, %v1862
    %v1870 = vmul.f32 %v650, %v1862
    %v1871 = vmul.f32 %v651, %v1862
    %v1872 = vmul.f32 %v652, %v1862
    %v1873 = vmul.f32 %v653, %v1862
    %v1874 = vmul.f32 %v654, %v1862
    %v1875 = vmul.f32 %v655, %v1862
    %v1876 = vmul.f32 %v656, %v1862
    %v1877 = vmul.f32 %v657, %v1862
    %v1878 = vmul.f32 %v658, %v1862
    %v1879 = vmul.f32 %v659, %v1862
    %v1880 = vmul.f32 %v660, %v1862
    %v1881 = vmul.f32 %v661, %v1862
    %v1882 = vmul.f32 %v662, %v1862
    %v1883 = vmul.f32 %v663, %v1862
    %v1884 = vmul.f32 %v664, %v1862
    %v1885 = vmul.f32 %v665, %v1862
    %v1886 = vmul.f32 %v666, %v1862
    %v1887 = vmul.f32 %v667, %v1862
    %v1888 = vmul.f32 %v668, %v1862
    %v1889 = vmul.f32 %v669, %v1862
    %v1890 = vmul.f32 %v670, %v1862
    %v1891 = vmul.f32 %v671, %v1862
    %v1892 = vmul.f32 %v672, %v1862
    %v1893 = vmul.f32 %v673, %v1862
    %v1894 = vmul.f32 %v674, %v1862
    %v1895 = vmul.f32 %v675, %v1862
    %v1896 = vmul.f32 %v676, %v1862
    %v1897 = vmul.f32 %v677, %v1862
    %v1898 = vmul.f32 %v678, %v1862
    %v1899 = vadd.f32 %v1825, %v1863
    %v1900 = vadd.f32 %v1826, %v1864
    %v1901 = vadd.f32 %v1827, %v1865
    %v1902 = vadd.f32 %v1828, %v1866
    %v1903 = vadd.f32 %v1829, %v1867
    %v1904 = vadd.f32 %v1830, %v1868
    %v1905 = vadd.f32 %v1831, %v1869
    %v1906 = vadd.f32 %v1832, %v1870
    %v1907 = vadd.f32 %v1833, %v1871
    %v1908 = vadd.f32 %v1834, %v1872
    %v1909 = vadd.f32 %v1835, %v1873
    %v1910 = vadd.f32 %v1836, %v1874
    %v1911 = vadd.f32 %v1837, %v1875
    %v1912 = vadd.f32 %v1838, %v1876
    %v1913 = vadd.f32 %v1839, %v1877
    %v1914 = vadd.f32 %v1840, %v1878
    %v1915 = vadd.f32 %v1841, %v1879
    %v1916 = vadd.f32 %v1842, %v1880
    %v1917 = vadd.f32 %v1843, %v1881
    %v1918 = vadd.f32 %v1844, %v1882
    %v1919 = vadd.f32 %v1845, %v1883
    %v1920 = vadd.f32 %v1846, %v1884
    %v1921 = vadd.f32 %v1847, %v1885
    %v1922 = vadd.f32 %v1848, %v1886
    %v1923 = vadd.f32 %v1849, %v1887
    %v1924 = vadd.f32 %v1850, %v1888
    %v1925 = vadd.f32 %v1851, %v1889
    %v1926 = vadd.f32 %v1852, %v1890
    %v1927 = vadd.f32 %v1853, %v1891
    %v1928 = vadd.f32 %v1854, %v1892
    %v1929 = vadd.f32 %v1855, %v1893
    %v1930 = vadd.f32 %v1856, %v1894
    %v1931 = vadd.f32 %v1857, %v1895
    %v1932 = vadd.f32 %v1858, %v1896
    %v1933 = vadd.f32 %v1859, %v1897
    %v1934 = vadd.f32 %v1860, %v1898
    %s1935 = sld [smem:[#allocation3 + $0xf]]
    %v1936 = vstv %s1935
    %v1937 = vmul.f32 %v645, %v1936
    %v1938 = vmul.f32 %v646, %v1936
    %v1939 = vmul.f32 %v647, %v1936
    %v1940 = vmul.f32 %v648, %v1936
    %v1941 = vmul.f32 %v649, %v1936
    %v1942 = vmul.f32 %v650, %v1936
    %v1943 = vmul.f32 %v651, %v1936
    %v1944 = vmul.f32 %v652, %v1936
    %v1945 = vmul.f32 %v653, %v1936
    %v1946 = vmul.f32 %v654, %v1936
    %v1947 = vmul.f32 %v655, %v1936
    %v1948 = vmul.f32 %v656, %v1936
    %v1949 = vmul.f32 %v657, %v1936
    %v1950 = vmul.f32 %v658, %v1936
    %v1951 = vmul.f32 %v659, %v1936
    %v1952 = vmul.f32 %v660, %v1936
    %v1953 = vmul.f32 %v661, %v1936
    %v1954 = vmul.f32 %v662, %v1936
    %v1955 = vmul.f32 %v663, %v1936
    %v1956 = vmul.f32 %v664, %v1936
    %v1957 = vmul.f32 %v665, %v1936
    %v1958 = vmul.f32 %v666, %v1936
    %v1959 = vmul.f32 %v667, %v1936
    %v1960 = vmul.f32 %v668, %v1936
    %v1961 = vmul.f32 %v669, %v1936
    %v1962 = vmul.f32 %v670, %v1936
    %v1963 = vmul.f32 %v671, %v1936
    %v1964 = vmul.f32 %v672, %v1936
    %v1965 = vmul.f32 %v673, %v1936
    %v1966 = vmul.f32 %v674, %v1936
    %v1967 = vmul.f32 %v675, %v1936
    %v1968 = vmul.f32 %v676, %v1936
    %v1969 = vmul.f32 %v677, %v1936
    %v1970 = vmul.f32 %v678, %v1936
    %v1971 = vmul.f32 %v679, %v1936
    %v1972 = vmul.f32 %v680, %v1936
    %v1973 = vadd.f32 %v1899, %v1937
    %v1974 = vadd.f32 %v1900, %v1938
    %v1975 = vadd.f32 %v1901, %v1939
    %v1976 = vadd.f32 %v1902, %v1940
    %v1977 = vadd.f32 %v1903, %v1941
    %v1978 = vadd.f32 %v1904, %v1942
    %v1979 = vadd.f32 %v1905, %v1943
    %v1980 = vadd.f32 %v1906, %v1944
    %v1981 = vadd.f32 %v1907, %v1945
    %v1982 = vadd.f32 %v1908, %v1946
    %v1983 = vadd.f32 %v1909, %v1947
    %v1984 = vadd.f32 %v1910, %v1948
    %v1985 = vadd.f32 %v1911, %v1949
    %v1986 = vadd.f32 %v1912, %v1950
    %v1987 = vadd.f32 %v1913, %v1951
    %v1988 = vadd.f32 %v1914, %v1952
    %v1989 = vadd.f32 %v1915, %v1953
    %v1990 = vadd.f32 %v1916, %v1954
    %v1991 = vadd.f32 %v1917, %v1955
    %v1992 = vadd.f32 %v1918, %v1956
    %v1993 = vadd.f32 %v1919, %v1957
    %v1994 = vadd.f32 %v1920, %v1958
    %v1995 = vadd.f32 %v1921, %v1959
    %v1996 = vadd.f32 %v1922, %v1960
    %v1997 = vadd.f32 %v1923, %v1961
    %v1998 = vadd.f32 %v1924, %v1962
    %v1999 = vadd.f32 %v1925, %v1963
    %v2000 = vadd.f32 %v1926, %v1964
    %v2001 = vadd.f32 %v1927, %v1965
    %v2002 = vadd.f32 %v1928, %v1966
    %v2003 = vadd.f32 %v1929, %v1967
    %v2004 = vadd.f32 %v1930, %v1968
    %v2005 = vadd.f32 %v1931, %v1969
    %v2006 = vadd.f32 %v1932, %v1970
    %v2007 = vadd.f32 %v1933, %v1971
    %v2008 = vadd.f32 %v1934, %v1972
    %s2009 = sld [smem:[#allocation3 + $0x10]]
    %v2010 = vstv %s2009
    %v2011 = vmul.f32 %v681, %v2010
    %v2012 = vmul.f32 %v682, %v2010
    %v2013 = vmul.f32 %v683, %v2010
    %v2014 = vmul.f32 %v684, %v2010
    %v2015 = vmul.f32 %v685, %v2010
    %v2016 = vmul.f32 %v686, %v2010
    %v2017 = vmul.f32 %v687, %v2010
    %v2018 = vmul.f32 %v688, %v2010
    %v2019 = vmul.f32 %v689, %v2010
    %v2020 = vmul.f32 %v690, %v2010
    %v2021 = vmul.f32 %v691, %v2010
    %v2022 = vmul.f32 %v692, %v2010
    %v2023 = vmul.f32 %v693, %v2010
    %v2024 = vmul.f32 %v694, %v2010
    %v2025 = vmul.f32 %v695, %v2010
    %v2026 = vmul.f32 %v696, %v2010
    %v2027 = vmul.f32 %v697, %v2010
    %v2028 = vmul.f32 %v698, %v2010
    %v2029 = vmul.f32 %v699, %v2010
    %v2030 = vmul.f32 %v700, %v2010
    %v2031 = vmul.f32 %v701, %v2010
    %v2032 = vmul.f32 %v702, %v2010
    %v2033 = vmul.f32 %v703, %v2010
    %v2034 = vmul.f32 %v704, %v2010
    %v2035 = vmul.f32 %v705, %v2010
    %v2036 = vmul.f32 %v706, %v2010
    %v2037 = vmul.f32 %v707, %v2010
    %v2038 = vmul.f32 %v708, %v2010
    %v2039 = vmul.f32 %v709, %v2010
    %v2040 = vmul.f32 %v710, %v2010
    %v2041 = vmul.f32 %v711, %v2010
    %v2042 = vmul.f32 %v712, %v2010
    %v2043 = vmul.f32 %v713, %v2010
    %v2044 = vmul.f32 %v714, %v2010
    %v2045 = vmul.f32 %v715, %v2010
    %v2046 = vmul.f32 %v716, %v2010
    %v2047 = vadd.f32 %v1973, %v2011
    %v2048 = vadd.f32 %v1974, %v2012
    %v2049 = vadd.f32 %v1975, %v2013
    %v2050 = vadd.f32 %v1976, %v2014
    %v2051 = vadd.f32 %v1977, %v2015
    %v2052 = vadd.f32 %v1978, %v2016
    %v2053 = vadd.f32 %v1979, %v2017
    %v2054 = vadd.f32 %v1980, %v2018
    %v2055 = vadd.f32 %v1981, %v2019
    %v2056 = vadd.f32 %v1982, %v2020
    %v2057 = vadd.f32 %v1983, %v2021
    %v2058 = vadd.f32 %v1984, %v2022
    %v2059 = vadd.f32 %v1985, %v2023
    %v2060 = vadd.f32 %v1986, %v2024
    %v2061 = vadd.f32 %v1987, %v2025
    %v2062 = vadd.f32 %v1988, %v2026
    %v2063 = vadd.f32 %v1989, %v2027
    %v2064 = vadd.f32 %v1990, %v2028
    %v2065 = vadd.f32 %v1991, %v2029
    %v2066 = vadd.f32 %v1992, %v2030
    %v2067 = vadd.f32 %v1993, %v2031
    %v2068 = vadd.f32 %v1994, %v2032
    %v2069 = vadd.f32 %v1995, %v2033
    %v2070 = vadd.f32 %v1996, %v2034
    %v2071 = vadd.f32 %v1997, %v2035
    %v2072 = vadd.f32 %v1998, %v2036
    %v2073 = vadd.f32 %v1999, %v2037
    %v2074 = vadd.f32 %v2000, %v2038
    %v2075 = vadd.f32 %v2001, %v2039
    %v2076 = vadd.f32 %v2002, %v2040
    %v2077 = vadd.f32 %v2003, %v2041
    %v2078 = vadd.f32 %v2004, %v2042
    %v2079 = vadd.f32 %v2005, %v2043
    %v2080 = vadd.f32 %v2006, %v2044
    %v2081 = vadd.f32 %v2007, %v2045
    %v2082 = vadd.f32 %v2008, %v2046
    %s2083 = sld [smem:[#allocation3 + $0x11]]
    %v2084 = vstv %s2083
    %v2085 = vmul.f32 %v717, %v2084
    %v2086 = vmul.f32 %v718, %v2084
    %v2087 = vmul.f32 %v719, %v2084
    %v2088 = vmul.f32 %v720, %v2084
    %v2089 = vmul.f32 %v721, %v2084
    %v2090 = vmul.f32 %v722, %v2084
    %v2091 = vmul.f32 %v723, %v2084
    %v2092 = vmul.f32 %v724, %v2084
    %v2093 = vmul.f32 %v725, %v2084
    %v2094 = vmul.f32 %v726, %v2084
    %v2095 = vmul.f32 %v727, %v2084
    %v2096 = vmul.f32 %v728, %v2084
    %v2097 = vmul.f32 %v729, %v2084
    %v2098 = vmul.f32 %v730, %v2084
    %v2099 = vmul.f32 %v731, %v2084
    %v2100 = vmul.f32 %v732, %v2084
    %v2101 = vmul.f32 %v733, %v2084
    %v2102 = vmul.f32 %v734, %v2084
    %v2103 = vmul.f32 %v735, %v2084
    %v2104 = vmul.f32 %v736, %v2084
    %v2105 = vmul.f32 %v737, %v2084
    %v2106 = vmul.f32 %v738, %v2084
    %v2107 = vmul.f32 %v739, %v2084
    %v2108 = vmul.f32 %v740, %v2084
    %v2109 = vmul.f32 %v741, %v2084
    %v2110 = vmul.f32 %v742, %v2084
    %v2111 = vmul.f32 %v743, %v2084
    %v2112 = vmul.f32 %v744, %v2084
    %v2113 = vmul.f32 %v745, %v2084
    %v2114 = vmul.f32 %v746, %v2084
    %v2115 = vmul.f32 %v747, %v2084
    %v2116 = vmul.f32 %v748, %v2084
    %v2117 = vmul.f32 %v749, %v2084
    %v2118 = vmul.f32 %v750, %v2084
    %v2119 = vmul.f32 %v751, %v2084
    %v2120 = vmul.f32 %v752, %v2084
    %v2121 = vadd.f32 %v2047, %v2085
    %v2122 = vadd.f32 %v2048, %v2086
    %v2123 = vadd.f32 %v2049, %v2087
    %v2124 = vadd.f32 %v2050, %v2088
    %v2125 = vadd.f32 %v2051, %v2089
    %v2126 = vadd.f32 %v2052, %v2090
    %v2127 = vadd.f32 %v2053, %v2091
    %v2128 = vadd.f32 %v2054, %v2092
    %v2129 = vadd.f32 %v2055, %v2093
    %v2130 = vadd.f32 %v2056, %v2094
    %v2131 = vadd.f32 %v2057, %v2095
    %v2132 = vadd.f32 %v2058, %v2096
    %v2133 = vadd.f32 %v2059, %v2097
    %v2134 = vadd.f32 %v2060, %v2098
    %v2135 = vadd.f32 %v2061, %v2099
    %v2136 = vadd.f32 %v2062, %v2100
    %v2137 = vadd.f32 %v2063, %v2101
    %v2138 = vadd.f32 %v2064, %v2102
    %v2139 = vadd.f32 %v2065, %v2103
    %v2140 = vadd.f32 %v2066, %v2104
    %v2141 = vadd.f32 %v2067, %v2105
    %v2142 = vadd.f32 %v2068, %v2106
    %v2143 = vadd.f32 %v2069, %v2107
    %v2144 = vadd.f32 %v2070, %v2108
    %v2145 = vadd.f32 %v2071, %v2109
    %v2146 = vadd.f32 %v2072, %v2110
    %v2147 = vadd.f32 %v2073, %v2111
    %v2148 = vadd.f32 %v2074, %v2112
    %v2149 = vadd.f32 %v2075, %v2113
    %v2150 = vadd.f32 %v2076, %v2114
    %v2151 = vadd.f32 %v2077, %v2115
    %v2152 = vadd.f32 %v2078, %v2116
    %v2153 = vadd.f32 %v2079, %v2117
    %v2154 = vadd.f32 %v2080, %v2118
    %v2155 = vadd.f32 %v2081, %v2119
    %v2156 = vadd.f32 %v2082, %v2120
    %s2157 = sld [smem:[#allocation5 + $0x1]]
    %v2158 = vstv %s2157
    %v2159 = vadd.f32 %v2121, %v2158
    %v2160 = vadd.f32 %v2122, %v2158
    %v2161 = vadd.f32 %v2123, %v2158
    %v2162 = vadd.f32 %v2124, %v2158
    %v2163 = vadd.f32 %v2125, %v2158
    %v2164 = vadd.f32 %v2126, %v2158
    %v2165 = vadd.f32 %v2127, %v2158
    %v2166 = vadd.f32 %v2128, %v2158
    %v2167 = vadd.f32 %v2129, %v2158
    %v2168 = vadd.f32 %v2130, %v2158
    %v2169 = vadd.f32 %v2131, %v2158
    %v2170 = vadd.f32 %v2132, %v2158
    %v2171 = vadd.f32 %v2133, %v2158
    %v2172 = vadd.f32 %v2134, %v2158
    %v2173 = vadd.f32 %v2135, %v2158
    %v2174 = vadd.f32 %v2136, %v2158
    %v2175 = vadd.f32 %v2137, %v2158
    %v2176 = vadd.f32 %v2138, %v2158
    %v2177 = vadd.f32 %v2139, %v2158
    %v2178 = vadd.f32 %v2140, %v2158
    %v2179 = vadd.f32 %v2141, %v2158
    %v2180 = vadd.f32 %v2142, %v2158
    %v2181 = vadd.f32 %v2143, %v2158
    %v2182 = vadd.f32 %v2144, %v2158
    %v2183 = vadd.f32 %v2145, %v2158
    %v2184 = vadd.f32 %v2146, %v2158
    %v2185 = vadd.f32 %v2147, %v2158
    %v2186 = vadd.f32 %v2148, %v2158
    %v2187 = vadd.f32 %v2149, %v2158
    %v2188 = vadd.f32 %v2150, %v2158
    %v2189 = vadd.f32 %v2151, %v2158
    %v2190 = vadd.f32 %v2152, %v2158
    %v2191 = vadd.f32 %v2153, %v2158
    %v2192 = vadd.f32 %v2154, %v2158
    %v2193 = vadd.f32 %v2155, %v2158
    %v2194 = vadd.f32 %v2156, %v2158
    %v2195 = vmax.f32 %v2159, 0.0
    %v2196 = vmax.f32 %v2160, 0.0
    %v2197 = vmax.f32 %v2161, 0.0
    %v2198 = vmax.f32 %v2162, 0.0
    %v2199 = vmax.f32 %v2163, 0.0
    %v2200 = vmax.f32 %v2164, 0.0
    %v2201 = vmax.f32 %v2165, 0.0
    %v2202 = vmax.f32 %v2166, 0.0
    %v2203 = vmax.f32 %v2167, 0.0
    %v2204 = vmax.f32 %v2168, 0.0
    %v2205 = vmax.f32 %v2169, 0.0
    %v2206 = vmax.f32 %v2170, 0.0
    %v2207 = vmax.f32 %v2171, 0.0
    %v2208 = vmax.f32 %v2172, 0.0
    %v2209 = vmax.f32 %v2173, 0.0
    %v2210 = vmax.f32 %v2174, 0.0
    %v2211 = vmax.f32 %v2175, 0.0
    %v2212 = vmax.f32 %v2176, 0.0
    %v2213 = vmax.f32 %v2177, 0.0
    %v2214 = vmax.f32 %v2178, 0.0
    %v2215 = vmax.f32 %v2179, 0.0
    %v2216 = vmax.f32 %v2180, 0.0
    %v2217 = vmax.f32 %v2181, 0.0
    %v2218 = vmax.f32 %v2182, 0.0
    %v2219 = vmax.f32 %v2183, 0.0
    %v2220 = vmax.f32 %v2184, 0.0
    %v2221 = vmax.f32 %v2185, 0.0
    %v2222 = vmax.f32 %v2186, 0.0
    %v2223 = vmax.f32 %v2187, 0.0
    %v2224 = vmax.f32 %v2188, 0.0
    %v2225 = vmax.f32 %v2189, 0.0
    %v2226 = vmax.f32 %v2190, 0.0
    %v2227 = vmax.f32 %v2191, 0.0
    %v2228 = vmax.f32 %v2192, 0.0
    %v2229 = vmax.f32 %v2193, 0.0
    %v2230 = vmax.f32 %v2194, 0.0
    %2231 = vmatpush.msra.mxu0 %v2210
    %2232 = vmatpush.msra.mxu0 %v2209
    %2233 = vmatpush.msra.mxu0 %v2208
    %2234 = vmatpush.msra.mxu0 %v2207
    %2235 = vmatpush.msra.mxu0 %v2206
    %2236 = vmatpush.msra.mxu0 %v2205
    %2237 = vmatpush.msra.mxu0 %v2204
    %2238 = vmatpush.msra.mxu0 %v2203
    %2239 = vmatpush.msra.mxu0 %v2202
    %2240 = vmatpush.msra.mxu0 %v2201
    %2241 = vmatpush.msra.mxu0 %v2200
    %2242 = vmatpush.msra.mxu0 %v2199
    %2243 = vmatpush.msra.mxu0 %v2198
    %2244 = vmatpush.msra.mxu0 %v2197
    %2245 = vmatpush.msra.mxu0 %v2196
    %2246 = vmatpush.msra.mxu0 %v2195
    %2247 = vmatmul.f32.gmra.mxu0 %v1459
    %v2248 = vpop.f32.mrf.mxu0
    %v2249 = vadd.f32 0.0, %v2248
    %2250 = vdwg.mxu0
    %2251 = vmatpush.msra.mxu0 %v2226
    %2252 = vmatpush.msra.mxu0 %v2225
    %2253 = vmatpush.msra.mxu0 %v2224
    %2254 = vmatpush.msra.mxu0 %v2223
    %2255 = vmatpush.msra.mxu0 %v2222
    %2256 = vmatpush.msra.mxu0 %v2221
    %2257 = vmatpush.msra.mxu0 %v2220
    %2258 = vmatpush.msra.mxu0 %v2219
    %2259 = vmatpush.msra.mxu0 %v2218
    %2260 = vmatpush.msra.mxu0 %v2217
    %2261 = vmatpush.msra.mxu0 %v2216
    %2262 = vmatpush.msra.mxu0 %v2215
    %2263 = vmatpush.msra.mxu0 %v2214
    %2264 = vmatpush.msra.mxu0 %v2213
    %2265 = vmatpush.msra.mxu0 %v2212
    %2266 = vmatpush.msra.mxu0 %v2211
    %2267 = vmatmul.f32.gmra.mxu0 %v1460
    %v2268 = vpop.f32.mrf.mxu0
    %v2269 = vadd.f32 %v2249, %v2268
    %2270 = vdwg.mxu0
    %2271 = vmatpush.msra.mxu0 0.0
    %2272 = vmatpush.msra.mxu0 0.0
    %2273 = vmatpush.msra.mxu0 0.0
    %2274 = vmatpush.msra.mxu0 0.0
    %2275 = vmatpush.msra.mxu0 0.0
    %2276 = vmatpush.msra.mxu0 0.0
    %2277 = vmatpush.msra.mxu0 0.0
    %2278 = vmatpush.msra.mxu0 0.0
    %2279 = vmatpush.msra.mxu0 0.0
    %2280 = vmatpush.msra.mxu0 0.0
    %2281 = vmatpush.msra.mxu0 0.0
    %2282 = vmatpush.msra.mxu0 0.0
    %2283 = vmatpush.msra.mxu0 %v2230
    %2284 = vmatpush.msra.mxu0 %v2229
    %2285 = vmatpush.msra.mxu0 %v2228
    %2286 = vmatpush.msra.mxu0 %v2227
    %2287 = vmatmul.f32.gmra.mxu0 %v1465
    %v2288 = vpop.f32.mrf.mxu0
    %v2289 = vadd.f32 %v2269, %v2288
    %2290 = vdwg.mxu0
    %s2291 = sld [smem:[#allocation3 + $0x12]]
    %v2292 = vstv %s2291
    %v2293 = vmul.f32 %v497, %v2292
    %v2294 = vmul.f32 %v498, %v2292
    %v2295 = vmul.f32 %v499, %v2292
    %v2296 = vmul.f32 %v500, %v2292
    %v2297 = vmul.f32 %v501, %v2292
    %v2298 = vmul.f32 %v502, %v2292
    %v2299 = vmul.f32 %v503, %v2292
    %v2300 = vmul.f32 %v504, %v2292
    %v2301 = vmul.f32 %v505, %v2292
    %v2302 = vmul.f32 %v506, %v2292
    %v2303 = vmul.f32 %v507, %v2292
    %v2304 = vmul.f32 %v508, %v2292
    %v2305 = vmul.f32 %v509, %v2292
    %v2306 = vmul.f32 %v510, %v2292
    %v2307 = vmul.f32 %v511, %v2292
    %v2308 = vmul.f32 %v512, %v2292
    %v2309 = vmul.f32 %v513, %v2292
    %v2310 = vmul.f32 %v514, %v2292
    %v2311 = vmul.f32 %v515, %v2292
    %v2312 = vmul.f32 %v516, %v2292
    %v2313 = vmul.f32 %v517, %v2292
    %v2314 = vmul.f32 %v518, %v2292
    %v2315 = vmul.f32 %v519, %v2292
    %v2316 = vmul.f32 %v520, %v2292
    %v2317 = vmul.f32 %v521, %v2292
    %v2318 = vmul.f32 %v522, %v2292
    %v2319 = vmul.f32 %v523, %v2292
    %v2320 = vmul.f32 %v524, %v2292
    %v2321 = vmul.f32 %v525, %v2292
    %v2322 = vmul.f32 %v526, %v2292
    %v2323 = vmul.f32 %v527, %v2292
    %v2324 = vmul.f32 %v528, %v2292
    %v2325 = vmul.f32 %v529, %v2292
    %v2326 = vmul.f32 %v530, %v2292
    %v2327 = vmul.f32 %v531, %v2292
    %v2328 = vmul.f32 %v532, %v2292
    %s2329 = sld [smem:[#allocation3 + $0x13]]
    %v2330 = vstv %s2329
    %v2331 = vmul.f32 %v533, %v2330
    %v2332 = vmul.f32 %v534, %v2330
    %v2333 = vmul.f32 %v535, %v2330
    %v2334 = vmul.f32 %v536, %v2330
    %v2335 = vmul.f32 %v537, %v2330
    %v2336 = vmul.f32 %v538, %v2330
    %v2337 = vmul.f32 %v539, %v2330
    %v2338 = vmul.f32 %v540, %v2330
    %v2339 = vmul.f32 %v541, %v2330
    %v2340 = vmul.f32 %v542, %v2330
    %v2341 = vmul.f32 %v543, %v2330
    %v2342 = vmul.f32 %v544, %v2330
    %v2343 = vmul.f32 %v545, %v2330
    %v2344 = vmul.f32 %v546, %v2330
    %v2345 = vmul.f32 %v547, %v2330
    %v2346 = vmul.f32 %v548, %v2330
    %v2347 = vmul.f32 %v549, %v2330
    %v2348 = vmul.f32 %v550, %v2330
    %v2349 = vmul.f32 %v551, %v2330
    %v2350 = vmul.f32 %v552, %v2330
    %v2351 = vmul.f32 %v553, %v2330
    %v2352 = vmul.f32 %v554, %v2330
    %v2353 = vmul.f32 %v555, %v2330
    %v2354 = vmul.f32 %v556, %v2330
    %v2355 = vmul.f32 %v557, %v2330
    %v2356 = vmul.f32 %v558, %v2330
    %v2357 = vmul.f32 %v559, %v2330
    %v2358 = vmul.f32 %v560, %v2330
    %v2359 = vmul.f32 %v561, %v2330
    %v2360 = vmul.f32 %v562, %v2330
    %v2361 = vmul.f32 %v563, %v2330
    %v2362 = vmul.f32 %v564, %v2330
    %v2363 = vmul.f32 %v565, %v2330
    %v2364 = vmul.f32 %v566, %v2330
    %v2365 = vmul.f32 %v567, %v2330
    %v2366 = vmul.f32 %v568, %v2330
    %v2367 = vadd.f32 %v2293, %v2331
    %v2368 = vadd.f32 %v2294, %v2332
    %v2369 = vadd.f32 %v2295, %v2333
    %v2370 = vadd.f32 %v2296, %v2334
    %v2371 = vadd.f32 %v2297, %v2335
    %v2372 = vadd.f32 %v2298, %v2336
    %v2373 = vadd.f32 %v2299, %v2337
    %v2374 = vadd.f32 %v2300, %v2338
    %v2375 = vadd.f32 %v2301, %v2339
    %v2376 = vadd.f32 %v2302, %v2340
    %v2377 = vadd.f32 %v2303, %v2341
    %v2378 = vadd.f32 %v2304, %v2342
    %v2379 = vadd.f32 %v2305, %v2343
    %v2380 = vadd.f32 %v2306, %v2344
    %v2381 = vadd.f32 %v2307, %v2345
    %v2382 = vadd.f32 %v2308, %v2346
    %v2383 = vadd.f32 %v2309, %v2347
    %v2384 = vadd.f32 %v2310, %v2348
    %v2385 = vadd.f32 %v2311, %v2349
    %v2386 = vadd.f32 %v2312, %v2350
    %v2387 = vadd.f32 %v2313, %v2351
    %v2388 = vadd.f32 %v2314, %v2352
    %v2389 = vadd.f32 %v2315, %v2353
    %v2390 = vadd.f32 %v2316, %v2354
    %v2391 = vadd.f32 %v2317, %v2355
    %v2392 = vadd.f32 %v2318, %v2356
    %v2393 = vadd.f32 %v2319, %v2357
    %v2394 = vadd.f32 %v2320, %v2358
    %v2395 = vadd.f32 %v2321, %v2359
    %v2396 = vadd.f32 %v2322, %v2360
    %v2397 = vadd.f32 %v2323, %v2361
    %v2398 = vadd.f32 %v2324, %v2362
    %v2399 = vadd.f32 %v2325, %v2363
    %v2400 = vadd.f32 %v2326, %v2364
    %v2401 = vadd.f32 %v2327, %v2365
    %v2402 = vadd.f32 %v2328, %v2366
    %s2403 = sld [smem:[#allocation3 + $0x14]]
    %v2404 = vstv %s2403
    %v2405 = vmul.f32 %v569, %v2404
    %v2406 = vmul.f32 %v570, %v2404
    %v2407 = vmul.f32 %v571, %v2404
    %v2408 = vmul.f32 %v572, %v2404
    %v2409 = vmul.f32 %v573, %v2404
    %v2410 = vmul.f32 %v574, %v2404
    %v2411 = vmul.f32 %v575, %v2404
    %v2412 = vmul.f32 %v576, %v2404
    %v2413 = vmul.f32 %v577, %v2404
    %v2414 = vmul.f32 %v578, %v2404
    %v2415 = vmul.f32 %v579, %v2404
    %v2416 = vmul.f32 %v580, %v2404
    %v2417 = vmul.f32 %v581, %v2404
    %v2418 = vmul.f32 %v582, %v2404
    %v2419 = vmul.f32 %v583, %v2404
    %v2420 = vmul.f32 %v584, %v2404
    %v2421 = vmul.f32 %v585, %v2404
    %v2422 = vmul.f32 %v586, %v2404
    %v2423 = vmul.f32 %v587, %v2404
    %v2424 = vmul.f32 %v588, %v2404
    %v2425 = vmul.f32 %v589, %v2404
    %v2426 = vmul.f32 %v590, %v2404
    %v2427 = vmul.f32 %v591, %v2404
    %v2428 = vmul.f32 %v592, %v2404
    %v2429 = vmul.f32 %v593, %v2404
    %v2430 = vmul.f32 %v594, %v2404
    %v2431 = vmul.f32 %v595, %v2404
    %v2432 = vmul.f32 %v596, %v2404
    %v2433 = vmul.f32 %v597, %v2404
    %v2434 = vmul.f32 %v598, %v2404
    %v2435 = vmul.f32 %v599, %v2404
    %v2436 = vmul.f32 %v600, %v2404
    %v2437 = vmul.f32 %v601, %v2404
    %v2438 = vmul.f32 %v602, %v2404
    %v2439 = vmul.f32 %v603, %v2404
    %v2440 = vmul.f32 %v604, %v2404
    %v2441 = vadd.f32 %v2367, %v2405
    %v2442 = vadd.f32 %v2368, %v2406
    %v2443 = vadd.f32 %v2369, %v2407
    %v2444 = vadd.f32 %v2370, %v2408
    %v2445 = vadd.f32 %v2371, %v2409
    %v2446 = vadd.f32 %v2372, %v2410
    %v2447 = vadd.f32 %v2373, %v2411
    %v2448 = vadd.f32 %v2374, %v2412
    %v2449 = vadd.f32 %v2375, %v2413
    %v2450 = vadd.f32 %v2376, %v2414
    %v2451 = vadd.f32 %v2377, %v2415
    %v2452 = vadd.f32 %v2378, %v2416
    %v2453 = vadd.f32 %v2379, %v2417
    %v2454 = vadd.f32 %v2380, %v2418
    %v2455 = vadd.f32 %v2381, %v2419
    %v2456 = vadd.f32 %v2382, %v2420
    %v2457 = vadd.f32 %v2383, %v2421
    %v2458 = vadd.f32 %v2384, %v2422
    %v2459 = vadd.f32 %v2385, %v2423
    %v2460 = vadd.f32 %v2386, %v2424
    %v2461 = vadd.f32 %v2387, %v2425
    %v2462 = vadd.f32 %v2388, %v2426
    %v2463 = vadd.f32 %v2389, %v2427
    %v2464 = vadd.f32 %v2390, %v2428
    %v2465 = vadd.f32 %v2391, %v2429
    %v2466 = vadd.f32 %v2392, %v2430
    %v2467 = vadd.f32 %v2393, %v2431
    %v2468 = vadd.f32 %v2394, %v2432
    %v2469 = vadd.f32 %v2395, %v2433
    %v2470 = vadd.f32 %v2396, %v2434
    %v2471 = vadd.f32 %v2397, %v2435
    %v2472 = vadd.f32 %v2398, %v2436
    %v2473 = vadd.f32 %v2399, %v2437
    %v2474 = vadd.f32 %v2400, %v2438
    %v2475 = vadd.f32 %v2401, %v2439
    %v2476 = vadd.f32 %v2402, %v2440
    %s2477 = sld [smem:[#allocation3 + $0x15]]
    %v2478 = vstv %s2477
    %v2479 = vmul.f32 %v571, %v2478
    %v2480 = vmul.f32 %v572, %v2478
    %v2481 = vmul.f32 %v573, %v2478
    %v2482 = vmul.f32 %v574, %v2478
    %v2483 = vmul.f32 %v575, %v2478
    %v2484 = vmul.f32 %v576, %v2478
    %v2485 = vmul.f32 %v577, %v2478
    %v2486 = vmul.f32 %v578, %v2478
    %v2487 = vmul.f32 %v579, %v2478
    %v2488 = vmul.f32 %v580, %v2478
    %v2489 = vmul.f32 %v581, %v2478
    %v2490 = vmul.f32 %v582, %v2478
    %v2491 = vmul.f32 %v583, %v2478
    %v2492 = vmul.f32 %v584, %v2478
    %v2493 = vmul.f32 %v585, %v2478
    %v2494 = vmul.f32 %v586, %v2478
    %v2495 = vmul.f32 %v587, %v2478
    %v2496 = vmul.f32 %v588, %v2478
    %v2497 = vmul.f32 %v589, %v2478
    %v2498 = vmul.f32 %v590, %v2478
    %v2499 = vmul.f32 %v591, %v2478
    %v2500 = vmul.f32 %v592, %v2478
    %v2501 = vmul.f32 %v593, %v2478
    %v2502 = vmul.f32 %v594, %v2478
    %v2503 = vmul.f32 %v595, %v2478
    %v2504 = vmul.f32 %v596, %v2478
    %v2505 = vmul.f32 %v597, %v2478
    %v2506 = vmul.f32 %v598, %v2478
    %v2507 = vmul.f32 %v599, %v2478
    %v2508 = vmul.f32 %v600, %v2478
    %v2509 = vmul.f32 %v601, %v2478
    %v2510 = vmul.f32 %v602, %v2478
    %v2511 = vmul.f32 %v603, %v2478
    %v2512 = vmul.f32 %v604, %v2478
    %v2513 = vmul.f32 %v605, %v2478
    %v2514 = vmul.f32 %v606, %v2478
    %v2515 = vadd.f32 %v2441, %v2479
    %v2516 = vadd.f32 %v2442, %v2480
    %v2517 = vadd.f32 %v2443, %v2481
    %v2518 = vadd.f32 %v2444, %v2482
    %v2519 = vadd.f32 %v2445, %v2483
    %v2520 = vadd.f32 %v2446, %v2484
    %v2521 = vadd.f32 %v2447, %v2485
    %v2522 = vadd.f32 %v2448, %v2486
    %v2523 = vadd.f32 %v2449, %v2487
    %v2524 = vadd.f32 %v2450, %v2488
    %v2525 = vadd.f32 %v2451, %v2489
    %v2526 = vadd.f32 %v2452, %v2490
    %v2527 = vadd.f32 %v2453, %v2491
    %v2528 = vadd.f32 %v2454, %v2492
    %v2529 = vadd.f32 %v2455, %v2493
    %v2530 = vadd.f32 %v2456, %v2494
    %v2531 = vadd.f32 %v2457, %v2495
    %v2532 = vadd.f32 %v2458, %v2496
    %v2533 = vadd.f32 %v2459, %v2497
    %v2534 = vadd.f32 %v2460, %v2498
    %v2535 = vadd.f32 %v2461, %v2499
    %v2536 = vadd.f32 %v2462, %v2500
    %v2537 = vadd.f32 %v2463, %v2501
    %v2538 = vadd.f32 %v2464, %v2502
    %v2539 = vadd.f32 %v2465, %v2503
    %v2540 = vadd.f32 %v2466, %v2504
    %v2541 = vadd.f32 %v2467, %v2505
    %v2542 = vadd.f32 %v2468, %v2506
    %v2543 = vadd.f32 %v2469, %v2507
    %v2544 = vadd.f32 %v2470, %v2508
    %v2545 = vadd.f32 %v2471, %v2509
    %v2546 = vadd.f32 %v2472, %v2510
    %v2547 = vadd.f32 %v2473, %v2511
    %v2548 = vadd.f32 %v2474, %v2512
    %v2549 = vadd.f32 %v2475, %v2513
    %v2550 = vadd.f32 %v2476, %v2514
    %s2551 = sld [smem:[#allocation3 + $0x16]]
    %v2552 = vstv %s2551
    %v2553 = vmul.f32 %v607, %v2552
    %v2554 = vmul.f32 %v608, %v2552
    %v2555 = vmul.f32 %v609, %v2552
    %v2556 = vmul.f32 %v610, %v2552
    %v2557 = vmul.f32 %v611, %v2552
    %v2558 = vmul.f32 %v612, %v2552
    %v2559 = vmul.f32 %v613, %v2552
    %v2560 = vmul.f32 %v614, %v2552
    %v2561 = vmul.f32 %v615, %v2552
    %v2562 = vmul.f32 %v616, %v2552
    %v2563 = vmul.f32 %v617, %v2552
    %v2564 = vmul.f32 %v618, %v2552
    %v2565 = vmul.f32 %v619, %v2552
    %v2566 = vmul.f32 %v620, %v2552
    %v2567 = vmul.f32 %v621, %v2552
    %v2568 = vmul.f32 %v622, %v2552
    %v2569 = vmul.f32 %v623, %v2552
    %v2570 = vmul.f32 %v624, %v2552
    %v2571 = vmul.f32 %v625, %v2552
    %v2572 = vmul.f32 %v626, %v2552
    %v2573 = vmul.f32 %v627, %v2552
    %v2574 = vmul.f32 %v628, %v2552
    %v2575 = vmul.f32 %v629, %v2552
    %v2576 = vmul.f32 %v630, %v2552
    %v2577 = vmul.f32 %v631, %v2552
    %v2578 = vmul.f32 %v632, %v2552
    %v2579 = vmul.f32 %v633, %v2552
    %v2580 = vmul.f32 %v634, %v2552
    %v2581 = vmul.f32 %v635, %v2552
    %v2582 = vmul.f32 %v636, %v2552
    %v2583 = vmul.f32 %v637, %v2552
    %v2584 = vmul.f32 %v638, %v2552
    %v2585 = vmul.f32 %v639, %v2552
    %v2586 = vmul.f32 %v640, %v2552
    %v2587 = vmul.f32 %v641, %v2552
    %v2588 = vmul.f32 %v642, %v2552
    %v2589 = vadd.f32 %v2515, %v2553
    %v2590 = vadd.f32 %v2516, %v2554
    %v2591 = vadd.f32 %v2517, %v2555
    %v2592 = vadd.f32 %v2518, %v2556
    %v2593 = vadd.f32 %v2519, %v2557
    %v2594 = vadd.f32 %v2520, %v2558
    %v2595 = vadd.f32 %v2521, %v2559
    %v2596 = vadd.f32 %v2522, %v2560
    %v2597 = vadd.f32 %v2523, %v2561
    %v2598 = vadd.f32 %v2524, %v2562
    %v2599 = vadd.f32 %v2525, %v2563
    %v2600 = vadd.f32 %v2526, %v2564
    %v2601 = vadd.f32 %v2527, %v2565
    %v2602 = vadd.f32 %v2528, %v2566
    %v2603 = vadd.f32 %v2529, %v2567
    %v2604 = vadd.f32 %v2530, %v2568
    %v2605 = vadd.f32 %v2531, %v2569
    %v2606 = vadd.f32 %v2532, %v2570
    %v2607 = vadd.f32 %v2533, %v2571
    %v2608 = vadd.f32 %v2534, %v2572
    %v2609 = vadd.f32 %v2535, %v2573
    %v2610 = vadd.f32 %v2536, %v2574
    %v2611 = vadd.f32 %v2537, %v2575
    %v2612 = vadd.f32 %v2538, %v2576
    %v2613 = vadd.f32 %v2539, %v2577
    %v2614 = vadd.f32 %v2540, %v2578
    %v2615 = vadd.f32 %v2541, %v2579
    %v2616 = vadd.f32 %v2542, %v2580
    %v2617 = vadd.f32 %v2543, %v2581
    %v2618 = vadd.f32 %v2544, %v2582
    %v2619 = vadd.f32 %v2545, %v2583
    %v2620 = vadd.f32 %v2546, %v2584
    %v2621 = vadd.f32 %v2547, %v2585
    %v2622 = vadd.f32 %v2548, %v2586
    %v2623 = vadd.f32 %v2549, %v2587
    %v2624 = vadd.f32 %v2550, %v2588
    %s2625 = sld [smem:[#allocation3 + $0x17]]
    %v2626 = vstv %s2625
    %v2627 = vmul.f32 %v643, %v2626
    %v2628 = vmul.f32 %v644, %v2626
    %v2629 = vmul.f32 %v645, %v2626
    %v2630 = vmul.f32 %v646, %v2626
    %v2631 = vmul.f32 %v647, %v2626
    %v2632 = vmul.f32 %v648, %v2626
    %v2633 = vmul.f32 %v649, %v2626
    %v2634 = vmul.f32 %v650, %v2626
    %v2635 = vmul.f32 %v651, %v2626
    %v2636 = vmul.f32 %v652, %v2626
    %v2637 = vmul.f32 %v653, %v2626
    %v2638 = vmul.f32 %v654, %v2626
    %v2639 = vmul.f32 %v655, %v2626
    %v2640 = vmul.f32 %v656, %v2626
    %v2641 = vmul.f32 %v657, %v2626
    %v2642 = vmul.f32 %v658, %v2626
    %v2643 = vmul.f32 %v659, %v2626
    %v2644 = vmul.f32 %v660, %v2626
    %v2645 = vmul.f32 %v661, %v2626
    %v2646 = vmul.f32 %v662, %v2626
    %v2647 = vmul.f32 %v663, %v2626
    %v2648 = vmul.f32 %v664, %v2626
    %v2649 = vmul.f32 %v665, %v2626
    %v2650 = vmul.f32 %v666, %v2626
    %v2651 = vmul.f32 %v667, %v2626
    %v2652 = vmul.f32 %v668, %v2626
    %v2653 = vmul.f32 %v669, %v2626
    %v2654 = vmul.f32 %v670, %v2626
    %v2655 = vmul.f32 %v671, %v2626
    %v2656 = vmul.f32 %v672, %v2626
    %v2657 = vmul.f32 %v673, %v2626
    %v2658 = vmul.f32 %v674, %v2626
    %v2659 = vmul.f32 %v675, %v2626
    %v2660 = vmul.f32 %v676, %v2626
    %v2661 = vmul.f32 %v677, %v2626
    %v2662 = vmul.f32 %v678, %v2626
    %v2663 = vadd.f32 %v2589, %v2627
    %v2664 = vadd.f32 %v2590, %v2628
    %v2665 = vadd.f32 %v2591, %v2629
    %v2666 = vadd.f32 %v2592, %v2630
    %v2667 = vadd.f32 %v2593, %v2631
    %v2668 = vadd.f32 %v2594, %v2632
    %v2669 = vadd.f32 %v2595, %v2633
    %v2670 = vadd.f32 %v2596, %v2634
    %v2671 = vadd.f32 %v2597, %v2635
    %v2672 = vadd.f32 %v2598, %v2636
    %v2673 = vadd.f32 %v2599, %v2637
    %v2674 = vadd.f32 %v2600, %v2638
    %v2675 = vadd.f32 %v2601, %v2639
    %v2676 = vadd.f32 %v2602, %v2640
    %v2677 = vadd.f32 %v2603, %v2641
    %v2678 = vadd.f32 %v2604, %v2642
    %v2679 = vadd.f32 %v2605, %v2643
    %v2680 = vadd.f32 %v2606, %v2644
    %v2681 = vadd.f32 %v2607, %v2645
    %v2682 = vadd.f32 %v2608, %v2646
    %v2683 = vadd.f32 %v2609, %v2647
    %v2684 = vadd.f32 %v2610, %v2648
    %v2685 = vadd.f32 %v2611, %v2649
    %v2686 = vadd.f32 %v2612, %v2650
    %v2687 = vadd.f32 %v2613, %v2651
    %v2688 = vadd.f32 %v2614, %v2652
    %v2689 = vadd.f32 %v2615, %v2653
    %v2690 = vadd.f32 %v2616, %v2654
    %v2691 = vadd.f32 %v2617, %v2655
    %v2692 = vadd.f32 %v2618, %v2656
    %v2693 = vadd.f32 %v2619, %v2657
    %v2694 = vadd.f32 %v2620, %v2658
    %v2695 = vadd.f32 %v2621, %v2659
    %v2696 = vadd.f32 %v2622, %v2660
    %v2697 = vadd.f32 %v2623, %v2661
    %v2698 = vadd.f32 %v2624, %v2662
    %s2699 = sld [smem:[#allocation3 + $0x18]]
    %v2700 = vstv %s2699
    %v2701 = vmul.f32 %v645, %v2700
    %v2702 = vmul.f32 %v646, %v2700
    %v2703 = vmul.f32 %v647, %v2700
    %v2704 = vmul.f32 %v648, %v2700
    %v2705 = vmul.f32 %v649, %v2700
    %v2706 = vmul.f32 %v650, %v2700
    %v2707 = vmul.f32 %v651, %v2700
    %v2708 = vmul.f32 %v652, %v2700
    %v2709 = vmul.f32 %v653, %v2700
    %v2710 = vmul.f32 %v654, %v2700
    %v2711 = vmul.f32 %v655, %v2700
    %v2712 = vmul.f32 %v656, %v2700
    %v2713 = vmul.f32 %v657, %v2700
    %v2714 = vmul.f32 %v658, %v2700
    %v2715 = vmul.f32 %v659, %v2700
    %v2716 = vmul.f32 %v660, %v2700
    %v2717 = vmul.f32 %v661, %v2700
    %v2718 = vmul.f32 %v662, %v2700
    %v2719 = vmul.f32 %v663, %v2700
    %v2720 = vmul.f32 %v664, %v2700
    %v2721 = vmul.f32 %v665, %v2700
    %v2722 = vmul.f32 %v666, %v2700
    %v2723 = vmul.f32 %v667, %v2700
    %v2724 = vmul.f32 %v668, %v2700
    %v2725 = vmul.f32 %v669, %v2700
    %v2726 = vmul.f32 %v670, %v2700
    %v2727 = vmul.f32 %v671, %v2700
    %v2728 = vmul.f32 %v672, %v2700
    %v2729 = vmul.f32 %v673, %v2700
    %v2730 = vmul.f32 %v674, %v2700
    %v2731 = vmul.f32 %v675, %v2700
    %v2732 = vmul.f32 %v676, %v2700
    %v2733 = vmul.f32 %v677, %v2700
    %v2734 = vmul.f32 %v678, %v2700
    %v2735 = vmul.f32 %v679, %v2700
    %v2736 = vmul.f32 %v680, %v2700
    %v2737 = vadd.f32 %v2663, %v2701
    %v2738 = vadd.f32 %v2664, %v2702
    %v2739 = vadd.f32 %v2665, %v2703
    %v2740 = vadd.f32 %v2666, %v2704
    %v2741 = vadd.f32 %v2667, %v2705
    %v2742 = vadd.f32 %v2668, %v2706
    %v2743 = vadd.f32 %v2669, %v2707
    %v2744 = vadd.f32 %v2670, %v2708
    %v2745 = vadd.f32 %v2671, %v2709
    %v2746 = vadd.f32 %v2672, %v2710
    %v2747 = vadd.f32 %v2673, %v2711
    %v2748 = vadd.f32 %v2674, %v2712
    %v2749 = vadd.f32 %v2675, %v2713
    %v2750 = vadd.f32 %v2676, %v2714
    %v2751 = vadd.f32 %v2677, %v2715
    %v2752 = vadd.f32 %v2678, %v2716
    %v2753 = vadd.f32 %v2679, %v2717
    %v2754 = vadd.f32 %v2680, %v2718
    %v2755 = vadd.f32 %v2681, %v2719
    %v2756 = vadd.f32 %v2682, %v2720
    %v2757 = vadd.f32 %v2683, %v2721
    %v2758 = vadd.f32 %v2684, %v2722
    %v2759 = vadd.f32 %v2685, %v2723
    %v2760 = vadd.f32 %v2686, %v2724
    %v2761 = vadd.f32 %v2687, %v2725
    %v2762 = vadd.f32 %v2688, %v2726
    %v2763 = vadd.f32 %v2689, %v2727
    %v2764 = vadd.f32 %v2690, %v2728
    %v2765 = vadd.f32 %v2691, %v2729
    %v2766 = vadd.f32 %v2692, %v2730
    %v2767 = vadd.f32 %v2693, %v2731
    %v2768 = vadd.f32 %v2694, %v2732
    %v2769 = vadd.f32 %v2695, %v2733
    %v2770 = vadd.f32 %v2696, %v2734
    %v2771 = vadd.f32 %v2697, %v2735
    %v2772 = vadd.f32 %v2698, %v2736
    %s2773 = sld [smem:[#allocation3 + $0x19]]
    %v2774 = vstv %s2773
    %v2775 = vmul.f32 %v681, %v2774
    %v2776 = vmul.f32 %v682, %v2774
    %v2777 = vmul.f32 %v683, %v2774
    %v2778 = vmul.f32 %v684, %v2774
    %v2779 = vmul.f32 %v685, %v2774
    %v2780 = vmul.f32 %v686, %v2774
    %v2781 = vmul.f32 %v687, %v2774
    %v2782 = vmul.f32 %v688, %v2774
    %v2783 = vmul.f32 %v689, %v2774
    %v2784 = vmul.f32 %v690, %v2774
    %v2785 = vmul.f32 %v691, %v2774
    %v2786 = vmul.f32 %v692, %v2774
    %v2787 = vmul.f32 %v693, %v2774
    %v2788 = vmul.f32 %v694, %v2774
    %v2789 = vmul.f32 %v695, %v2774
    %v2790 = vmul.f32 %v696, %v2774
    %v2791 = vmul.f32 %v697, %v2774
    %v2792 = vmul.f32 %v698, %v2774
    %v2793 = vmul.f32 %v699, %v2774
    %v2794 = vmul.f32 %v700, %v2774
    %v2795 = vmul.f32 %v701, %v2774
    %v2796 = vmul.f32 %v702, %v2774
    %v2797 = vmul.f32 %v703, %v2774
    %v2798 = vmul.f32 %v704, %v2774
    %v2799 = vmul.f32 %v705, %v2774
    %v2800 = vmul.f32 %v706, %v2774
    %v2801 = vmul.f32 %v707, %v2774
    %v2802 = vmul.f32 %v708, %v2774
    %v2803 = vmul.f32 %v709, %v2774
    %v2804 = vmul.f32 %v710, %v2774
    %v2805 = vmul.f32 %v711, %v2774
    %v2806 = vmul.f32 %v712, %v2774
    %v2807 = vmul.f32 %v713, %v2774
    %v2808 = vmul.f32 %v714, %v2774
    %v2809 = vmul.f32 %v715, %v2774
    %v2810 = vmul.f32 %v716, %v2774
    %v2811 = vadd.f32 %v2737, %v2775
    %v2812 = vadd.f32 %v2738, %v2776
    %v2813 = vadd.f32 %v2739, %v2777
    %v2814 = vadd.f32 %v2740, %v2778
    %v2815 = vadd.f32 %v2741, %v2779
    %v2816 = vadd.f32 %v2742, %v2780
    %v2817 = vadd.f32 %v2743, %v2781
    %v2818 = vadd.f32 %v2744, %v2782
    %v2819 = vadd.f32 %v2745, %v2783
    %v2820 = vadd.f32 %v2746, %v2784
    %v2821 = vadd.f32 %v2747, %v2785
    %v2822 = vadd.f32 %v2748, %v2786
    %v2823 = vadd.f32 %v2749, %v2787
    %v2824 = vadd.f32 %v2750, %v2788
    %v2825 = vadd.f32 %v2751, %v2789
    %v2826 = vadd.f32 %v2752, %v2790
    %v2827 = vadd.f32 %v2753, %v2791
    %v2828 = vadd.f32 %v2754, %v2792
    %v2829 = vadd.f32 %v2755, %v2793
    %v2830 = vadd.f32 %v2756, %v2794
    %v2831 = vadd.f32 %v2757, %v2795
    %v2832 = vadd.f32 %v2758, %v2796
    %v2833 = vadd.f32 %v2759, %v2797
    %v2834 = vadd.f32 %v2760, %v2798
    %v2835 = vadd.f32 %v2761, %v2799
    %v2836 = vadd.f32 %v2762, %v2800
    %v2837 = vadd.f32 %v2763, %v2801
    %v2838 = vadd.f32 %v2764, %v2802
    %v2839 = vadd.f32 %v2765, %v2803
    %v2840 = vadd.f32 %v2766, %v2804
    %v2841 = vadd.f32 %v2767, %v2805
    %v2842 = vadd.f32 %v2768, %v2806
    %v2843 = vadd.f32 %v2769, %v2807
    %v2844 = vadd.f32 %v2770, %v2808
    %v2845 = vadd.f32 %v2771, %v2809
    %v2846 = vadd.f32 %v2772, %v2810
    %s2847 = sld [smem:[#allocation3 + $0x1a]]
    %v2848 = vstv %s2847
    %v2849 = vmul.f32 %v717, %v2848
    %v2850 = vmul.f32 %v718, %v2848
    %v2851 = vmul.f32 %v719, %v2848
    %v2852 = vmul.f32 %v720, %v2848
    %v2853 = vmul.f32 %v721, %v2848
    %v2854 = vmul.f32 %v722, %v2848
    %v2855 = vmul.f32 %v723, %v2848
    %v2856 = vmul.f32 %v724, %v2848
    %v2857 = vmul.f32 %v725, %v2848
    %v2858 = vmul.f32 %v726, %v2848
    %v2859 = vmul.f32 %v727, %v2848
    %v2860 = vmul.f32 %v728, %v2848
    %v2861 = vmul.f32 %v729, %v2848
    %v2862 = vmul.f32 %v730, %v2848
    %v2863 = vmul.f32 %v731, %v2848
    %v2864 = vmul.f32 %v732, %v2848
    %v2865 = vmul.f32 %v733, %v2848
    %v2866 = vmul.f32 %v734, %v2848
    %v2867 = vmul.f32 %v735, %v2848
    %v2868 = vmul.f32 %v736, %v2848
    %v2869 = vmul.f32 %v737, %v2848
    %v2870 = vmul.f32 %v738, %v2848
    %v2871 = vmul.f32 %v739, %v2848
    %v2872 = vmul.f32 %v740, %v2848
    %v2873 = vmul.f32 %v741, %v2848
    %v2874 = vmul.f32 %v742, %v2848
    %v2875 = vmul.f32 %v743, %v2848
    %v2876 = vmul.f32 %v744, %v2848
    %v2877 = vmul.f32 %v745, %v2848
    %v2878 = vmul.f32 %v746, %v2848
    %v2879 = vmul.f32 %v747, %v2848
    %v2880 = vmul.f32 %v748, %v2848
    %v2881 = vmul.f32 %v749, %v2848
    %v2882 = vmul.f32 %v750, %v2848
    %v2883 = vmul.f32 %v751, %v2848
    %v2884 = vmul.f32 %v752, %v2848
    %v2885 = vadd.f32 %v2811, %v2849
    %v2886 = vadd.f32 %v2812, %v2850
    %v2887 = vadd.f32 %v2813, %v2851
    %v2888 = vadd.f32 %v2814, %v2852
    %v2889 = vadd.f32 %v2815, %v2853
    %v2890 = vadd.f32 %v2816, %v2854
    %v2891 = vadd.f32 %v2817, %v2855
    %v2892 = vadd.f32 %v2818, %v2856
    %v2893 = vadd.f32 %v2819, %v2857
    %v2894 = vadd.f32 %v2820, %v2858
    %v2895 = vadd.f32 %v2821, %v2859
    %v2896 = vadd.f32 %v2822, %v2860
    %v2897 = vadd.f32 %v2823, %v2861
    %v2898 = vadd.f32 %v2824, %v2862
    %v2899 = vadd.f32 %v2825, %v2863
    %v2900 = vadd.f32 %v2826, %v2864
    %v2901 = vadd.f32 %v2827, %v2865
    %v2902 = vadd.f32 %v2828, %v2866
    %v2903 = vadd.f32 %v2829, %v2867
    %v2904 = vadd.f32 %v2830, %v2868
    %v2905 = vadd.f32 %v2831, %v2869
    %v2906 = vadd.f32 %v2832, %v2870
    %v2907 = vadd.f32 %v2833, %v2871
    %v2908 = vadd.f32 %v2834, %v2872
    %v2909 = vadd.f32 %v2835, %v2873
    %v2910 = vadd.f32 %v2836, %v2874
    %v2911 = vadd.f32 %v2837, %v2875
    %v2912 = vadd.f32 %v2838, %v2876
    %v2913 = vadd.f32 %v2839, %v2877
    %v2914 = vadd.f32 %v2840, %v2878
    %v2915 = vadd.f32 %v2841, %v2879
    %v2916 = vadd.f32 %v2842, %v2880
    %v2917 = vadd.f32 %v2843, %v2881
    %v2918 = vadd.f32 %v2844, %v2882
    %v2919 = vadd.f32 %v2845, %v2883
    %v2920 = vadd.f32 %v2846, %v2884
    %s2921 = sld [smem:[#allocation5 + $0x2]]
    %v2922 = vstv %s2921
    %v2923 = vadd.f32 %v2885, %v2922
    %v2924 = vadd.f32 %v2886, %v2922
    %v2925 = vadd.f32 %v2887, %v2922
    %v2926 = vadd.f32 %v2888, %v2922
    %v2927 = vadd.f32 %v2889, %v2922
    %v2928 = vadd.f32 %v2890, %v2922
    %v2929 = vadd.f32 %v2891, %v2922
    %v2930 = vadd.f32 %v2892, %v2922
    %v2931 = vadd.f32 %v2893, %v2922
    %v2932 = vadd.f32 %v2894, %v2922
    %v2933 = vadd.f32 %v2895, %v2922
    %v2934 = vadd.f32 %v2896, %v2922
    %v2935 = vadd.f32 %v2897, %v2922
    %v2936 = vadd.f32 %v2898, %v2922
    %v2937 = vadd.f32 %v2899, %v2922
    %v2938 = vadd.f32 %v2900, %v2922
    %v2939 = vadd.f32 %v2901, %v2922
    %v2940 = vadd.f32 %v2902, %v2922
    %v2941 = vadd.f32 %v2903, %v2922
    %v2942 = vadd.f32 %v2904, %v2922
    %v2943 = vadd.f32 %v2905, %v2922
    %v2944 = vadd.f32 %v2906, %v2922
    %v2945 = vadd.f32 %v2907, %v2922
    %v2946 = vadd.f32 %v2908, %v2922
    %v2947 = vadd.f32 %v2909, %v2922
    %v2948 = vadd.f32 %v2910, %v2922
    %v2949 = vadd.f32 %v2911, %v2922
    %v2950 = vadd.f32 %v2912, %v2922
    %v2951 = vadd.f32 %v2913, %v2922
    %v2952 = vadd.f32 %v2914, %v2922
    %v2953 = vadd.f32 %v2915, %v2922
    %v2954 = vadd.f32 %v2916, %v2922
    %v2955 = vadd.f32 %v2917, %v2922
    %v2956 = vadd.f32 %v2918, %v2922
    %v2957 = vadd.f32 %v2919, %v2922
    %v2958 = vadd.f32 %v2920, %v2922
    %v2959 = vmax.f32 %v2923, 0.0
    %v2960 = vmax.f32 %v2924, 0.0
    %v2961 = vmax.f32 %v2925, 0.0
    %v2962 = vmax.f32 %v2926, 0.0
    %v2963 = vmax.f32 %v2927, 0.0
    %v2964 = vmax.f32 %v2928, 0.0
    %v2965 = vmax.f32 %v2929, 0.0
    %v2966 = vmax.f32 %v2930, 0.0
    %v2967 = vmax.f32 %v2931, 0.0
    %v2968 = vmax.f32 %v2932, 0.0
    %v2969 = vmax.f32 %v2933, 0.0
    %v2970 = vmax.f32 %v2934, 0.0
    %v2971 = vmax.f32 %v2935, 0.0
    %v2972 = vmax.f32 %v2936, 0.0
    %v2973 = vmax.f32 %v2937, 0.0
    %v2974 = vmax.f32 %v2938, 0.0
    %v2975 = vmax.f32 %v2939, 0.0
    %v2976 = vmax.f32 %v2940, 0.0
    %v2977 = vmax.f32 %v2941, 0.0
    %v2978 = vmax.f32 %v2942, 0.0
    %v2979 = vmax.f32 %v2943, 0.0
    %v2980 = vmax.f32 %v2944, 0.0
    %v2981 = vmax.f32 %v2945, 0.0
    %v2982 = vmax.f32 %v2946, 0.0
    %v2983 = vmax.f32 %v2947, 0.0
    %v2984 = vmax.f32 %v2948, 0.0
    %v2985 = vmax.f32 %v2949, 0.0
    %v2986 = vmax.f32 %v2950, 0.0
    %v2987 = vmax.f32 %v2951, 0.0
    %v2988 = vmax.f32 %v2952, 0.0
    %v2989 = vmax.f32 %v2953, 0.0
    %v2990 = vmax.f32 %v2954, 0.0
    %v2991 = vmax.f32 %v2955, 0.0
    %v2992 = vmax.f32 %v2956, 0.0
    %v2993 = vmax.f32 %v2957, 0.0
    %v2994 = vmax.f32 %v2958, 0.0
    %2995 = vmatpush.msra.mxu0 %v2974
    %2996 = vmatpush.msra.mxu0 %v2973
    %2997 = vmatpush.msra.mxu0 %v2972
    %2998 = vmatpush.msra.mxu0 %v2971
    %2999 = vmatpush.msra.mxu0 %v2970
    %3000 = vmatpush.msra.mxu0 %v2969
    %3001 = vmatpush.msra.mxu0 %v2968
    %3002 = vmatpush.msra.mxu0 %v2967
    %3003 = vmatpush.msra.mxu0 %v2966
    %3004 = vmatpush.msra.mxu0 %v2965
    %3005 = vmatpush.msra.mxu0 %v2964
    %3006 = vmatpush.msra.mxu0 %v2963
    %3007 = vmatpush.msra.mxu0 %v2962
    %3008 = vmatpush.msra.mxu0 %v2961
    %3009 = vmatpush.msra.mxu0 %v2960
    %3010 = vmatpush.msra.mxu0 %v2959
    %3011 = vmatmul.f32.gmra.mxu0 %v1459
    %v3012 = vpop.f32.mrf.mxu0
    %v3013 = vadd.f32 0.0, %v3012
    %3014 = vdwg.mxu0
    %3015 = vmatpush.msra.mxu0 %v2990
    %3016 = vmatpush.msra.mxu0 %v2989
    %3017 = vmatpush.msra.mxu0 %v2988
    %3018 = vmatpush.msra.mxu0 %v2987
    %3019 = vmatpush.msra.mxu0 %v2986
    %3020 = vmatpush.msra.mxu0 %v2985
    %3021 = vmatpush.msra.mxu0 %v2984
    %3022 = vmatpush.msra.mxu0 %v2983
    %3023 = vmatpush.msra.mxu0 %v2982
    %3024 = vmatpush.msra.mxu0 %v2981
    %3025 = vmatpush.msra.mxu0 %v2980
    %3026 = vmatpush.msra.mxu0 %v2979
    %3027 = vmatpush.msra.mxu0 %v2978
    %3028 = vmatpush.msra.mxu0 %v2977
    %3029 = vmatpush.msra.mxu0 %v2976
    %3030 = vmatpush.msra.mxu0 %v2975
    %3031 = vmatmul.f32.gmra.mxu0 %v1460
    %v3032 = vpop.f32.mrf.mxu0
    %v3033 = vadd.f32 %v3013, %v3032
    %3034 = vdwg.mxu0
    %3035 = vmatpush.msra.mxu0 0.0
    %3036 = vmatpush.msra.mxu0 0.0
    %3037 = vmatpush.msra.mxu0 0.0
    %3038 = vmatpush.msra.mxu0 0.0
    %3039 = vmatpush.msra.mxu0 0.0
    %3040 = vmatpush.msra.mxu0 0.0
    %3041 = vmatpush.msra.mxu0 0.0
    %3042 = vmatpush.msra.mxu0 0.0
    %3043 = vmatpush.msra.mxu0 0.0
    %3044 = vmatpush.msra.mxu0 0.0
    %3045 = vmatpush.msra.mxu0 0.0
    %3046 = vmatpush.msra.mxu0 0.0
    %3047 = vmatpush.msra.mxu0 %v2994
    %3048 = vmatpush.msra.mxu0 %v2993
    %3049 = vmatpush.msra.mxu0 %v2992
    %3050 = vmatpush.msra.mxu0 %v2991
    %3051 = vmatmul.f32.gmra.mxu0 %v1465
    %v3052 = vpop.f32.mrf.mxu0
    %v3053 = vadd.f32 %v3033, %v3052
    %3054 = vdwg.mxu0
    %s3055 = sld [smem:[#allocation3 + $0x1b]]
    %v3056 = vstv %s3055
    %v3057 = vmul.f32 %v497, %v3056
    %v3058 = vmul.f32 %v498, %v3056
    %v3059 = vmul.f32 %v499, %v3056
    %v3060 = vmul.f32 %v500, %v3056
    %v3061 = vmul.f32 %v501, %v3056
    %v3062 = vmul.f32 %v502, %v3056
    %v3063 = vmul.f32 %v503, %v3056
    %v3064 = vmul.f32 %v504, %v3056
    %v3065 = vmul.f32 %v505, %v3056
    %v3066 = vmul.f32 %v506, %v3056
    %v3067 = vmul.f32 %v507, %v3056
    %v3068 = vmul.f32 %v508, %v3056
    %v3069 = vmul.f32 %v509, %v3056
    %v3070 = vmul.f32 %v510, %v3056
    %v3071 = vmul.f32 %v511, %v3056
    %v3072 = vmul.f32 %v512, %v3056
    %v3073 = vmul.f32 %v513, %v3056
    %v3074 = vmul.f32 %v514, %v3056
    %v3075 = vmul.f32 %v515, %v3056
    %v3076 = vmul.f32 %v516, %v3056
    %v3077 = vmul.f32 %v517, %v3056
    %v3078 = vmul.f32 %v518, %v3056
    %v3079 = vmul.f32 %v519, %v3056
    %v3080 = vmul.f32 %v520, %v3056
    %v3081 = vmul.f32 %v521, %v3056
    %v3082 = vmul.f32 %v522, %v3056
    %v3083 = vmul.f32 %v523, %v3056
    %v3084 = vmul.f32 %v524, %v3056
    %v3085 = vmul.f32 %v525, %v3056
    %v3086 = vmul.f32 %v526, %v3056
    %v3087 = vmul.f32 %v527, %v3056
    %v3088 = vmul.f32 %v528, %v3056
    %v3089 = vmul.f32 %v529, %v3056
    %v3090 = vmul.f32 %v530, %v3056
    %v3091 = vmul.f32 %v531, %v3056
    %v3092 = vmul.f32 %v532, %v3056
    %s3093 = sld [smem:[#allocation3 + $0x1c]]
    %v3094 = vstv %s3093
    %v3095 = vmul.f32 %v533, %v3094
    %v3096 = vmul.f32 %v534, %v3094
    %v3097 = vmul.f32 %v535, %v3094
    %v3098 = vmul.f32 %v536, %v3094
    %v3099 = vmul.f32 %v537, %v3094
    %v3100 = vmul.f32 %v538, %v3094
    %v3101 = vmul.f32 %v539, %v3094
    %v3102 = vmul.f32 %v540, %v3094
    %v3103 = vmul.f32 %v541, %v3094
    %v3104 = vmul.f32 %v542, %v3094
    %v3105 = vmul.f32 %v543, %v3094
    %v3106 = vmul.f32 %v544, %v3094
    %v3107 = vmul.f32 %v545, %v3094
    %v3108 = vmul.f32 %v546, %v3094
    %v3109 = vmul.f32 %v547, %v3094
    %v3110 = vmul.f32 %v548, %v3094
    %v3111 = vmul.f32 %v549, %v3094
    %v3112 = vmul.f32 %v550, %v3094
    %v3113 = vmul.f32 %v551, %v3094
    %v3114 = vmul.f32 %v552, %v3094
    %v3115 = vmul.f32 %v553, %v3094
    %v3116 = vmul.f32 %v554, %v3094
    %v3117 = vmul.f32 %v555, %v3094
    %v3118 = vmul.f32 %v556, %v3094
    %v3119 = vmul.f32 %v557, %v3094
    %v3120 = vmul.f32 %v558, %v3094
    %v3121 = vmul.f32 %v559, %v3094
    %v3122 = vmul.f32 %v560, %v3094
    %v3123 = vmul.f32 %v561, %v3094
    %v3124 = vmul.f32 %v562, %v3094
    %v3125 = vmul.f32 %v563, %v3094
    %v3126 = vmul.f32 %v564, %v3094
    %v3127 = vmul.f32 %v565, %v3094
    %v3128 = vmul.f32 %v566, %v3094
    %v3129 = vmul.f32 %v567, %v3094
    %v3130 = vmul.f32 %v568, %v3094
    %v3131 = vadd.f32 %v3057, %v3095
    %v3132 = vadd.f32 %v3058, %v3096
    %v3133 = vadd.f32 %v3059, %v3097
    %v3134 = vadd.f32 %v3060, %v3098
    %v3135 = vadd.f32 %v3061, %v3099
    %v3136 = vadd.f32 %v3062, %v3100
    %v3137 = vadd.f32 %v3063, %v3101
    %v3138 = vadd.f32 %v3064, %v3102
    %v3139 = vadd.f32 %v3065, %v3103
    %v3140 = vadd.f32 %v3066, %v3104
    %v3141 = vadd.f32 %v3067, %v3105
    %v3142 = vadd.f32 %v3068, %v3106
    %v3143 = vadd.f32 %v3069, %v3107
    %v3144 = vadd.f32 %v3070, %v3108
    %v3145 = vadd.f32 %v3071, %v3109
    %v3146 = vadd.f32 %v3072, %v3110
    %v3147 = vadd.f32 %v3073, %v3111
    %v3148 = vadd.f32 %v3074, %v3112
    %v3149 = vadd.f32 %v3075, %v3113
    %v3150 = vadd.f32 %v3076, %v3114
    %v3151 = vadd.f32 %v3077, %v3115
    %v3152 = vadd.f32 %v3078, %v3116
    %v3153 = vadd.f32 %v3079, %v3117
    %v3154 = vadd.f32 %v3080, %v3118
    %v3155 = vadd.f32 %v3081, %v3119
    %v3156 = vadd.f32 %v3082, %v3120
    %v3157 = vadd.f32 %v3083, %v3121
    %v3158 = vadd.f32 %v3084, %v3122
    %v3159 = vadd.f32 %v3085, %v3123
    %v3160 = vadd.f32 %v3086, %v3124
    %v3161 = vadd.f32 %v3087, %v3125
    %v3162 = vadd.f32 %v3088, %v3126
    %v3163 = vadd.f32 %v3089, %v3127
    %v3164 = vadd.f32 %v3090, %v3128
    %v3165 = vadd.f32 %v3091, %v3129
    %v3166 = vadd.f32 %v3092, %v3130
    %s3167 = sld [smem:[#allocation3 + $0x1d]]
    %v3168 = vstv %s3167
    %v3169 = vmul.f32 %v569, %v3168
    %v3170 = vmul.f32 %v570, %v3168
    %v3171 = vmul.f32 %v571, %v3168
    %v3172 = vmul.f32 %v572, %v3168
    %v3173 = vmul.f32 %v573, %v3168
    %v3174 = vmul.f32 %v574, %v3168
    %v3175 = vmul.f32 %v575, %v3168
    %v3176 = vmul.f32 %v576, %v3168
    %v3177 = vmul.f32 %v577, %v3168
    %v3178 = vmul.f32 %v578, %v3168
    %v3179 = vmul.f32 %v579, %v3168
    %v3180 = vmul.f32 %v580, %v3168
    %v3181 = vmul.f32 %v581, %v3168
    %v3182 = vmul.f32 %v582, %v3168
    %v3183 = vmul.f32 %v583, %v3168
    %v3184 = vmul.f32 %v584, %v3168
    %v3185 = vmul.f32 %v585, %v3168
    %v3186 = vmul.f32 %v586, %v3168
    %v3187 = vmul.f32 %v587, %v3168
    %v3188 = vmul.f32 %v588, %v3168
    %v3189 = vmul.f32 %v589, %v3168
    %v3190 = vmul.f32 %v590, %v3168
    %v3191 = vmul.f32 %v591, %v3168
    %v3192 = vmul.f32 %v592, %v3168
    %v3193 = vmul.f32 %v593, %v3168
    %v3194 = vmul.f32 %v594, %v3168
    %v3195 = vmul.f32 %v595, %v3168
    %v3196 = vmul.f32 %v596, %v3168
    %v3197 = vmul.f32 %v597, %v3168
    %v3198 = vmul.f32 %v598, %v3168
    %v3199 = vmul.f32 %v599, %v3168
    %v3200 = vmul.f32 %v600, %v3168
    %v3201 = vmul.f32 %v601, %v3168
    %v3202 = vmul.f32 %v602, %v3168
    %v3203 = vmul.f32 %v603, %v3168
    %v3204 = vmul.f32 %v604, %v3168
    %v3205 = vadd.f32 %v3131, %v3169
    %v3206 = vadd.f32 %v3132, %v3170
    %v3207 = vadd.f32 %v3133, %v3171
    %v3208 = vadd.f32 %v3134, %v3172
    %v3209 = vadd.f32 %v3135, %v3173
    %v3210 = vadd.f32 %v3136, %v3174
    %v3211 = vadd.f32 %v3137, %v3175
    %v3212 = vadd.f32 %v3138, %v3176
    %v3213 = vadd.f32 %v3139, %v3177
    %v3214 = vadd.f32 %v3140, %v3178
    %v3215 = vadd.f32 %v3141, %v3179
    %v3216 = vadd.f32 %v3142, %v3180
    %v3217 = vadd.f32 %v3143, %v3181
    %v3218 = vadd.f32 %v3144, %v3182
    %v3219 = vadd.f32 %v3145, %v3183
    %v3220 = vadd.f32 %v3146, %v3184
    %v3221 = vadd.f32 %v3147, %v3185
    %v3222 = vadd.f32 %v3148, %v3186
    %v3223 = vadd.f32 %v3149, %v3187
    %v3224 = vadd.f32 %v3150, %v3188
    %v3225 = vadd.f32 %v3151, %v3189
    %v3226 = vadd.f32 %v3152, %v3190
    %v3227 = vadd.f32 %v3153, %v3191
    %v3228 = vadd.f32 %v3154, %v3192
    %v3229 = vadd.f32 %v3155, %v3193
    %v3230 = vadd.f32 %v3156, %v3194
    %v3231 = vadd.f32 %v3157, %v3195
    %v3232 = vadd.f32 %v3158, %v3196
    %v3233 = vadd.f32 %v3159, %v3197
    %v3234 = vadd.f32 %v3160, %v3198
    %v3235 = vadd.f32 %v3161, %v3199
    %v3236 = vadd.f32 %v3162, %v3200
    %v3237 = vadd.f32 %v3163, %v3201
    %v3238 = vadd.f32 %v3164, %v3202
    %v3239 = vadd.f32 %v3165, %v3203
    %v3240 = vadd.f32 %v3166, %v3204
    %s3241 = sld [smem:[#allocation3 + $0x1e]]
    %v3242 = vstv %s3241
    %v3243 = vmul.f32 %v571, %v3242
    %v3244 = vmul.f32 %v572, %v3242
    %v3245 = vmul.f32 %v573, %v3242
    %v3246 = vmul.f32 %v574, %v3242
    %v3247 = vmul.f32 %v575, %v3242
    %v3248 = vmul.f32 %v576, %v3242
    %v3249 = vmul.f32 %v577, %v3242
    %v3250 = vmul.f32 %v578, %v3242
    %v3251 = vmul.f32 %v579, %v3242
    %v3252 = vmul.f32 %v580, %v3242
    %v3253 = vmul.f32 %v581, %v3242
    %v3254 = vmul.f32 %v582, %v3242
    %v3255 = vmul.f32 %v583, %v3242
    %v3256 = vmul.f32 %v584, %v3242
    %v3257 = vmul.f32 %v585, %v3242
    %v3258 = vmul.f32 %v586, %v3242
    %v3259 = vmul.f32 %v587, %v3242
    %v3260 = vmul.f32 %v588, %v3242
    %v3261 = vmul.f32 %v589, %v3242
    %v3262 = vmul.f32 %v590, %v3242
    %v3263 = vmul.f32 %v591, %v3242
    %v3264 = vmul.f32 %v592, %v3242
    %v3265 = vmul.f32 %v593, %v3242
    %v3266 = vmul.f32 %v594, %v3242
    %v3267 = vmul.f32 %v595, %v3242
    %v3268 = vmul.f32 %v596, %v3242
    %v3269 = vmul.f32 %v597, %v3242
    %v3270 = vmul.f32 %v598, %v3242
    %v3271 = vmul.f32 %v599, %v3242
    %v3272 = vmul.f32 %v600, %v3242
    %v3273 = vmul.f32 %v601, %v3242
    %v3274 = vmul.f32 %v602, %v3242
    %v3275 = vmul.f32 %v603, %v3242
    %v3276 = vmul.f32 %v604, %v3242
    %v3277 = vmul.f32 %v605, %v3242
    %v3278 = vmul.f32 %v606, %v3242
    %v3279 = vadd.f32 %v3205, %v3243
    %v3280 = vadd.f32 %v3206, %v3244
    %v3281 = vadd.f32 %v3207, %v3245
    %v3282 = vadd.f32 %v3208, %v3246
    %v3283 = vadd.f32 %v3209, %v3247
    %v3284 = vadd.f32 %v3210, %v3248
    %v3285 = vadd.f32 %v3211, %v3249
    %v3286 = vadd.f32 %v3212, %v3250
    %v3287 = vadd.f32 %v3213, %v3251
    %v3288 = vadd.f32 %v3214, %v3252
    %v3289 = vadd.f32 %v3215, %v3253
    %v3290 = vadd.f32 %v3216, %v3254
    %v3291 = vadd.f32 %v3217, %v3255
    %v3292 = vadd.f32 %v3218, %v3256
    %v3293 = vadd.f32 %v3219, %v3257
    %v3294 = vadd.f32 %v3220, %v3258
    %v3295 = vadd.f32 %v3221, %v3259
    %v3296 = vadd.f32 %v3222, %v3260
    %v3297 = vadd.f32 %v3223, %v3261
    %v3298 = vadd.f32 %v3224, %v3262
    %v3299 = vadd.f32 %v3225, %v3263
    %v3300 = vadd.f32 %v3226, %v3264
    %v3301 = vadd.f32 %v3227, %v3265
    %v3302 = vadd.f32 %v3228, %v3266
    %v3303 = vadd.f32 %v3229, %v3267
    %v3304 = vadd.f32 %v3230, %v3268
    %v3305 = vadd.f32 %v3231, %v3269
    %v3306 = vadd.f32 %v3232, %v3270
    %v3307 = vadd.f32 %v3233, %v3271
    %v3308 = vadd.f32 %v3234, %v3272
    %v3309 = vadd.f32 %v3235, %v3273
    %v3310 = vadd.f32 %v3236, %v3274
    %v3311 = vadd.f32 %v3237, %v3275
    %v3312 = vadd.f32 %v3238, %v3276
    %v3313 = vadd.f32 %v3239, %v3277
    %v3314 = vadd.f32 %v3240, %v3278
    %s3315 = sld [smem:[#allocation3 + $0x1f]]
    %v3316 = vstv %s3315
    %v3317 = vmul.f32 %v607, %v3316
    %v3318 = vmul.f32 %v608, %v3316
    %v3319 = vmul.f32 %v609, %v3316
    %v3320 = vmul.f32 %v610, %v3316
    %v3321 = vmul.f32 %v611, %v3316
    %v3322 = vmul.f32 %v612, %v3316
    %v3323 = vmul.f32 %v613, %v3316
    %v3324 = vmul.f32 %v614, %v3316
    %v3325 = vmul.f32 %v615, %v3316
    %v3326 = vmul.f32 %v616, %v3316
    %v3327 = vmul.f32 %v617, %v3316
    %v3328 = vmul.f32 %v618, %v3316
    %v3329 = vmul.f32 %v619, %v3316
    %v3330 = vmul.f32 %v620, %v3316
    %v3331 = vmul.f32 %v621, %v3316
    %v3332 = vmul.f32 %v622, %v3316
    %v3333 = vmul.f32 %v623, %v3316
    %v3334 = vmul.f32 %v624, %v3316
    %v3335 = vmul.f32 %v625, %v3316
    %v3336 = vmul.f32 %v626, %v3316
    %v3337 = vmul.f32 %v627, %v3316
    %v3338 = vmul.f32 %v628, %v3316
    %v3339 = vmul.f32 %v629, %v3316
    %v3340 = vmul.f32 %v630, %v3316
    %v3341 = vmul.f32 %v631, %v3316
    %v3342 = vmul.f32 %v632, %v3316
    %v3343 = vmul.f32 %v633, %v3316
    %v3344 = vmul.f32 %v634, %v3316
    %v3345 = vmul.f32 %v635, %v3316
    %v3346 = vmul.f32 %v636, %v3316
    %v3347 = vmul.f32 %v637, %v3316
    %v3348 = vmul.f32 %v638, %v3316
    %v3349 = vmul.f32 %v639, %v3316
    %v3350 = vmul.f32 %v640, %v3316
    %v3351 = vmul.f32 %v641, %v3316
    %v3352 = vmul.f32 %v642, %v3316
    %v3353 = vadd.f32 %v3279, %v3317
    %v3354 = vadd.f32 %v3280, %v3318
    %v3355 = vadd.f32 %v3281, %v3319
    %v3356 = vadd.f32 %v3282, %v3320
    %v3357 = vadd.f32 %v3283, %v3321
    %v3358 = vadd.f32 %v3284, %v3322
    %v3359 = vadd.f32 %v3285, %v3323
    %v3360 = vadd.f32 %v3286, %v3324
    %v3361 = vadd.f32 %v3287, %v3325
    %v3362 = vadd.f32 %v3288, %v3326
    %v3363 = vadd.f32 %v3289, %v3327
    %v3364 = vadd.f32 %v3290, %v3328
    %v3365 = vadd.f32 %v3291, %v3329
    %v3366 = vadd.f32 %v3292, %v3330
    %v3367 = vadd.f32 %v3293, %v3331
    %v3368 = vadd.f32 %v3294, %v3332
    %v3369 = vadd.f32 %v3295, %v3333
    %v3370 = vadd.f32 %v3296, %v3334
    %v3371 = vadd.f32 %v3297, %v3335
    %v3372 = vadd.f32 %v3298, %v3336
    %v3373 = vadd.f32 %v3299, %v3337
    %v3374 = vadd.f32 %v3300, %v3338
    %v3375 = vadd.f32 %v3301, %v3339
    %v3376 = vadd.f32 %v3302, %v3340
    %v3377 = vadd.f32 %v3303, %v3341
    %v3378 = vadd.f32 %v3304, %v3342
    %v3379 = vadd.f32 %v3305, %v3343
    %v3380 = vadd.f32 %v3306, %v3344
    %v3381 = vadd.f32 %v3307, %v3345
    %v3382 = vadd.f32 %v3308, %v3346
    %v3383 = vadd.f32 %v3309, %v3347
    %v3384 = vadd.f32 %v3310, %v3348
    %v3385 = vadd.f32 %v3311, %v3349
    %v3386 = vadd.f32 %v3312, %v3350
    %v3387 = vadd.f32 %v3313, %v3351
    %v3388 = vadd.f32 %v3314, %v3352
    %s3389 = sld [smem:[#allocation3 + $0x20]]
    %v3390 = vstv %s3389
    %v3391 = vmul.f32 %v643, %v3390
    %v3392 = vmul.f32 %v644, %v3390
    %v3393 = vmul.f32 %v645, %v3390
    %v3394 = vmul.f32 %v646, %v3390
    %v3395 = vmul.f32 %v647, %v3390
    %v3396 = vmul.f32 %v648, %v3390
    %v3397 = vmul.f32 %v649, %v3390
    %v3398 = vmul.f32 %v650, %v3390
    %v3399 = vmul.f32 %v651, %v3390
    %v3400 = vmul.f32 %v652, %v3390
    %v3401 = vmul.f32 %v653, %v3390
    %v3402 = vmul.f32 %v654, %v3390
    %v3403 = vmul.f32 %v655, %v3390
    %v3404 = vmul.f32 %v656, %v3390
    %v3405 = vmul.f32 %v657, %v3390
    %v3406 = vmul.f32 %v658, %v3390
    %v3407 = vmul.f32 %v659, %v3390
    %v3408 = vmul.f32 %v660, %v3390
    %v3409 = vmul.f32 %v661, %v3390
    %v3410 = vmul.f32 %v662, %v3390
    %v3411 = vmul.f32 %v663, %v3390
    %v3412 = vmul.f32 %v664, %v3390
    %v3413 = vmul.f32 %v665, %v3390
    %v3414 = vmul.f32 %v666, %v3390
    %v3415 = vmul.f32 %v667, %v3390
    %v3416 = vmul.f32 %v668, %v3390
    %v3417 = vmul.f32 %v669, %v3390
    %v3418 = vmul.f32 %v670, %v3390
    %v3419 = vmul.f32 %v671, %v3390
    %v3420 = vmul.f32 %v672, %v3390
    %v3421 = vmul.f32 %v673, %v3390
    %v3422 = vmul.f32 %v674, %v3390
    %v3423 = vmul.f32 %v675, %v3390
    %v3424 = vmul.f32 %v676, %v3390
    %v3425 = vmul.f32 %v677, %v3390
    %v3426 = vmul.f32 %v678, %v3390
    %v3427 = vadd.f32 %v3353, %v3391
    %v3428 = vadd.f32 %v3354, %v3392
    %v3429 = vadd.f32 %v3355, %v3393
    %v3430 = vadd.f32 %v3356, %v3394
    %v3431 = vadd.f32 %v3357, %v3395
    %v3432 = vadd.f32 %v3358, %v3396
    %v3433 = vadd.f32 %v3359, %v3397
    %v3434 = vadd.f32 %v3360, %v3398
    %v3435 = vadd.f32 %v3361, %v3399
    %v3436 = vadd.f32 %v3362, %v3400
    %v3437 = vadd.f32 %v3363, %v3401
    %v3438 = vadd.f32 %v3364, %v3402
    %v3439 = vadd.f32 %v3365, %v3403
    %v3440 = vadd.f32 %v3366, %v3404
    %v3441 = vadd.f32 %v3367, %v3405
    %v3442 = vadd.f32 %v3368, %v3406
    %v3443 = vadd.f32 %v3369, %v3407
    %v3444 = vadd.f32 %v3370, %v3408
    %v3445 = vadd.f32 %v3371, %v3409
    %v3446 = vadd.f32 %v3372, %v3410
    %v3447 = vadd.f32 %v3373, %v3411
    %v3448 = vadd.f32 %v3374, %v3412
    %v3449 = vadd.f32 %v3375, %v3413
    %v3450 = vadd.f32 %v3376, %v3414
    %v3451 = vadd.f32 %v3377, %v3415
    %v3452 = vadd.f32 %v3378, %v3416
    %v3453 = vadd.f32 %v3379, %v3417
    %v3454 = vadd.f32 %v3380, %v3418
    %v3455 = vadd.f32 %v3381, %v3419
    %v3456 = vadd.f32 %v3382, %v3420
    %v3457 = vadd.f32 %v3383, %v3421
    %v3458 = vadd.f32 %v3384, %v3422
    %v3459 = vadd.f32 %v3385, %v3423
    %v3460 = vadd.f32 %v3386, %v3424
    %v3461 = vadd.f32 %v3387, %v3425
    %v3462 = vadd.f32 %v3388, %v3426
    %s3463 = sld [smem:[#allocation3 + $0x21]]
    %v3464 = vstv %s3463
    %v3465 = vmul.f32 %v645, %v3464
    %v3466 = vmul.f32 %v646, %v3464
    %v3467 = vmul.f32 %v647, %v3464
    %v3468 = vmul.f32 %v648, %v3464
    %v3469 = vmul.f32 %v649, %v3464
    %v3470 = vmul.f32 %v650, %v3464
    %v3471 = vmul.f32 %v651, %v3464
    %v3472 = vmul.f32 %v652, %v3464
    %v3473 = vmul.f32 %v653, %v3464
    %v3474 = vmul.f32 %v654, %v3464
    %v3475 = vmul.f32 %v655, %v3464
    %v3476 = vmul.f32 %v656, %v3464
    %v3477 = vmul.f32 %v657, %v3464
    %v3478 = vmul.f32 %v658, %v3464
    %v3479 = vmul.f32 %v659, %v3464
    %v3480 = vmul.f32 %v660, %v3464
    %v3481 = vmul.f32 %v661, %v3464
    %v3482 = vmul.f32 %v662, %v3464
    %v3483 = vmul.f32 %v663, %v3464
    %v3484 = vmul.f32 %v664, %v3464
    %v3485 = vmul.f32 %v665, %v3464
    %v3486 = vmul.f32 %v666, %v3464
    %v3487 = vmul.f32 %v667, %v3464
    %v3488 = vmul.f32 %v668, %v3464
    %v3489 = vmul.f32 %v669, %v3464
    %v3490 = vmul.f32 %v670, %v3464
    %v3491 = vmul.f32 %v671, %v3464
    %v3492 = vmul.f32 %v672, %v3464
    %v3493 = vmul.f32 %v673, %v3464
    %v3494 = vmul.f32 %v674, %v3464
    %v3495 = vmul.f32 %v675, %v3464
    %v3496 = vmul.f32 %v676, %v3464
    %v3497 = vmul.f32 %v677, %v3464
    %v3498 = vmul.f32 %v678, %v3464
    %v3499 = vmul.f32 %v679, %v3464
    %v3500 = vmul.f32 %v680, %v3464
    %v3501 = vadd.f32 %v3427, %v3465
    %v3502 = vadd.f32 %v3428, %v3466
    %v3503 = vadd.f32 %v3429, %v3467
    %v3504 = vadd.f32 %v3430, %v3468
    %v3505 = vadd.f32 %v3431, %v3469
    %v3506 = vadd.f32 %v3432, %v3470
    %v3507 = vadd.f32 %v3433, %v3471
    %v3508 = vadd.f32 %v3434, %v3472
    %v3509 = vadd.f32 %v3435, %v3473
    %v3510 = vadd.f32 %v3436, %v3474
    %v3511 = vadd.f32 %v3437, %v3475
    %v3512 = vadd.f32 %v3438, %v3476
    %v3513 = vadd.f32 %v3439, %v3477
    %v3514 = vadd.f32 %v3440, %v3478
    %v3515 = vadd.f32 %v3441, %v3479
    %v3516 = vadd.f32 %v3442, %v3480
    %v3517 = vadd.f32 %v3443, %v3481
    %v3518 = vadd.f32 %v3444, %v3482
    %v3519 = vadd.f32 %v3445, %v3483
    %v3520 = vadd.f32 %v3446, %v3484
    %v3521 = vadd.f32 %v3447, %v3485
    %v3522 = vadd.f32 %v3448, %v3486
    %v3523 = vadd.f32 %v3449, %v3487
    %v3524 = vadd.f32 %v3450, %v3488
    %v3525 = vadd.f32 %v3451, %v3489
    %v3526 = vadd.f32 %v3452, %v3490
    %v3527 = vadd.f32 %v3453, %v3491
    %v3528 = vadd.f32 %v3454, %v3492
    %v3529 = vadd.f32 %v3455, %v3493
    %v3530 = vadd.f32 %v3456, %v3494
    %v3531 = vadd.f32 %v3457, %v3495
    %v3532 = vadd.f32 %v3458, %v3496
    %v3533 = vadd.f32 %v3459, %v3497
    %v3534 = vadd.f32 %v3460, %v3498
    %v3535 = vadd.f32 %v3461, %v3499
    %v3536 = vadd.f32 %v3462, %v3500
    %s3537 = sld [smem:[#allocation3 + $0x22]]
    %v3538 = vstv %s3537
    %v3539 = vmul.f32 %v681, %v3538
    %v3540 = vmul.f32 %v682, %v3538
    %v3541 = vmul.f32 %v683, %v3538
    %v3542 = vmul.f32 %v684, %v3538
    %v3543 = vmul.f32 %v685, %v3538
    %v3544 = vmul.f32 %v686, %v3538
    %v3545 = vmul.f32 %v687, %v3538
    %v3546 = vmul.f32 %v688, %v3538
    %v3547 = vmul.f32 %v689, %v3538
    %v3548 = vmul.f32 %v690, %v3538
    %v3549 = vmul.f32 %v691, %v3538
    %v3550 = vmul.f32 %v692, %v3538
    %v3551 = vmul.f32 %v693, %v3538
    %v3552 = vmul.f32 %v694, %v3538
    %v3553 = vmul.f32 %v695, %v3538
    %v3554 = vmul.f32 %v696, %v3538
    %v3555 = vmul.f32 %v697, %v3538
    %v3556 = vmul.f32 %v698, %v3538
    %v3557 = vmul.f32 %v699, %v3538
    %v3558 = vmul.f32 %v700, %v3538
    %v3559 = vmul.f32 %v701, %v3538
    %v3560 = vmul.f32 %v702, %v3538
    %v3561 = vmul.f32 %v703, %v3538
    %v3562 = vmul.f32 %v704, %v3538
    %v3563 = vmul.f32 %v705, %v3538
    %v3564 = vmul.f32 %v706, %v3538
    %v3565 = vmul.f32 %v707, %v3538
    %v3566 = vmul.f32 %v708, %v3538
    %v3567 = vmul.f32 %v709, %v3538
    %v3568 = vmul.f32 %v710, %v3538
    %v3569 = vmul.f32 %v711, %v3538
    %v3570 = vmul.f32 %v712, %v3538
    %v3571 = vmul.f32 %v713, %v3538
    %v3572 = vmul.f32 %v714, %v3538
    %v3573 = vmul.f32 %v715, %v3538
    %v3574 = vmul.f32 %v716, %v3538
    %v3575 = vadd.f32 %v3501, %v3539
    %v3576 = vadd.f32 %v3502, %v3540
    %v3577 = vadd.f32 %v3503, %v3541
    %v3578 = vadd.f32 %v3504, %v3542
    %v3579 = vadd.f32 %v3505, %v3543
    %v3580 = vadd.f32 %v3506, %v3544
    %v3581 = vadd.f32 %v3507, %v3545
    %v3582 = vadd.f32 %v3508, %v3546
    %v3583 = vadd.f32 %v3509, %v3547
    %v3584 = vadd.f32 %v3510, %v3548
    %v3585 = vadd.f32 %v3511, %v3549
    %v3586 = vadd.f32 %v3512, %v3550
    %v3587 = vadd.f32 %v3513, %v3551
    %v3588 = vadd.f32 %v3514, %v3552
    %v3589 = vadd.f32 %v3515, %v3553
    %v3590 = vadd.f32 %v3516, %v3554
    %v3591 = vadd.f32 %v3517, %v3555
    %v3592 = vadd.f32 %v3518, %v3556
    %v3593 = vadd.f32 %v3519, %v3557
    %v3594 = vadd.f32 %v3520, %v3558
    %v3595 = vadd.f32 %v3521, %v3559
    %v3596 = vadd.f32 %v3522, %v3560
    %v3597 = vadd.f32 %v3523, %v3561
    %v3598 = vadd.f32 %v3524, %v3562
    %v3599 = vadd.f32 %v3525, %v3563
    %v3600 = vadd.f32 %v3526, %v3564
    %v3601 = vadd.f32 %v3527, %v3565
    %v3602 = vadd.f32 %v3528, %v3566
    %v3603 = vadd.f32 %v3529, %v3567
    %v3604 = vadd.f32 %v3530, %v3568
    %v3605 = vadd.f32 %v3531, %v3569
    %v3606 = vadd.f32 %v3532, %v3570
    %v3607 = vadd.f32 %v3533, %v3571
    %v3608 = vadd.f32 %v3534, %v3572
    %v3609 = vadd.f32 %v3535, %v3573
    %v3610 = vadd.f32 %v3536, %v3574
    %s3611 = sld [smem:[#allocation3 + $0x23]]
    %v3612 = vstv %s3611
    %v3613 = vmul.f32 %v717, %v3612
    %v3614 = vmul.f32 %v718, %v3612
    %v3615 = vmul.f32 %v719, %v3612
    %v3616 = vmul.f32 %v720, %v3612
    %v3617 = vmul.f32 %v721, %v3612
    %v3618 = vmul.f32 %v722, %v3612
    %v3619 = vmul.f32 %v723, %v3612
    %v3620 = vmul.f32 %v724, %v3612
    %v3621 = vmul.f32 %v725, %v3612
    %v3622 = vmul.f32 %v726, %v3612
    %v3623 = vmul.f32 %v727, %v3612
    %v3624 = vmul.f32 %v728, %v3612
    %v3625 = vmul.f32 %v729, %v3612
    %v3626 = vmul.f32 %v730, %v3612
    %v3627 = vmul.f32 %v731, %v3612
    %v3628 = vmul.f32 %v732, %v3612
    %v3629 = vmul.f32 %v733, %v3612
    %v3630 = vmul.f32 %v734, %v3612
    %v3631 = vmul.f32 %v735, %v3612
    %v3632 = vmul.f32 %v736, %v3612
    %v3633 = vmul.f32 %v737, %v3612
    %v3634 = vmul.f32 %v738, %v3612
    %v3635 = vmul.f32 %v739, %v3612
    %v3636 = vmul.f32 %v740, %v3612
    %v3637 = vmul.f32 %v741, %v3612
    %v3638 = vmul.f32 %v742, %v3612
    %v3639 = vmul.f32 %v743, %v3612
    %v3640 = vmul.f32 %v744, %v3612
    %v3641 = vmul.f32 %v745, %v3612
    %v3642 = vmul.f32 %v746, %v3612
    %v3643 = vmul.f32 %v747, %v3612
    %v3644 = vmul.f32 %v748, %v3612
    %v3645 = vmul.f32 %v749, %v3612
    %v3646 = vmul.f32 %v750, %v3612
    %v3647 = vmul.f32 %v751, %v3612
    %v3648 = vmul.f32 %v752, %v3612
    %v3649 = vadd.f32 %v3575, %v3613
    %v3650 = vadd.f32 %v3576, %v3614
    %v3651 = vadd.f32 %v3577, %v3615
    %v3652 = vadd.f32 %v3578, %v3616
    %v3653 = vadd.f32 %v3579, %v3617
    %v3654 = vadd.f32 %v3580, %v3618
    %v3655 = vadd.f32 %v3581, %v3619
    %v3656 = vadd.f32 %v3582, %v3620
    %v3657 = vadd.f32 %v3583, %v3621
    %v3658 = vadd.f32 %v3584, %v3622
    %v3659 = vadd.f32 %v3585, %v3623
    %v3660 = vadd.f32 %v3586, %v3624
    %v3661 = vadd.f32 %v3587, %v3625
    %v3662 = vadd.f32 %v3588, %v3626
    %v3663 = vadd.f32 %v3589, %v3627
    %v3664 = vadd.f32 %v3590, %v3628
    %v3665 = vadd.f32 %v3591, %v3629
    %v3666 = vadd.f32 %v3592, %v3630
    %v3667 = vadd.f32 %v3593, %v3631
    %v3668 = vadd.f32 %v3594, %v3632
    %v3669 = vadd.f32 %v3595, %v3633
    %v3670 = vadd.f32 %v3596, %v3634
    %v3671 = vadd.f32 %v3597, %v3635
    %v3672 = vadd.f32 %v3598, %v3636
    %v3673 = vadd.f32 %v3599, %v3637
    %v3674 = vadd.f32 %v3600, %v3638
    %v3675 = vadd.f32 %v3601, %v3639
    %v3676 = vadd.f32 %v3602, %v3640
    %v3677 = vadd.f32 %v3603, %v3641
    %v3678 = vadd.f32 %v3604, %v3642
    %v3679 = vadd.f32 %v3605, %v3643
    %v3680 = vadd.f32 %v3606, %v3644
    %v3681 = vadd.f32 %v3607, %v3645
    %v3682 = vadd.f32 %v3608, %v3646
    %v3683 = vadd.f32 %v3609, %v3647
    %v3684 = vadd.f32 %v3610, %v3648
    %s3685 = sld [smem:[#allocation5 + $0x3]]
    %v3686 = vstv %s3685
    %v3687 = vadd.f32 %v3649, %v3686
    %v3688 = vadd.f32 %v3650, %v3686
    %v3689 = vadd.f32 %v3651, %v3686
    %v3690 = vadd.f32 %v3652, %v3686
    %v3691 = vadd.f32 %v3653, %v3686
    %v3692 = vadd.f32 %v3654, %v3686
    %v3693 = vadd.f32 %v3655, %v3686
    %v3694 = vadd.f32 %v3656, %v3686
    %v3695 = vadd.f32 %v3657, %v3686
    %v3696 = vadd.f32 %v3658, %v3686
    %v3697 = vadd.f32 %v3659, %v3686
    %v3698 = vadd.f32 %v3660, %v3686
    %v3699 = vadd.f32 %v3661, %v3686
    %v3700 = vadd.f32 %v3662, %v3686
    %v3701 = vadd.f32 %v3663, %v3686
    %v3702 = vadd.f32 %v3664, %v3686
    %v3703 = vadd.f32 %v3665, %v3686
    %v3704 = vadd.f32 %v3666, %v3686
    %v3705 = vadd.f32 %v3667, %v3686
    %v3706 = vadd.f32 %v3668, %v3686
    %v3707 = vadd.f32 %v3669, %v3686
    %v3708 = vadd.f32 %v3670, %v3686
    %v3709 = vadd.f32 %v3671, %v3686
    %v3710 = vadd.f32 %v3672, %v3686
    %v3711 = vadd.f32 %v3673, %v3686
    %v3712 = vadd.f32 %v3674, %v3686
    %v3713 = vadd.f32 %v3675, %v3686
    %v3714 = vadd.f32 %v3676, %v3686
    %v3715 = vadd.f32 %v3677, %v3686
    %v3716 = vadd.f32 %v3678, %v3686
    %v3717 = vadd.f32 %v3679, %v3686
    %v3718 = vadd.f32 %v3680, %v3686
    %v3719 = vadd.f32 %v3681, %v3686
    %v3720 = vadd.f32 %v3682, %v3686
    %v3721 = vadd.f32 %v3683, %v3686
    %v3722 = vadd.f32 %v3684, %v3686
    %v3723 = vmax.f32 %v3687, 0.0
    %v3724 = vmax.f32 %v3688, 0.0
    %v3725 = vmax.f32 %v3689, 0.0
    %v3726 = vmax.f32 %v3690, 0.0
    %v3727 = vmax.f32 %v3691, 0.0
    %v3728 = vmax.f32 %v3692, 0.0
    %v3729 = vmax.f32 %v3693, 0.0
    %v3730 = vmax.f32 %v3694, 0.0
    %v3731 = vmax.f32 %v3695, 0.0
    %v3732 = vmax.f32 %v3696, 0.0
    %v3733 = vmax.f32 %v3697, 0.0
    %v3734 = vmax.f32 %v3698, 0.0
    %v3735 = vmax.f32 %v3699, 0.0
    %v3736 = vmax.f32 %v3700, 0.0
    %v3737 = vmax.f32 %v3701, 0.0
    %v3738 = vmax.f32 %v3702, 0.0
    %v3739 = vmax.f32 %v3703, 0.0
    %v3740 = vmax.f32 %v3704, 0.0
    %v3741 = vmax.f32 %v3705, 0.0
    %v3742 = vmax.f32 %v3706, 0.0
    %v3743 = vmax.f32 %v3707, 0.0
    %v3744 = vmax.f32 %v3708, 0.0
    %v3745 = vmax.f32 %v3709, 0.0
    %v3746 = vmax.f32 %v3710, 0.0
    %v3747 = vmax.f32 %v3711, 0.0
    %v3748 = vmax.f32 %v3712, 0.0
    %v3749 = vmax.f32 %v3713, 0.0
    %v3750 = vmax.f32 %v3714, 0.0
    %v3751 = vmax.f32 %v3715, 0.0
    %v3752 = vmax.f32 %v3716, 0.0
    %v3753 = vmax.f32 %v3717, 0.0
    %v3754 = vmax.f32 %v3718, 0.0
    %v3755 = vmax.f32 %v3719, 0.0
    %v3756 = vmax.f32 %v3720, 0.0
    %v3757 = vmax.f32 %v3721, 0.0
    %v3758 = vmax.f32 %v3722, 0.0
    %3759 = vmatpush.msra.mxu0 %v3738
    %3760 = vmatpush.msra.mxu0 %v3737
    %3761 = vmatpush.msra.mxu0 %v3736
    %3762 = vmatpush.msra.mxu0 %v3735
    %3763 = vmatpush.msra.mxu0 %v3734
    %3764 = vmatpush.msra.mxu0 %v3733
    %3765 = vmatpush.msra.mxu0 %v3732
    %3766 = vmatpush.msra.mxu0 %v3731
    %3767 = vmatpush.msra.mxu0 %v3730
    %3768 = vmatpush.msra.mxu0 %v3729
    %3769 = vmatpush.msra.mxu0 %v3728
    %3770 = vmatpush.msra.mxu0 %v3727
    %3771 = vmatpush.msra.mxu0 %v3726
    %3772 = vmatpush.msra.mxu0 %v3725
    %3773 = vmatpush.msra.mxu0 %v3724
    %3774 = vmatpush.msra.mxu0 %v3723
    %3775 = vmatmul.f32.gmra.mxu0 %v1459
    %v3776 = vpop.f32.mrf.mxu0
    %v3777 = vadd.f32 0.0, %v3776
    %3778 = vdwg.mxu0
    %3779 = vmatpush.msra.mxu0 %v3754
    %3780 = vmatpush.msra.mxu0 %v3753
    %3781 = vmatpush.msra.mxu0 %v3752
    %3782 = vmatpush.msra.mxu0 %v3751
    %3783 = vmatpush.msra.mxu0 %v3750
    %3784 = vmatpush.msra.mxu0 %v3749
    %3785 = vmatpush.msra.mxu0 %v3748
    %3786 = vmatpush.msra.mxu0 %v3747
    %3787 = vmatpush.msra.mxu0 %v3746
    %3788 = vmatpush.msra.mxu0 %v3745
    %3789 = vmatpush.msra.mxu0 %v3744
    %3790 = vmatpush.msra.mxu0 %v3743
    %3791 = vmatpush.msra.mxu0 %v3742
    %3792 = vmatpush.msra.mxu0 %v3741
    %3793 = vmatpush.msra.mxu0 %v3740
    %3794 = vmatpush.msra.mxu0 %v3739
    %3795 = vmatmul.f32.gmra.mxu0 %v1460
    %v3796 = vpop.f32.mrf.mxu0
    %v3797 = vadd.f32 %v3777, %v3796
    %3798 = vdwg.mxu0
    %3799 = vmatpush.msra.mxu0 0.0
    %3800 = vmatpush.msra.mxu0 0.0
    %3801 = vmatpush.msra.mxu0 0.0
    %3802 = vmatpush.msra.mxu0 0.0
    %3803 = vmatpush.msra.mxu0 0.0
    %3804 = vmatpush.msra.mxu0 0.0
    %3805 = vmatpush.msra.mxu0 0.0
    %3806 = vmatpush.msra.mxu0 0.0
    %3807 = vmatpush.msra.mxu0 0.0
    %3808 = vmatpush.msra.mxu0 0.0
    %3809 = vmatpush.msra.mxu0 0.0
    %3810 = vmatpush.msra.mxu0 0.0
    %3811 = vmatpush.msra.mxu0 %v3758
    %3812 = vmatpush.msra.mxu0 %v3757
    %3813 = vmatpush.msra.mxu0 %v3756
    %3814 = vmatpush.msra.mxu0 %v3755
    %3815 = vmatmul.f32.gmra.mxu0 %v1465
    %v3816 = vpop.f32.mrf.mxu0
    %v3817 = vadd.f32 %v3797, %v3816
    %3818 = vdwg.mxu0
    %s3819 = sld [smem:[#allocation3 + $0x24]]
    %v3820 = vstv %s3819
    %v3821 = vmul.f32 %v497, %v3820
    %v3822 = vmul.f32 %v498, %v3820
    %v3823 = vmul.f32 %v499, %v3820
    %v3824 = vmul.f32 %v500, %v3820
    %v3825 = vmul.f32 %v501, %v3820
    %v3826 = vmul.f32 %v502, %v3820
    %v3827 = vmul.f32 %v503, %v3820
    %v3828 = vmul.f32 %v504, %v3820
    %v3829 = vmul.f32 %v505, %v3820
    %v3830 = vmul.f32 %v506, %v3820
    %v3831 = vmul.f32 %v507, %v3820
    %v3832 = vmul.f32 %v508, %v3820
    %v3833 = vmul.f32 %v509, %v3820
    %v3834 = vmul.f32 %v510, %v3820
    %v3835 = vmul.f32 %v511, %v3820
    %v3836 = vmul.f32 %v512, %v3820
    %v3837 = vmul.f32 %v513, %v3820
    %v3838 = vmul.f32 %v514, %v3820
    %v3839 = vmul.f32 %v515, %v3820
    %v3840 = vmul.f32 %v516, %v3820
    %v3841 = vmul.f32 %v517, %v3820
    %v3842 = vmul.f32 %v518, %v3820
    %v3843 = vmul.f32 %v519, %v3820
    %v3844 = vmul.f32 %v520, %v3820
    %v3845 = vmul.f32 %v521, %v3820
    %v3846 = vmul.f32 %v522, %v3820
    %v3847 = vmul.f32 %v523, %v3820
    %v3848 = vmul.f32 %v524, %v3820
    %v3849 = vmul.f32 %v525, %v3820
    %v3850 = vmul.f32 %v526, %v3820
    %v3851 = vmul.f32 %v527, %v3820
    %v3852 = vmul.f32 %v528, %v3820
    %v3853 = vmul.f32 %v529, %v3820
    %v3854 = vmul.f32 %v530, %v3820
    %v3855 = vmul.f32 %v531, %v3820
    %v3856 = vmul.f32 %v532, %v3820
    %s3857 = sld [smem:[#allocation3 + $0x25]]
    %v3858 = vstv %s3857
    %v3859 = vmul.f32 %v533, %v3858
    %v3860 = vmul.f32 %v534, %v3858
    %v3861 = vmul.f32 %v535, %v3858
    %v3862 = vmul.f32 %v536, %v3858
    %v3863 = vmul.f32 %v537, %v3858
    %v3864 = vmul.f32 %v538, %v3858
    %v3865 = vmul.f32 %v539, %v3858
    %v3866 = vmul.f32 %v540, %v3858
    %v3867 = vmul.f32 %v541, %v3858
    %v3868 = vmul.f32 %v542, %v3858
    %v3869 = vmul.f32 %v543, %v3858
    %v3870 = vmul.f32 %v544, %v3858
    %v3871 = vmul.f32 %v545, %v3858
    %v3872 = vmul.f32 %v546, %v3858
    %v3873 = vmul.f32 %v547, %v3858
    %v3874 = vmul.f32 %v548, %v3858
    %v3875 = vmul.f32 %v549, %v3858
    %v3876 = vmul.f32 %v550, %v3858
    %v3877 = vmul.f32 %v551, %v3858
    %v3878 = vmul.f32 %v552, %v3858
    %v3879 = vmul.f32 %v553, %v3858
    %v3880 = vmul.f32 %v554, %v3858
    %v3881 = vmul.f32 %v555, %v3858
    %v3882 = vmul.f32 %v556, %v3858
    %v3883 = vmul.f32 %v557, %v3858
    %v3884 = vmul.f32 %v558, %v3858
    %v3885 = vmul.f32 %v559, %v3858
    %v3886 = vmul.f32 %v560, %v3858
    %v3887 = vmul.f32 %v561, %v3858
    %v3888 = vmul.f32 %v562, %v3858
    %v3889 = vmul.f32 %v563, %v3858
    %v3890 = vmul.f32 %v564, %v3858
    %v3891 = vmul.f32 %v565, %v3858
    %v3892 = vmul.f32 %v566, %v3858
    %v3893 = vmul.f32 %v567, %v3858
    %v3894 = vmul.f32 %v568, %v3858
    %v3895 = vadd.f32 %v3821, %v3859
    %v3896 = vadd.f32 %v3822, %v3860
    %v3897 = vadd.f32 %v3823, %v3861
    %v3898 = vadd.f32 %v3824, %v3862
    %v3899 = vadd.f32 %v3825, %v3863
    %v3900 = vadd.f32 %v3826, %v3864
    %v3901 = vadd.f32 %v3827, %v3865
    %v3902 = vadd.f32 %v3828, %v3866
    %v3903 = vadd.f32 %v3829, %v3867
    %v3904 = vadd.f32 %v3830, %v3868
    %v3905 = vadd.f32 %v3831, %v3869
    %v3906 = vadd.f32 %v3832, %v3870
    %v3907 = vadd.f32 %v3833, %v3871
    %v3908 = vadd.f32 %v3834, %v3872
    %v3909 = vadd.f32 %v3835, %v3873
    %v3910 = vadd.f32 %v3836, %v3874
    %v3911 = vadd.f32 %v3837, %v3875
    %v3912 = vadd.f32 %v3838, %v3876
    %v3913 = vadd.f32 %v3839, %v3877
    %v3914 = vadd.f32 %v3840, %v3878
    %v3915 = vadd.f32 %v3841, %v3879
    %v3916 = vadd.f32 %v3842, %v3880
    %v3917 = vadd.f32 %v3843, %v3881
    %v3918 = vadd.f32 %v3844, %v3882
    %v3919 = vadd.f32 %v3845, %v3883
    %v3920 = vadd.f32 %v3846, %v3884
    %v3921 = vadd.f32 %v3847, %v3885
    %v3922 = vadd.f32 %v3848, %v3886
    %v3923 = vadd.f32 %v3849, %v3887
    %v3924 = vadd.f32 %v3850, %v3888
    %v3925 = vadd.f32 %v3851, %v3889
    %v3926 = vadd.f32 %v3852, %v3890
    %v3927 = vadd.f32 %v3853, %v3891
    %v3928 = vadd.f32 %v3854, %v3892
    %v3929 = vadd.f32 %v3855, %v3893
    %v3930 = vadd.f32 %v3856, %v3894
    %s3931 = sld [smem:[#allocation3 + $0x26]]
    %v3932 = vstv %s3931
    %v3933 = vmul.f32 %v569, %v3932
    %v3934 = vmul.f32 %v570, %v3932
    %v3935 = vmul.f32 %v571, %v3932
    %v3936 = vmul.f32 %v572, %v3932
    %v3937 = vmul.f32 %v573, %v3932
    %v3938 = vmul.f32 %v574, %v3932
    %v3939 = vmul.f32 %v575, %v3932
    %v3940 = vmul.f32 %v576, %v3932
    %v3941 = vmul.f32 %v577, %v3932
    %v3942 = vmul.f32 %v578, %v3932
    %v3943 = vmul.f32 %v579, %v3932
    %v3944 = vmul.f32 %v580, %v3932
    %v3945 = vmul.f32 %v581, %v3932
    %v3946 = vmul.f32 %v582, %v3932
    %v3947 = vmul.f32 %v583, %v3932
    %v3948 = vmul.f32 %v584, %v3932
    %v3949 = vmul.f32 %v585, %v3932
    %v3950 = vmul.f32 %v586, %v3932
    %v3951 = vmul.f32 %v587, %v3932
    %v3952 = vmul.f32 %v588, %v3932
    %v3953 = vmul.f32 %v589, %v3932
    %v3954 = vmul.f32 %v590, %v3932
    %v3955 = vmul.f32 %v591, %v3932
    %v3956 = vmul.f32 %v592, %v3932
    %v3957 = vmul.f32 %v593, %v3932
    %v3958 = vmul.f32 %v594, %v3932
    %v3959 = vmul.f32 %v595, %v3932
    %v3960 = vmul.f32 %v596, %v3932
    %v3961 = vmul.f32 %v597, %v3932
    %v3962 = vmul.f32 %v598, %v3932
    %v3963 = vmul.f32 %v599, %v3932
    %v3964 = vmul.f32 %v600, %v3932
    %v3965 = vmul.f32 %v601, %v3932
    %v3966 = vmul.f32 %v602, %v3932
    %v3967 = vmul.f32 %v603, %v3932
    %v3968 = vmul.f32 %v604, %v3932
    %v3969 = vadd.f32 %v3895, %v3933
    %v3970 = vadd.f32 %v3896, %v3934
    %v3971 = vadd.f32 %v3897, %v3935
    %v3972 = vadd.f32 %v3898, %v3936
    %v3973 = vadd.f32 %v3899, %v3937
    %v3974 = vadd.f32 %v3900, %v3938
    %v3975 = vadd.f32 %v3901, %v3939
    %v3976 = vadd.f32 %v3902, %v3940
    %v3977 = vadd.f32 %v3903, %v3941
    %v3978 = vadd.f32 %v3904, %v3942
    %v3979 = vadd.f32 %v3905, %v3943
    %v3980 = vadd.f32 %v3906, %v3944
    %v3981 = vadd.f32 %v3907, %v3945
    %v3982 = vadd.f32 %v3908, %v3946
    %v3983 = vadd.f32 %v3909, %v3947
    %v3984 = vadd.f32 %v3910, %v3948
    %v3985 = vadd.f32 %v3911, %v3949
    %v3986 = vadd.f32 %v3912, %v3950
    %v3987 = vadd.f32 %v3913, %v3951
    %v3988 = vadd.f32 %v3914, %v3952
    %v3989 = vadd.f32 %v3915, %v3953
    %v3990 = vadd.f32 %v3916, %v3954
    %v3991 = vadd.f32 %v3917, %v3955
    %v3992 = vadd.f32 %v3918, %v3956
    %v3993 = vadd.f32 %v3919, %v3957
    %v3994 = vadd.f32 %v3920, %v3958
    %v3995 = vadd.f32 %v3921, %v3959
    %v3996 = vadd.f32 %v3922, %v3960
    %v3997 = vadd.f32 %v3923, %v3961
    %v3998 = vadd.f32 %v3924, %v3962
    %v3999 = vadd.f32 %v3925, %v3963
    %v4000 = vadd.f32 %v3926, %v3964
    %v4001 = vadd.f32 %v3927, %v3965
    %v4002 = vadd.f32 %v3928, %v3966
    %v4003 = vadd.f32 %v3929, %v3967
    %v4004 = vadd.f32 %v3930, %v3968
    %s4005 = sld [smem:[#allocation3 + $0x27]]
    %v4006 = vstv %s4005
    %v4007 = vmul.f32 %v571, %v4006
    %v4008 = vmul.f32 %v572, %v4006
    %v4009 = vmul.f32 %v573, %v4006
    %v4010 = vmul.f32 %v574, %v4006
    %v4011 = vmul.f32 %v575, %v4006
    %v4012 = vmul.f32 %v576, %v4006
    %v4013 = vmul.f32 %v577, %v4006
    %v4014 = vmul.f32 %v578, %v4006
    %v4015 = vmul.f32 %v579, %v4006
    %v4016 = vmul.f32 %v580, %v4006
    %v4017 = vmul.f32 %v581, %v4006
    %v4018 = vmul.f32 %v582, %v4006
    %v4019 = vmul.f32 %v583, %v4006
    %v4020 = vmul.f32 %v584, %v4006
    %v4021 = vmul.f32 %v585, %v4006
    %v4022 = vmul.f32 %v586, %v4006
    %v4023 = vmul.f32 %v587, %v4006
    %v4024 = vmul.f32 %v588, %v4006
    %v4025 = vmul.f32 %v589, %v4006
    %v4026 = vmul.f32 %v590, %v4006
    %v4027 = vmul.f32 %v591, %v4006
    %v4028 = vmul.f32 %v592, %v4006
    %v4029 = vmul.f32 %v593, %v4006
    %v4030 = vmul.f32 %v594, %v4006
    %v4031 = vmul.f32 %v595, %v4006
    %v4032 = vmul.f32 %v596, %v4006
    %v4033 = vmul.f32 %v597, %v4006
    %v4034 = vmul.f32 %v598, %v4006
    %v4035 = vmul.f32 %v599, %v4006
    %v4036 = vmul.f32 %v600, %v4006
    %v4037 = vmul.f32 %v601, %v4006
    %v4038 = vmul.f32 %v602, %v4006
    %v4039 = vmul.f32 %v603, %v4006
    %v4040 = vmul.f32 %v604, %v4006
    %v4041 = vmul.f32 %v605, %v4006
    %v4042 = vmul.f32 %v606, %v4006
    %v4043 = vadd.f32 %v3969, %v4007
    %v4044 = vadd.f32 %v3970, %v4008
    %v4045 = vadd.f32 %v3971, %v4009
    %v4046 = vadd.f32 %v3972, %v4010
    %v4047 = vadd.f32 %v3973, %v4011
    %v4048 = vadd.f32 %v3974, %v4012
    %v4049 = vadd.f32 %v3975, %v4013
    %v4050 = vadd.f32 %v3976, %v4014
    %v4051 = vadd.f32 %v3977, %v4015
    %v4052 = vadd.f32 %v3978, %v4016
    %v4053 = vadd.f32 %v3979, %v4017
    %v4054 = vadd.f32 %v3980, %v4018
    %v4055 = vadd.f32 %v3981, %v4019
    %v4056 = vadd.f32 %v3982, %v4020
    %v4057 = vadd.f32 %v3983, %v4021
    %v4058 = vadd.f32 %v3984, %v4022
    %v4059 = vadd.f32 %v3985, %v4023
    %v4060 = vadd.f32 %v3986, %v4024
    %v4061 = vadd.f32 %v3987, %v4025
    %v4062 = vadd.f32 %v3988, %v4026
    %v4063 = vadd.f32 %v3989, %v4027
    %v4064 = vadd.f32 %v3990, %v4028
    %v4065 = vadd.f32 %v3991, %v4029
    %v4066 = vadd.f32 %v3992, %v4030
    %v4067 = vadd.f32 %v3993, %v4031
    %v4068 = vadd.f32 %v3994, %v4032
    %v4069 = vadd.f32 %v3995, %v4033
    %v4070 = vadd.f32 %v3996, %v4034
    %v4071 = vadd.f32 %v3997, %v4035
    %v4072 = vadd.f32 %v3998, %v4036
    %v4073 = vadd.f32 %v3999, %v4037
    %v4074 = vadd.f32 %v4000, %v4038
    %v4075 = vadd.f32 %v4001, %v4039
    %v4076 = vadd.f32 %v4002, %v4040
    %v4077 = vadd.f32 %v4003, %v4041
    %v4078 = vadd.f32 %v4004, %v4042
    %s4079 = sld [smem:[#allocation3 + $0x28]]
    %v4080 = vstv %s4079
    %v4081 = vmul.f32 %v607, %v4080
    %v4082 = vmul.f32 %v608, %v4080
    %v4083 = vmul.f32 %v609, %v4080
    %v4084 = vmul.f32 %v610, %v4080
    %v4085 = vmul.f32 %v611, %v4080
    %v4086 = vmul.f32 %v612, %v4080
    %v4087 = vmul.f32 %v613, %v4080
    %v4088 = vmul.f32 %v614, %v4080
    %v4089 = vmul.f32 %v615, %v4080
    %v4090 = vmul.f32 %v616, %v4080
    %v4091 = vmul.f32 %v617, %v4080
    %v4092 = vmul.f32 %v618, %v4080
    %v4093 = vmul.f32 %v619, %v4080
    %v4094 = vmul.f32 %v620, %v4080
    %v4095 = vmul.f32 %v621, %v4080
    %v4096 = vmul.f32 %v622, %v4080
    %v4097 = vmul.f32 %v623, %v4080
    %v4098 = vmul.f32 %v624, %v4080
    %v4099 = vmul.f32 %v625, %v4080
    %v4100 = vmul.f32 %v626, %v4080
    %v4101 = vmul.f32 %v627, %v4080
    %v4102 = vmul.f32 %v628, %v4080
    %v4103 = vmul.f32 %v629, %v4080
    %v4104 = vmul.f32 %v630, %v4080
    %v4105 = vmul.f32 %v631, %v4080
    %v4106 = vmul.f32 %v632, %v4080
    %v4107 = vmul.f32 %v633, %v4080
    %v4108 = vmul.f32 %v634, %v4080
    %v4109 = vmul.f32 %v635, %v4080
    %v4110 = vmul.f32 %v636, %v4080
    %v4111 = vmul.f32 %v637, %v4080
    %v4112 = vmul.f32 %v638, %v4080
    %v4113 = vmul.f32 %v639, %v4080
    %v4114 = vmul.f32 %v640, %v4080
    %v4115 = vmul.f32 %v641, %v4080
    %v4116 = vmul.f32 %v642, %v4080
    %v4117 = vadd.f32 %v4043, %v4081
    %v4118 = vadd.f32 %v4044, %v4082
    %v4119 = vadd.f32 %v4045, %v4083
    %v4120 = vadd.f32 %v4046, %v4084
    %v4121 = vadd.f32 %v4047, %v4085
    %v4122 = vadd.f32 %v4048, %v4086
    %v4123 = vadd.f32 %v4049, %v4087
    %v4124 = vadd.f32 %v4050, %v4088
    %v4125 = vadd.f32 %v4051, %v4089
    %v4126 = vadd.f32 %v4052, %v4090
    %v4127 = vadd.f32 %v4053, %v4091
    %v4128 = vadd.f32 %v4054, %v4092
    %v4129 = vadd.f32 %v4055, %v4093
    %v4130 = vadd.f32 %v4056, %v4094
    %v4131 = vadd.f32 %v4057, %v4095
    %v4132 = vadd.f32 %v4058, %v4096
    %v4133 = vadd.f32 %v4059, %v4097
    %v4134 = vadd.f32 %v4060, %v4098
    %v4135 = vadd.f32 %v4061, %v4099
    %v4136 = vadd.f32 %v4062, %v4100
    %v4137 = vadd.f32 %v4063, %v4101
    %v4138 = vadd.f32 %v4064, %v4102
    %v4139 = vadd.f32 %v4065, %v4103
    %v4140 = vadd.f32 %v4066, %v4104
    %v4141 = vadd.f32 %v4067, %v4105
    %v4142 = vadd.f32 %v4068, %v4106
    %v4143 = vadd.f32 %v4069, %v4107
    %v4144 = vadd.f32 %v4070, %v4108
    %v4145 = vadd.f32 %v4071, %v4109
    %v4146 = vadd.f32 %v4072, %v4110
    %v4147 = vadd.f32 %v4073, %v4111
    %v4148 = vadd.f32 %v4074, %v4112
    %v4149 = vadd.f32 %v4075, %v4113
    %v4150 = vadd.f32 %v4076, %v4114
    %v4151 = vadd.f32 %v4077, %v4115
    %v4152 = vadd.f32 %v4078, %v4116
    %s4153 = sld [smem:[#allocation3 + $0x29]]
    %v4154 = vstv %s4153
    %v4155 = vmul.f32 %v643, %v4154
    %v4156 = vmul.f32 %v644, %v4154
    %v4157 = vmul.f32 %v645, %v4154
    %v4158 = vmul.f32 %v646, %v4154
    %v4159 = vmul.f32 %v647, %v4154
    %v4160 = vmul.f32 %v648, %v4154
    %v4161 = vmul.f32 %v649, %v4154
    %v4162 = vmul.f32 %v650, %v4154
    %v4163 = vmul.f32 %v651, %v4154
    %v4164 = vmul.f32 %v652, %v4154
    %v4165 = vmul.f32 %v653, %v4154
    %v4166 = vmul.f32 %v654, %v4154
    %v4167 = vmul.f32 %v655, %v4154
    %v4168 = vmul.f32 %v656, %v4154
    %v4169 = vmul.f32 %v657, %v4154
    %v4170 = vmul.f32 %v658, %v4154
    %v4171 = vmul.f32 %v659, %v4154
    %v4172 = vmul.f32 %v660, %v4154
    %v4173 = vmul.f32 %v661, %v4154
    %v4174 = vmul.f32 %v662, %v4154
    %v4175 = vmul.f32 %v663, %v4154
    %v4176 = vmul.f32 %v664, %v4154
    %v4177 = vmul.f32 %v665, %v4154
    %v4178 = vmul.f32 %v666, %v4154
    %v4179 = vmul.f32 %v667, %v4154
    %v4180 = vmul.f32 %v668, %v4154
    %v4181 = vmul.f32 %v669, %v4154
    %v4182 = vmul.f32 %v670, %v4154
    %v4183 = vmul.f32 %v671, %v4154
    %v4184 = vmul.f32 %v672, %v4154
    %v4185 = vmul.f32 %v673, %v4154
    %v4186 = vmul.f32 %v674, %v4154
    %v4187 = vmul.f32 %v675, %v4154
    %v4188 = vmul.f32 %v676, %v4154
    %v4189 = vmul.f32 %v677, %v4154
    %v4190 = vmul.f32 %v678, %v4154
    %v4191 = vadd.f32 %v4117, %v4155
    %v4192 = vadd.f32 %v4118, %v4156
    %v4193 = vadd.f32 %v4119, %v4157
    %v4194 = vadd.f32 %v4120, %v4158
    %v4195 = vadd.f32 %v4121, %v4159
    %v4196 = vadd.f32 %v4122, %v4160
    %v4197 = vadd.f32 %v4123, %v4161
    %v4198 = vadd.f32 %v4124, %v4162
    %v4199 = vadd.f32 %v4125, %v4163
    %v4200 = vadd.f32 %v4126, %v4164
    %v4201 = vadd.f32 %v4127, %v4165
    %v4202 = vadd.f32 %v4128, %v4166
    %v4203 = vadd.f32 %v4129, %v4167
    %v4204 = vadd.f32 %v4130, %v4168
    %v4205 = vadd.f32 %v4131, %v4169
    %v4206 = vadd.f32 %v4132, %v4170
    %v4207 = vadd.f32 %v4133, %v4171
    %v4208 = vadd.f32 %v4134, %v4172
    %v4209 = vadd.f32 %v4135, %v4173
    %v4210 = vadd.f32 %v4136, %v4174
    %v4211 = vadd.f32 %v4137, %v4175
    %v4212 = vadd.f32 %v4138, %v4176
    %v4213 = vadd.f32 %v4139, %v4177
    %v4214 = vadd.f32 %v4140, %v4178
    %v4215 = vadd.f32 %v4141, %v4179
    %v4216 = vadd.f32 %v4142, %v4180
    %v4217 = vadd.f32 %v4143, %v4181
    %v4218 = vadd.f32 %v4144, %v4182
    %v4219 = vadd.f32 %v4145, %v4183
    %v4220 = vadd.f32 %v4146, %v4184
    %v4221 = vadd.f32 %v4147, %v4185
    %v4222 = vadd.f32 %v4148, %v4186
    %v4223 = vadd.f32 %v4149, %v4187
    %v4224 = vadd.f32 %v4150, %v4188
    %v4225 = vadd.f32 %v4151, %v4189
    %v4226 = vadd.f32 %v4152, %v4190
    %s4227 = sld [smem:[#allocation3 + $0x2a]]
    %v4228 = vstv %s4227
    %v4229 = vmul.f32 %v645, %v4228
    %v4230 = vmul.f32 %v646, %v4228
    %v4231 = vmul.f32 %v647, %v4228
    %v4232 = vmul.f32 %v648, %v4228
    %v4233 = vmul.f32 %v649, %v4228
    %v4234 = vmul.f32 %v650, %v4228
    %v4235 = vmul.f32 %v651, %v4228
    %v4236 = vmul.f32 %v652, %v4228
    %v4237 = vmul.f32 %v653, %v4228
    %v4238 = vmul.f32 %v654, %v4228
    %v4239 = vmul.f32 %v655, %v4228
    %v4240 = vmul.f32 %v656, %v4228
    %v4241 = vmul.f32 %v657, %v4228
    %v4242 = vmul.f32 %v658, %v4228
    %v4243 = vmul.f32 %v659, %v4228
    %v4244 = vmul.f32 %v660, %v4228
    %v4245 = vmul.f32 %v661, %v4228
    %v4246 = vmul.f32 %v662, %v4228
    %v4247 = vmul.f32 %v663, %v4228
    %v4248 = vmul.f32 %v664, %v4228
    %v4249 = vmul.f32 %v665, %v4228
    %v4250 = vmul.f32 %v666, %v4228
    %v4251 = vmul.f32 %v667, %v4228
    %v4252 = vmul.f32 %v668, %v4228
    %v4253 = vmul.f32 %v669, %v4228
    %v4254 = vmul.f32 %v670, %v4228
    %v4255 = vmul.f32 %v671, %v4228
    %v4256 = vmul.f32 %v672, %v4228
    %v4257 = vmul.f32 %v673, %v4228
    %v4258 = vmul.f32 %v674, %v4228
    %v4259 = vmul.f32 %v675, %v4228
    %v4260 = vmul.f32 %v676, %v4228
    %v4261 = vmul.f32 %v677, %v4228
    %v4262 = vmul.f32 %v678, %v4228
    %v4263 = vmul.f32 %v679, %v4228
    %v4264 = vmul.f32 %v680, %v4228
    %v4265 = vadd.f32 %v4191, %v4229
    %v4266 = vadd.f32 %v4192, %v4230
    %v4267 = vadd.f32 %v4193, %v4231
    %v4268 = vadd.f32 %v4194, %v4232
    %v4269 = vadd.f32 %v4195, %v4233
    %v4270 = vadd.f32 %v4196, %v4234
    %v4271 = vadd.f32 %v4197, %v4235
    %v4272 = vadd.f32 %v4198, %v4236
    %v4273 = vadd.f32 %v4199, %v4237
    %v4274 = vadd.f32 %v4200, %v4238
    %v4275 = vadd.f32 %v4201, %v4239
    %v4276 = vadd.f32 %v4202, %v4240
    %v4277 = vadd.f32 %v4203, %v4241
    %v4278 = vadd.f32 %v4204, %v4242
    %v4279 = vadd.f32 %v4205, %v4243
    %v4280 = vadd.f32 %v4206, %v4244
    %v4281 = vadd.f32 %v4207, %v4245
    %v4282 = vadd.f32 %v4208, %v4246
    %v4283 = vadd.f32 %v4209, %v4247
    %v4284 = vadd.f32 %v4210, %v4248
    %v4285 = vadd.f32 %v4211, %v4249
    %v4286 = vadd.f32 %v4212, %v4250
    %v4287 = vadd.f32 %v4213, %v4251
    %v4288 = vadd.f32 %v4214, %v4252
    %v4289 = vadd.f32 %v4215, %v4253
    %v4290 = vadd.f32 %v4216, %v4254
    %v4291 = vadd.f32 %v4217, %v4255
    %v4292 = vadd.f32 %v4218, %v4256
    %v4293 = vadd.f32 %v4219, %v4257
    %v4294 = vadd.f32 %v4220, %v4258
    %v4295 = vadd.f32 %v4221, %v4259
    %v4296 = vadd.f32 %v4222, %v4260
    %v4297 = vadd.f32 %v4223, %v4261
    %v4298 = vadd.f32 %v4224, %v4262
    %v4299 = vadd.f32 %v4225, %v4263
    %v4300 = vadd.f32 %v4226, %v4264
    %s4301 = sld [smem:[#allocation3 + $0x2b]]
    %v4302 = vstv %s4301
    %v4303 = vmul.f32 %v681, %v4302
    %v4304 = vmul.f32 %v682, %v4302
    %v4305 = vmul.f32 %v683, %v4302
    %v4306 = vmul.f32 %v684, %v4302
    %v4307 = vmul.f32 %v685, %v4302
    %v4308 = vmul.f32 %v686, %v4302
    %v4309 = vmul.f32 %v687, %v4302
    %v4310 = vmul.f32 %v688, %v4302
    %v4311 = vmul.f32 %v689, %v4302
    %v4312 = vmul.f32 %v690, %v4302
    %v4313 = vmul.f32 %v691, %v4302
    %v4314 = vmul.f32 %v692, %v4302
    %v4315 = vmul.f32 %v693, %v4302
    %v4316 = vmul.f32 %v694, %v4302
    %v4317 = vmul.f32 %v695, %v4302
    %v4318 = vmul.f32 %v696, %v4302
    %v4319 = vmul.f32 %v697, %v4302
    %v4320 = vmul.f32 %v698, %v4302
    %v4321 = vmul.f32 %v699, %v4302
    %v4322 = vmul.f32 %v700, %v4302
    %v4323 = vmul.f32 %v701, %v4302
    %v4324 = vmul.f32 %v702, %v4302
    %v4325 = vmul.f32 %v703, %v4302
    %v4326 = vmul.f32 %v704, %v4302
    %v4327 = vmul.f32 %v705, %v4302
    %v4328 = vmul.f32 %v706, %v4302
    %v4329 = vmul.f32 %v707, %v4302
    %v4330 = vmul.f32 %v708, %v4302
    %v4331 = vmul.f32 %v709, %v4302
    %v4332 = vmul.f32 %v710, %v4302
    %v4333 = vmul.f32 %v711, %v4302
    %v4334 = vmul.f32 %v712, %v4302
    %v4335 = vmul.f32 %v713, %v4302
    %v4336 = vmul.f32 %v714, %v4302
    %v4337 = vmul.f32 %v715, %v4302
    %v4338 = vmul.f32 %v716, %v4302
    %v4339 = vadd.f32 %v4265, %v4303
    %v4340 = vadd.f32 %v4266, %v4304
    %v4341 = vadd.f32 %v4267, %v4305
    %v4342 = vadd.f32 %v4268, %v4306
    %v4343 = vadd.f32 %v4269, %v4307
    %v4344 = vadd.f32 %v4270, %v4308
    %v4345 = vadd.f32 %v4271, %v4309
    %v4346 = vadd.f32 %v4272, %v4310
    %v4347 = vadd.f32 %v4273, %v4311
    %v4348 = vadd.f32 %v4274, %v4312
    %v4349 = vadd.f32 %v4275, %v4313
    %v4350 = vadd.f32 %v4276, %v4314
    %v4351 = vadd.f32 %v4277, %v4315
    %v4352 = vadd.f32 %v4278, %v4316
    %v4353 = vadd.f32 %v4279, %v4317
    %v4354 = vadd.f32 %v4280, %v4318
    %v4355 = vadd.f32 %v4281, %v4319
    %v4356 = vadd.f32 %v4282, %v4320
    %v4357 = vadd.f32 %v4283, %v4321
    %v4358 = vadd.f32 %v4284, %v4322
    %v4359 = vadd.f32 %v4285, %v4323
    %v4360 = vadd.f32 %v4286, %v4324
    %v4361 = vadd.f32 %v4287, %v4325
    %v4362 = vadd.f32 %v4288, %v4326
    %v4363 = vadd.f32 %v4289, %v4327
    %v4364 = vadd.f32 %v4290, %v4328
    %v4365 = vadd.f32 %v4291, %v4329
    %v4366 = vadd.f32 %v4292, %v4330
    %v4367 = vadd.f32 %v4293, %v4331
    %v4368 = vadd.f32 %v4294, %v4332
    %v4369 = vadd.f32 %v4295, %v4333
    %v4370 = vadd.f32 %v4296, %v4334
    %v4371 = vadd.f32 %v4297, %v4335
    %v4372 = vadd.f32 %v4298, %v4336
    %v4373 = vadd.f32 %v4299, %v4337
    %v4374 = vadd.f32 %v4300, %v4338
    %s4375 = sld [smem:[#allocation3 + $0x2c]]
    %v4376 = vstv %s4375
    %v4377 = vmul.f32 %v717, %v4376
    %v4378 = vmul.f32 %v718, %v4376
    %v4379 = vmul.f32 %v719, %v4376
    %v4380 = vmul.f32 %v720, %v4376
    %v4381 = vmul.f32 %v721, %v4376
    %v4382 = vmul.f32 %v722, %v4376
    %v4383 = vmul.f32 %v723, %v4376
    %v4384 = vmul.f32 %v724, %v4376
    %v4385 = vmul.f32 %v725, %v4376
    %v4386 = vmul.f32 %v726, %v4376
    %v4387 = vmul.f32 %v727, %v4376
    %v4388 = vmul.f32 %v728, %v4376
    %v4389 = vmul.f32 %v729, %v4376
    %v4390 = vmul.f32 %v730, %v4376
    %v4391 = vmul.f32 %v731, %v4376
    %v4392 = vmul.f32 %v732, %v4376
    %v4393 = vmul.f32 %v733, %v4376
    %v4394 = vmul.f32 %v734, %v4376
    %v4395 = vmul.f32 %v735, %v4376
    %v4396 = vmul.f32 %v736, %v4376
    %v4397 = vmul.f32 %v737, %v4376
    %v4398 = vmul.f32 %v738, %v4376
    %v4399 = vmul.f32 %v739, %v4376
    %v4400 = vmul.f32 %v740, %v4376
    %v4401 = vmul.f32 %v741, %v4376
    %v4402 = vmul.f32 %v742, %v4376
    %v4403 = vmul.f32 %v743, %v4376
    %v4404 = vmul.f32 %v744, %v4376
    %v4405 = vmul.f32 %v745, %v4376
    %v4406 = vmul.f32 %v746, %v4376
    %v4407 = vmul.f32 %v747, %v4376
    %v4408 = vmul.f32 %v748, %v4376
    %v4409 = vmul.f32 %v749, %v4376
    %v4410 = vmul.f32 %v750, %v4376
    %v4411 = vmul.f32 %v751, %v4376
    %v4412 = vmul.f32 %v752, %v4376
    %v4413 = vadd.f32 %v4339, %v4377
    %v4414 = vadd.f32 %v4340, %v4378
    %v4415 = vadd.f32 %v4341, %v4379
    %v4416 = vadd.f32 %v4342, %v4380
    %v4417 = vadd.f32 %v4343, %v4381
    %v4418 = vadd.f32 %v4344, %v4382
    %v4419 = vadd.f32 %v4345, %v4383
    %v4420 = vadd.f32 %v4346, %v4384
    %v4421 = vadd.f32 %v4347, %v4385
    %v4422 = vadd.f32 %v4348, %v4386
    %v4423 = vadd.f32 %v4349, %v4387
    %v4424 = vadd.f32 %v4350, %v4388
    %v4425 = vadd.f32 %v4351, %v4389
    %v4426 = vadd.f32 %v4352, %v4390
    %v4427 = vadd.f32 %v4353, %v4391
    %v4428 = vadd.f32 %v4354, %v4392
    %v4429 = vadd.f32 %v4355, %v4393
    %v4430 = vadd.f32 %v4356, %v4394
    %v4431 = vadd.f32 %v4357, %v4395
    %v4432 = vadd.f32 %v4358, %v4396
    %v4433 = vadd.f32 %v4359, %v4397
    %v4434 = vadd.f32 %v4360, %v4398
    %v4435 = vadd.f32 %v4361, %v4399
    %v4436 = vadd.f32 %v4362, %v4400
    %v4437 = vadd.f32 %v4363, %v4401
    %v4438 = vadd.f32 %v4364, %v4402
    %v4439 = vadd.f32 %v4365, %v4403
    %v4440 = vadd.f32 %v4366, %v4404
    %v4441 = vadd.f32 %v4367, %v4405
    %v4442 = vadd.f32 %v4368, %v4406
    %v4443 = vadd.f32 %v4369, %v4407
    %v4444 = vadd.f32 %v4370, %v4408
    %v4445 = vadd.f32 %v4371, %v4409
    %v4446 = vadd.f32 %v4372, %v4410
    %v4447 = vadd.f32 %v4373, %v4411
    %v4448 = vadd.f32 %v4374, %v4412
    %s4449 = sld [smem:[#allocation5 + $0x4]]
    %v4450 = vstv %s4449
    %v4451 = vadd.f32 %v4413, %v4450
    %v4452 = vadd.f32 %v4414, %v4450
    %v4453 = vadd.f32 %v4415, %v4450
    %v4454 = vadd.f32 %v4416, %v4450
    %v4455 = vadd.f32 %v4417, %v4450
    %v4456 = vadd.f32 %v4418, %v4450
    %v4457 = vadd.f32 %v4419, %v4450
    %v4458 = vadd.f32 %v4420, %v4450
    %v4459 = vadd.f32 %v4421, %v4450
    %v4460 = vadd.f32 %v4422, %v4450
    %v4461 = vadd.f32 %v4423, %v4450
    %v4462 = vadd.f32 %v4424, %v4450
    %v4463 = vadd.f32 %v4425, %v4450
    %v4464 = vadd.f32 %v4426, %v4450
    %v4465 = vadd.f32 %v4427, %v4450
    %v4466 = vadd.f32 %v4428, %v4450
    %v4467 = vadd.f32 %v4429, %v4450
    %v4468 = vadd.f32 %v4430, %v4450
    %v4469 = vadd.f32 %v4431, %v4450
    %v4470 = vadd.f32 %v4432, %v4450
    %v4471 = vadd.f32 %v4433, %v4450
    %v4472 = vadd.f32 %v4434, %v4450
    %v4473 = vadd.f32 %v4435, %v4450
    %v4474 = vadd.f32 %v4436, %v4450
    %v4475 = vadd.f32 %v4437, %v4450
    %v4476 = vadd.f32 %v4438, %v4450
    %v4477 = vadd.f32 %v4439, %v4450
    %v4478 = vadd.f32 %v4440, %v4450
    %v4479 = vadd.f32 %v4441, %v4450
    %v4480 = vadd.f32 %v4442, %v4450
    %v4481 = vadd.f32 %v4443, %v4450
    %v4482 = vadd.f32 %v4444, %v4450
    %v4483 = vadd.f32 %v4445, %v4450
    %v4484 = vadd.f32 %v4446, %v4450
    %v4485 = vadd.f32 %v4447, %v4450
    %v4486 = vadd.f32 %v4448, %v4450
    %v4487 = vmax.f32 %v4451, 0.0
    %v4488 = vmax.f32 %v4452, 0.0
    %v4489 = vmax.f32 %v4453, 0.0
    %v4490 = vmax.f32 %v4454, 0.0
    %v4491 = vmax.f32 %v4455, 0.0
    %v4492 = vmax.f32 %v4456, 0.0
    %v4493 = vmax.f32 %v4457, 0.0
    %v4494 = vmax.f32 %v4458, 0.0
    %v4495 = vmax.f32 %v4459, 0.0
    %v4496 = vmax.f32 %v4460, 0.0
    %v4497 = vmax.f32 %v4461, 0.0
    %v4498 = vmax.f32 %v4462, 0.0
    %v4499 = vmax.f32 %v4463, 0.0
    %v4500 = vmax.f32 %v4464, 0.0
    %v4501 = vmax.f32 %v4465, 0.0
    %v4502 = vmax.f32 %v4466, 0.0
    %v4503 = vmax.f32 %v4467, 0.0
    %v4504 = vmax.f32 %v4468, 0.0
    %v4505 = vmax.f32 %v4469, 0.0
    %v4506 = vmax.f32 %v4470, 0.0
    %v4507 = vmax.f32 %v4471, 0.0
    %v4508 = vmax.f32 %v4472, 0.0
    %v4509 = vmax.f32 %v4473, 0.0
    %v4510 = vmax.f32 %v4474, 0.0
    %v4511 = vmax.f32 %v4475, 0.0
    %v4512 = vmax.f32 %v4476, 0.0
    %v4513 = vmax.f32 %v4477, 0.0
    %v4514 = vmax.f32 %v4478, 0.0
    %v4515 = vmax.f32 %v4479, 0.0
    %v4516 = vmax.f32 %v4480, 0.0
    %v4517 = vmax.f32 %v4481, 0.0
    %v4518 = vmax.f32 %v4482, 0.0
    %v4519 = vmax.f32 %v4483, 0.0
    %v4520 = vmax.f32 %v4484, 0.0
    %v4521 = vmax.f32 %v4485, 0.0
    %v4522 = vmax.f32 %v4486, 0.0
    %4523 = vmatpush.msra.mxu0 %v4502
    %4524 = vmatpush.msra.mxu0 %v4501
    %4525 = vmatpush.msra.mxu0 %v4500
    %4526 = vmatpush.msra.mxu0 %v4499
    %4527 = vmatpush.msra.mxu0 %v4498
    %4528 = vmatpush.msra.mxu0 %v4497
    %4529 = vmatpush.msra.mxu0 %v4496
    %4530 = vmatpush.msra.mxu0 %v4495
    %4531 = vmatpush.msra.mxu0 %v4494
    %4532 = vmatpush.msra.mxu0 %v4493
    %4533 = vmatpush.msra.mxu0 %v4492
    %4534 = vmatpush.msra.mxu0 %v4491
    %4535 = vmatpush.msra.mxu0 %v4490
    %4536 = vmatpush.msra.mxu0 %v4489
    %4537 = vmatpush.msra.mxu0 %v4488
    %4538 = vmatpush.msra.mxu0 %v4487
    %4539 = vmatmul.f32.gmra.mxu0 %v1459
    %v4540 = vpop.f32.mrf.mxu0
    %v4541 = vadd.f32 0.0, %v4540
    %4542 = vdwg.mxu0
    %4543 = vmatpush.msra.mxu0 %v4518
    %4544 = vmatpush.msra.mxu0 %v4517
    %4545 = vmatpush.msra.mxu0 %v4516
    %4546 = vmatpush.msra.mxu0 %v4515
    %4547 = vmatpush.msra.mxu0 %v4514
    %4548 = vmatpush.msra.mxu0 %v4513
    %4549 = vmatpush.msra.mxu0 %v4512
    %4550 = vmatpush.msra.mxu0 %v4511
    %4551 = vmatpush.msra.mxu0 %v4510
    %4552 = vmatpush.msra.mxu0 %v4509
    %4553 = vmatpush.msra.mxu0 %v4508
    %4554 = vmatpush.msra.mxu0 %v4507
    %4555 = vmatpush.msra.mxu0 %v4506
    %4556 = vmatpush.msra.mxu0 %v4505
    %4557 = vmatpush.msra.mxu0 %v4504
    %4558 = vmatpush.msra.mxu0 %v4503
    %4559 = vmatmul.f32.gmra.mxu0 %v1460
    %v4560 = vpop.f32.mrf.mxu0
    %v4561 = vadd.f32 %v4541, %v4560
    %4562 = vdwg.mxu0
    %4563 = vmatpush.msra.mxu0 0.0
    %4564 = vmatpush.msra.mxu0 0.0
    %4565 = vmatpush.msra.mxu0 0.0
    %4566 = vmatpush.msra.mxu0 0.0
    %4567 = vmatpush.msra.mxu0 0.0
    %4568 = vmatpush.msra.mxu0 0.0
    %4569 = vmatpush.msra.mxu0 0.0
    %4570 = vmatpush.msra.mxu0 0.0
    %4571 = vmatpush.msra.mxu0 0.0
    %4572 = vmatpush.msra.mxu0 0.0
    %4573 = vmatpush.msra.mxu0 0.0
    %4574 = vmatpush.msra.mxu0 0.0
    %4575 = vmatpush.msra.mxu0 %v4522
    %4576 = vmatpush.msra.mxu0 %v4521
    %4577 = vmatpush.msra.mxu0 %v4520
    %4578 = vmatpush.msra.mxu0 %v4519
    %4579 = vmatmul.f32.gmra.mxu0 %v1465
    %v4580 = vpop.f32.mrf.mxu0
    %v4581 = vadd.f32 %v4561, %v4580
    %4582 = vdwg.mxu0
    %s4583 = sld [smem:[#allocation3 + $0x2d]]
    %v4584 = vstv %s4583
    %v4585 = vmul.f32 %v497, %v4584
    %v4586 = vmul.f32 %v498, %v4584
    %v4587 = vmul.f32 %v499, %v4584
    %v4588 = vmul.f32 %v500, %v4584
    %v4589 = vmul.f32 %v501, %v4584
    %v4590 = vmul.f32 %v502, %v4584
    %v4591 = vmul.f32 %v503, %v4584
    %v4592 = vmul.f32 %v504, %v4584
    %v4593 = vmul.f32 %v505, %v4584
    %v4594 = vmul.f32 %v506, %v4584
    %v4595 = vmul.f32 %v507, %v4584
    %v4596 = vmul.f32 %v508, %v4584
    %v4597 = vmul.f32 %v509, %v4584
    %v4598 = vmul.f32 %v510, %v4584
    %v4599 = vmul.f32 %v511, %v4584
    %v4600 = vmul.f32 %v512, %v4584
    %v4601 = vmul.f32 %v513, %v4584
    %v4602 = vmul.f32 %v514, %v4584
    %v4603 = vmul.f32 %v515, %v4584
    %v4604 = vmul.f32 %v516, %v4584
    %v4605 = vmul.f32 %v517, %v4584
    %v4606 = vmul.f32 %v518, %v4584
    %v4607 = vmul.f32 %v519, %v4584
    %v4608 = vmul.f32 %v520, %v4584
    %v4609 = vmul.f32 %v521, %v4584
    %v4610 = vmul.f32 %v522, %v4584
    %v4611 = vmul.f32 %v523, %v4584
    %v4612 = vmul.f32 %v524, %v4584
    %v4613 = vmul.f32 %v525, %v4584
    %v4614 = vmul.f32 %v526, %v4584
    %v4615 = vmul.f32 %v527, %v4584
    %v4616 = vmul.f32 %v528, %v4584
    %v4617 = vmul.f32 %v529, %v4584
    %v4618 = vmul.f32 %v530, %v4584
    %v4619 = vmul.f32 %v531, %v4584
    %v4620 = vmul.f32 %v532, %v4584
    %s4621 = sld [smem:[#allocation3 + $0x2e]]
    %v4622 = vstv %s4621
    %v4623 = vmul.f32 %v533, %v4622
    %v4624 = vmul.f32 %v534, %v4622
    %v4625 = vmul.f32 %v535, %v4622
    %v4626 = vmul.f32 %v536, %v4622
    %v4627 = vmul.f32 %v537, %v4622
    %v4628 = vmul.f32 %v538, %v4622
    %v4629 = vmul.f32 %v539, %v4622
    %v4630 = vmul.f32 %v540, %v4622
    %v4631 = vmul.f32 %v541, %v4622
    %v4632 = vmul.f32 %v542, %v4622
    %v4633 = vmul.f32 %v543, %v4622
    %v4634 = vmul.f32 %v544, %v4622
    %v4635 = vmul.f32 %v545, %v4622
    %v4636 = vmul.f32 %v546, %v4622
    %v4637 = vmul.f32 %v547, %v4622
    %v4638 = vmul.f32 %v548, %v4622
    %v4639 = vmul.f32 %v549, %v4622
    %v4640 = vmul.f32 %v550, %v4622
    %v4641 = vmul.f32 %v551, %v4622
    %v4642 = vmul.f32 %v552, %v4622
    %v4643 = vmul.f32 %v553, %v4622
    %v4644 = vmul.f32 %v554, %v4622
    %v4645 = vmul.f32 %v555, %v4622
    %v4646 = vmul.f32 %v556, %v4622
    %v4647 = vmul.f32 %v557, %v4622
    %v4648 = vmul.f32 %v558, %v4622
    %v4649 = vmul.f32 %v559, %v4622
    %v4650 = vmul.f32 %v560, %v4622
    %v4651 = vmul.f32 %v561, %v4622
    %v4652 = vmul.f32 %v562, %v4622
    %v4653 = vmul.f32 %v563, %v4622
    %v4654 = vmul.f32 %v564, %v4622
    %v4655 = vmul.f32 %v565, %v4622
    %v4656 = vmul.f32 %v566, %v4622
    %v4657 = vmul.f32 %v567, %v4622
    %v4658 = vmul.f32 %v568, %v4622
    %v4659 = vadd.f32 %v4585, %v4623
    %v4660 = vadd.f32 %v4586, %v4624
    %v4661 = vadd.f32 %v4587, %v4625
    %v4662 = vadd.f32 %v4588, %v4626
    %v4663 = vadd.f32 %v4589, %v4627
    %v4664 = vadd.f32 %v4590, %v4628
    %v4665 = vadd.f32 %v4591, %v4629
    %v4666 = vadd.f32 %v4592, %v4630
    %v4667 = vadd.f32 %v4593, %v4631
    %v4668 = vadd.f32 %v4594, %v4632
    %v4669 = vadd.f32 %v4595, %v4633
    %v4670 = vadd.f32 %v4596, %v4634
    %v4671 = vadd.f32 %v4597, %v4635
    %v4672 = vadd.f32 %v4598, %v4636
    %v4673 = vadd.f32 %v4599, %v4637
    %v4674 = vadd.f32 %v4600, %v4638
    %v4675 = vadd.f32 %v4601, %v4639
    %v4676 = vadd.f32 %v4602, %v4640
    %v4677 = vadd.f32 %v4603, %v4641
    %v4678 = vadd.f32 %v4604, %v4642
    %v4679 = vadd.f32 %v4605, %v4643
    %v4680 = vadd.f32 %v4606, %v4644
    %v4681 = vadd.f32 %v4607, %v4645
    %v4682 = vadd.f32 %v4608, %v4646
    %v4683 = vadd.f32 %v4609, %v4647
    %v4684 = vadd.f32 %v4610, %v4648
    %v4685 = vadd.f32 %v4611, %v4649
    %v4686 = vadd.f32 %v4612, %v4650
    %v4687 = vadd.f32 %v4613, %v4651
    %v4688 = vadd.f32 %v4614, %v4652
    %v4689 = vadd.f32 %v4615, %v4653
    %v4690 = vadd.f32 %v4616, %v4654
    %v4691 = vadd.f32 %v4617, %v4655
    %v4692 = vadd.f32 %v4618, %v4656
    %v4693 = vadd.f32 %v4619, %v4657
    %v4694 = vadd.f32 %v4620, %v4658
    %s4695 = sld [smem:[#allocation3 + $0x2f]]
    %v4696 = vstv %s4695
    %v4697 = vmul.f32 %v569, %v4696
    %v4698 = vmul.f32 %v570, %v4696
    %v4699 = vmul.f32 %v571, %v4696
    %v4700 = vmul.f32 %v572, %v4696
    %v4701 = vmul.f32 %v573, %v4696
    %v4702 = vmul.f32 %v574, %v4696
    %v4703 = vmul.f32 %v575, %v4696
    %v4704 = vmul.f32 %v576, %v4696
    %v4705 = vmul.f32 %v577, %v4696
    %v4706 = vmul.f32 %v578, %v4696
    %v4707 = vmul.f32 %v579, %v4696
    %v4708 = vmul.f32 %v580, %v4696
    %v4709 = vmul.f32 %v581, %v4696
    %v4710 = vmul.f32 %v582, %v4696
    %v4711 = vmul.f32 %v583, %v4696
    %v4712 = vmul.f32 %v584, %v4696
    %v4713 = vmul.f32 %v585, %v4696
    %v4714 = vmul.f32 %v586, %v4696
    %v4715 = vmul.f32 %v587, %v4696
    %v4716 = vmul.f32 %v588, %v4696
    %v4717 = vmul.f32 %v589, %v4696
    %v4718 = vmul.f32 %v590, %v4696
    %v4719 = vmul.f32 %v591, %v4696
    %v4720 = vmul.f32 %v592, %v4696
    %v4721 = vmul.f32 %v593, %v4696
    %v4722 = vmul.f32 %v594, %v4696
    %v4723 = vmul.f32 %v595, %v4696
    %v4724 = vmul.f32 %v596, %v4696
    %v4725 = vmul.f32 %v597, %v4696
    %v4726 = vmul.f32 %v598, %v4696
    %v4727 = vmul.f32 %v599, %v4696
    %v4728 = vmul.f32 %v600, %v4696
    %v4729 = vmul.f32 %v601, %v4696
    %v4730 = vmul.f32 %v602, %v4696
    %v4731 = vmul.f32 %v603, %v4696
    %v4732 = vmul.f32 %v604, %v4696
    %v4733 = vadd.f32 %v4659, %v4697
    %v4734 = vadd.f32 %v4660, %v4698
    %v4735 = vadd.f32 %v4661, %v4699
    %v4736 = vadd.f32 %v4662, %v4700
    %v4737 = vadd.f32 %v4663, %v4701
    %v4738 = vadd.f32 %v4664, %v4702
    %v4739 = vadd.f32 %v4665, %v4703
    %v4740 = vadd.f32 %v4666, %v4704
    %v4741 = vadd.f32 %v4667, %v4705
    %v4742 = vadd.f32 %v4668, %v4706
    %v4743 = vadd.f32 %v4669, %v4707
    %v4744 = vadd.f32 %v4670, %v4708
    %v4745 = vadd.f32 %v4671, %v4709
    %v4746 = vadd.f32 %v4672, %v4710
    %v4747 = vadd.f32 %v4673, %v4711
    %v4748 = vadd.f32 %v4674, %v4712
    %v4749 = vadd.f32 %v4675, %v4713
    %v4750 = vadd.f32 %v4676, %v4714
    %v4751 = vadd.f32 %v4677, %v4715
    %v4752 = vadd.f32 %v4678, %v4716
    %v4753 = vadd.f32 %v4679, %v4717
    %v4754 = vadd.f32 %v4680, %v4718
    %v4755 = vadd.f32 %v4681, %v4719
    %v4756 = vadd.f32 %v4682, %v4720
    %v4757 = vadd.f32 %v4683, %v4721
    %v4758 = vadd.f32 %v4684, %v4722
    %v4759 = vadd.f32 %v4685, %v4723
    %v4760 = vadd.f32 %v4686, %v4724
    %v4761 = vadd.f32 %v4687, %v4725
    %v4762 = vadd.f32 %v4688, %v4726
    %v4763 = vadd.f32 %v4689, %v4727
    %v4764 = vadd.f32 %v4690, %v4728
    %v4765 = vadd.f32 %v4691, %v4729
    %v4766 = vadd.f32 %v4692, %v4730
    %v4767 = vadd.f32 %v4693, %v4731
    %v4768 = vadd.f32 %v4694, %v4732
    %s4769 = sld [smem:[#allocation3 + $0x30]]
    %v4770 = vstv %s4769
    %v4771 = vmul.f32 %v571, %v4770
    %v4772 = vmul.f32 %v572, %v4770
    %v4773 = vmul.f32 %v573, %v4770
    %v4774 = vmul.f32 %v574, %v4770
    %v4775 = vmul.f32 %v575, %v4770
    %v4776 = vmul.f32 %v576, %v4770
    %v4777 = vmul.f32 %v577, %v4770
    %v4778 = vmul.f32 %v578, %v4770
    %v4779 = vmul.f32 %v579, %v4770
    %v4780 = vmul.f32 %v580, %v4770
    %v4781 = vmul.f32 %v581, %v4770
    %v4782 = vmul.f32 %v582, %v4770
    %v4783 = vmul.f32 %v583, %v4770
    %v4784 = vmul.f32 %v584, %v4770
    %v4785 = vmul.f32 %v585, %v4770
    %v4786 = vmul.f32 %v586, %v4770
    %v4787 = vmul.f32 %v587, %v4770
    %v4788 = vmul.f32 %v588, %v4770
    %v4789 = vmul.f32 %v589, %v4770
    %v4790 = vmul.f32 %v590, %v4770
    %v4791 = vmul.f32 %v591, %v4770
    %v4792 = vmul.f32 %v592, %v4770
    %v4793 = vmul.f32 %v593, %v4770
    %v4794 = vmul.f32 %v594, %v4770
    %v4795 = vmul.f32 %v595, %v4770
    %v4796 = vmul.f32 %v596, %v4770
    %v4797 = vmul.f32 %v597, %v4770
    %v4798 = vmul.f32 %v598, %v4770
    %v4799 = vmul.f32 %v599, %v4770
    %v4800 = vmul.f32 %v600, %v4770
    %v4801 = vmul.f32 %v601, %v4770
    %v4802 = vmul.f32 %v602, %v4770
    %v4803 = vmul.f32 %v603, %v4770
    %v4804 = vmul.f32 %v604, %v4770
    %v4805 = vmul.f32 %v605, %v4770
    %v4806 = vmul.f32 %v606, %v4770
    %v4807 = vadd.f32 %v4733, %v4771
    %v4808 = vadd.f32 %v4734, %v4772
    %v4809 = vadd.f32 %v4735, %v4773
    %v4810 = vadd.f32 %v4736, %v4774
    %v4811 = vadd.f32 %v4737, %v4775
    %v4812 = vadd.f32 %v4738, %v4776
    %v4813 = vadd.f32 %v4739, %v4777
    %v4814 = vadd.f32 %v4740, %v4778
    %v4815 = vadd.f32 %v4741, %v4779
    %v4816 = vadd.f32 %v4742, %v4780
    %v4817 = vadd.f32 %v4743, %v4781
    %v4818 = vadd.f32 %v4744, %v4782
    %v4819 = vadd.f32 %v4745, %v4783
    %v4820 = vadd.f32 %v4746, %v4784
    %v4821 = vadd.f32 %v4747, %v4785
    %v4822 = vadd.f32 %v4748, %v4786
    %v4823 = vadd.f32 %v4749, %v4787
    %v4824 = vadd.f32 %v4750, %v4788
    %v4825 = vadd.f32 %v4751, %v4789
    %v4826 = vadd.f32 %v4752, %v4790
    %v4827 = vadd.f32 %v4753, %v4791
    %v4828 = vadd.f32 %v4754, %v4792
    %v4829 = vadd.f32 %v4755, %v4793
    %v4830 = vadd.f32 %v4756, %v4794
    %v4831 = vadd.f32 %v4757, %v4795
    %v4832 = vadd.f32 %v4758, %v4796
    %v4833 = vadd.f32 %v4759, %v4797
    %v4834 = vadd.f32 %v4760, %v4798
    %v4835 = vadd.f32 %v4761, %v4799
    %v4836 = vadd.f32 %v4762, %v4800
    %v4837 = vadd.f32 %v4763, %v4801
    %v4838 = vadd.f32 %v4764, %v4802
    %v4839 = vadd.f32 %v4765, %v4803
    %v4840 = vadd.f32 %v4766, %v4804
    %v4841 = vadd.f32 %v4767, %v4805
    %v4842 = vadd.f32 %v4768, %v4806
    %s4843 = sld [smem:[#allocation3 + $0x31]]
    %v4844 = vstv %s4843
    %v4845 = vmul.f32 %v607, %v4844
    %v4846 = vmul.f32 %v608, %v4844
    %v4847 = vmul.f32 %v609, %v4844
    %v4848 = vmul.f32 %v610, %v4844
    %v4849 = vmul.f32 %v611, %v4844
    %v4850 = vmul.f32 %v612, %v4844
    %v4851 = vmul.f32 %v613, %v4844
    %v4852 = vmul.f32 %v614, %v4844
    %v4853 = vmul.f32 %v615, %v4844
    %v4854 = vmul.f32 %v616, %v4844
    %v4855 = vmul.f32 %v617, %v4844
    %v4856 = vmul.f32 %v618, %v4844
    %v4857 = vmul.f32 %v619, %v4844
    %v4858 = vmul.f32 %v620, %v4844
    %v4859 = vmul.f32 %v621, %v4844
    %v4860 = vmul.f32 %v622, %v4844
    %v4861 = vmul.f32 %v623, %v4844
    %v4862 = vmul.f32 %v624, %v4844
    %v4863 = vmul.f32 %v625, %v4844
    %v4864 = vmul.f32 %v626, %v4844
    %v4865 = vmul.f32 %v627, %v4844
    %v4866 = vmul.f32 %v628, %v4844
    %v4867 = vmul.f32 %v629, %v4844
    %v4868 = vmul.f32 %v630, %v4844
    %v4869 = vmul.f32 %v631, %v4844
    %v4870 = vmul.f32 %v632, %v4844
    %v4871 = vmul.f32 %v633, %v4844
    %v4872 = vmul.f32 %v634, %v4844
    %v4873 = vmul.f32 %v635, %v4844
    %v4874 = vmul.f32 %v636, %v4844
    %v4875 = vmul.f32 %v637, %v4844
    %v4876 = vmul.f32 %v638, %v4844
    %v4877 = vmul.f32 %v639, %v4844
    %v4878 = vmul.f32 %v640, %v4844
    %v4879 = vmul.f32 %v641, %v4844
    %v4880 = vmul.f32 %v642, %v4844
    %v4881 = vadd.f32 %v4807, %v4845
    %v4882 = vadd.f32 %v4808, %v4846
    %v4883 = vadd.f32 %v4809, %v4847
    %v4884 = vadd.f32 %v4810, %v4848
    %v4885 = vadd.f32 %v4811, %v4849
    %v4886 = vadd.f32 %v4812, %v4850
    %v4887 = vadd.f32 %v4813, %v4851
    %v4888 = vadd.f32 %v4814, %v4852
    %v4889 = vadd.f32 %v4815, %v4853
    %v4890 = vadd.f32 %v4816, %v4854
    %v4891 = vadd.f32 %v4817, %v4855
    %v4892 = vadd.f32 %v4818, %v4856
    %v4893 = vadd.f32 %v4819, %v4857
    %v4894 = vadd.f32 %v4820, %v4858
    %v4895 = vadd.f32 %v4821, %v4859
    %v4896 = vadd.f32 %v4822, %v4860
    %v4897 = vadd.f32 %v4823, %v4861
    %v4898 = vadd.f32 %v4824, %v4862
    %v4899 = vadd.f32 %v4825, %v4863
    %v4900 = vadd.f32 %v4826, %v4864
    %v4901 = vadd.f32 %v4827, %v4865
    %v4902 = vadd.f32 %v4828, %v4866
    %v4903 = vadd.f32 %v4829, %v4867
    %v4904 = vadd.f32 %v4830, %v4868
    %v4905 = vadd.f32 %v4831, %v4869
    %v4906 = vadd.f32 %v4832, %v4870
    %v4907 = vadd.f32 %v4833, %v4871
    %v4908 = vadd.f32 %v4834, %v4872
    %v4909 = vadd.f32 %v4835, %v4873
    %v4910 = vadd.f32 %v4836, %v4874
    %v4911 = vadd.f32 %v4837, %v4875
    %v4912 = vadd.f32 %v4838, %v4876
    %v4913 = vadd.f32 %v4839, %v4877
    %v4914 = vadd.f32 %v4840, %v4878
    %v4915 = vadd.f32 %v4841, %v4879
    %v4916 = vadd.f32 %v4842, %v4880
    %s4917 = sld [smem:[#allocation3 + $0x32]]
    %v4918 = vstv %s4917
    %v4919 = vmul.f32 %v643, %v4918
    %v4920 = vmul.f32 %v644, %v4918
    %v4921 = vmul.f32 %v645, %v4918
    %v4922 = vmul.f32 %v646, %v4918
    %v4923 = vmul.f32 %v647, %v4918
    %v4924 = vmul.f32 %v648, %v4918
    %v4925 = vmul.f32 %v649, %v4918
    %v4926 = vmul.f32 %v650, %v4918
    %v4927 = vmul.f32 %v651, %v4918
    %v4928 = vmul.f32 %v652, %v4918
    %v4929 = vmul.f32 %v653, %v4918
    %v4930 = vmul.f32 %v654, %v4918
    %v4931 = vmul.f32 %v655, %v4918
    %v4932 = vmul.f32 %v656, %v4918
    %v4933 = vmul.f32 %v657, %v4918
    %v4934 = vmul.f32 %v658, %v4918
    %v4935 = vmul.f32 %v659, %v4918
    %v4936 = vmul.f32 %v660, %v4918
    %v4937 = vmul.f32 %v661, %v4918
    %v4938 = vmul.f32 %v662, %v4918
    %v4939 = vmul.f32 %v663, %v4918
    %v4940 = vmul.f32 %v664, %v4918
    %v4941 = vmul.f32 %v665, %v4918
    %v4942 = vmul.f32 %v666, %v4918
    %v4943 = vmul.f32 %v667, %v4918
    %v4944 = vmul.f32 %v668, %v4918
    %v4945 = vmul.f32 %v669, %v4918
    %v4946 = vmul.f32 %v670, %v4918
    %v4947 = vmul.f32 %v671, %v4918
    %v4948 = vmul.f32 %v672, %v4918
    %v4949 = vmul.f32 %v673, %v4918
    %v4950 = vmul.f32 %v674, %v4918
    %v4951 = vmul.f32 %v675, %v4918
    %v4952 = vmul.f32 %v676, %v4918
    %v4953 = vmul.f32 %v677, %v4918
    %v4954 = vmul.f32 %v678, %v4918
    %v4955 = vadd.f32 %v4881, %v4919
    %v4956 = vadd.f32 %v4882, %v4920
    %v4957 = vadd.f32 %v4883, %v4921
    %v4958 = vadd.f32 %v4884, %v4922
    %v4959 = vadd.f32 %v4885, %v4923
    %v4960 = vadd.f32 %v4886, %v4924
    %v4961 = vadd.f32 %v4887, %v4925
    %v4962 = vadd.f32 %v4888, %v4926
    %v4963 = vadd.f32 %v4889, %v4927
    %v4964 = vadd.f32 %v4890, %v4928
    %v4965 = vadd.f32 %v4891, %v4929
    %v4966 = vadd.f32 %v4892, %v4930
    %v4967 = vadd.f32 %v4893, %v4931
    %v4968 = vadd.f32 %v4894, %v4932
    %v4969 = vadd.f32 %v4895, %v4933
    %v4970 = vadd.f32 %v4896, %v4934
    %v4971 = vadd.f32 %v4897, %v4935
    %v4972 = vadd.f32 %v4898, %v4936
    %v4973 = vadd.f32 %v4899, %v4937
    %v4974 = vadd.f32 %v4900, %v4938
    %v4975 = vadd.f32 %v4901, %v4939
    %v4976 = vadd.f32 %v4902, %v4940
    %v4977 = vadd.f32 %v4903, %v4941
    %v4978 = vadd.f32 %v4904, %v4942
    %v4979 = vadd.f32 %v4905, %v4943
    %v4980 = vadd.f32 %v4906, %v4944
    %v4981 = vadd.f32 %v4907, %v4945
    %v4982 = vadd.f32 %v4908, %v4946
    %v4983 = vadd.f32 %v4909, %v4947
    %v4984 = vadd.f32 %v4910, %v4948
    %v4985 = vadd.f32 %v4911, %v4949
    %v4986 = vadd.f32 %v4912, %v4950
    %v4987 = vadd.f32 %v4913, %v4951
    %v4988 = vadd.f32 %v4914, %v4952
    %v4989 = vadd.f32 %v4915, %v4953
    %v4990 = vadd.f32 %v4916, %v4954
    %s4991 = sld [smem:[#allocation3 + $0x33]]
    %v4992 = vstv %s4991
    %v4993 = vmul.f32 %v645, %v4992
    %v4994 = vmul.f32 %v646, %v4992
    %v4995 = vmul.f32 %v647, %v4992
    %v4996 = vmul.f32 %v648, %v4992
    %v4997 = vmul.f32 %v649, %v4992
    %v4998 = vmul.f32 %v650, %v4992
    %v4999 = vmul.f32 %v651, %v4992
    %v5000 = vmul.f32 %v652, %v4992
    %v5001 = vmul.f32 %v653, %v4992
    %v5002 = vmul.f32 %v654, %v4992
    %v5003 = vmul.f32 %v655, %v4992
    %v5004 = vmul.f32 %v656, %v4992
    %v5005 = vmul.f32 %v657, %v4992
    %v5006 = vmul.f32 %v658, %v4992
    %v5007 = vmul.f32 %v659, %v4992
    %v5008 = vmul.f32 %v660, %v4992
    %v5009 = vmul.f32 %v661, %v4992
    %v5010 = vmul.f32 %v662, %v4992
    %v5011 = vmul.f32 %v663, %v4992
    %v5012 = vmul.f32 %v664, %v4992
    %v5013 = vmul.f32 %v665, %v4992
    %v5014 = vmul.f32 %v666, %v4992
    %v5015 = vmul.f32 %v667, %v4992
    %v5016 = vmul.f32 %v668, %v4992
    %v5017 = vmul.f32 %v669, %v4992
    %v5018 = vmul.f32 %v670, %v4992
    %v5019 = vmul.f32 %v671, %v4992
    %v5020 = vmul.f32 %v672, %v4992
    %v5021 = vmul.f32 %v673, %v4992
    %v5022 = vmul.f32 %v674, %v4992
    %v5023 = vmul.f32 %v675, %v4992
    %v5024 = vmul.f32 %v676, %v4992
    %v5025 = vmul.f32 %v677, %v4992
    %v5026 = vmul.f32 %v678, %v4992
    %v5027 = vmul.f32 %v679, %v4992
    %v5028 = vmul.f32 %v680, %v4992
    %v5029 = vadd.f32 %v4955, %v4993
    %v5030 = vadd.f32 %v4956, %v4994
    %v5031 = vadd.f32 %v4957, %v4995
    %v5032 = vadd.f32 %v4958, %v4996
    %v5033 = vadd.f32 %v4959, %v4997
    %v5034 = vadd.f32 %v4960, %v4998
    %v5035 = vadd.f32 %v4961, %v4999
    %v5036 = vadd.f32 %v4962, %v5000
    %v5037 = vadd.f32 %v4963, %v5001
    %v5038 = vadd.f32 %v4964, %v5002
    %v5039 = vadd.f32 %v4965, %v5003
    %v5040 = vadd.f32 %v4966, %v5004
    %v5041 = vadd.f32 %v4967, %v5005
    %v5042 = vadd.f32 %v4968, %v5006
    %v5043 = vadd.f32 %v4969, %v5007
    %v5044 = vadd.f32 %v4970, %v5008
    %v5045 = vadd.f32 %v4971, %v5009
    %v5046 = vadd.f32 %v4972, %v5010
    %v5047 = vadd.f32 %v4973, %v5011
    %v5048 = vadd.f32 %v4974, %v5012
    %v5049 = vadd.f32 %v4975, %v5013
    %v5050 = vadd.f32 %v4976, %v5014
    %v5051 = vadd.f32 %v4977, %v5015
    %v5052 = vadd.f32 %v4978, %v5016
    %v5053 = vadd.f32 %v4979, %v5017
    %v5054 = vadd.f32 %v4980, %v5018
    %v5055 = vadd.f32 %v4981, %v5019
    %v5056 = vadd.f32 %v4982, %v5020
    %v5057 = vadd.f32 %v4983, %v5021
    %v5058 = vadd.f32 %v4984, %v5022
    %v5059 = vadd.f32 %v4985, %v5023
    %v5060 = vadd.f32 %v4986, %v5024
    %v5061 = vadd.f32 %v4987, %v5025
    %v5062 = vadd.f32 %v4988, %v5026
    %v5063 = vadd.f32 %v4989, %v5027
    %v5064 = vadd.f32 %v4990, %v5028
    %s5065 = sld [smem:[#allocation3 + $0x34]]
    %v5066 = vstv %s5065
    %v5067 = vmul.f32 %v681, %v5066
    %v5068 = vmul.f32 %v682, %v5066
    %v5069 = vmul.f32 %v683, %v5066
    %v5070 = vmul.f32 %v684, %v5066
    %v5071 = vmul.f32 %v685, %v5066
    %v5072 = vmul.f32 %v686, %v5066
    %v5073 = vmul.f32 %v687, %v5066
    %v5074 = vmul.f32 %v688, %v5066
    %v5075 = vmul.f32 %v689, %v5066
    %v5076 = vmul.f32 %v690, %v5066
    %v5077 = vmul.f32 %v691, %v5066
    %v5078 = vmul.f32 %v692, %v5066
    %v5079 = vmul.f32 %v693, %v5066
    %v5080 = vmul.f32 %v694, %v5066
    %v5081 = vmul.f32 %v695, %v5066
    %v5082 = vmul.f32 %v696, %v5066
    %v5083 = vmul.f32 %v697, %v5066
    %v5084 = vmul.f32 %v698, %v5066
    %v5085 = vmul.f32 %v699, %v5066
    %v5086 = vmul.f32 %v700, %v5066
    %v5087 = vmul.f32 %v701, %v5066
    %v5088 = vmul.f32 %v702, %v5066
    %v5089 = vmul.f32 %v703, %v5066
    %v5090 = vmul.f32 %v704, %v5066
    %v5091 = vmul.f32 %v705, %v5066
    %v5092 = vmul.f32 %v706, %v5066
    %v5093 = vmul.f32 %v707, %v5066
    %v5094 = vmul.f32 %v708, %v5066
    %v5095 = vmul.f32 %v709, %v5066
    %v5096 = vmul.f32 %v710, %v5066
    %v5097 = vmul.f32 %v711, %v5066
    %v5098 = vmul.f32 %v712, %v5066
    %v5099 = vmul.f32 %v713, %v5066
    %v5100 = vmul.f32 %v714, %v5066
    %v5101 = vmul.f32 %v715, %v5066
    %v5102 = vmul.f32 %v716, %v5066
    %v5103 = vadd.f32 %v5029, %v5067
    %v5104 = vadd.f32 %v5030, %v5068
    %v5105 = vadd.f32 %v5031, %v5069
    %v5106 = vadd.f32 %v5032, %v5070
    %v5107 = vadd.f32 %v5033, %v5071
    %v5108 = vadd.f32 %v5034, %v5072
    %v5109 = vadd.f32 %v5035, %v5073
    %v5110 = vadd.f32 %v5036, %v5074
    %v5111 = vadd.f32 %v5037, %v5075
    %v5112 = vadd.f32 %v5038, %v5076
    %v5113 = vadd.f32 %v5039, %v5077
    %v5114 = vadd.f32 %v5040, %v5078
    %v5115 = vadd.f32 %v5041, %v5079
    %v5116 = vadd.f32 %v5042, %v5080
    %v5117 = vadd.f32 %v5043, %v5081
    %v5118 = vadd.f32 %v5044, %v5082
    %v5119 = vadd.f32 %v5045, %v5083
    %v5120 = vadd.f32 %v5046, %v5084
    %v5121 = vadd.f32 %v5047, %v5085
    %v5122 = vadd.f32 %v5048, %v5086
    %v5123 = vadd.f32 %v5049, %v5087
    %v5124 = vadd.f32 %v5050, %v5088
    %v5125 = vadd.f32 %v5051, %v5089
    %v5126 = vadd.f32 %v5052, %v5090
    %v5127 = vadd.f32 %v5053, %v5091
    %v5128 = vadd.f32 %v5054, %v5092
    %v5129 = vadd.f32 %v5055, %v5093
    %v5130 = vadd.f32 %v5056, %v5094
    %v5131 = vadd.f32 %v5057, %v5095
    %v5132 = vadd.f32 %v5058, %v5096
    %v5133 = vadd.f32 %v5059, %v5097
    %v5134 = vadd.f32 %v5060, %v5098
    %v5135 = vadd.f32 %v5061, %v5099
    %v5136 = vadd.f32 %v5062, %v5100
    %v5137 = vadd.f32 %v5063, %v5101
    %v5138 = vadd.f32 %v5064, %v5102
    %s5139 = sld [smem:[#allocation3 + $0x35]]
    %v5140 = vstv %s5139
    %v5141 = vmul.f32 %v717, %v5140
    %v5142 = vmul.f32 %v718, %v5140
    %v5143 = vmul.f32 %v719, %v5140
    %v5144 = vmul.f32 %v720, %v5140
    %v5145 = vmul.f32 %v721, %v5140
    %v5146 = vmul.f32 %v722, %v5140
    %v5147 = vmul.f32 %v723, %v5140
    %v5148 = vmul.f32 %v724, %v5140
    %v5149 = vmul.f32 %v725, %v5140
    %v5150 = vmul.f32 %v726, %v5140
    %v5151 = vmul.f32 %v727, %v5140
    %v5152 = vmul.f32 %v728, %v5140
    %v5153 = vmul.f32 %v729, %v5140
    %v5154 = vmul.f32 %v730, %v5140
    %v5155 = vmul.f32 %v731, %v5140
    %v5156 = vmul.f32 %v732, %v5140
    %v5157 = vmul.f32 %v733, %v5140
    %v5158 = vmul.f32 %v734, %v5140
    %v5159 = vmul.f32 %v735, %v5140
    %v5160 = vmul.f32 %v736, %v5140
    %v5161 = vmul.f32 %v737, %v5140
    %v5162 = vmul.f32 %v738, %v5140
    %v5163 = vmul.f32 %v739, %v5140
    %v5164 = vmul.f32 %v740, %v5140
    %v5165 = vmul.f32 %v741, %v5140
    %v5166 = vmul.f32 %v742, %v5140
    %v5167 = vmul.f32 %v743, %v5140
    %v5168 = vmul.f32 %v744, %v5140
    %v5169 = vmul.f32 %v745, %v5140
    %v5170 = vmul.f32 %v746, %v5140
    %v5171 = vmul.f32 %v747, %v5140
    %v5172 = vmul.f32 %v748, %v5140
    %v5173 = vmul.f32 %v749, %v5140
    %v5174 = vmul.f32 %v750, %v5140
    %v5175 = vmul.f32 %v751, %v5140
    %v5176 = vmul.f32 %v752, %v5140
    %v5177 = vadd.f32 %v5103, %v5141
    %v5178 = vadd.f32 %v5104, %v5142
    %v5179 = vadd.f32 %v5105, %v5143
    %v5180 = vadd.f32 %v5106, %v5144
    %v5181 = vadd.f32 %v5107, %v5145
    %v5182 = vadd.f32 %v5108, %v5146
    %v5183 = vadd.f32 %v5109, %v5147
    %v5184 = vadd.f32 %v5110, %v5148
    %v5185 = vadd.f32 %v5111, %v5149
    %v5186 = vadd.f32 %v5112, %v5150
    %v5187 = vadd.f32 %v5113, %v5151
    %v5188 = vadd.f32 %v5114, %v5152
    %v5189 = vadd.f32 %v5115, %v5153
    %v5190 = vadd.f32 %v5116, %v5154
    %v5191 = vadd.f32 %v5117, %v5155
    %v5192 = vadd.f32 %v5118, %v5156
    %v5193 = vadd.f32 %v5119, %v5157
    %v5194 = vadd.f32 %v5120, %v5158
    %v5195 = vadd.f32 %v5121, %v5159
    %v5196 = vadd.f32 %v5122, %v5160
    %v5197 = vadd.f32 %v5123, %v5161
    %v5198 = vadd.f32 %v5124, %v5162
    %v5199 = vadd.f32 %v5125, %v5163
    %v5200 = vadd.f32 %v5126, %v5164
    %v5201 = vadd.f32 %v5127, %v5165
    %v5202 = vadd.f32 %v5128, %v5166
    %v5203 = vadd.f32 %v5129, %v5167
    %v5204 = vadd.f32 %v5130, %v5168
    %v5205 = vadd.f32 %v5131, %v5169
    %v5206 = vadd.f32 %v5132, %v5170
    %v5207 = vadd.f32 %v5133, %v5171
    %v5208 = vadd.f32 %v5134, %v5172
    %v5209 = vadd.f32 %v5135, %v5173
    %v5210 = vadd.f32 %v5136, %v5174
    %v5211 = vadd.f32 %v5137, %v5175
    %v5212 = vadd.f32 %v5138, %v5176
    %s5213 = sld [smem:[#allocation5 + $0x5]]
    %v5214 = vstv %s5213
    %v5215 = vadd.f32 %v5177, %v5214
    %v5216 = vadd.f32 %v5178, %v5214
    %v5217 = vadd.f32 %v5179, %v5214
    %v5218 = vadd.f32 %v5180, %v5214
    %v5219 = vadd.f32 %v5181, %v5214
    %v5220 = vadd.f32 %v5182, %v5214
    %v5221 = vadd.f32 %v5183, %v5214
    %v5222 = vadd.f32 %v5184, %v5214
    %v5223 = vadd.f32 %v5185, %v5214
    %v5224 = vadd.f32 %v5186, %v5214
    %v5225 = vadd.f32 %v5187, %v5214
    %v5226 = vadd.f32 %v5188, %v5214
    %v5227 = vadd.f32 %v5189, %v5214
    %v5228 = vadd.f32 %v5190, %v5214
    %v5229 = vadd.f32 %v5191, %v5214
    %v5230 = vadd.f32 %v5192, %v5214
    %v5231 = vadd.f32 %v5193, %v5214
    %v5232 = vadd.f32 %v5194, %v5214
    %v5233 = vadd.f32 %v5195, %v5214
    %v5234 = vadd.f32 %v5196, %v5214
    %v5235 = vadd.f32 %v5197, %v5214
    %v5236 = vadd.f32 %v5198, %v5214
    %v5237 = vadd.f32 %v5199, %v5214
    %v5238 = vadd.f32 %v5200, %v5214
    %v5239 = vadd.f32 %v5201, %v5214
    %v5240 = vadd.f32 %v5202, %v5214
    %v5241 = vadd.f32 %v5203, %v5214
    %v5242 = vadd.f32 %v5204, %v5214
    %v5243 = vadd.f32 %v5205, %v5214
    %v5244 = vadd.f32 %v5206, %v5214
    %v5245 = vadd.f32 %v5207, %v5214
    %v5246 = vadd.f32 %v5208, %v5214
    %v5247 = vadd.f32 %v5209, %v5214
    %v5248 = vadd.f32 %v5210, %v5214
    %v5249 = vadd.f32 %v5211, %v5214
    %v5250 = vadd.f32 %v5212, %v5214
    %v5251 = vmax.f32 %v5215, 0.0
    %v5252 = vmax.f32 %v5216, 0.0
    %v5253 = vmax.f32 %v5217, 0.0
    %v5254 = vmax.f32 %v5218, 0.0
    %v5255 = vmax.f32 %v5219, 0.0
    %v5256 = vmax.f32 %v5220, 0.0
    %v5257 = vmax.f32 %v5221, 0.0
    %v5258 = vmax.f32 %v5222, 0.0
    %v5259 = vmax.f32 %v5223, 0.0
    %v5260 = vmax.f32 %v5224, 0.0
    %v5261 = vmax.f32 %v5225, 0.0
    %v5262 = vmax.f32 %v5226, 0.0
    %v5263 = vmax.f32 %v5227, 0.0
    %v5264 = vmax.f32 %v5228, 0.0
    %v5265 = vmax.f32 %v5229, 0.0
    %v5266 = vmax.f32 %v5230, 0.0
    %v5267 = vmax.f32 %v5231, 0.0
    %v5268 = vmax.f32 %v5232, 0.0
    %v5269 = vmax.f32 %v5233, 0.0
    %v5270 = vmax.f32 %v5234, 0.0
    %v5271 = vmax.f32 %v5235, 0.0
    %v5272 = vmax.f32 %v5236, 0.0
    %v5273 = vmax.f32 %v5237, 0.0
    %v5274 = vmax.f32 %v5238, 0.0
    %v5275 = vmax.f32 %v5239, 0.0
    %v5276 = vmax.f32 %v5240, 0.0
    %v5277 = vmax.f32 %v5241, 0.0
    %v5278 = vmax.f32 %v5242, 0.0
    %v5279 = vmax.f32 %v5243, 0.0
    %v5280 = vmax.f32 %v5244, 0.0
    %v5281 = vmax.f32 %v5245, 0.0
    %v5282 = vmax.f32 %v5246, 0.0
    %v5283 = vmax.f32 %v5247, 0.0
    %v5284 = vmax.f32 %v5248, 0.0
    %v5285 = vmax.f32 %v5249, 0.0
    %v5286 = vmax.f32 %v5250, 0.0
    %5287 = vmatpush.msra.mxu0 %v5266
    %5288 = vmatpush.msra.mxu0 %v5265
    %5289 = vmatpush.msra.mxu0 %v5264
    %5290 = vmatpush.msra.mxu0 %v5263
    %5291 = vmatpush.msra.mxu0 %v5262
    %5292 = vmatpush.msra.mxu0 %v5261
    %5293 = vmatpush.msra.mxu0 %v5260
    %5294 = vmatpush.msra.mxu0 %v5259
    %5295 = vmatpush.msra.mxu0 %v5258
    %5296 = vmatpush.msra.mxu0 %v5257
    %5297 = vmatpush.msra.mxu0 %v5256
    %5298 = vmatpush.msra.mxu0 %v5255
    %5299 = vmatpush.msra.mxu0 %v5254
    %5300 = vmatpush.msra.mxu0 %v5253
    %5301 = vmatpush.msra.mxu0 %v5252
    %5302 = vmatpush.msra.mxu0 %v5251
    %5303 = vmatmul.f32.gmra.mxu0 %v1459
    %v5304 = vpop.f32.mrf.mxu0
    %v5305 = vadd.f32 0.0, %v5304
    %5306 = vdwg.mxu0
    %5307 = vmatpush.msra.mxu0 %v5282
    %5308 = vmatpush.msra.mxu0 %v5281
    %5309 = vmatpush.msra.mxu0 %v5280
    %5310 = vmatpush.msra.mxu0 %v5279
    %5311 = vmatpush.msra.mxu0 %v5278
    %5312 = vmatpush.msra.mxu0 %v5277
    %5313 = vmatpush.msra.mxu0 %v5276
    %5314 = vmatpush.msra.mxu0 %v5275
    %5315 = vmatpush.msra.mxu0 %v5274
    %5316 = vmatpush.msra.mxu0 %v5273
    %5317 = vmatpush.msra.mxu0 %v5272
    %5318 = vmatpush.msra.mxu0 %v5271
    %5319 = vmatpush.msra.mxu0 %v5270
    %5320 = vmatpush.msra.mxu0 %v5269
    %5321 = vmatpush.msra.mxu0 %v5268
    %5322 = vmatpush.msra.mxu0 %v5267
    %5323 = vmatmul.f32.gmra.mxu0 %v1460
    %v5324 = vpop.f32.mrf.mxu0
    %v5325 = vadd.f32 %v5305, %v5324
    %5326 = vdwg.mxu0
    %5327 = vmatpush.msra.mxu0 0.0
    %5328 = vmatpush.msra.mxu0 0.0
    %5329 = vmatpush.msra.mxu0 0.0
    %5330 = vmatpush.msra.mxu0 0.0
    %5331 = vmatpush.msra.mxu0 0.0
    %5332 = vmatpush.msra.mxu0 0.0
    %5333 = vmatpush.msra.mxu0 0.0
    %5334 = vmatpush.msra.mxu0 0.0
    %5335 = vmatpush.msra.mxu0 0.0
    %5336 = vmatpush.msra.mxu0 0.0
    %5337 = vmatpush.msra.mxu0 0.0
    %5338 = vmatpush.msra.mxu0 0.0
    %5339 = vmatpush.msra.mxu0 %v5286
    %5340 = vmatpush.msra.mxu0 %v5285
    %5341 = vmatpush.msra.mxu0 %v5284
    %5342 = vmatpush.msra.mxu0 %v5283
    %5343 = vmatmul.f32.gmra.mxu0 %v1465
    %v5344 = vpop.f32.mrf.mxu0
    %v5345 = vadd.f32 %v5325, %v5344
    %5346 = vdwg.mxu0
    %s5347 = sld [smem:[#allocation3 + $0x36]]
    %v5348 = vstv %s5347
    %v5349 = vmul.f32 %v497, %v5348
    %v5350 = vmul.f32 %v498, %v5348
    %v5351 = vmul.f32 %v499, %v5348
    %v5352 = vmul.f32 %v500, %v5348
    %v5353 = vmul.f32 %v501, %v5348
    %v5354 = vmul.f32 %v502, %v5348
    %v5355 = vmul.f32 %v503, %v5348
    %v5356 = vmul.f32 %v504, %v5348
    %v5357 = vmul.f32 %v505, %v5348
    %v5358 = vmul.f32 %v506, %v5348
    %v5359 = vmul.f32 %v507, %v5348
    %v5360 = vmul.f32 %v508, %v5348
    %v5361 = vmul.f32 %v509, %v5348
    %v5362 = vmul.f32 %v510, %v5348
    %v5363 = vmul.f32 %v511, %v5348
    %v5364 = vmul.f32 %v512, %v5348
    %v5365 = vmul.f32 %v513, %v5348
    %v5366 = vmul.f32 %v514, %v5348
    %v5367 = vmul.f32 %v515, %v5348
    %v5368 = vmul.f32 %v516, %v5348
    %v5369 = vmul.f32 %v517, %v5348
    %v5370 = vmul.f32 %v518, %v5348
    %v5371 = vmul.f32 %v519, %v5348
    %v5372 = vmul.f32 %v520, %v5348
    %v5373 = vmul.f32 %v521, %v5348
    %v5374 = vmul.f32 %v522, %v5348
    %v5375 = vmul.f32 %v523, %v5348
    %v5376 = vmul.f32 %v524, %v5348
    %v5377 = vmul.f32 %v525, %v5348
    %v5378 = vmul.f32 %v526, %v5348
    %v5379 = vmul.f32 %v527, %v5348
    %v5380 = vmul.f32 %v528, %v5348
    %v5381 = vmul.f32 %v529, %v5348
    %v5382 = vmul.f32 %v530, %v5348
    %v5383 = vmul.f32 %v531, %v5348
    %v5384 = vmul.f32 %v532, %v5348
    %s5385 = sld [smem:[#allocation3 + $0x37]]
    %v5386 = vstv %s5385
    %v5387 = vmul.f32 %v533, %v5386
    %v5388 = vmul.f32 %v534, %v5386
    %v5389 = vmul.f32 %v535, %v5386
    %v5390 = vmul.f32 %v536, %v5386
    %v5391 = vmul.f32 %v537, %v5386
    %v5392 = vmul.f32 %v538, %v5386
    %v5393 = vmul.f32 %v539, %v5386
    %v5394 = vmul.f32 %v540, %v5386
    %v5395 = vmul.f32 %v541, %v5386
    %v5396 = vmul.f32 %v542, %v5386
    %v5397 = vmul.f32 %v543, %v5386
    %v5398 = vmul.f32 %v544, %v5386
    %v5399 = vmul.f32 %v545, %v5386
    %v5400 = vmul.f32 %v546, %v5386
    %v5401 = vmul.f32 %v547, %v5386
    %v5402 = vmul.f32 %v548, %v5386
    %v5403 = vmul.f32 %v549, %v5386
    %v5404 = vmul.f32 %v550, %v5386
    %v5405 = vmul.f32 %v551, %v5386
    %v5406 = vmul.f32 %v552, %v5386
    %v5407 = vmul.f32 %v553, %v5386
    %v5408 = vmul.f32 %v554, %v5386
    %v5409 = vmul.f32 %v555, %v5386
    %v5410 = vmul.f32 %v556, %v5386
    %v5411 = vmul.f32 %v557, %v5386
    %v5412 = vmul.f32 %v558, %v5386
    %v5413 = vmul.f32 %v559, %v5386
    %v5414 = vmul.f32 %v560, %v5386
    %v5415 = vmul.f32 %v561, %v5386
    %v5416 = vmul.f32 %v562, %v5386
    %v5417 = vmul.f32 %v563, %v5386
    %v5418 = vmul.f32 %v564, %v5386
    %v5419 = vmul.f32 %v565, %v5386
    %v5420 = vmul.f32 %v566, %v5386
    %v5421 = vmul.f32 %v567, %v5386
    %v5422 = vmul.f32 %v568, %v5386
    %v5423 = vadd.f32 %v5349, %v5387
    %v5424 = vadd.f32 %v5350, %v5388
    %v5425 = vadd.f32 %v5351, %v5389
    %v5426 = vadd.f32 %v5352, %v5390
    %v5427 = vadd.f32 %v5353, %v5391
    %v5428 = vadd.f32 %v5354, %v5392
    %v5429 = vadd.f32 %v5355, %v5393
    %v5430 = vadd.f32 %v5356, %v5394
    %v5431 = vadd.f32 %v5357, %v5395
    %v5432 = vadd.f32 %v5358, %v5396
    %v5433 = vadd.f32 %v5359, %v5397
    %v5434 = vadd.f32 %v5360, %v5398
    %v5435 = vadd.f32 %v5361, %v5399
    %v5436 = vadd.f32 %v5362, %v5400
    %v5437 = vadd.f32 %v5363, %v5401
    %v5438 = vadd.f32 %v5364, %v5402
    %v5439 = vadd.f32 %v5365, %v5403
    %v5440 = vadd.f32 %v5366, %v5404
    %v5441 = vadd.f32 %v5367, %v5405
    %v5442 = vadd.f32 %v5368, %v5406
    %v5443 = vadd.f32 %v5369, %v5407
    %v5444 = vadd.f32 %v5370, %v5408
    %v5445 = vadd.f32 %v5371, %v5409
    %v5446 = vadd.f32 %v5372, %v5410
    %v5447 = vadd.f32 %v5373, %v5411
    %v5448 = vadd.f32 %v5374, %v5412
    %v5449 = vadd.f32 %v5375, %v5413
    %v5450 = vadd.f32 %v5376, %v5414
    %v5451 = vadd.f32 %v5377, %v5415
    %v5452 = vadd.f32 %v5378, %v5416
    %v5453 = vadd.f32 %v5379, %v5417
    %v5454 = vadd.f32 %v5380, %v5418
    %v5455 = vadd.f32 %v5381, %v5419
    %v5456 = vadd.f32 %v5382, %v5420
    %v5457 = vadd.f32 %v5383, %v5421
    %v5458 = vadd.f32 %v5384, %v5422
    %s5459 = sld [smem:[#allocation3 + $0x38]]
    %v5460 = vstv %s5459
    %v5461 = vmul.f32 %v569, %v5460
    %v5462 = vmul.f32 %v570, %v5460
    %v5463 = vmul.f32 %v571, %v5460
    %v5464 = vmul.f32 %v572, %v5460
    %v5465 = vmul.f32 %v573, %v5460
    %v5466 = vmul.f32 %v574, %v5460
    %v5467 = vmul.f32 %v575, %v5460
    %v5468 = vmul.f32 %v576, %v5460
    %v5469 = vmul.f32 %v577, %v5460
    %v5470 = vmul.f32 %v578, %v5460
    %v5471 = vmul.f32 %v579, %v5460
    %v5472 = vmul.f32 %v580, %v5460
    %v5473 = vmul.f32 %v581, %v5460
    %v5474 = vmul.f32 %v582, %v5460
    %v5475 = vmul.f32 %v583, %v5460
    %v5476 = vmul.f32 %v584, %v5460
    %v5477 = vmul.f32 %v585, %v5460
    %v5478 = vmul.f32 %v586, %v5460
    %v5479 = vmul.f32 %v587, %v5460
    %v5480 = vmul.f32 %v588, %v5460
    %v5481 = vmul.f32 %v589, %v5460
    %v5482 = vmul.f32 %v590, %v5460
    %v5483 = vmul.f32 %v591, %v5460
    %v5484 = vmul.f32 %v592, %v5460
    %v5485 = vmul.f32 %v593, %v5460
    %v5486 = vmul.f32 %v594, %v5460
    %v5487 = vmul.f32 %v595, %v5460
    %v5488 = vmul.f32 %v596, %v5460
    %v5489 = vmul.f32 %v597, %v5460
    %v5490 = vmul.f32 %v598, %v5460
    %v5491 = vmul.f32 %v599, %v5460
    %v5492 = vmul.f32 %v600, %v5460
    %v5493 = vmul.f32 %v601, %v5460
    %v5494 = vmul.f32 %v602, %v5460
    %v5495 = vmul.f32 %v603, %v5460
    %v5496 = vmul.f32 %v604, %v5460
    %v5497 = vadd.f32 %v5423, %v5461
    %v5498 = vadd.f32 %v5424, %v5462
    %v5499 = vadd.f32 %v5425, %v5463
    %v5500 = vadd.f32 %v5426, %v5464
    %v5501 = vadd.f32 %v5427, %v5465
    %v5502 = vadd.f32 %v5428, %v5466
    %v5503 = vadd.f32 %v5429, %v5467
    %v5504 = vadd.f32 %v5430, %v5468
    %v5505 = vadd.f32 %v5431, %v5469
    %v5506 = vadd.f32 %v5432, %v5470
    %v5507 = vadd.f32 %v5433, %v5471
    %v5508 = vadd.f32 %v5434, %v5472
    %v5509 = vadd.f32 %v5435, %v5473
    %v5510 = vadd.f32 %v5436, %v5474
    %v5511 = vadd.f32 %v5437, %v5475
    %v5512 = vadd.f32 %v5438, %v5476
    %v5513 = vadd.f32 %v5439, %v5477
    %v5514 = vadd.f32 %v5440, %v5478
    %v5515 = vadd.f32 %v5441, %v5479
    %v5516 = vadd.f32 %v5442, %v5480
    %v5517 = vadd.f32 %v5443, %v5481
    %v5518 = vadd.f32 %v5444, %v5482
    %v5519 = vadd.f32 %v5445, %v5483
    %v5520 = vadd.f32 %v5446, %v5484
    %v5521 = vadd.f32 %v5447, %v5485
    %v5522 = vadd.f32 %v5448, %v5486
    %v5523 = vadd.f32 %v5449, %v5487
    %v5524 = vadd.f32 %v5450, %v5488
    %v5525 = vadd.f32 %v5451, %v5489
    %v5526 = vadd.f32 %v5452, %v5490
    %v5527 = vadd.f32 %v5453, %v5491
    %v5528 = vadd.f32 %v5454, %v5492
    %v5529 = vadd.f32 %v5455, %v5493
    %v5530 = vadd.f32 %v5456, %v5494
    %v5531 = vadd.f32 %v5457, %v5495
    %v5532 = vadd.f32 %v5458, %v5496
    %s5533 = sld [smem:[#allocation3 + $0x39]]
    %v5534 = vstv %s5533
    %v5535 = vmul.f32 %v571, %v5534
    %v5536 = vmul.f32 %v572, %v5534
    %v5537 = vmul.f32 %v573, %v5534
    %v5538 = vmul.f32 %v574, %v5534
    %v5539 = vmul.f32 %v575, %v5534
    %v5540 = vmul.f32 %v576, %v5534
    %v5541 = vmul.f32 %v577, %v5534
    %v5542 = vmul.f32 %v578, %v5534
    %v5543 = vmul.f32 %v579, %v5534
    %v5544 = vmul.f32 %v580, %v5534
    %v5545 = vmul.f32 %v581, %v5534
    %v5546 = vmul.f32 %v582, %v5534
    %v5547 = vmul.f32 %v583, %v5534
    %v5548 = vmul.f32 %v584, %v5534
    %v5549 = vmul.f32 %v585, %v5534
    %v5550 = vmul.f32 %v586, %v5534
    %v5551 = vmul.f32 %v587, %v5534
    %v5552 = vmul.f32 %v588, %v5534
    %v5553 = vmul.f32 %v589, %v5534
    %v5554 = vmul.f32 %v590, %v5534
    %v5555 = vmul.f32 %v591, %v5534
    %v5556 = vmul.f32 %v592, %v5534
    %v5557 = vmul.f32 %v593, %v5534
    %v5558 = vmul.f32 %v594, %v5534
    %v5559 = vmul.f32 %v595, %v5534
    %v5560 = vmul.f32 %v596, %v5534
    %v5561 = vmul.f32 %v597, %v5534
    %v5562 = vmul.f32 %v598, %v5534
    %v5563 = vmul.f32 %v599, %v5534
    %v5564 = vmul.f32 %v600, %v5534
    %v5565 = vmul.f32 %v601, %v5534
    %v5566 = vmul.f32 %v602, %v5534
    %v5567 = vmul.f32 %v603, %v5534
    %v5568 = vmul.f32 %v604, %v5534
    %v5569 = vmul.f32 %v605, %v5534
    %v5570 = vmul.f32 %v606, %v5534
    %v5571 = vadd.f32 %v5497, %v5535
    %v5572 = vadd.f32 %v5498, %v5536
    %v5573 = vadd.f32 %v5499, %v5537
    %v5574 = vadd.f32 %v5500, %v5538
    %v5575 = vadd.f32 %v5501, %v5539
    %v5576 = vadd.f32 %v5502, %v5540
    %v5577 = vadd.f32 %v5503, %v5541
    %v5578 = vadd.f32 %v5504, %v5542
    %v5579 = vadd.f32 %v5505, %v5543
    %v5580 = vadd.f32 %v5506, %v5544
    %v5581 = vadd.f32 %v5507, %v5545
    %v5582 = vadd.f32 %v5508, %v5546
    %v5583 = vadd.f32 %v5509, %v5547
    %v5584 = vadd.f32 %v5510, %v5548
    %v5585 = vadd.f32 %v5511, %v5549
    %v5586 = vadd.f32 %v5512, %v5550
    %v5587 = vadd.f32 %v5513, %v5551
    %v5588 = vadd.f32 %v5514, %v5552
    %v5589 = vadd.f32 %v5515, %v5553
    %v5590 = vadd.f32 %v5516, %v5554
    %v5591 = vadd.f32 %v5517, %v5555
    %v5592 = vadd.f32 %v5518, %v5556
    %v5593 = vadd.f32 %v5519, %v5557
    %v5594 = vadd.f32 %v5520, %v5558
    %v5595 = vadd.f32 %v5521, %v5559
    %v5596 = vadd.f32 %v5522, %v5560
    %v5597 = vadd.f32 %v5523, %v5561
    %v5598 = vadd.f32 %v5524, %v5562
    %v5599 = vadd.f32 %v5525, %v5563
    %v5600 = vadd.f32 %v5526, %v5564
    %v5601 = vadd.f32 %v5527, %v5565
    %v5602 = vadd.f32 %v5528, %v5566
    %v5603 = vadd.f32 %v5529, %v5567
    %v5604 = vadd.f32 %v5530, %v5568
    %v5605 = vadd.f32 %v5531, %v5569
    %v5606 = vadd.f32 %v5532, %v5570
    %s5607 = sld [smem:[#allocation3 + $0x3a]]
    %v5608 = vstv %s5607
    %v5609 = vmul.f32 %v607, %v5608
    %v5610 = vmul.f32 %v608, %v5608
    %v5611 = vmul.f32 %v609, %v5608
    %v5612 = vmul.f32 %v610, %v5608
    %v5613 = vmul.f32 %v611, %v5608
    %v5614 = vmul.f32 %v612, %v5608
    %v5615 = vmul.f32 %v613, %v5608
    %v5616 = vmul.f32 %v614, %v5608
    %v5617 = vmul.f32 %v615, %v5608
    %v5618 = vmul.f32 %v616, %v5608
    %v5619 = vmul.f32 %v617, %v5608
    %v5620 = vmul.f32 %v618, %v5608
    %v5621 = vmul.f32 %v619, %v5608
    %v5622 = vmul.f32 %v620, %v5608
    %v5623 = vmul.f32 %v621, %v5608
    %v5624 = vmul.f32 %v622, %v5608
    %v5625 = vmul.f32 %v623, %v5608
    %v5626 = vmul.f32 %v624, %v5608
    %v5627 = vmul.f32 %v625, %v5608
    %v5628 = vmul.f32 %v626, %v5608
    %v5629 = vmul.f32 %v627, %v5608
    %v5630 = vmul.f32 %v628, %v5608
    %v5631 = vmul.f32 %v629, %v5608
    %v5632 = vmul.f32 %v630, %v5608
    %v5633 = vmul.f32 %v631, %v5608
    %v5634 = vmul.f32 %v632, %v5608
    %v5635 = vmul.f32 %v633, %v5608
    %v5636 = vmul.f32 %v634, %v5608
    %v5637 = vmul.f32 %v635, %v5608
    %v5638 = vmul.f32 %v636, %v5608
    %v5639 = vmul.f32 %v637, %v5608
    %v5640 = vmul.f32 %v638, %v5608
    %v5641 = vmul.f32 %v639, %v5608
    %v5642 = vmul.f32 %v640, %v5608
    %v5643 = vmul.f32 %v641, %v5608
    %v5644 = vmul.f32 %v642, %v5608
    %v5645 = vadd.f32 %v5571, %v5609
    %v5646 = vadd.f32 %v5572, %v5610
    %v5647 = vadd.f32 %v5573, %v5611
    %v5648 = vadd.f32 %v5574, %v5612
    %v5649 = vadd.f32 %v5575, %v5613
    %v5650 = vadd.f32 %v5576, %v5614
    %v5651 = vadd.f32 %v5577, %v5615
    %v5652 = vadd.f32 %v5578, %v5616
    %v5653 = vadd.f32 %v5579, %v5617
    %v5654 = vadd.f32 %v5580, %v5618
    %v5655 = vadd.f32 %v5581, %v5619
    %v5656 = vadd.f32 %v5582, %v5620
    %v5657 = vadd.f32 %v5583, %v5621
    %v5658 = vadd.f32 %v5584, %v5622
    %v5659 = vadd.f32 %v5585, %v5623
    %v5660 = vadd.f32 %v5586, %v5624
    %v5661 = vadd.f32 %v5587, %v5625
    %v5662 = vadd.f32 %v5588, %v5626
    %v5663 = vadd.f32 %v5589, %v5627
    %v5664 = vadd.f32 %v5590, %v5628
    %v5665 = vadd.f32 %v5591, %v5629
    %v5666 = vadd.f32 %v5592, %v5630
    %v5667 = vadd.f32 %v5593, %v5631
    %v5668 = vadd.f32 %v5594, %v5632
    %v5669 = vadd.f32 %v5595, %v5633
    %v5670 = vadd.f32 %v5596, %v5634
    %v5671 = vadd.f32 %v5597, %v5635
    %v5672 = vadd.f32 %v5598, %v5636
    %v5673 = vadd.f32 %v5599, %v5637
    %v5674 = vadd.f32 %v5600, %v5638
    %v5675 = vadd.f32 %v5601, %v5639
    %v5676 = vadd.f32 %v5602, %v5640
    %v5677 = vadd.f32 %v5603, %v5641
    %v5678 = vadd.f32 %v5604, %v5642
    %v5679 = vadd.f32 %v5605, %v5643
    %v5680 = vadd.f32 %v5606, %v5644
    %s5681 = sld [smem:[#allocation3 + $0x3b]]
    %v5682 = vstv %s5681
    %v5683 = vmul.f32 %v643, %v5682
    %v5684 = vmul.f32 %v644, %v5682
    %v5685 = vmul.f32 %v645, %v5682
    %v5686 = vmul.f32 %v646, %v5682
    %v5687 = vmul.f32 %v647, %v5682
    %v5688 = vmul.f32 %v648, %v5682
    %v5689 = vmul.f32 %v649, %v5682
    %v5690 = vmul.f32 %v650, %v5682
    %v5691 = vmul.f32 %v651, %v5682
    %v5692 = vmul.f32 %v652, %v5682
    %v5693 = vmul.f32 %v653, %v5682
    %v5694 = vmul.f32 %v654, %v5682
    %v5695 = vmul.f32 %v655, %v5682
    %v5696 = vmul.f32 %v656, %v5682
    %v5697 = vmul.f32 %v657, %v5682
    %v5698 = vmul.f32 %v658, %v5682
    %v5699 = vmul.f32 %v659, %v5682
    %v5700 = vmul.f32 %v660, %v5682
    %v5701 = vmul.f32 %v661, %v5682
    %v5702 = vmul.f32 %v662, %v5682
    %v5703 = vmul.f32 %v663, %v5682
    %v5704 = vmul.f32 %v664, %v5682
    %v5705 = vmul.f32 %v665, %v5682
    %v5706 = vmul.f32 %v666, %v5682
    %v5707 = vmul.f32 %v667, %v5682
    %v5708 = vmul.f32 %v668, %v5682
    %v5709 = vmul.f32 %v669, %v5682
    %v5710 = vmul.f32 %v670, %v5682
    %v5711 = vmul.f32 %v671, %v5682
    %v5712 = vmul.f32 %v672, %v5682
    %v5713 = vmul.f32 %v673, %v5682
    %v5714 = vmul.f32 %v674, %v5682
    %v5715 = vmul.f32 %v675, %v5682
    %v5716 = vmul.f32 %v676, %v5682
    %v5717 = vmul.f32 %v677, %v5682
    %v5718 = vmul.f32 %v678, %v5682
    %v5719 = vadd.f32 %v5645, %v5683
    %v5720 = vadd.f32 %v5646, %v5684
    %v5721 = vadd.f32 %v5647, %v5685
    %v5722 = vadd.f32 %v5648, %v5686
    %v5723 = vadd.f32 %v5649, %v5687
    %v5724 = vadd.f32 %v5650, %v5688
    %v5725 = vadd.f32 %v5651, %v5689
    %v5726 = vadd.f32 %v5652, %v5690
    %v5727 = vadd.f32 %v5653, %v5691
    %v5728 = vadd.f32 %v5654, %v5692
    %v5729 = vadd.f32 %v5655, %v5693
    %v5730 = vadd.f32 %v5656, %v5694
    %v5731 = vadd.f32 %v5657, %v5695
    %v5732 = vadd.f32 %v5658, %v5696
    %v5733 = vadd.f32 %v5659, %v5697
    %v5734 = vadd.f32 %v5660, %v5698
    %v5735 = vadd.f32 %v5661, %v5699
    %v5736 = vadd.f32 %v5662, %v5700
    %v5737 = vadd.f32 %v5663, %v5701
    %v5738 = vadd.f32 %v5664, %v5702
    %v5739 = vadd.f32 %v5665, %v5703
    %v5740 = vadd.f32 %v5666, %v5704
    %v5741 = vadd.f32 %v5667, %v5705
    %v5742 = vadd.f32 %v5668, %v5706
    %v5743 = vadd.f32 %v5669, %v5707
    %v5744 = vadd.f32 %v5670, %v5708
    %v5745 = vadd.f32 %v5671, %v5709
    %v5746 = vadd.f32 %v5672, %v5710
    %v5747 = vadd.f32 %v5673, %v5711
    %v5748 = vadd.f32 %v5674, %v5712
    %v5749 = vadd.f32 %v5675, %v5713
    %v5750 = vadd.f32 %v5676, %v5714
    %v5751 = vadd.f32 %v5677, %v5715
    %v5752 = vadd.f32 %v5678, %v5716
    %v5753 = vadd.f32 %v5679, %v5717
    %v5754 = vadd.f32 %v5680, %v5718
    %s5755 = sld [smem:[#allocation3 + $0x3c]]
    %v5756 = vstv %s5755
    %v5757 = vmul.f32 %v645, %v5756
    %v5758 = vmul.f32 %v646, %v5756
    %v5759 = vmul.f32 %v647, %v5756
    %v5760 = vmul.f32 %v648, %v5756
    %v5761 = vmul.f32 %v649, %v5756
    %v5762 = vmul.f32 %v650, %v5756
    %v5763 = vmul.f32 %v651, %v5756
    %v5764 = vmul.f32 %v652, %v5756
    %v5765 = vmul.f32 %v653, %v5756
    %v5766 = vmul.f32 %v654, %v5756
    %v5767 = vmul.f32 %v655, %v5756
    %v5768 = vmul.f32 %v656, %v5756
    %v5769 = vmul.f32 %v657, %v5756
    %v5770 = vmul.f32 %v658, %v5756
    %v5771 = vmul.f32 %v659, %v5756
    %v5772 = vmul.f32 %v660, %v5756
    %v5773 = vmul.f32 %v661, %v5756
    %v5774 = vmul.f32 %v662, %v5756
    %v5775 = vmul.f32 %v663, %v5756
    %v5776 = vmul.f32 %v664, %v5756
    %v5777 = vmul.f32 %v665, %v5756
    %v5778 = vmul.f32 %v666, %v5756
    %v5779 = vmul.f32 %v667, %v5756
    %v5780 = vmul.f32 %v668, %v5756
    %v5781 = vmul.f32 %v669, %v5756
    %v5782 = vmul.f32 %v670, %v5756
    %v5783 = vmul.f32 %v671, %v5756
    %v5784 = vmul.f32 %v672, %v5756
    %v5785 = vmul.f32 %v673, %v5756
    %v5786 = vmul.f32 %v674, %v5756
    %v5787 = vmul.f32 %v675, %v5756
    %v5788 = vmul.f32 %v676, %v5756
    %v5789 = vmul.f32 %v677, %v5756
    %v5790 = vmul.f32 %v678, %v5756
    %v5791 = vmul.f32 %v679, %v5756
    %v5792 = vmul.f32 %v680, %v5756
    %v5793 = vadd.f32 %v5719, %v5757
    %v5794 = vadd.f32 %v5720, %v5758
    %v5795 = vadd.f32 %v5721, %v5759
    %v5796 = vadd.f32 %v5722, %v5760
    %v5797 = vadd.f32 %v5723, %v5761
    %v5798 = vadd.f32 %v5724, %v5762
    %v5799 = vadd.f32 %v5725, %v5763
    %v5800 = vadd.f32 %v5726, %v5764
    %v5801 = vadd.f32 %v5727, %v5765
    %v5802 = vadd.f32 %v5728, %v5766
    %v5803 = vadd.f32 %v5729, %v5767
    %v5804 = vadd.f32 %v5730, %v5768
    %v5805 = vadd.f32 %v5731, %v5769
    %v5806 = vadd.f32 %v5732, %v5770
    %v5807 = vadd.f32 %v5733, %v5771
    %v5808 = vadd.f32 %v5734, %v5772
    %v5809 = vadd.f32 %v5735, %v5773
    %v5810 = vadd.f32 %v5736, %v5774
    %v5811 = vadd.f32 %v5737, %v5775
    %v5812 = vadd.f32 %v5738, %v5776
    %v5813 = vadd.f32 %v5739, %v5777
    %v5814 = vadd.f32 %v5740, %v5778
    %v5815 = vadd.f32 %v5741, %v5779
    %v5816 = vadd.f32 %v5742, %v5780
    %v5817 = vadd.f32 %v5743, %v5781
    %v5818 = vadd.f32 %v5744, %v5782
    %v5819 = vadd.f32 %v5745, %v5783
    %v5820 = vadd.f32 %v5746, %v5784
    %v5821 = vadd.f32 %v5747, %v5785
    %v5822 = vadd.f32 %v5748, %v5786
    %v5823 = vadd.f32 %v5749, %v5787
    %v5824 = vadd.f32 %v5750, %v5788
    %v5825 = vadd.f32 %v5751, %v5789
    %v5826 = vadd.f32 %v5752, %v5790
    %v5827 = vadd.f32 %v5753, %v5791
    %v5828 = vadd.f32 %v5754, %v5792
    %s5829 = sld [smem:[#allocation3 + $0x3d]]
    %v5830 = vstv %s5829
    %v5831 = vmul.f32 %v681, %v5830
    %v5832 = vmul.f32 %v682, %v5830
    %v5833 = vmul.f32 %v683, %v5830
    %v5834 = vmul.f32 %v684, %v5830
    %v5835 = vmul.f32 %v685, %v5830
    %v5836 = vmul.f32 %v686, %v5830
    %v5837 = vmul.f32 %v687, %v5830
    %v5838 = vmul.f32 %v688, %v5830
    %v5839 = vmul.f32 %v689, %v5830
    %v5840 = vmul.f32 %v690, %v5830
    %v5841 = vmul.f32 %v691, %v5830
    %v5842 = vmul.f32 %v692, %v5830
    %v5843 = vmul.f32 %v693, %v5830
    %v5844 = vmul.f32 %v694, %v5830
    %v5845 = vmul.f32 %v695, %v5830
    %v5846 = vmul.f32 %v696, %v5830
    %v5847 = vmul.f32 %v697, %v5830
    %v5848 = vmul.f32 %v698, %v5830
    %v5849 = vmul.f32 %v699, %v5830
    %v5850 = vmul.f32 %v700, %v5830
    %v5851 = vmul.f32 %v701, %v5830
    %v5852 = vmul.f32 %v702, %v5830
    %v5853 = vmul.f32 %v703, %v5830
    %v5854 = vmul.f32 %v704, %v5830
    %v5855 = vmul.f32 %v705, %v5830
    %v5856 = vmul.f32 %v706, %v5830
    %v5857 = vmul.f32 %v707, %v5830
    %v5858 = vmul.f32 %v708, %v5830
    %v5859 = vmul.f32 %v709, %v5830
    %v5860 = vmul.f32 %v710, %v5830
    %v5861 = vmul.f32 %v711, %v5830
    %v5862 = vmul.f32 %v712, %v5830
    %v5863 = vmul.f32 %v713, %v5830
    %v5864 = vmul.f32 %v714, %v5830
    %v5865 = vmul.f32 %v715, %v5830
    %v5866 = vmul.f32 %v716, %v5830
    %v5867 = vadd.f32 %v5793, %v5831
    %v5868 = vadd.f32 %v5794, %v5832
    %v5869 = vadd.f32 %v5795, %v5833
    %v5870 = vadd.f32 %v5796, %v5834
    %v5871 = vadd.f32 %v5797, %v5835
    %v5872 = vadd.f32 %v5798, %v5836
    %v5873 = vadd.f32 %v5799, %v5837
    %v5874 = vadd.f32 %v5800, %v5838
    %v5875 = vadd.f32 %v5801, %v5839
    %v5876 = vadd.f32 %v5802, %v5840
    %v5877 = vadd.f32 %v5803, %v5841
    %v5878 = vadd.f32 %v5804, %v5842
    %v5879 = vadd.f32 %v5805, %v5843
    %v5880 = vadd.f32 %v5806, %v5844
    %v5881 = vadd.f32 %v5807, %v5845
    %v5882 = vadd.f32 %v5808, %v5846
    %v5883 = vadd.f32 %v5809, %v5847
    %v5884 = vadd.f32 %v5810, %v5848
    %v5885 = vadd.f32 %v5811, %v5849
    %v5886 = vadd.f32 %v5812, %v5850
    %v5887 = vadd.f32 %v5813, %v5851
    %v5888 = vadd.f32 %v5814, %v5852
    %v5889 = vadd.f32 %v5815, %v5853
    %v5890 = vadd.f32 %v5816, %v5854
    %v5891 = vadd.f32 %v5817, %v5855
    %v5892 = vadd.f32 %v5818, %v5856
    %v5893 = vadd.f32 %v5819, %v5857
    %v5894 = vadd.f32 %v5820, %v5858
    %v5895 = vadd.f32 %v5821, %v5859
    %v5896 = vadd.f32 %v5822, %v5860
    %v5897 = vadd.f32 %v5823, %v5861
    %v5898 = vadd.f32 %v5824, %v5862
    %v5899 = vadd.f32 %v5825, %v5863
    %v5900 = vadd.f32 %v5826, %v5864
    %v5901 = vadd.f32 %v5827, %v5865
    %v5902 = vadd.f32 %v5828, %v5866
    %s5903 = sld [smem:[#allocation3 + $0x3e]]
    %v5904 = vstv %s5903
    %v5905 = vmul.f32 %v717, %v5904
    %v5906 = vmul.f32 %v718, %v5904
    %v5907 = vmul.f32 %v719, %v5904
    %v5908 = vmul.f32 %v720, %v5904
    %v5909 = vmul.f32 %v721, %v5904
    %v5910 = vmul.f32 %v722, %v5904
    %v5911 = vmul.f32 %v723, %v5904
    %v5912 = vmul.f32 %v724, %v5904
    %v5913 = vmul.f32 %v725, %v5904
    %v5914 = vmul.f32 %v726, %v5904
    %v5915 = vmul.f32 %v727, %v5904
    %v5916 = vmul.f32 %v728, %v5904
    %v5917 = vmul.f32 %v729, %v5904
    %v5918 = vmul.f32 %v730, %v5904
    %v5919 = vmul.f32 %v731, %v5904
    %v5920 = vmul.f32 %v732, %v5904
    %v5921 = vmul.f32 %v733, %v5904
    %v5922 = vmul.f32 %v734, %v5904
    %v5923 = vmul.f32 %v735, %v5904
    %v5924 = vmul.f32 %v736, %v5904
    %v5925 = vmul.f32 %v737, %v5904
    %v5926 = vmul.f32 %v738, %v5904
    %v5927 = vmul.f32 %v739, %v5904
    %v5928 = vmul.f32 %v740, %v5904
    %v5929 = vmul.f32 %v741, %v5904
    %v5930 = vmul.f32 %v742, %v5904
    %v5931 = vmul.f32 %v743, %v5904
    %v5932 = vmul.f32 %v744, %v5904
    %v5933 = vmul.f32 %v745, %v5904
    %v5934 = vmul.f32 %v746, %v5904
    %v5935 = vmul.f32 %v747, %v5904
    %v5936 = vmul.f32 %v748, %v5904
    %v5937 = vmul.f32 %v749, %v5904
    %v5938 = vmul.f32 %v750, %v5904
    %v5939 = vmul.f32 %v751, %v5904
    %v5940 = vmul.f32 %v752, %v5904
    %v5941 = vadd.f32 %v5867, %v5905
    %v5942 = vadd.f32 %v5868, %v5906
    %v5943 = vadd.f32 %v5869, %v5907
    %v5944 = vadd.f32 %v5870, %v5908
    %v5945 = vadd.f32 %v5871, %v5909
    %v5946 = vadd.f32 %v5872, %v5910
    %v5947 = vadd.f32 %v5873, %v5911
    %v5948 = vadd.f32 %v5874, %v5912
    %v5949 = vadd.f32 %v5875, %v5913
    %v5950 = vadd.f32 %v5876, %v5914
    %v5951 = vadd.f32 %v5877, %v5915
    %v5952 = vadd.f32 %v5878, %v5916
    %v5953 = vadd.f32 %v5879, %v5917
    %v5954 = vadd.f32 %v5880, %v5918
    %v5955 = vadd.f32 %v5881, %v5919
    %v5956 = vadd.f32 %v5882, %v5920
    %v5957 = vadd.f32 %v5883, %v5921
    %v5958 = vadd.f32 %v5884, %v5922
    %v5959 = vadd.f32 %v5885, %v5923
    %v5960 = vadd.f32 %v5886, %v5924
    %v5961 = vadd.f32 %v5887, %v5925
    %v5962 = vadd.f32 %v5888, %v5926
    %v5963 = vadd.f32 %v5889, %v5927
    %v5964 = vadd.f32 %v5890, %v5928
    %v5965 = vadd.f32 %v5891, %v5929
    %v5966 = vadd.f32 %v5892, %v5930
    %v5967 = vadd.f32 %v5893, %v5931
    %v5968 = vadd.f32 %v5894, %v5932
    %v5969 = vadd.f32 %v5895, %v5933
    %v5970 = vadd.f32 %v5896, %v5934
    %v5971 = vadd.f32 %v5897, %v5935
    %v5972 = vadd.f32 %v5898, %v5936
    %v5973 = vadd.f32 %v5899, %v5937
    %v5974 = vadd.f32 %v5900, %v5938
    %v5975 = vadd.f32 %v5901, %v5939
    %v5976 = vadd.f32 %v5902, %v5940
    %s5977 = sld [smem:[#allocation5 + $0x6]]
    %v5978 = vstv %s5977
    %v5979 = vadd.f32 %v5941, %v5978
    %v5980 = vadd.f32 %v5942, %v5978
    %v5981 = vadd.f32 %v5943, %v5978
    %v5982 = vadd.f32 %v5944, %v5978
    %v5983 = vadd.f32 %v5945, %v5978
    %v5984 = vadd.f32 %v5946, %v5978
    %v5985 = vadd.f32 %v5947, %v5978
    %v5986 = vadd.f32 %v5948, %v5978
    %v5987 = vadd.f32 %v5949, %v5978
    %v5988 = vadd.f32 %v5950, %v5978
    %v5989 = vadd.f32 %v5951, %v5978
    %v5990 = vadd.f32 %v5952, %v5978
    %v5991 = vadd.f32 %v5953, %v5978
    %v5992 = vadd.f32 %v5954, %v5978
    %v5993 = vadd.f32 %v5955, %v5978
    %v5994 = vadd.f32 %v5956, %v5978
    %v5995 = vadd.f32 %v5957, %v5978
    %v5996 = vadd.f32 %v5958, %v5978
    %v5997 = vadd.f32 %v5959, %v5978
    %v5998 = vadd.f32 %v5960, %v5978
    %v5999 = vadd.f32 %v5961, %v5978
    %v6000 = vadd.f32 %v5962, %v5978
    %v6001 = vadd.f32 %v5963, %v5978
    %v6002 = vadd.f32 %v5964, %v5978
    %v6003 = vadd.f32 %v5965, %v5978
    %v6004 = vadd.f32 %v5966, %v5978
    %v6005 = vadd.f32 %v5967, %v5978
    %v6006 = vadd.f32 %v5968, %v5978
    %v6007 = vadd.f32 %v5969, %v5978
    %v6008 = vadd.f32 %v5970, %v5978
    %v6009 = vadd.f32 %v5971, %v5978
    %v6010 = vadd.f32 %v5972, %v5978
    %v6011 = vadd.f32 %v5973, %v5978
    %v6012 = vadd.f32 %v5974, %v5978
    %v6013 = vadd.f32 %v5975, %v5978
    %v6014 = vadd.f32 %v5976, %v5978
    %v6015 = vmax.f32 %v5979, 0.0
    %v6016 = vmax.f32 %v5980, 0.0
    %v6017 = vmax.f32 %v5981, 0.0
    %v6018 = vmax.f32 %v5982, 0.0
    %v6019 = vmax.f32 %v5983, 0.0
    %v6020 = vmax.f32 %v5984, 0.0
    %v6021 = vmax.f32 %v5985, 0.0
    %v6022 = vmax.f32 %v5986, 0.0
    %v6023 = vmax.f32 %v5987, 0.0
    %v6024 = vmax.f32 %v5988, 0.0
    %v6025 = vmax.f32 %v5989, 0.0
    %v6026 = vmax.f32 %v5990, 0.0
    %v6027 = vmax.f32 %v5991, 0.0
    %v6028 = vmax.f32 %v5992, 0.0
    %v6029 = vmax.f32 %v5993, 0.0
    %v6030 = vmax.f32 %v5994, 0.0
    %v6031 = vmax.f32 %v5995, 0.0
    %v6032 = vmax.f32 %v5996, 0.0
    %v6033 = vmax.f32 %v5997, 0.0
    %v6034 = vmax.f32 %v5998, 0.0
    %v6035 = vmax.f32 %v5999, 0.0
    %v6036 = vmax.f32 %v6000, 0.0
    %v6037 = vmax.f32 %v6001, 0.0
    %v6038 = vmax.f32 %v6002, 0.0
    %v6039 = vmax.f32 %v6003, 0.0
    %v6040 = vmax.f32 %v6004, 0.0
    %v6041 = vmax.f32 %v6005, 0.0
    %v6042 = vmax.f32 %v6006, 0.0
    %v6043 = vmax.f32 %v6007, 0.0
    %v6044 = vmax.f32 %v6008, 0.0
    %v6045 = vmax.f32 %v6009, 0.0
    %v6046 = vmax.f32 %v6010, 0.0
    %v6047 = vmax.f32 %v6011, 0.0
    %v6048 = vmax.f32 %v6012, 0.0
    %v6049 = vmax.f32 %v6013, 0.0
    %v6050 = vmax.f32 %v6014, 0.0
    %6051 = vmatpush.msra.mxu0 %v6030
    %6052 = vmatpush.msra.mxu0 %v6029
    %6053 = vmatpush.msra.mxu0 %v6028
    %6054 = vmatpush.msra.mxu0 %v6027
    %6055 = vmatpush.msra.mxu0 %v6026
    %6056 = vmatpush.msra.mxu0 %v6025
    %6057 = vmatpush.msra.mxu0 %v6024
    %6058 = vmatpush.msra.mxu0 %v6023
    %6059 = vmatpush.msra.mxu0 %v6022
    %6060 = vmatpush.msra.mxu0 %v6021
    %6061 = vmatpush.msra.mxu0 %v6020
    %6062 = vmatpush.msra.mxu0 %v6019
    %6063 = vmatpush.msra.mxu0 %v6018
    %6064 = vmatpush.msra.mxu0 %v6017
    %6065 = vmatpush.msra.mxu0 %v6016
    %6066 = vmatpush.msra.mxu0 %v6015
    %6067 = vmatmul.f32.gmra.mxu0 %v1459
    %v6068 = vpop.f32.mrf.mxu0
    %v6069 = vadd.f32 0.0, %v6068
    %6070 = vdwg.mxu0
    %6071 = vmatpush.msra.mxu0 %v6046
    %6072 = vmatpush.msra.mxu0 %v6045
    %6073 = vmatpush.msra.mxu0 %v6044
    %6074 = vmatpush.msra.mxu0 %v6043
    %6075 = vmatpush.msra.mxu0 %v6042
    %6076 = vmatpush.msra.mxu0 %v6041
    %6077 = vmatpush.msra.mxu0 %v6040
    %6078 = vmatpush.msra.mxu0 %v6039
    %6079 = vmatpush.msra.mxu0 %v6038
    %6080 = vmatpush.msra.mxu0 %v6037
    %6081 = vmatpush.msra.mxu0 %v6036
    %6082 = vmatpush.msra.mxu0 %v6035
    %6083 = vmatpush.msra.mxu0 %v6034
    %6084 = vmatpush.msra.mxu0 %v6033
    %6085 = vmatpush.msra.mxu0 %v6032
    %6086 = vmatpush.msra.mxu0 %v6031
    %6087 = vmatmul.f32.gmra.mxu0 %v1460
    %v6088 = vpop.f32.mrf.mxu0
    %v6089 = vadd.f32 %v6069, %v6088
    %6090 = vdwg.mxu0
    %6091 = vmatpush.msra.mxu0 0.0
    %6092 = vmatpush.msra.mxu0 0.0
    %6093 = vmatpush.msra.mxu0 0.0
    %6094 = vmatpush.msra.mxu0 0.0
    %6095 = vmatpush.msra.mxu0 0.0
    %6096 = vmatpush.msra.mxu0 0.0
    %6097 = vmatpush.msra.mxu0 0.0
    %6098 = vmatpush.msra.mxu0 0.0
    %6099 = vmatpush.msra.mxu0 0.0
    %6100 = vmatpush.msra.mxu0 0.0
    %6101 = vmatpush.msra.mxu0 0.0
    %6102 = vmatpush.msra.mxu0 0.0
    %6103 = vmatpush.msra.mxu0 %v6050
    %6104 = vmatpush.msra.mxu0 %v6049
    %6105 = vmatpush.msra.mxu0 %v6048
    %6106 = vmatpush.msra.mxu0 %v6047
    %6107 = vmatmul.f32.gmra.mxu0 %v1465
    %v6108 = vpop.f32.mrf.mxu0
    %v6109 = vadd.f32 %v6089, %v6108
    %6110 = vdwg.mxu0
    %s6111 = sld [smem:[#allocation3 + $0x3f]]
    %v6112 = vstv %s6111
    %v6113 = vmul.f32 %v497, %v6112
    %v6114 = vmul.f32 %v498, %v6112
    %v6115 = vmul.f32 %v499, %v6112
    %v6116 = vmul.f32 %v500, %v6112
    %v6117 = vmul.f32 %v501, %v6112
    %v6118 = vmul.f32 %v502, %v6112
    %v6119 = vmul.f32 %v503, %v6112
    %v6120 = vmul.f32 %v504, %v6112
    %v6121 = vmul.f32 %v505, %v6112
    %v6122 = vmul.f32 %v506, %v6112
    %v6123 = vmul.f32 %v507, %v6112
    %v6124 = vmul.f32 %v508, %v6112
    %v6125 = vmul.f32 %v509, %v6112
    %v6126 = vmul.f32 %v510, %v6112
    %v6127 = vmul.f32 %v511, %v6112
    %v6128 = vmul.f32 %v512, %v6112
    %v6129 = vmul.f32 %v513, %v6112
    %v6130 = vmul.f32 %v514, %v6112
    %v6131 = vmul.f32 %v515, %v6112
    %v6132 = vmul.f32 %v516, %v6112
    %v6133 = vmul.f32 %v517, %v6112
    %v6134 = vmul.f32 %v518, %v6112
    %v6135 = vmul.f32 %v519, %v6112
    %v6136 = vmul.f32 %v520, %v6112
    %v6137 = vmul.f32 %v521, %v6112
    %v6138 = vmul.f32 %v522, %v6112
    %v6139 = vmul.f32 %v523, %v6112
    %v6140 = vmul.f32 %v524, %v6112
    %v6141 = vmul.f32 %v525, %v6112
    %v6142 = vmul.f32 %v526, %v6112
    %v6143 = vmul.f32 %v527, %v6112
    %v6144 = vmul.f32 %v528, %v6112
    %v6145 = vmul.f32 %v529, %v6112
    %v6146 = vmul.f32 %v530, %v6112
    %v6147 = vmul.f32 %v531, %v6112
    %v6148 = vmul.f32 %v532, %v6112
    %s6149 = sld [smem:[#allocation3 + $0x40]]
    %v6150 = vstv %s6149
    %v6151 = vmul.f32 %v533, %v6150
    %v6152 = vmul.f32 %v534, %v6150
    %v6153 = vmul.f32 %v535, %v6150
    %v6154 = vmul.f32 %v536, %v6150
    %v6155 = vmul.f32 %v537, %v6150
    %v6156 = vmul.f32 %v538, %v6150
    %v6157 = vmul.f32 %v539, %v6150
    %v6158 = vmul.f32 %v540, %v6150
    %v6159 = vmul.f32 %v541, %v6150
    %v6160 = vmul.f32 %v542, %v6150
    %v6161 = vmul.f32 %v543, %v6150
    %v6162 = vmul.f32 %v544, %v6150
    %v6163 = vmul.f32 %v545, %v6150
    %v6164 = vmul.f32 %v546, %v6150
    %v6165 = vmul.f32 %v547, %v6150
    %v6166 = vmul.f32 %v548, %v6150
    %v6167 = vmul.f32 %v549, %v6150
    %v6168 = vmul.f32 %v550, %v6150
    %v6169 = vmul.f32 %v551, %v6150
    %v6170 = vmul.f32 %v552, %v6150
    %v6171 = vmul.f32 %v553, %v6150
    %v6172 = vmul.f32 %v554, %v6150
    %v6173 = vmul.f32 %v555, %v6150
    %v6174 = vmul.f32 %v556, %v6150
    %v6175 = vmul.f32 %v557, %v6150
    %v6176 = vmul.f32 %v558, %v6150
    %v6177 = vmul.f32 %v559, %v6150
    %v6178 = vmul.f32 %v560, %v6150
    %v6179 = vmul.f32 %v561, %v6150
    %v6180 = vmul.f32 %v562, %v6150
    %v6181 = vmul.f32 %v563, %v6150
    %v6182 = vmul.f32 %v564, %v6150
    %v6183 = vmul.f32 %v565, %v6150
    %v6184 = vmul.f32 %v566, %v6150
    %v6185 = vmul.f32 %v567, %v6150
    %v6186 = vmul.f32 %v568, %v6150
    %v6187 = vadd.f32 %v6113, %v6151
    %v6188 = vadd.f32 %v6114, %v6152
    %v6189 = vadd.f32 %v6115, %v6153
    %v6190 = vadd.f32 %v6116, %v6154
    %v6191 = vadd.f32 %v6117, %v6155
    %v6192 = vadd.f32 %v6118, %v6156
    %v6193 = vadd.f32 %v6119, %v6157
    %v6194 = vadd.f32 %v6120, %v6158
    %v6195 = vadd.f32 %v6121, %v6159
    %v6196 = vadd.f32 %v6122, %v6160
    %v6197 = vadd.f32 %v6123, %v6161
    %v6198 = vadd.f32 %v6124, %v6162
    %v6199 = vadd.f32 %v6125, %v6163
    %v6200 = vadd.f32 %v6126, %v6164
    %v6201 = vadd.f32 %v6127, %v6165
    %v6202 = vadd.f32 %v6128, %v6166
    %v6203 = vadd.f32 %v6129, %v6167
    %v6204 = vadd.f32 %v6130, %v6168
    %v6205 = vadd.f32 %v6131, %v6169
    %v6206 = vadd.f32 %v6132, %v6170
    %v6207 = vadd.f32 %v6133, %v6171
    %v6208 = vadd.f32 %v6134, %v6172
    %v6209 = vadd.f32 %v6135, %v6173
    %v6210 = vadd.f32 %v6136, %v6174
    %v6211 = vadd.f32 %v6137, %v6175
    %v6212 = vadd.f32 %v6138, %v6176
    %v6213 = vadd.f32 %v6139, %v6177
    %v6214 = vadd.f32 %v6140, %v6178
    %v6215 = vadd.f32 %v6141, %v6179
    %v6216 = vadd.f32 %v6142, %v6180
    %v6217 = vadd.f32 %v6143, %v6181
    %v6218 = vadd.f32 %v6144, %v6182
    %v6219 = vadd.f32 %v6145, %v6183
    %v6220 = vadd.f32 %v6146, %v6184
    %v6221 = vadd.f32 %v6147, %v6185
    %v6222 = vadd.f32 %v6148, %v6186
    %s6223 = sld [smem:[#allocation3 + $0x41]]
    %v6224 = vstv %s6223
    %v6225 = vmul.f32 %v569, %v6224
    %v6226 = vmul.f32 %v570, %v6224
    %v6227 = vmul.f32 %v571, %v6224
    %v6228 = vmul.f32 %v572, %v6224
    %v6229 = vmul.f32 %v573, %v6224
    %v6230 = vmul.f32 %v574, %v6224
    %v6231 = vmul.f32 %v575, %v6224
    %v6232 = vmul.f32 %v576, %v6224
    %v6233 = vmul.f32 %v577, %v6224
    %v6234 = vmul.f32 %v578, %v6224
    %v6235 = vmul.f32 %v579, %v6224
    %v6236 = vmul.f32 %v580, %v6224
    %v6237 = vmul.f32 %v581, %v6224
    %v6238 = vmul.f32 %v582, %v6224
    %v6239 = vmul.f32 %v583, %v6224
    %v6240 = vmul.f32 %v584, %v6224
    %v6241 = vmul.f32 %v585, %v6224
    %v6242 = vmul.f32 %v586, %v6224
    %v6243 = vmul.f32 %v587, %v6224
    %v6244 = vmul.f32 %v588, %v6224
    %v6245 = vmul.f32 %v589, %v6224
    %v6246 = vmul.f32 %v590, %v6224
    %v6247 = vmul.f32 %v591, %v6224
    %v6248 = vmul.f32 %v592, %v6224
    %v6249 = vmul.f32 %v593, %v6224
    %v6250 = vmul.f32 %v594, %v6224
    %v6251 = vmul.f32 %v595, %v6224
    %v6252 = vmul.f32 %v596, %v6224
    %v6253 = vmul.f32 %v597, %v6224
    %v6254 = vmul.f32 %v598, %v6224
    %v6255 = vmul.f32 %v599, %v6224
    %v6256 = vmul.f32 %v600, %v6224
    %v6257 = vmul.f32 %v601, %v6224
    %v6258 = vmul.f32 %v602, %v6224
    %v6259 = vmul.f32 %v603, %v6224
    %v6260 = vmul.f32 %v604, %v6224
    %v6261 = vadd.f32 %v6187, %v6225
    %v6262 = vadd.f32 %v6188, %v6226
    %v6263 = vadd.f32 %v6189, %v6227
    %v6264 = vadd.f32 %v6190, %v6228
    %v6265 = vadd.f32 %v6191, %v6229
    %v6266 = vadd.f32 %v6192, %v6230
    %v6267 = vadd.f32 %v6193, %v6231
    %v6268 = vadd.f32 %v6194, %v6232
    %v6269 = vadd.f32 %v6195, %v6233
    %v6270 = vadd.f32 %v6196, %v6234
    %v6271 = vadd.f32 %v6197, %v6235
    %v6272 = vadd.f32 %v6198, %v6236
    %v6273 = vadd.f32 %v6199, %v6237
    %v6274 = vadd.f32 %v6200, %v6238
    %v6275 = vadd.f32 %v6201, %v6239
    %v6276 = vadd.f32 %v6202, %v6240
    %v6277 = vadd.f32 %v6203, %v6241
    %v6278 = vadd.f32 %v6204, %v6242
    %v6279 = vadd.f32 %v6205, %v6243
    %v6280 = vadd.f32 %v6206, %v6244
    %v6281 = vadd.f32 %v6207, %v6245
    %v6282 = vadd.f32 %v6208, %v6246
    %v6283 = vadd.f32 %v6209, %v6247
    %v6284 = vadd.f32 %v6210, %v6248
    %v6285 = vadd.f32 %v6211, %v6249
    %v6286 = vadd.f32 %v6212, %v6250
    %v6287 = vadd.f32 %v6213, %v6251
    %v6288 = vadd.f32 %v6214, %v6252
    %v6289 = vadd.f32 %v6215, %v6253
    %v6290 = vadd.f32 %v6216, %v6254
    %v6291 = vadd.f32 %v6217, %v6255
    %v6292 = vadd.f32 %v6218, %v6256
    %v6293 = vadd.f32 %v6219, %v6257
    %v6294 = vadd.f32 %v6220, %v6258
    %v6295 = vadd.f32 %v6221, %v6259
    %v6296 = vadd.f32 %v6222, %v6260
    %s6297 = sld [smem:[#allocation3 + $0x42]]
    %v6298 = vstv %s6297
    %v6299 = vmul.f32 %v571, %v6298
    %v6300 = vmul.f32 %v572, %v6298
    %v6301 = vmul.f32 %v573, %v6298
    %v6302 = vmul.f32 %v574, %v6298
    %v6303 = vmul.f32 %v575, %v6298
    %v6304 = vmul.f32 %v576, %v6298
    %v6305 = vmul.f32 %v577, %v6298
    %v6306 = vmul.f32 %v578, %v6298
    %v6307 = vmul.f32 %v579, %v6298
    %v6308 = vmul.f32 %v580, %v6298
    %v6309 = vmul.f32 %v581, %v6298
    %v6310 = vmul.f32 %v582, %v6298
    %v6311 = vmul.f32 %v583, %v6298
    %v6312 = vmul.f32 %v584, %v6298
    %v6313 = vmul.f32 %v585, %v6298
    %v6314 = vmul.f32 %v586, %v6298
    %v6315 = vmul.f32 %v587, %v6298
    %v6316 = vmul.f32 %v588, %v6298
    %v6317 = vmul.f32 %v589, %v6298
    %v6318 = vmul.f32 %v590, %v6298
    %v6319 = vmul.f32 %v591, %v6298
    %v6320 = vmul.f32 %v592, %v6298
    %v6321 = vmul.f32 %v593, %v6298
    %v6322 = vmul.f32 %v594, %v6298
    %v6323 = vmul.f32 %v595, %v6298
    %v6324 = vmul.f32 %v596, %v6298
    %v6325 = vmul.f32 %v597, %v6298
    %v6326 = vmul.f32 %v598, %v6298
    %v6327 = vmul.f32 %v599, %v6298
    %v6328 = vmul.f32 %v600, %v6298
    %v6329 = vmul.f32 %v601, %v6298
    %v6330 = vmul.f32 %v602, %v6298
    %v6331 = vmul.f32 %v603, %v6298
    %v6332 = vmul.f32 %v604, %v6298
    %v6333 = vmul.f32 %v605, %v6298
    %v6334 = vmul.f32 %v606, %v6298
    %v6335 = vadd.f32 %v6261, %v6299
    %v6336 = vadd.f32 %v6262, %v6300
    %v6337 = vadd.f32 %v6263, %v6301
    %v6338 = vadd.f32 %v6264, %v6302
    %v6339 = vadd.f32 %v6265, %v6303
    %v6340 = vadd.f32 %v6266, %v6304
    %v6341 = vadd.f32 %v6267, %v6305
    %v6342 = vadd.f32 %v6268, %v6306
    %v6343 = vadd.f32 %v6269, %v6307
    %v6344 = vadd.f32 %v6270, %v6308
    %v6345 = vadd.f32 %v6271, %v6309
    %v6346 = vadd.f32 %v6272, %v6310
    %v6347 = vadd.f32 %v6273, %v6311
    %v6348 = vadd.f32 %v6274, %v6312
    %v6349 = vadd.f32 %v6275, %v6313
    %v6350 = vadd.f32 %v6276, %v6314
    %v6351 = vadd.f32 %v6277, %v6315
    %v6352 = vadd.f32 %v6278, %v6316
    %v6353 = vadd.f32 %v6279, %v6317
    %v6354 = vadd.f32 %v6280, %v6318
    %v6355 = vadd.f32 %v6281, %v6319
    %v6356 = vadd.f32 %v6282, %v6320
    %v6357 = vadd.f32 %v6283, %v6321
    %v6358 = vadd.f32 %v6284, %v6322
    %v6359 = vadd.f32 %v6285, %v6323
    %v6360 = vadd.f32 %v6286, %v6324
    %v6361 = vadd.f32 %v6287, %v6325
    %v6362 = vadd.f32 %v6288, %v6326
    %v6363 = vadd.f32 %v6289, %v6327
    %v6364 = vadd.f32 %v6290, %v6328
    %v6365 = vadd.f32 %v6291, %v6329
    %v6366 = vadd.f32 %v6292, %v6330
    %v6367 = vadd.f32 %v6293, %v6331
    %v6368 = vadd.f32 %v6294, %v6332
    %v6369 = vadd.f32 %v6295, %v6333
    %v6370 = vadd.f32 %v6296, %v6334
    %s6371 = sld [smem:[#allocation3 + $0x43]]
    %v6372 = vstv %s6371
    %v6373 = vmul.f32 %v607, %v6372
    %v6374 = vmul.f32 %v608, %v6372
    %v6375 = vmul.f32 %v609, %v6372
    %v6376 = vmul.f32 %v610, %v6372
    %v6377 = vmul.f32 %v611, %v6372
    %v6378 = vmul.f32 %v612, %v6372
    %v6379 = vmul.f32 %v613, %v6372
    %v6380 = vmul.f32 %v614, %v6372
    %v6381 = vmul.f32 %v615, %v6372
    %v6382 = vmul.f32 %v616, %v6372
    %v6383 = vmul.f32 %v617, %v6372
    %v6384 = vmul.f32 %v618, %v6372
    %v6385 = vmul.f32 %v619, %v6372
    %v6386 = vmul.f32 %v620, %v6372
    %v6387 = vmul.f32 %v621, %v6372
    %v6388 = vmul.f32 %v622, %v6372
    %v6389 = vmul.f32 %v623, %v6372
    %v6390 = vmul.f32 %v624, %v6372
    %v6391 = vmul.f32 %v625, %v6372
    %v6392 = vmul.f32 %v626, %v6372
    %v6393 = vmul.f32 %v627, %v6372
    %v6394 = vmul.f32 %v628, %v6372
    %v6395 = vmul.f32 %v629, %v6372
    %v6396 = vmul.f32 %v630, %v6372
    %v6397 = vmul.f32 %v631, %v6372
    %v6398 = vmul.f32 %v632, %v6372
    %v6399 = vmul.f32 %v633, %v6372
    %v6400 = vmul.f32 %v634, %v6372
    %v6401 = vmul.f32 %v635, %v6372
    %v6402 = vmul.f32 %v636, %v6372
    %v6403 = vmul.f32 %v637, %v6372
    %v6404 = vmul.f32 %v638, %v6372
    %v6405 = vmul.f32 %v639, %v6372
    %v6406 = vmul.f32 %v640, %v6372
    %v6407 = vmul.f32 %v641, %v6372
    %v6408 = vmul.f32 %v642, %v6372
    %v6409 = vadd.f32 %v6335, %v6373
    %v6410 = vadd.f32 %v6336, %v6374
    %v6411 = vadd.f32 %v6337, %v6375
    %v6412 = vadd.f32 %v6338, %v6376
    %v6413 = vadd.f32 %v6339, %v6377
    %v6414 = vadd.f32 %v6340, %v6378
    %v6415 = vadd.f32 %v6341, %v6379
    %v6416 = vadd.f32 %v6342, %v6380
    %v6417 = vadd.f32 %v6343, %v6381
    %v6418 = vadd.f32 %v6344, %v6382
    %v6419 = vadd.f32 %v6345, %v6383
    %v6420 = vadd.f32 %v6346, %v6384
    %v6421 = vadd.f32 %v6347, %v6385
    %v6422 = vadd.f32 %v6348, %v6386
    %v6423 = vadd.f32 %v6349, %v6387
    %v6424 = vadd.f32 %v6350, %v6388
    %v6425 = vadd.f32 %v6351, %v6389
    %v6426 = vadd.f32 %v6352, %v6390
    %v6427 = vadd.f32 %v6353, %v6391
    %v6428 = vadd.f32 %v6354, %v6392
    %v6429 = vadd.f32 %v6355, %v6393
    %v6430 = vadd.f32 %v6356, %v6394
    %v6431 = vadd.f32 %v6357, %v6395
    %v6432 = vadd.f32 %v6358, %v6396
    %v6433 = vadd.f32 %v6359, %v6397
    %v6434 = vadd.f32 %v6360, %v6398
    %v6435 = vadd.f32 %v6361, %v6399
    %v6436 = vadd.f32 %v6362, %v6400
    %v6437 = vadd.f32 %v6363, %v6401
    %v6438 = vadd.f32 %v6364, %v6402
    %v6439 = vadd.f32 %v6365, %v6403
    %v6440 = vadd.f32 %v6366, %v6404
    %v6441 = vadd.f32 %v6367, %v6405
    %v6442 = vadd.f32 %v6368, %v6406
    %v6443 = vadd.f32 %v6369, %v6407
    %v6444 = vadd.f32 %v6370, %v6408
    %s6445 = sld [smem:[#allocation3 + $0x44]]
    %v6446 = vstv %s6445
    %v6447 = vmul.f32 %v643, %v6446
    %v6448 = vmul.f32 %v644, %v6446
    %v6449 = vmul.f32 %v645, %v6446
    %v6450 = vmul.f32 %v646, %v6446
    %v6451 = vmul.f32 %v647, %v6446
    %v6452 = vmul.f32 %v648, %v6446
    %v6453 = vmul.f32 %v649, %v6446
    %v6454 = vmul.f32 %v650, %v6446
    %v6455 = vmul.f32 %v651, %v6446
    %v6456 = vmul.f32 %v652, %v6446
    %v6457 = vmul.f32 %v653, %v6446
    %v6458 = vmul.f32 %v654, %v6446
    %v6459 = vmul.f32 %v655, %v6446
    %v6460 = vmul.f32 %v656, %v6446
    %v6461 = vmul.f32 %v657, %v6446
    %v6462 = vmul.f32 %v658, %v6446
    %v6463 = vmul.f32 %v659, %v6446
    %v6464 = vmul.f32 %v660, %v6446
    %v6465 = vmul.f32 %v661, %v6446
    %v6466 = vmul.f32 %v662, %v6446
    %v6467 = vmul.f32 %v663, %v6446
    %v6468 = vmul.f32 %v664, %v6446
    %v6469 = vmul.f32 %v665, %v6446
    %v6470 = vmul.f32 %v666, %v6446
    %v6471 = vmul.f32 %v667, %v6446
    %v6472 = vmul.f32 %v668, %v6446
    %v6473 = vmul.f32 %v669, %v6446
    %v6474 = vmul.f32 %v670, %v6446
    %v6475 = vmul.f32 %v671, %v6446
    %v6476 = vmul.f32 %v672, %v6446
    %v6477 = vmul.f32 %v673, %v6446
    %v6478 = vmul.f32 %v674, %v6446
    %v6479 = vmul.f32 %v675, %v6446
    %v6480 = vmul.f32 %v676, %v6446
    %v6481 = vmul.f32 %v677, %v6446
    %v6482 = vmul.f32 %v678, %v6446
    %v6483 = vadd.f32 %v6409, %v6447
    %v6484 = vadd.f32 %v6410, %v6448
    %v6485 = vadd.f32 %v6411, %v6449
    %v6486 = vadd.f32 %v6412, %v6450
    %v6487 = vadd.f32 %v6413, %v6451
    %v6488 = vadd.f32 %v6414, %v6452
    %v6489 = vadd.f32 %v6415, %v6453
    %v6490 = vadd.f32 %v6416, %v6454
    %v6491 = vadd.f32 %v6417, %v6455
    %v6492 = vadd.f32 %v6418, %v6456
    %v6493 = vadd.f32 %v6419, %v6457
    %v6494 = vadd.f32 %v6420, %v6458
    %v6495 = vadd.f32 %v6421, %v6459
    %v6496 = vadd.f32 %v6422, %v6460
    %v6497 = vadd.f32 %v6423, %v6461
    %v6498 = vadd.f32 %v6424, %v6462
    %v6499 = vadd.f32 %v6425, %v6463
    %v6500 = vadd.f32 %v6426, %v6464
    %v6501 = vadd.f32 %v6427, %v6465
    %v6502 = vadd.f32 %v6428, %v6466
    %v6503 = vadd.f32 %v6429, %v6467
    %v6504 = vadd.f32 %v6430, %v6468
    %v6505 = vadd.f32 %v6431, %v6469
    %v6506 = vadd.f32 %v6432, %v6470
    %v6507 = vadd.f32 %v6433, %v6471
    %v6508 = vadd.f32 %v6434, %v6472
    %v6509 = vadd.f32 %v6435, %v6473
    %v6510 = vadd.f32 %v6436, %v6474
    %v6511 = vadd.f32 %v6437, %v6475
    %v6512 = vadd.f32 %v6438, %v6476
    %v6513 = vadd.f32 %v6439, %v6477
    %v6514 = vadd.f32 %v6440, %v6478
    %v6515 = vadd.f32 %v6441, %v6479
    %v6516 = vadd.f32 %v6442, %v6480
    %v6517 = vadd.f32 %v6443, %v6481
    %v6518 = vadd.f32 %v6444, %v6482
    %s6519 = sld [smem:[#allocation3 + $0x45]]
    %v6520 = vstv %s6519
    %v6521 = vmul.f32 %v645, %v6520
    %v6522 = vmul.f32 %v646, %v6520
    %v6523 = vmul.f32 %v647, %v6520
    %v6524 = vmul.f32 %v648, %v6520
    %v6525 = vmul.f32 %v649, %v6520
    %v6526 = vmul.f32 %v650, %v6520
    %v6527 = vmul.f32 %v651, %v6520
    %v6528 = vmul.f32 %v652, %v6520
    %v6529 = vmul.f32 %v653, %v6520
    %v6530 = vmul.f32 %v654, %v6520
    %v6531 = vmul.f32 %v655, %v6520
    %v6532 = vmul.f32 %v656, %v6520
    %v6533 = vmul.f32 %v657, %v6520
    %v6534 = vmul.f32 %v658, %v6520
    %v6535 = vmul.f32 %v659, %v6520
    %v6536 = vmul.f32 %v660, %v6520
    %v6537 = vmul.f32 %v661, %v6520
    %v6538 = vmul.f32 %v662, %v6520
    %v6539 = vmul.f32 %v663, %v6520
    %v6540 = vmul.f32 %v664, %v6520
    %v6541 = vmul.f32 %v665, %v6520
    %v6542 = vmul.f32 %v666, %v6520
    %v6543 = vmul.f32 %v667, %v6520
    %v6544 = vmul.f32 %v668, %v6520
    %v6545 = vmul.f32 %v669, %v6520
    %v6546 = vmul.f32 %v670, %v6520
    %v6547 = vmul.f32 %v671, %v6520
    %v6548 = vmul.f32 %v672, %v6520
    %v6549 = vmul.f32 %v673, %v6520
    %v6550 = vmul.f32 %v674, %v6520
    %v6551 = vmul.f32 %v675, %v6520
    %v6552 = vmul.f32 %v676, %v6520
    %v6553 = vmul.f32 %v677, %v6520
    %v6554 = vmul.f32 %v678, %v6520
    %v6555 = vmul.f32 %v679, %v6520
    %v6556 = vmul.f32 %v680, %v6520
    %v6557 = vadd.f32 %v6483, %v6521
    %v6558 = vadd.f32 %v6484, %v6522
    %v6559 = vadd.f32 %v6485, %v6523
    %v6560 = vadd.f32 %v6486, %v6524
    %v6561 = vadd.f32 %v6487, %v6525
    %v6562 = vadd.f32 %v6488, %v6526
    %v6563 = vadd.f32 %v6489, %v6527
    %v6564 = vadd.f32 %v6490, %v6528
    %v6565 = vadd.f32 %v6491, %v6529
    %v6566 = vadd.f32 %v6492, %v6530
    %v6567 = vadd.f32 %v6493, %v6531
    %v6568 = vadd.f32 %v6494, %v6532
    %v6569 = vadd.f32 %v6495, %v6533
    %v6570 = vadd.f32 %v6496, %v6534
    %v6571 = vadd.f32 %v6497, %v6535
    %v6572 = vadd.f32 %v6498, %v6536
    %v6573 = vadd.f32 %v6499, %v6537
    %v6574 = vadd.f32 %v6500, %v6538
    %v6575 = vadd.f32 %v6501, %v6539
    %v6576 = vadd.f32 %v6502, %v6540
    %v6577 = vadd.f32 %v6503, %v6541
    %v6578 = vadd.f32 %v6504, %v6542
    %v6579 = vadd.f32 %v6505, %v6543
    %v6580 = vadd.f32 %v6506, %v6544
    %v6581 = vadd.f32 %v6507, %v6545
    %v6582 = vadd.f32 %v6508, %v6546
    %v6583 = vadd.f32 %v6509, %v6547
    %v6584 = vadd.f32 %v6510, %v6548
    %v6585 = vadd.f32 %v6511, %v6549
    %v6586 = vadd.f32 %v6512, %v6550
    %v6587 = vadd.f32 %v6513, %v6551
    %v6588 = vadd.f32 %v6514, %v6552
    %v6589 = vadd.f32 %v6515, %v6553
    %v6590 = vadd.f32 %v6516, %v6554
    %v6591 = vadd.f32 %v6517, %v6555
    %v6592 = vadd.f32 %v6518, %v6556
    %s6593 = sld [smem:[#allocation3 + $0x46]]
    %v6594 = vstv %s6593
    %v6595 = vmul.f32 %v681, %v6594
    %v6596 = vmul.f32 %v682, %v6594
    %v6597 = vmul.f32 %v683, %v6594
    %v6598 = vmul.f32 %v684, %v6594
    %v6599 = vmul.f32 %v685, %v6594
    %v6600 = vmul.f32 %v686, %v6594
    %v6601 = vmul.f32 %v687, %v6594
    %v6602 = vmul.f32 %v688, %v6594
    %v6603 = vmul.f32 %v689, %v6594
    %v6604 = vmul.f32 %v690, %v6594
    %v6605 = vmul.f32 %v691, %v6594
    %v6606 = vmul.f32 %v692, %v6594
    %v6607 = vmul.f32 %v693, %v6594
    %v6608 = vmul.f32 %v694, %v6594
    %v6609 = vmul.f32 %v695, %v6594
    %v6610 = vmul.f32 %v696, %v6594
    %v6611 = vmul.f32 %v697, %v6594
    %v6612 = vmul.f32 %v698, %v6594
    %v6613 = vmul.f32 %v699, %v6594
    %v6614 = vmul.f32 %v700, %v6594
    %v6615 = vmul.f32 %v701, %v6594
    %v6616 = vmul.f32 %v702, %v6594
    %v6617 = vmul.f32 %v703, %v6594
    %v6618 = vmul.f32 %v704, %v6594
    %v6619 = vmul.f32 %v705, %v6594
    %v6620 = vmul.f32 %v706, %v6594
    %v6621 = vmul.f32 %v707, %v6594
    %v6622 = vmul.f32 %v708, %v6594
    %v6623 = vmul.f32 %v709, %v6594
    %v6624 = vmul.f32 %v710, %v6594
    %v6625 = vmul.f32 %v711, %v6594
    %v6626 = vmul.f32 %v712, %v6594
    %v6627 = vmul.f32 %v713, %v6594
    %v6628 = vmul.f32 %v714, %v6594
    %v6629 = vmul.f32 %v715, %v6594
    %v6630 = vmul.f32 %v716, %v6594
    %v6631 = vadd.f32 %v6557, %v6595
    %v6632 = vadd.f32 %v6558, %v6596
    %v6633 = vadd.f32 %v6559, %v6597
    %v6634 = vadd.f32 %v6560, %v6598
    %v6635 = vadd.f32 %v6561, %v6599
    %v6636 = vadd.f32 %v6562, %v6600
    %v6637 = vadd.f32 %v6563, %v6601
    %v6638 = vadd.f32 %v6564, %v6602
    %v6639 = vadd.f32 %v6565, %v6603
    %v6640 = vadd.f32 %v6566, %v6604
    %v6641 = vadd.f32 %v6567, %v6605
    %v6642 = vadd.f32 %v6568, %v6606
    %v6643 = vadd.f32 %v6569, %v6607
    %v6644 = vadd.f32 %v6570, %v6608
    %v6645 = vadd.f32 %v6571, %v6609
    %v6646 = vadd.f32 %v6572, %v6610
    %v6647 = vadd.f32 %v6573, %v6611
    %v6648 = vadd.f32 %v6574, %v6612
    %v6649 = vadd.f32 %v6575, %v6613
    %v6650 = vadd.f32 %v6576, %v6614
    %v6651 = vadd.f32 %v6577, %v6615
    %v6652 = vadd.f32 %v6578, %v6616
    %v6653 = vadd.f32 %v6579, %v6617
    %v6654 = vadd.f32 %v6580, %v6618
    %v6655 = vadd.f32 %v6581, %v6619
    %v6656 = vadd.f32 %v6582, %v6620
    %v6657 = vadd.f32 %v6583, %v6621
    %v6658 = vadd.f32 %v6584, %v6622
    %v6659 = vadd.f32 %v6585, %v6623
    %v6660 = vadd.f32 %v6586, %v6624
    %v6661 = vadd.f32 %v6587, %v6625
    %v6662 = vadd.f32 %v6588, %v6626
    %v6663 = vadd.f32 %v6589, %v6627
    %v6664 = vadd.f32 %v6590, %v6628
    %v6665 = vadd.f32 %v6591, %v6629
    %v6666 = vadd.f32 %v6592, %v6630
    %s6667 = sld [smem:[#allocation3 + $0x47]]
    %v6668 = vstv %s6667
    %v6669 = vmul.f32 %v717, %v6668
    %v6670 = vmul.f32 %v718, %v6668
    %v6671 = vmul.f32 %v719, %v6668
    %v6672 = vmul.f32 %v720, %v6668
    %v6673 = vmul.f32 %v721, %v6668
    %v6674 = vmul.f32 %v722, %v6668
    %v6675 = vmul.f32 %v723, %v6668
    %v6676 = vmul.f32 %v724, %v6668
    %v6677 = vmul.f32 %v725, %v6668
    %v6678 = vmul.f32 %v726, %v6668
    %v6679 = vmul.f32 %v727, %v6668
    %v6680 = vmul.f32 %v728, %v6668
    %v6681 = vmul.f32 %v729, %v6668
    %v6682 = vmul.f32 %v730, %v6668
    %v6683 = vmul.f32 %v731, %v6668
    %v6684 = vmul.f32 %v732, %v6668
    %v6685 = vmul.f32 %v733, %v6668
    %v6686 = vmul.f32 %v734, %v6668
    %v6687 = vmul.f32 %v735, %v6668
    %v6688 = vmul.f32 %v736, %v6668
    %v6689 = vmul.f32 %v737, %v6668
    %v6690 = vmul.f32 %v738, %v6668
    %v6691 = vmul.f32 %v739, %v6668
    %v6692 = vmul.f32 %v740, %v6668
    %v6693 = vmul.f32 %v741, %v6668
    %v6694 = vmul.f32 %v742, %v6668
    %v6695 = vmul.f32 %v743, %v6668
    %v6696 = vmul.f32 %v744, %v6668
    %v6697 = vmul.f32 %v745, %v6668
    %v6698 = vmul.f32 %v746, %v6668
    %v6699 = vmul.f32 %v747, %v6668
    %v6700 = vmul.f32 %v748, %v6668
    %v6701 = vmul.f32 %v749, %v6668
    %v6702 = vmul.f32 %v750, %v6668
    %v6703 = vmul.f32 %v751, %v6668
    %v6704 = vmul.f32 %v752, %v6668
    %v6705 = vadd.f32 %v6631, %v6669
    %v6706 = vadd.f32 %v6632, %v6670
    %v6707 = vadd.f32 %v6633, %v6671
    %v6708 = vadd.f32 %v6634, %v6672
    %v6709 = vadd.f32 %v6635, %v6673
    %v6710 = vadd.f32 %v6636, %v6674
    %v6711 = vadd.f32 %v6637, %v6675
    %v6712 = vadd.f32 %v6638, %v6676
    %v6713 = vadd.f32 %v6639, %v6677
    %v6714 = vadd.f32 %v6640, %v6678
    %v6715 = vadd.f32 %v6641, %v6679
    %v6716 = vadd.f32 %v6642, %v6680
    %v6717 = vadd.f32 %v6643, %v6681
    %v6718 = vadd.f32 %v6644, %v6682
    %v6719 = vadd.f32 %v6645, %v6683
    %v6720 = vadd.f32 %v6646, %v6684
    %v6721 = vadd.f32 %v6647, %v6685
    %v6722 = vadd.f32 %v6648, %v6686
    %v6723 = vadd.f32 %v6649, %v6687
    %v6724 = vadd.f32 %v6650, %v6688
    %v6725 = vadd.f32 %v6651, %v6689
    %v6726 = vadd.f32 %v6652, %v6690
    %v6727 = vadd.f32 %v6653, %v6691
    %v6728 = vadd.f32 %v6654, %v6692
    %v6729 = vadd.f32 %v6655, %v6693
    %v6730 = vadd.f32 %v6656, %v6694
    %v6731 = vadd.f32 %v6657, %v6695
    %v6732 = vadd.f32 %v6658, %v6696
    %v6733 = vadd.f32 %v6659, %v6697
    %v6734 = vadd.f32 %v6660, %v6698
    %v6735 = vadd.f32 %v6661, %v6699
    %v6736 = vadd.f32 %v6662, %v6700
    %v6737 = vadd.f32 %v6663, %v6701
    %v6738 = vadd.f32 %v6664, %v6702
    %v6739 = vadd.f32 %v6665, %v6703
    %v6740 = vadd.f32 %v6666, %v6704
    %s6741 = sld [smem:[#allocation5 + $0x7]]
    %v6742 = vstv %s6741
    %v6743 = vadd.f32 %v6705, %v6742
    %v6744 = vadd.f32 %v6706, %v6742
    %v6745 = vadd.f32 %v6707, %v6742
    %v6746 = vadd.f32 %v6708, %v6742
    %v6747 = vadd.f32 %v6709, %v6742
    %v6748 = vadd.f32 %v6710, %v6742
    %v6749 = vadd.f32 %v6711, %v6742
    %v6750 = vadd.f32 %v6712, %v6742
    %v6751 = vadd.f32 %v6713, %v6742
    %v6752 = vadd.f32 %v6714, %v6742
    %v6753 = vadd.f32 %v6715, %v6742
    %v6754 = vadd.f32 %v6716, %v6742
    %v6755 = vadd.f32 %v6717, %v6742
    %v6756 = vadd.f32 %v6718, %v6742
    %v6757 = vadd.f32 %v6719, %v6742
    %v6758 = vadd.f32 %v6720, %v6742
    %v6759 = vadd.f32 %v6721, %v6742
    %v6760 = vadd.f32 %v6722, %v6742
    %v6761 = vadd.f32 %v6723, %v6742
    %v6762 = vadd.f32 %v6724, %v6742
    %v6763 = vadd.f32 %v6725, %v6742
    %v6764 = vadd.f32 %v6726, %v6742
    %v6765 = vadd.f32 %v6727, %v6742
    %v6766 = vadd.f32 %v6728, %v6742
    %v6767 = vadd.f32 %v6729, %v6742
    %v6768 = vadd.f32 %v6730, %v6742
    %v6769 = vadd.f32 %v6731, %v6742
    %v6770 = vadd.f32 %v6732, %v6742
    %v6771 = vadd.f32 %v6733, %v6742
    %v6772 = vadd.f32 %v6734, %v6742
    %v6773 = vadd.f32 %v6735, %v6742
    %v6774 = vadd.f32 %v6736, %v6742
    %v6775 = vadd.f32 %v6737, %v6742
    %v6776 = vadd.f32 %v6738, %v6742
    %v6777 = vadd.f32 %v6739, %v6742
    %v6778 = vadd.f32 %v6740, %v6742
    %v6779 = vmax.f32 %v6743, 0.0
    %v6780 = vmax.f32 %v6744, 0.0
    %v6781 = vmax.f32 %v6745, 0.0
    %v6782 = vmax.f32 %v6746, 0.0
    %v6783 = vmax.f32 %v6747, 0.0
    %v6784 = vmax.f32 %v6748, 0.0
    %v6785 = vmax.f32 %v6749, 0.0
    %v6786 = vmax.f32 %v6750, 0.0
    %v6787 = vmax.f32 %v6751, 0.0
    %v6788 = vmax.f32 %v6752, 0.0
    %v6789 = vmax.f32 %v6753, 0.0
    %v6790 = vmax.f32 %v6754, 0.0
    %v6791 = vmax.f32 %v6755, 0.0
    %v6792 = vmax.f32 %v6756, 0.0
    %v6793 = vmax.f32 %v6757, 0.0
    %v6794 = vmax.f32 %v6758, 0.0
    %v6795 = vmax.f32 %v6759, 0.0
    %v6796 = vmax.f32 %v6760, 0.0
    %v6797 = vmax.f32 %v6761, 0.0
    %v6798 = vmax.f32 %v6762, 0.0
    %v6799 = vmax.f32 %v6763, 0.0
    %v6800 = vmax.f32 %v6764, 0.0
    %v6801 = vmax.f32 %v6765, 0.0
    %v6802 = vmax.f32 %v6766, 0.0
    %v6803 = vmax.f32 %v6767, 0.0
    %v6804 = vmax.f32 %v6768, 0.0
    %v6805 = vmax.f32 %v6769, 0.0
    %v6806 = vmax.f32 %v6770, 0.0
    %v6807 = vmax.f32 %v6771, 0.0
    %v6808 = vmax.f32 %v6772, 0.0
    %v6809 = vmax.f32 %v6773, 0.0
    %v6810 = vmax.f32 %v6774, 0.0
    %v6811 = vmax.f32 %v6775, 0.0
    %v6812 = vmax.f32 %v6776, 0.0
    %v6813 = vmax.f32 %v6777, 0.0
    %v6814 = vmax.f32 %v6778, 0.0
    %6815 = vmatpush.msra.mxu0 %v6794
    %6816 = vmatpush.msra.mxu0 %v6793
    %6817 = vmatpush.msra.mxu0 %v6792
    %6818 = vmatpush.msra.mxu0 %v6791
    %6819 = vmatpush.msra.mxu0 %v6790
    %6820 = vmatpush.msra.mxu0 %v6789
    %6821 = vmatpush.msra.mxu0 %v6788
    %6822 = vmatpush.msra.mxu0 %v6787
    %6823 = vmatpush.msra.mxu0 %v6786
    %6824 = vmatpush.msra.mxu0 %v6785
    %6825 = vmatpush.msra.mxu0 %v6784
    %6826 = vmatpush.msra.mxu0 %v6783
    %6827 = vmatpush.msra.mxu0 %v6782
    %6828 = vmatpush.msra.mxu0 %v6781
    %6829 = vmatpush.msra.mxu0 %v6780
    %6830 = vmatpush.msra.mxu0 %v6779
    %6831 = vmatmul.f32.gmra.mxu0 %v1459
    %v6832 = vpop.f32.mrf.mxu0
    %v6833 = vadd.f32 0.0, %v6832
    %6834 = vdwg.mxu0
    %6835 = vmatpush.msra.mxu0 %v6810
    %6836 = vmatpush.msra.mxu0 %v6809
    %6837 = vmatpush.msra.mxu0 %v6808
    %6838 = vmatpush.msra.mxu0 %v6807
    %6839 = vmatpush.msra.mxu0 %v6806
    %6840 = vmatpush.msra.mxu0 %v6805
    %6841 = vmatpush.msra.mxu0 %v6804
    %6842 = vmatpush.msra.mxu0 %v6803
    %6843 = vmatpush.msra.mxu0 %v6802
    %6844 = vmatpush.msra.mxu0 %v6801
    %6845 = vmatpush.msra.mxu0 %v6800
    %6846 = vmatpush.msra.mxu0 %v6799
    %6847 = vmatpush.msra.mxu0 %v6798
    %6848 = vmatpush.msra.mxu0 %v6797
    %6849 = vmatpush.msra.mxu0 %v6796
    %6850 = vmatpush.msra.mxu0 %v6795
    %6851 = vmatmul.f32.gmra.mxu0 %v1460
    %v6852 = vpop.f32.mrf.mxu0
    %v6853 = vadd.f32 %v6833, %v6852
    %6854 = vdwg.mxu0
    %6855 = vmatpush.msra.mxu0 0.0
    %6856 = vmatpush.msra.mxu0 0.0
    %6857 = vmatpush.msra.mxu0 0.0
    %6858 = vmatpush.msra.mxu0 0.0
    %6859 = vmatpush.msra.mxu0 0.0
    %6860 = vmatpush.msra.mxu0 0.0
    %6861 = vmatpush.msra.mxu0 0.0
    %6862 = vmatpush.msra.mxu0 0.0
    %6863 = vmatpush.msra.mxu0 0.0
    %6864 = vmatpush.msra.mxu0 0.0
    %6865 = vmatpush.msra.mxu0 0.0
    %6866 = vmatpush.msra.mxu0 0.0
    %6867 = vmatpush.msra.mxu0 %v6814
    %6868 = vmatpush.msra.mxu0 %v6813
    %6869 = vmatpush.msra.mxu0 %v6812
    %6870 = vmatpush.msra.mxu0 %v6811
    %6871 = vmatmul.f32.gmra.mxu0 %v1465
    %v6872 = vpop.f32.mrf.mxu0
    %v6873 = vadd.f32 %v6853, %v6872
    %6874 = vdwg.mxu0
    %vm6875 = vcmask 57344
    %6876 = vst.msk [vmem:[#allocation2] sm:$0x1] %vm6875, %v1525
    %6877 = vst.msk [vmem:[#allocation2 + $0x1] sm:$0x1] %vm6875, %v2289
    %6878 = vst.msk [vmem:[#allocation2 + $0x2] sm:$0x1] %vm6875, %v3053
    %6879 = vst.msk [vmem:[#allocation2 + $0x3] sm:$0x1] %vm6875, %v3817
    %6880 = vst.msk [vmem:[#allocation2 + $0x4] sm:$0x1] %vm6875, %v4581
    %6881 = vst.msk [vmem:[#allocation2 + $0x5] sm:$0x1] %vm6875, %v5345
    %6882 = vst.msk [vmem:[#allocation2 + $0x6] sm:$0x1] %vm6875, %v6109
    %6883 = vst.msk [vmem:[#allocation2 + $0x7] sm:$0x1] %vm6875, %v6873
    %v6884 = vld [vmem:[#allocation2] sm:$0xff]
    %v6885 = vld [vmem:[%s5 + $0x70] sm:$0xf]
    %v6886 = vld [vmem:[%s5 + $0x74] sm:$0xf]
    %v6887 = vld [vmem:[%s5 + $0x78] sm:$0xf]
    %v6888 = vld [vmem:[%s5 + $0x7c] sm:$0xf]
    %v6889 = vld [vmem:[%s5 + $0x80] sm:$0xf]
    %v6890 = vld [vmem:[%s5 + $0x84] sm:$0xf]
    %v6891 = vld [vmem:[%s5 + $0x88] sm:$0xf]
    %v6892 = vld [vmem:[%s5 + $0x8c] sm:$0xf]
    %v6893 = vld [vmem:[%s6 + $0x180] sm:$0xff]
    %v6894 = vld [vmem:[%s6 + $0x188] sm:$0xff]
    %v6895 = vld [vmem:[%s6 + $0x190] sm:$0xff]
    %v6896 = vld [vmem:[%s6 + $0x198] sm:$0xff]
    %v6897 = vld [vmem:[%s6 + $0x1a0] sm:$0xff]
    %v6898 = vld [vmem:[%s6 + $0x1a8] sm:$0xff]
    %v6899 = vld [vmem:[%s6 + $0x1b0] sm:$0xff]
    %v6900 = vld [vmem:[%s6 + $0x1b8] sm:$0xff]
    %v6901 = vpack.c.bf16 %v6884, %v6884
    %6903 = vset.pattern.permute.xlu0 0
    %6904 = vperm.xlu0 %6903, %v6893
    %v6905 = vpop.permute.xlu0 %6904
    %6908 = vset.pattern.permute.xlu0 0
    %6909 = vperm.xlu0 %6908, %v6894
    %v6910 = vpop.permute.xlu0 %6909
    %6913 = vset.pattern.permute.xlu0 0
    %6914 = vperm.xlu0 %6913, %v6895
    %v6915 = vpop.permute.xlu0 %6914
    %6918 = vset.pattern.permute.xlu0 0
    %6919 = vperm.xlu0 %6918, %v6896
    %v6920 = vpop.permute.xlu0 %6919
    %6923 = vset.pattern.permute.xlu0 0
    %6924 = vperm.xlu0 %6923, %v6897
    %v6925 = vpop.permute.xlu0 %6924
    %6928 = vset.pattern.permute.xlu0 0
    %6929 = vperm.xlu0 %6928, %v6898
    %v6930 = vpop.permute.xlu0 %6929
    %6933 = vset.pattern.permute.xlu0 0
    %6934 = vperm.xlu0 %6933, %v6899
    %v6935 = vpop.permute.xlu0 %6934
    %6938 = vset.pattern.permute.xlu0 0
    %6939 = vperm.xlu0 %6938, %v6900
    %v6940 = vpop.permute.xlu0 %6939
    %v6950 = vunpack.c.l.b16 %v6885
    %v6951 = vunpack.c.l.b16 %v6886
    %v6952 = vunpack.c.l.b16 %v6887
    %v6953 = vunpack.c.l.b16 %v6888
    %v6954 = vunpack.c.l.b16 %v6889
    %v6955 = vunpack.c.l.b16 %v6890
    %v6956 = vunpack.c.l.b16 %v6891
    %v6957 = vunpack.c.l.b16 %v6892
    %v6958 = vpack.c.b16 %v6951, %v6950
    %v6959 = vpack.c.b16 %v6953, %v6952
    %v6960 = vpack.c.b16 %v6955, %v6954
    %v6961 = vpack.c.b16 %v6957, %v6956
    %v6963 = vsel %vm206, %v6958, 0
    %v6966 = vsel %vm206, %v6959, 0
    %v6969 = vsel %vm206, %v6960, 0
    %v6972 = vsel %vm206, %v6961, 0
    %v6975 = vsel %vm231, %v6901, 0
    %6977 = vmatpush.bf16.msra.mxu0 0
    %6978 = vmatpush.bf16.msra.mxu0 0
    %6979 = vmatpush.bf16.msra.mxu0 0
    %6980 = vmatpush.bf16.msra.mxu0 0
    %6981 = vmatpush.bf16.msra.mxu0 0
    %6982 = vmatpush.bf16.msra.mxu0 0
    %6983 = vmatpush.bf16.msra.mxu0 0
    %6984 = vmatpush.bf16.msra.mxu0 %v6975
    %6985 = vmatmul.bf16.gmra.mxu0 %v6963
    %v6986 = vpop.f32.mrf.mxu0
    %v6987 = vadd.f32 %v6905, %v6986
    %v6988 = vpop.f32.mrf.mxu0
    %v6989 = vadd.f32 %v6910, %v6988
    %6990 = vmatmul.bf16.gmra.mxu0 %v6966
    %v6991 = vpop.f32.mrf.mxu0
    %v6992 = vadd.f32 %v6915, %v6991
    %v6993 = vpop.f32.mrf.mxu0
    %v6994 = vadd.f32 %v6920, %v6993
    %6995 = vmatmul.bf16.gmra.mxu0 %v6969
    %v6996 = vpop.f32.mrf.mxu0
    %v6997 = vadd.f32 %v6925, %v6996
    %v6998 = vpop.f32.mrf.mxu0
    %v6999 = vadd.f32 %v6930, %v6998
    %7000 = vmatmul.bf16.gmra.mxu0 %v6972
    %v7001 = vpop.f32.mrf.mxu0
    %v7002 = vadd.f32 %v6935, %v7001
    %v7003 = vpop.f32.mrf.mxu0
    %v7004 = vadd.f32 %v6940, %v7003
    %7005 = vdwg.mxu0
    %v7006 = vld [vmem:[%s5 + $0x90] sm:$0xf]
    %v7007 = vld [vmem:[%s5 + $0x94] sm:$0xf]
    %v7008 = vld [vmem:[%s5 + $0x98] sm:$0xf]
    %v7009 = vld [vmem:[%s5 + $0x9c] sm:$0xf]
    %v7010 = vld [vmem:[%s5 + $0xa0] sm:$0xf]
    %v7011 = vld [vmem:[%s5 + $0xa4] sm:$0xf]
    %v7012 = vld [vmem:[%s5 + $0xa8] sm:$0xf]
    %v7013 = vld [vmem:[%s5 + $0xac] sm:$0xf]
    %v7014 = vpack.c.bf16 %v494, %v493
    %v7015 = vpack.c.bf16 %v496, %v495
    %v7016 = vld [vmem:[%s5 + $0xb0] sm:$0xf]
    %v7017 = vld [vmem:[%s5 + $0xb4] sm:$0xf]
    %v7018 = vld [vmem:[%s5 + $0xb8] sm:$0xf]
    %v7019 = vld [vmem:[%s5 + $0xbc] sm:$0xf]
    %v7020 = vld [vmem:[%s5 + $0xc0] sm:$0xf]
    %v7021 = vld [vmem:[%s5 + $0xc4] sm:$0xf]
    %v7022 = vld [vmem:[%s5 + $0xc8] sm:$0xf]
    %v7023 = vld [vmem:[%s5 + $0xcc] sm:$0xf]
    %v7024 = vpack.c.bf16 %v6989, %v6987
    %v7025 = vpack.c.bf16 %v6994, %v6992
    %v7026 = vpack.c.bf16 %v6999, %v6997
    %v7027 = vpack.c.bf16 %v7004, %v7002
    %v7036 = vunpack.c.l.b16 %v7016
    %v7037 = vunpack.c.l.b16 %v7017
    %v7038 = vunpack.c.l.b16 %v7018
    %v7039 = vunpack.c.l.b16 %v7019
    %v7040 = vunpack.c.l.b16 %v7020
    %v7041 = vunpack.c.l.b16 %v7021
    %v7042 = vunpack.c.l.b16 %v7022
    %v7043 = vunpack.c.l.b16 %v7023
    %v7044 = vpack.c.b16 %v7037, %v7036
    %v7045 = vpack.c.b16 %v7039, %v7038
    %v7046 = vpack.c.b16 %v7041, %v7040
    %v7047 = vpack.c.b16 %v7043, %v7042
    %v7049 = vsel %vm467, %v7044, 0
    %v7052 = vsel %vm467, %v7045, 0
    %v7055 = vsel %vm467, %v7046, 0
    %v7058 = vsel %vm467, %v7047, 0
    %7060 = vmatpush.bf16.msra.mxu0 0
    %7061 = vmatpush.bf16.msra.mxu0 0
    %7062 = vmatpush.bf16.msra.mxu0 0
    %7063 = vmatpush.bf16.msra.mxu0 0
    %7064 = vmatpush.bf16.msra.mxu0 %v7027
    %7065 = vmatpush.bf16.msra.mxu0 %v7026
    %7066 = vmatpush.bf16.msra.mxu0 %v7025
    %7067 = vmatpush.bf16.msra.mxu0 %v7024
    %7068 = vmatmul.bf16.gmra.mxu0 %v7049
    %v7069 = vpop.f32.mrf.mxu0
    %v7070 = vadd.f32 0.0, %v7069
    %v7071 = vpop.f32.mrf.mxu0
    %v7072 = vadd.f32 0.0, %v7071
    %7073 = vmatmul.bf16.gmra.mxu0 %v7052
    %v7074 = vpop.f32.mrf.mxu0
    %v7075 = vadd.f32 0.0, %v7074
    %v7076 = vpop.f32.mrf.mxu0
    %v7077 = vadd.f32 0.0, %v7076
    %7078 = vmatmul.bf16.gmra.mxu0 %v7055
    %v7079 = vpop.f32.mrf.mxu0
    %v7080 = vadd.f32 0.0, %v7079
    %v7081 = vpop.f32.mrf.mxu0
    %v7082 = vadd.f32 0.0, %v7081
    %7083 = vmatmul.bf16.gmra.mxu0 %v7058
    %v7084 = vpop.f32.mrf.mxu0
    %v7085 = vadd.f32 0.0, %v7084
    %v7086 = vpop.f32.mrf.mxu0
    %v7087 = vadd.f32 0.0, %v7086
    %7088 = vdwg.mxu0
    %v7097 = vunpack.c.l.b16 %v7006
    %v7098 = vunpack.c.l.b16 %v7007
    %v7099 = vunpack.c.l.b16 %v7008
    %v7100 = vunpack.c.l.b16 %v7009
    %v7101 = vunpack.c.l.b16 %v7010
    %v7102 = vunpack.c.l.b16 %v7011
    %v7103 = vunpack.c.l.b16 %v7012
    %v7104 = vunpack.c.l.b16 %v7013
    %v7105 = vpack.c.b16 %v7098, %v7097
    %v7106 = vpack.c.b16 %v7100, %v7099
    %v7107 = vpack.c.b16 %v7102, %v7101
    %v7108 = vpack.c.b16 %v7104, %v7103
    %v7110 = vsel %vm1464, %v7105, 0
    %v7113 = vsel %vm1464, %v7106, 0
    %v7116 = vsel %vm1464, %v7107, 0
    %v7119 = vsel %vm1464, %v7108, 0
    %7121 = vmatpush.bf16.msra.mxu0 0
    %7122 = vmatpush.bf16.msra.mxu0 0
    %7123 = vmatpush.bf16.msra.mxu0 0
    %7124 = vmatpush.bf16.msra.mxu0 0
    %7125 = vmatpush.bf16.msra.mxu0 0
    %7126 = vmatpush.bf16.msra.mxu0 0
    %7127 = vmatpush.bf16.msra.mxu0 %v7015
    %7128 = vmatpush.bf16.msra.mxu0 %v7014
    %7129 = vmatmul.bf16.gmra.mxu0 %v7110
    %v7130 = vpop.f32.mrf.mxu0
    %v7131 = vadd.f32 %v7070, %v7130
    %v7132 = vpop.f32.mrf.mxu0
    %v7133 = vadd.f32 %v7072, %v7132
    %7134 = vmatmul.bf16.gmra.mxu0 %v7113
    %v7135 = vpop.f32.mrf.mxu0
    %v7136 = vadd.f32 %v7075, %v7135
    %v7137 = vpop.f32.mrf.mxu0
    %v7138 = vadd.f32 %v7077, %v7137
    %7139 = vmatmul.bf16.gmra.mxu0 %v7116
    %v7140 = vpop.f32.mrf.mxu0
    %v7141 = vadd.f32 %v7080, %v7140
    %v7142 = vpop.f32.mrf.mxu0
    %v7143 = vadd.f32 %v7082, %v7142
    %7144 = vmatmul.bf16.gmra.mxu0 %v7119
    %v7145 = vpop.f32.mrf.mxu0
    %v7146 = vadd.f32 %v7085, %v7145
    %v7147 = vpop.f32.mrf.mxu0
    %v7148 = vadd.f32 %v7087, %v7147
    %7149 = vdwg.mxu0
    %v7150 = vld [vmem:[%s6 + $0x200] sm:$0xff]
    %v7151 = vld [vmem:[%s6 + $0x208] sm:$0xff]
    %v7152 = vld [vmem:[%s6 + $0x210] sm:$0xff]
    %v7153 = vld [vmem:[%s6 + $0x218] sm:$0xff]
    %v7154 = vld [vmem:[%s6 + $0x220] sm:$0xff]
    %v7155 = vld [vmem:[%s6 + $0x228] sm:$0xff]
    %v7156 = vld [vmem:[%s6 + $0x230] sm:$0xff]
    %v7157 = vld [vmem:[%s6 + $0x238] sm:$0xff]
    %7159 = vset.pattern.permute.xlu0 0
    %7160 = vperm.xlu0 %7159, %v7150
    %v7161 = vpop.permute.xlu0 %7160
    %7164 = vset.pattern.permute.xlu0 0
    %7165 = vperm.xlu0 %7164, %v7151
    %v7166 = vpop.permute.xlu0 %7165
    %7169 = vset.pattern.permute.xlu0 0
    %7170 = vperm.xlu0 %7169, %v7152
    %v7171 = vpop.permute.xlu0 %7170
    %7174 = vset.pattern.permute.xlu0 0
    %7175 = vperm.xlu0 %7174, %v7153
    %v7176 = vpop.permute.xlu0 %7175
    %7179 = vset.pattern.permute.xlu0 0
    %7180 = vperm.xlu0 %7179, %v7154
    %v7181 = vpop.permute.xlu0 %7180
    %7184 = vset.pattern.permute.xlu0 0
    %7185 = vperm.xlu0 %7184, %v7155
    %v7186 = vpop.permute.xlu0 %7185
    %7189 = vset.pattern.permute.xlu0 0
    %7190 = vperm.xlu0 %7189, %v7156
    %v7191 = vpop.permute.xlu0 %7190
    %7194 = vset.pattern.permute.xlu0 0
    %7195 = vperm.xlu0 %7194, %v7157
    %v7196 = vpop.permute.xlu0 %7195
    %v7198 = vadd.f32 %v7131, %v7161
    %v7199 = vadd.f32 %v7133, %v7166
    %v7200 = vadd.f32 %v7136, %v7171
    %v7201 = vadd.f32 %v7138, %v7176
    %v7202 = vadd.f32 %v7141, %v7181
    %v7203 = vadd.f32 %v7143, %v7186
    %v7204 = vadd.f32 %v7146, %v7191
    %v7205 = vadd.f32 %v7148, %v7196
    %v7206 = vmax.f32 %v7198, 0.0
    %v7207 = vmax.f32 %v7199, 0.0
    %v7208 = vmax.f32 %v7200, 0.0
    %v7209 = vmax.f32 %v7201, 0.0
    %v7210 = vmax.f32 %v7202, 0.0
    %v7211 = vmax.f32 %v7203, 0.0
    %v7212 = vmax.f32 %v7204, 0.0
    %v7213 = vmax.f32 %v7205, 0.0
    %v7214 = vld [vmem:[%s5 + $0xd0] sm:$0xf]
    %v7215 = vld [vmem:[%s5 + $0xd4] sm:$0xf]
    %v7216 = vld [vmem:[%s5 + $0xd8] sm:$0xf]
    %v7217 = vld [vmem:[%s5 + $0xdc] sm:$0xf]
    %v7218 = vld [vmem:[%s6 + $0x280] sm:$0xff]
    %v7219 = vld [vmem:[%s6 + $0x288] sm:$0xff]
    %v7220 = vld [vmem:[%s6 + $0x290] sm:$0xff]
    %v7221 = vld [vmem:[%s6 + $0x298] sm:$0xff]
    %v7222 = vpack.c.bf16 %v7207, %v7206
    %v7223 = vpack.c.bf16 %v7209, %v7208
    %v7224 = vpack.c.bf16 %v7211, %v7210
    %v7225 = vpack.c.bf16 %v7213, %v7212
    %7227 = vset.pattern.permute.xlu0 0
    %7228 = vperm.xlu0 %7227, %v7218
    %v7229 = vpop.permute.xlu0 %7228
    %7232 = vset.pattern.permute.xlu0 0
    %7233 = vperm.xlu0 %7232, %v7219
    %v7234 = vpop.permute.xlu0 %7233
    %7237 = vset.pattern.permute.xlu0 0
    %7238 = vperm.xlu0 %7237, %v7220
    %v7239 = vpop.permute.xlu0 %7238
    %7242 = vset.pattern.permute.xlu0 0
    %7243 = vperm.xlu0 %7242, %v7221
    %v7244 = vpop.permute.xlu0 %7243
    %v7250 = vunpack.c.l.b16 %v7214
    %v7251 = vunpack.c.l.b16 %v7215
    %v7252 = vunpack.c.l.b16 %v7216
    %v7253 = vunpack.c.l.b16 %v7217
    %v7254 = vpack.c.b16 %v7251, %v7250
    %v7255 = vpack.c.b16 %v7253, %v7252
    %v7257 = vsel %vm467, %v7254, 0
    %v7260 = vsel %vm467, %v7255, 0
    %7262 = vmatpush.bf16.msra.mxu0 0
    %7263 = vmatpush.bf16.msra.mxu0 0
    %7264 = vmatpush.bf16.msra.mxu0 0
    %7265 = vmatpush.bf16.msra.mxu0 0
    %7266 = vmatpush.bf16.msra.mxu0 %v7225
    %7267 = vmatpush.bf16.msra.mxu0 %v7224
    %7268 = vmatpush.bf16.msra.mxu0 %v7223
    %7269 = vmatpush.bf16.msra.mxu0 %v7222
    %7270 = vmatmul.bf16.gmra.mxu0 %v7257
    %v7271 = vpop.f32.mrf.mxu0
    %v7272 = vadd.f32 %v7229, %v7271
    %v7273 = vpop.f32.mrf.mxu0
    %v7274 = vadd.f32 %v7234, %v7273
    %7275 = vmatmul.bf16.gmra.mxu0 %v7260
    %v7276 = vpop.f32.mrf.mxu0
    %v7277 = vadd.f32 %v7239, %v7276
    %v7278 = vpop.f32.mrf.mxu0
    %v7279 = vadd.f32 %v7244, %v7278
    %7280 = vdwg.mxu0
    %v7281 = vmax.f32 %v7272, 0.0
    %v7282 = vmax.f32 %v7274, 0.0
    %v7283 = vmax.f32 %v7277, 0.0
    %v7284 = vmax.f32 %v7279, 0.0
    %v7285 = vld [vmem:[%s5 + $0xe0] sm:$0xf]
    %v7286 = vld [vmem:[%s5 + $0xe4] sm:$0xf]
    %v7287 = vld [vmem:[%s6 + $0x300] sm:$0xff]
    %v7288 = vld [vmem:[%s6 + $0x308] sm:$0xff]
    %v7289 = vpack.c.bf16 %v7282, %v7281
    %v7290 = vpack.c.bf16 %v7284, %v7283
    %7292 = vset.pattern.permute.xlu0 0
    %7293 = vperm.xlu0 %7292, %v7287
    %v7294 = vpop.permute.xlu0 %7293
    %7297 = vset.pattern.permute.xlu0 0
    %7298 = vperm.xlu0 %7297, %v7288
    %v7299 = vpop.permute.xlu0 %7298
    %v7303 = vunpack.c.l.b16 %v7285
    %v7304 = vunpack.c.l.b16 %v7286
    %v7305 = vpack.c.b16 %v7304, %v7303
    %v7307 = vsel %vm1464, %v7305, 0
    %7309 = vmatpush.bf16.msra.mxu0 0
    %7310 = vmatpush.bf16.msra.mxu0 0
    %7311 = vmatpush.bf16.msra.mxu0 0
    %7312 = vmatpush.bf16.msra.mxu0 0
    %7313 = vmatpush.bf16.msra.mxu0 0
    %7314 = vmatpush.bf16.msra.mxu0 0
    %7315 = vmatpush.bf16.msra.mxu0 %v7290
    %7316 = vmatpush.bf16.msra.mxu0 %v7289
    %7317 = vmatmul.bf16.gmra.mxu0 %v7307
    %v7318 = vpop.f32.mrf.mxu0
    %v7319 = vadd.f32 %v7294, %v7318
    %v7320 = vpop.f32.mrf.mxu0
    %v7321 = vadd.f32 %v7299, %v7320
    %7322 = vdwg.mxu0
    %v7323 = vmax.f32 %v7319, 0.0
    %v7324 = vmax.f32 %v7321, 0.0
    %v7325 = vld [vmem:[%s5 + $0xe8] sm:$0xf]
    %v7326 = vld [vmem:[%s6 + $0x380] sm:$0xff]
    %v7327 = vpack.c.bf16 %v7324, %v7323
    %7329 = vset.pattern.permute.xlu0 0
    %7330 = vperm.xlu0 %7329, %v7326
    %v7331 = vpop.permute.xlu0 %7330
    %vm7333 = vcmask 130048
    %v7335 = vsel %vm7333, %v7325, 0
    %7337 = vmatpush.bf16.msra.mxu0 0
    %7338 = vmatpush.bf16.msra.mxu0 0
    %7339 = vmatpush.bf16.msra.mxu0 0
    %7340 = vmatpush.bf16.msra.mxu0 0
    %7341 = vmatpush.bf16.msra.mxu0 0
    %7342 = vmatpush.bf16.msra.mxu0 0
    %7343 = vmatpush.bf16.msra.mxu0 0
    %7344 = vmatpush.bf16.msra.mxu0 %v7327
    %7345 = vmatmul.bf16.gmra.mxu0 %v7335
    %v7346 = vpop.f32.mrf.mxu0
    %v7347 = vadd.f32 %v7331, %v7346
    %v7348 = vpop.f32.mrf.mxu0
    %7349 = vdwg.mxu0
    %7350 = vst.msk [vmem:[%s7] sm:$0xff] %vm206, %v7347
    // Predicated region
    $region38: #{combonet_forward.1} parent=1 // pred_check
      _
    $region39: #{combonet_forward.1} parent=1 // pred_check_branch
      %7352 = sbr.rel (0) target = $region41
    $region40: #{combonet_forward.1} parent=1 // pred_region
      _
    $region41: #{combonet_forward.1} parent=1 // pred_fallthru
      _
    // Predicated region
    $region42: #{combonet_forward.1} parent=1 // pred_check
      _
    $region43: #{combonet_forward.1} parent=1 // pred_check_branch
      %7354 = sbr.rel (0) target = $region45
    $region44: #{combonet_forward.1} parent=1 // pred_region
      _
    $region45: #{combonet_forward.1} parent=1 // pred_fallthru
      _
    %7355 = vsyncpa [#allocation4], 1
    %7356 = vsyncpa [#allocation6], 1

</llo_original>
